<compile_context>
chip_gen: v5e
topology: v5e:2x2
jax: 0.10.0
libtpu: 0.0.40
codegen_flags: <defaults>
</compile_context>

<pallas_src>
import functools

import jax
import jax.numpy as jnp
from jax import lax
from jax.experimental import pallas as pl
from jax.experimental.pallas import tpu as pltpu

EPS = 1e-5  # nn.LayerNorm default


# ------------------------------------------------------------------ kernel ---

def _row_ln(v, gamma=None, beta=None):
    """LayerNorm over the last axis of a 2-D (tokens, channels) slab."""
    mu = jnp.mean(v, axis=-1, keepdims=True)
    xc = v - mu
    var = jnp.mean(xc * xc, axis=-1, keepdims=True)
    y = xc * lax.rsqrt(var + EPS)
    if gamma is not None:
        y = y * gamma + beta
    return y


def _regroup_rows(v, groups):
    """'(m, g*c) -> (g*m, c)': channel group g of coarse row m becomes row g*M + m.

    This is the in-VMEM pixel shuffle (up to a row permutation that is compensated by
    pre-permuting the skip tensors and un-permuting the final output host-side).
    Row-block sizes are multiples of 8, so the sublane concatenation stays tile-aligned.
    """
    c = v.shape[1] // groups
    return jnp.concatenate([v[:, g * c:(g + 1) * c] for g in range(groups)], axis=0)


def _decoder_kernel(
        x0_ref, s1_ref, s2_ref, s3_ref,
        w0e_ref, gb0_ref,
        w1a_ref, w1b_ref, b1_ref, gb1_ref,
        w2a_ref, w2b_ref, b2_ref, gb2_ref,
        w3a_ref, w3b_ref, b3_ref,
        fupw_ref, fupb_ref, sum16_ref, bc16_ref, convw_ref, convb_ref,
        o_ref):
    dot = functools.partial(jnp.dot, preferred_element_type=jnp.float32)

    # --- inx = 0: PatchExpand(dim=8E): expand-linear + shuffle + LN(4E) -------------
    x2 = dot(x0_ref[...], w0e_ref[...])                                   # (M0, 16E)
    a1 = _row_ln(_regroup_rows(x2, 4), gb0_ref[0:1, :], gb0_ref[1:2, :])  # (4M0, 4E)

    # --- inx = 1: concat-linear (+identity Swin blocks) + PatchExpand (weight folded)
    h1 = dot(a1, w1a_ref[...]) + dot(s1_ref[...], w1b_ref[...]) + b1_ref[...]   # (4M0, 8E)
    a2 = _row_ln(_regroup_rows(h1, 4), gb1_ref[0:1, :], gb1_ref[1:2, :])        # (16M0, 2E)

    # --- inx = 2 ----------------------------------------------------------------------
    h2 = dot(a2, w2a_ref[...]) + dot(s2_ref[...], w2b_ref[...]) + b2_ref[...]   # (16M0, 4E)
    a3 = _row_ln(_regroup_rows(h2, 4), gb2_ref[0:1, :], gb2_ref[1:2, :])        # (64M0, E)

    # --- inx = 3: concat-linear + norm_up (affine folded into the expand weight) ------
    h3 = dot(a3, w3a_ref[...]) + dot(s3_ref[...], w3b_ref[...]) + b3_ref[...]   # (64M0, E)
    z = _row_ln(h3)                                                             # norm_up
    x4 = dot(z, fupw_ref[...]) + fupb_ref[...]                                  # (64M0, 16E)

    # FinalPatchExpand_X4 LayerNorm over 16 contiguous E-channel groups via a
    # factorized per-group mean (sum matrix + 0/1 broadcast-back) -> MXU, tiny DMA.
    mu = dot(dot(x4, sum16_ref[...]), bc16_ref[...])
    xc = x4 - mu
    var = dot(dot(xc * xc, sum16_ref[...]), bc16_ref[...])
    y = xc * lax.rsqrt(var + EPS)                                               # (64M0, 16E)

    # 1x1 conv (E -> 1) per group, with the fup-LN affine folded in host-side.
    o_ref[...] = (dot(y, convw_ref[...]) + convb_ref[...]).astype(o_ref.dtype)  # (64M0, 16)


def _fused_call(operands, out_rows, out_cols):
    in_specs = [pl.BlockSpec(op.shape, lambda i: (0, 0)) for op in operands]
    return pl.pallas_call(
        _decoder_kernel,
        out_shape=jax.ShapeDtypeStruct((out_rows, out_cols), jnp.float32),
        grid_spec=pltpu.PrefetchScalarGridSpec(
            num_scalar_prefetch=0,
            grid=(1,),
            in_specs=in_specs,
            out_specs=pl.BlockSpec((out_rows, out_cols), lambda i: (0, 0)),
        ),
        compiler_params=pltpu.CompilerParams(dimension_semantics=("arbitrary",)),
    )(*operands)


# --------------------------------------------------- host-side permutations ---

def _group_major_skip(s, B, H0, W0, k):
    """Permute a skip (B, (2^k H0)*(2^k W0), C) from natural row-major token order into
    the kernel's group-major row order (matching k applications of _regroup_rows)."""
    C = s.shape[-1]
    s = s.reshape((B, H0) + (2,) * k + (W0,) + (2,) * k + (C,))
    perm = []
    for j in range(k, 0, -1):          # finest sub-pixel bits outermost
        perm.append(1 + j)             # y-bit of weight 2^(k-j)
        perm.append(k + 2 + j)         # x-bit of weight 2^(k-j)
    perm += [0, 1, k + 2, 2 * k + 3]   # b, h0, w0, C
    s = jnp.transpose(s, perm)
    return s.reshape((4 ** k) * B * H0 * W0, C)


def _ungroup_output(o, B, H0, W0):
    """(64*B*H0*W0, 16) group-major kernel output -> (B, 1, 32*H0, 32*W0) NCHW image."""
    o = o.reshape(2, 2, 2, 2, 2, 2, B, H0, W0, 4, 4)
    # axes (e1,e2,q1,q2,p1,p2,b,h0,w0,u1,u2) -> (b, h0,p1,q1,e1,u1, w0,p2,q2,e2,u2)
    o = jnp.transpose(o, (6, 7, 4, 2, 0, 9, 8, 5, 3, 1, 10))
    return o.reshape(B, 1, 32 * H0, 32 * W0)


# ------------------------------------------------------------------- params ---

def init_decoder_params(key, embed_dim=16, num_layers=4):
    p = {}
    dims = [embed_dim * 2 ** (num_layers - 1 - i) for i in range(num_layers)]  # [128,64,32,16]
    keys = iter(jax.random.split(key, 32))

    def w(shape):
        return 0.02 * jax.random.normal(next(keys), shape, jnp.float32)

    def affine(dim):
        g = 1.0 + 0.1 * jax.random.normal(next(keys), (dim,), jnp.float32)
        b = 0.1 * jax.random.normal(next(keys), (dim,), jnp.float32)
        return g, b

    # layers_up[0]: PatchExpand(dim=8E)
    p["up0_w"] = w((dims[0], 2 * dims[0]))
    p["up0_g"], p["up0_b"] = affine(dims[0] // 2)
    # layers_up[1..2]: concat_back_dim Linear(2d->d, bias) split into (d,d) halves
    # (top half multiplies x, bottom half the skip) + PatchExpand(dim=d)
    for i in (1, 2):
        d = dims[i]
        p[f"cb{i}_wa"], p[f"cb{i}_wb"] = w((d, d)), w((d, d))
        p[f"cb{i}_b"] = 0.1 * jax.random.normal(next(keys), (d,), jnp.float32)
        p[f"up{i}_w"] = w((d, 2 * d))
        p[f"up{i}_g"], p[f"up{i}_b"] = affine(d // 2)
    # layers_up[3]: concat_back_dim only (no upsample)
    d = dims[3]
    p["cb3_wa"], p["cb3_wb"] = w((d, d)), w((d, d))
    p["cb3_b"] = 0.1 * jax.random.normal(next(keys), (d,), jnp.float32)
    # norm_up, FinalPatchExpand_X4 and the 1x1 output conv
    p["norm_up_g"], p["norm_up_b"] = affine(embed_dim)
    p["fup_w"] = w((embed_dim, 16 * embed_dim))
    p["fup_g"], p["fup_b"] = affine(embed_dim)
    p["out_w"] = w((embed_dim, 1))
    return p


def derive_constants(p, embed_dim=16):
    """Fold/pack parameters into kernel-ready operands."""
    E = embed_dim
    cst = {}

    def gb(g, b):
        return jnp.stack([g, b], axis=0)            # (2, c): row 0 = gamma, row 1 = beta

    cst["up0_w"] = p["up0_w"]                       # (8E, 16E)
    cst["up0_gb"] = gb(p["up0_g"], p["up0_b"])      # (2, 4E)

    # Stages 1/2: fold the PatchExpand weight into the concat-linear halves
    # (valid while the Swin block stacks are identity).
    for i in (1, 2):
        we = p[f"up{i}_w"]
        cst[f"cb{i}_wa"] = p[f"cb{i}_wa"] @ we
        cst[f"cb{i}_wb"] = p[f"cb{i}_wb"] @ we
        cst[f"cb{i}_b"] = (p[f"cb{i}_b"] @ we).reshape(1, -1)
        cst[f"up{i}_gb"] = gb(p[f"up{i}_g"], p[f"up{i}_b"])

    cst["cb3_wa"] = p["cb3_wa"]
    cst["cb3_wb"] = p["cb3_wb"]
    cst["cb3_b"] = p["cb3_b"].reshape(1, -1)

    # norm_up affine folded into the FinalPatchExpand weight (which has no bias).
    cst["fup_w"] = p["norm_up_g"][:, None] * p["fup_w"]              # (E, 16E)
    cst["fup_b"] = (p["norm_up_b"] @ p["fup_w"]).reshape(1, -1)      # (1, 16E)

    # Factorized per-group mean for the FinalPatchExpand LN (16 groups of E channels).
    eye16 = jnp.eye(16, dtype=jnp.float32)
    ones_e = jnp.ones((E, 1), jnp.float32)
    cst["sum16"] = jnp.kron(eye16, ones_e / E)                       # (16E, 16)
    cst["bc16"] = jnp.kron(eye16, ones_e.T)                          # (16, 16E)

    # FinalPatchExpand LN affine + 1x1 conv folded into one (16E, 16) matmul + bias.
    out_wbd = jnp.kron(eye16, p["out_w"])                            # (16E, 16)
    g_t = jnp.tile(p["fup_g"], 16)
    b_t = jnp.tile(p["fup_b"], 16)
    cst["conv_w"] = g_t[:, None] * out_wbd
    cst["conv_b"] = (b_t @ out_wbd).reshape(1, 16)
    return cst


# ------------------------------------------------------------------ forward ---

def decoder_forward(cst, x, x_downsample, patches_resolution=(16, 16)):
    """Decoder.forward (mode='swin', spatial_attention='0').

    x:            (B, (pr/8)^2, 8*embed_dim)
    x_downsample: list of 4 skips, x_downsample[i]: (B, (pr/2^(3-i))^2, embed_dim*2^(3-i))
    returns:      (B, num_classes=1, 4*pr, 4*pr) NCHW
    """
    prH, prW = patches_resolution
    assert prH % 8 == 0 and prW % 8 == 0
    B = x.shape[0]
    H0, W0 = prH // 8, prW // 8

    x0 = x.reshape(B * H0 * W0, -1)
    s1 = _group_major_skip(x_downsample[2], B, H0, W0, 1)
    s2 = _group_major_skip(x_downsample[1], B, H0, W0, 2)
    s3 = _group_major_skip(x_downsample[0], B, H0, W0, 3)

    operands = [
        x0, s1, s2, s3,
        cst["up0_w"], cst["up0_gb"],
        cst["cb1_wa"], cst["cb1_wb"], cst["cb1_b"], cst["up1_gb"],
        cst["cb2_wa"], cst["cb2_wb"], cst["cb2_b"], cst["up2_gb"],
        cst["cb3_wa"], cst["cb3_wb"], cst["cb3_b"],
        cst["fup_w"], cst["fup_b"], cst["sum16"], cst["bc16"],
        cst["conv_w"], cst["conv_b"],
    ]
    out2d = _fused_call(operands, 64 * B * H0 * W0, 16)
    return _ungroup_output(out2d, B, H0, W0)


# --------------------------------------------------------- pure-JAX reference --

def decoder_reference(p, x, x_downsample, patches_resolution=(16, 16)):
    """Direct transcription of the PyTorch forward (Swin blocks = identity)."""
    prH, prW = patches_resolution
    B = x.shape[0]

    def ln(v, g, b):
        mu = v.mean(-1, keepdims=True)
        var = ((v - mu) ** 2).mean(-1, keepdims=True)
        return (v - mu) / jnp.sqrt(var + EPS) * g + b

    def pixel_shuffle(v, H, W, s):
        Bv, _, C = v.shape
        c = C // (s * s)
        v = v.reshape(Bv, H, W, s, s, c).transpose(0, 1, 3, 2, 4, 5)
        return v.reshape(Bv, H * s * W * s, c)

    H, W = prH // 8, prW // 8
    x = x @ p["up0_w"]
    x = ln(pixel_shuffle(x, H, W, 2), p["up0_g"], p["up0_b"])
    H, W = 2 * H, 2 * W
    for i, skip in ((1, x_downsample[2]), (2, x_downsample[1])):
        x = x @ p[f"cb{i}_wa"] + skip @ p[f"cb{i}_wb"] + p[f"cb{i}_b"]
        x = x @ p[f"up{i}_w"]
        x = ln(pixel_shuffle(x, H, W, 2), p[f"up{i}_g"], p[f"up{i}_b"])
        H, W = 2 * H, 2 * W
    x = x @ p["cb3_wa"] + x_downsample[0] @ p["cb3_wb"] + p["cb3_b"]
    x = ln(x, p["norm_up_g"], p["norm_up_b"])
    x = x @ p["fup_w"]
    x = ln(pixel_shuffle(x, H, W, 4), p["fup_g"], p["fup_b"])
    x = x.reshape(B, 4 * prH, 4 * prW, -1)
    return jnp.einsum("bhwc,co->bohw", x, p["out_w"])


# ---------------------------------------------------------------------- main --

if __name__ == "__main__":
    B = 2
    embed_dim = 16
    patches_resolution = (16, 16)  # img_size=64, patch_size=4

    key = jax.random.PRNGKey(0)
    kp, kx, k0, k1, k2, k3 = jax.random.split(key, 6)
    params = init_decoder_params(kp, embed_dim=embed_dim)
    cst = derive_constants(params, embed_dim=embed_dim)

    # bottleneck: (B, (16/8)^2, 8E) = (2, 4, 128); encoder skips at each resolution
    x = jax.random.normal(kx, (B, 4, 8 * embed_dim), jnp.float32)
    x_downsample = [
        jax.random.normal(k0, (B, 256, embed_dim), jnp.float32),      # (2, 256, 16)
        jax.random.normal(k1, (B, 64, 2 * embed_dim), jnp.float32),   # (2, 64, 32)
        jax.random.normal(k2, (B, 16, 4 * embed_dim), jnp.float32),   # (2, 16, 64)
        jax.random.normal(k3, (B, 4, 8 * embed_dim), jnp.float32),    # (2, 4, 128) (unused)
    ]

    fwd = jax.jit(functools.partial(decoder_forward, patches_resolution=patches_resolution))
    out = jax.block_until_ready(fwd(cst, x, x_downsample))
    assert out.shape == (B, 1, 64, 64), out.shape
    assert bool(jnp.all(jnp.isfinite(out)))

    ref = decoder_reference(params, x, x_downsample, patches_resolution)
    err = float(jnp.max(jnp.abs(out - ref)))
    assert err < 2e-2, f"mismatch vs reference: max abs err {err}"

    print("KERNEL_OK")
</pallas_src>

<mosaic_0001>
module attributes {stable_mosaic.version = 11 : i64} {
  func.func @_decoder_kernel(%arg0: i32, %arg1: memref<8x128xf32, #tpu.memory_space<vmem>>, %arg2: memref<32x64xf32, #tpu.memory_space<vmem>>, %arg3: memref<128x32xf32, #tpu.memory_space<vmem>>, %arg4: memref<512x16xf32, #tpu.memory_space<vmem>>, %arg5: memref<128x256xf32, #tpu.memory_space<vmem>>, %arg6: memref<2x64xf32, #tpu.memory_space<vmem>>, %arg7: memref<64x128xf32, #tpu.memory_space<vmem>>, %arg8: memref<64x128xf32, #tpu.memory_space<vmem>>, %arg9: memref<1x128xf32, #tpu.memory_space<vmem>>, %arg10: memref<2x32xf32, #tpu.memory_space<vmem>>, %arg11: memref<32x64xf32, #tpu.memory_space<vmem>>, %arg12: memref<32x64xf32, #tpu.memory_space<vmem>>, %arg13: memref<1x64xf32, #tpu.memory_space<vmem>>, %arg14: memref<2x16xf32, #tpu.memory_space<vmem>>, %arg15: memref<16x16xf32, #tpu.memory_space<vmem>>, %arg16: memref<16x16xf32, #tpu.memory_space<vmem>>, %arg17: memref<1x16xf32, #tpu.memory_space<vmem>>, %arg18: memref<16x256xf32, #tpu.memory_space<vmem>>, %arg19: memref<1x256xf32, #tpu.memory_space<vmem>>, %arg20: memref<256x16xf32, #tpu.memory_space<vmem>>, %arg21: memref<16x256xf32, #tpu.memory_space<vmem>>, %arg22: memref<256x16xf32, #tpu.memory_space<vmem>>, %arg23: memref<1x16xf32, #tpu.memory_space<vmem>>, %arg24: memref<512x16xf32, #tpu.memory_space<vmem>>) attributes {dimension_semantics = [#tpu.dimension_semantics<arbitrary>], iteration_bounds = array<i64: 1>, scalar_prefetch = 0 : i64, scratch_operands = 0 : i64, tpu.core_type = #tpu.core_type<tc>, window_params = [{pipeline_mode = #tpu.pipeline_mode<synchronous>, transform_indices = @transform_0, window_bounds = array<i64: 8, 128>}, {pipeline_mode = #tpu.pipeline_mode<synchronous>, transform_indices = @transform_1, window_bounds = array<i64: 32, 64>}, {pipeline_mode = #tpu.pipeline_mode<synchronous>, transform_indices = @transform_2, window_bounds = array<i64: 128, 32>}, {pipeline_mode = #tpu.pipeline_mode<synchronous>, transform_indices = @transform_3, window_bounds = array<i64: 512, 16>}, {pipeline_mode = #tpu.pipeline_mode<synchronous>, transform_indices = @transform_4, window_bounds = array<i64: 128, 256>}, {pipeline_mode = #tpu.pipeline_mode<synchronous>, transform_indices = @transform_5, window_bounds = array<i64: 2, 64>}, {pipeline_mode = #tpu.pipeline_mode<synchronous>, transform_indices = @transform_6, window_bounds = array<i64: 64, 128>}, {pipeline_mode = #tpu.pipeline_mode<synchronous>, transform_indices = @transform_7, window_bounds = array<i64: 64, 128>}, {pipeline_mode = #tpu.pipeline_mode<synchronous>, transform_indices = @transform_8, window_bounds = array<i64: 1, 128>}, {pipeline_mode = #tpu.pipeline_mode<synchronous>, transform_indices = @transform_9, window_bounds = array<i64: 2, 32>}, {pipeline_mode = #tpu.pipeline_mode<synchronous>, transform_indices = @transform_10, window_bounds = array<i64: 32, 64>}, {pipeline_mode = #tpu.pipeline_mode<synchronous>, transform_indices = @transform_11, window_bounds = array<i64: 32, 64>}, {pipeline_mode = #tpu.pipeline_mode<synchronous>, transform_indices = @transform_12, window_bounds = array<i64: 1, 64>}, {pipeline_mode = #tpu.pipeline_mode<synchronous>, transform_indices = @transform_13, window_bounds = array<i64: 2, 16>}, {pipeline_mode = #tpu.pipeline_mode<synchronous>, transform_indices = @transform_14, window_bounds = array<i64: 16, 16>}, {pipeline_mode = #tpu.pipeline_mode<synchronous>, transform_indices = @transform_15, window_bounds = array<i64: 16, 16>}, {pipeline_mode = #tpu.pipeline_mode<synchronous>, transform_indices = @transform_16, window_bounds = array<i64: 1, 16>}, {pipeline_mode = #tpu.pipeline_mode<synchronous>, transform_indices = @transform_17, window_bounds = array<i64: 16, 256>}, {pipeline_mode = #tpu.pipeline_mode<synchronous>, transform_indices = @transform_18, window_bounds = array<i64: 1, 256>}, {pipeline_mode = #tpu.pipeline_mode<synchronous>, transform_indices = @transform_19, window_bounds = array<i64: 256, 16>}, {pipeline_mode = #tpu.pipeline_mode<synchronous>, transform_indices = @transform_20, window_bounds = array<i64: 16, 256>}, {pipeline_mode = #tpu.pipeline_mode<synchronous>, transform_indices = @transform_21, window_bounds = array<i64: 256, 16>}, {pipeline_mode = #tpu.pipeline_mode<synchronous>, transform_indices = @transform_22, window_bounds = array<i64: 1, 16>}, {pipeline_mode = #tpu.pipeline_mode<synchronous>, transform_indices = @transform_23, window_bounds = array<i64: 512, 16>}]} {
    %c0 = arith.constant 0 : index
    %c0_0 = arith.constant 0 : index
    %0 = vector.load %arg1[%c0, %c0_0] : memref<8x128xf32, #tpu.memory_space<vmem>>, vector<8x128xf32>
    %c0_1 = arith.constant 0 : index
    %c0_2 = arith.constant 0 : index
    %1 = vector.load %arg5[%c0_1, %c0_2] : memref<128x256xf32, #tpu.memory_space<vmem>>, vector<128x256xf32>
    %cst = arith.constant dense<0.000000e+00> : vector<8x256xf32>
    %2 = tpu.matmul %0, %1, %cst {dimension_numbers = #tpu.dot_dimension_numbers<[1], [0], [0], [1], [0, 0, 1, 1], [], []>} : vector<8x128xf32>, vector<128x256xf32>, vector<8x256xf32> -> vector<8x256xf32>
    %3 = vector.extract_strided_slice %2 {offsets = [0, 0], sizes = [8, 64], strides = [1, 1]} : vector<8x256xf32> to vector<8x64xf32>
    %4 = vector.extract_strided_slice %2 {offsets = [0, 64], sizes = [8, 64], strides = [1, 1]} : vector<8x256xf32> to vector<8x64xf32>
    %5 = vector.extract_strided_slice %2 {offsets = [0, 128], sizes = [8, 64], strides = [1, 1]} : vector<8x256xf32> to vector<8x64xf32>
    %6 = vector.extract_strided_slice %2 {offsets = [0, 192], sizes = [8, 64], strides = [1, 1]} : vector<8x256xf32> to vector<8x64xf32>
    %7 = tpu.concatenate %3, %4, %5, %6 in 0 : vector<8x64xf32>, vector<8x64xf32>, vector<8x64xf32>, vector<8x64xf32> -> vector<32x64xf32>
    %c0_3 = arith.constant 0 : index
    %c0_4 = arith.constant 0 : index
    %8 = vector.load %arg6[%c0_3, %c0_4] : memref<2x64xf32, #tpu.memory_space<vmem>>, vector<1x64xf32>
    %c1 = arith.constant 1 : index
    %c0_5 = arith.constant 0 : index
    %9 = vector.load %arg6[%c1, %c0_5] : memref<2x64xf32, #tpu.memory_space<vmem>>, vector<1x64xf32>
    %cst_6 = arith.constant dense<0.000000e+00> : vector<32xf32>
    %10 = vector.multi_reduction <add>, %7, %cst_6 [1] : vector<32x64xf32> to vector<32xf32>
    %11 = vector.shape_cast %10 : vector<32xf32> to vector<32x1xf32>
    %cst_7 = arith.constant 6.400000e+01 : f32
    %12 = vector.broadcast %cst_7 : f32 to vector<32x1xf32>
    %13 = arith.divf %11, %12 : vector<32x1xf32>
    %14 = vector.broadcast %13 : vector<32x1xf32> to vector<32x64xf32>
    %15 = arith.subf %7, %14 : vector<32x64xf32>
    %16 = arith.mulf %15, %15 : vector<32x64xf32>
    %cst_8 = arith.constant dense<0.000000e+00> : vector<32xf32>
    %17 = vector.multi_reduction <add>, %16, %cst_8 [1] : vector<32x64xf32> to vector<32xf32>
    %18 = vector.shape_cast %17 : vector<32xf32> to vector<32x1xf32>
    %cst_9 = arith.constant 6.400000e+01 : f32
    %19 = vector.broadcast %cst_9 : f32 to vector<32x1xf32>
    %20 = arith.divf %18, %19 : vector<32x1xf32>
    %cst_10 = arith.constant 9.99999974E-6 : f32
    %21 = vector.broadcast %cst_10 : f32 to vector<32x1xf32>
    %22 = arith.addf %20, %21 : vector<32x1xf32>
    %23 = math.rsqrt %22 : vector<32x1xf32>
    %24 = vector.broadcast %23 : vector<32x1xf32> to vector<32x64xf32>
    %25 = arith.mulf %15, %24 : vector<32x64xf32>
    %26 = vector.broadcast %8 : vector<1x64xf32> to vector<32x64xf32>
    %27 = arith.mulf %25, %26 : vector<32x64xf32>
    %28 = vector.broadcast %9 : vector<1x64xf32> to vector<32x64xf32>
    %29 = arith.addf %27, %28 : vector<32x64xf32>
    %c0_11 = arith.constant 0 : index
    %c0_12 = arith.constant 0 : index
    %30 = vector.load %arg7[%c0_11, %c0_12] : memref<64x128xf32, #tpu.memory_space<vmem>>, vector<64x128xf32>
    %cst_13 = arith.constant dense<0.000000e+00> : vector<32x128xf32>
    %31 = tpu.matmul %29, %30, %cst_13 {dimension_numbers = #tpu.dot_dimension_numbers<[1], [0], [0], [1], [0, 0, 1, 1], [], []>} : vector<32x64xf32>, vector<64x128xf32>, vector<32x128xf32> -> vector<32x128xf32>
    %c0_14 = arith.constant 0 : index
    %c0_15 = arith.constant 0 : index
    %32 = vector.load %arg2[%c0_14, %c0_15] : memref<32x64xf32, #tpu.memory_space<vmem>>, vector<32x64xf32>
    %c0_16 = arith.constant 0 : index
    %c0_17 = arith.constant 0 : index
    %33 = vector.load %arg8[%c0_16, %c0_17] : memref<64x128xf32, #tpu.memory_space<vmem>>, vector<64x128xf32>
    %cst_18 = arith.constant dense<0.000000e+00> : vector<32x128xf32>
    %34 = tpu.matmul %32, %33, %cst_18 {dimension_numbers = #tpu.dot_dimension_numbers<[1], [0], [0], [1], [0, 0, 1, 1], [], []>} : vector<32x64xf32>, vector<64x128xf32>, vector<32x128xf32> -> vector<32x128xf32>
    %35 = arith.addf %31, %34 : vector<32x128xf32>
    %c0_19 = arith.constant 0 : index
    %c0_20 = arith.constant 0 : index
    %36 = vector.load %arg9[%c0_19, %c0_20] : memref<1x128xf32, #tpu.memory_space<vmem>>, vector<1x128xf32>
    %37 = vector.broadcast %36 : vector<1x128xf32> to vector<32x128xf32>
    %38 = arith.addf %35, %37 : vector<32x128xf32>
    %39 = vector.extract_strided_slice %38 {offsets = [0, 0], sizes = [32, 32], strides = [1, 1]} : vector<32x128xf32> to vector<32x32xf32>
    %40 = vector.extract_strided_slice %38 {offsets = [0, 32], sizes = [32, 32], strides = [1, 1]} : vector<32x128xf32> to vector<32x32xf32>
    %41 = vector.extract_strided_slice %38 {offsets = [0, 64], sizes = [32, 32], strides = [1, 1]} : vector<32x128xf32> to vector<32x32xf32>
    %42 = vector.extract_strided_slice %38 {offsets = [0, 96], sizes = [32, 32], strides = [1, 1]} : vector<32x128xf32> to vector<32x32xf32>
    %43 = tpu.concatenate %39, %40, %41, %42 in 0 : vector<32x32xf32>, vector<32x32xf32>, vector<32x32xf32>, vector<32x32xf32> -> vector<128x32xf32>
    %c0_21 = arith.constant 0 : index
    %c0_22 = arith.constant 0 : index
    %44 = vector.load %arg10[%c0_21, %c0_22] : memref<2x32xf32, #tpu.memory_space<vmem>>, vector<1x32xf32>
    %c1_23 = arith.constant 1 : index
    %c0_24 = arith.constant 0 : index
    %45 = vector.load %arg10[%c1_23, %c0_24] : memref<2x32xf32, #tpu.memory_space<vmem>>, vector<1x32xf32>
    %cst_25 = arith.constant dense<0.000000e+00> : vector<128xf32>
    %46 = vector.multi_reduction <add>, %43, %cst_25 [1] : vector<128x32xf32> to vector<128xf32>
    %47 = vector.shape_cast %46 : vector<128xf32> to vector<128x1xf32>
    %cst_26 = arith.constant 3.200000e+01 : f32
    %48 = vector.broadcast %cst_26 : f32 to vector<128x1xf32>
    %49 = arith.divf %47, %48 : vector<128x1xf32>
    %50 = vector.broadcast %49 : vector<128x1xf32> to vector<128x32xf32>
    %51 = arith.subf %43, %50 : vector<128x32xf32>
    %52 = arith.mulf %51, %51 : vector<128x32xf32>
    %cst_27 = arith.constant dense<0.000000e+00> : vector<128xf32>
    %53 = vector.multi_reduction <add>, %52, %cst_27 [1] : vector<128x32xf32> to vector<128xf32>
    %54 = vector.shape_cast %53 : vector<128xf32> to vector<128x1xf32>
    %cst_28 = arith.constant 3.200000e+01 : f32
    %55 = vector.broadcast %cst_28 : f32 to vector<128x1xf32>
    %56 = arith.divf %54, %55 : vector<128x1xf32>
    %cst_29 = arith.constant 9.99999974E-6 : f32
    %57 = vector.broadcast %cst_29 : f32 to vector<128x1xf32>
    %58 = arith.addf %56, %57 : vector<128x1xf32>
    %59 = math.rsqrt %58 : vector<128x1xf32>
    %60 = vector.broadcast %59 : vector<128x1xf32> to vector<128x32xf32>
    %61 = arith.mulf %51, %60 : vector<128x32xf32>
    %62 = vector.broadcast %44 : vector<1x32xf32> to vector<128x32xf32>
    %63 = arith.mulf %61, %62 : vector<128x32xf32>
    %64 = vector.broadcast %45 : vector<1x32xf32> to vector<128x32xf32>
    %65 = arith.addf %63, %64 : vector<128x32xf32>
    %c0_30 = arith.constant 0 : index
    %c0_31 = arith.constant 0 : index
    %66 = vector.load %arg11[%c0_30, %c0_31] : memref<32x64xf32, #tpu.memory_space<vmem>>, vector<32x64xf32>
    %cst_32 = arith.constant dense<0.000000e+00> : vector<128x64xf32>
    %67 = tpu.matmul %65, %66, %cst_32 {dimension_numbers = #tpu.dot_dimension_numbers<[1], [0], [0], [1], [0, 0, 1, 1], [], []>} : vector<128x32xf32>, vector<32x64xf32>, vector<128x64xf32> -> vector<128x64xf32>
    %c0_33 = arith.constant 0 : index
    %c0_34 = arith.constant 0 : index
    %68 = vector.load %arg3[%c0_33, %c0_34] : memref<128x32xf32, #tpu.memory_space<vmem>>, vector<128x32xf32>
    %c0_35 = arith.constant 0 : index
    %c0_36 = arith.constant 0 : index
    %69 = vector.load %arg12[%c0_35, %c0_36] : memref<32x64xf32, #tpu.memory_space<vmem>>, vector<32x64xf32>
    %cst_37 = arith.constant dense<0.000000e+00> : vector<128x64xf32>
    %70 = tpu.matmul %68, %69, %cst_37 {dimension_numbers = #tpu.dot_dimension_numbers<[1], [0], [0], [1], [0, 0, 1, 1], [], []>} : vector<128x32xf32>, vector<32x64xf32>, vector<128x64xf32> -> vector<128x64xf32>
    %71 = arith.addf %67, %70 : vector<128x64xf32>
    %c0_38 = arith.constant 0 : index
    %c0_39 = arith.constant 0 : index
    %72 = vector.load %arg13[%c0_38, %c0_39] : memref<1x64xf32, #tpu.memory_space<vmem>>, vector<1x64xf32>
    %73 = vector.broadcast %72 : vector<1x64xf32> to vector<128x64xf32>
    %74 = arith.addf %71, %73 : vector<128x64xf32>
    %75 = vector.extract_strided_slice %74 {offsets = [0, 0], sizes = [128, 16], strides = [1, 1]} : vector<128x64xf32> to vector<128x16xf32>
    %76 = vector.extract_strided_slice %74 {offsets = [0, 16], sizes = [128, 16], strides = [1, 1]} : vector<128x64xf32> to vector<128x16xf32>
    %77 = vector.extract_strided_slice %74 {offsets = [0, 32], sizes = [128, 16], strides = [1, 1]} : vector<128x64xf32> to vector<128x16xf32>
    %78 = vector.extract_strided_slice %74 {offsets = [0, 48], sizes = [128, 16], strides = [1, 1]} : vector<128x64xf32> to vector<128x16xf32>
    %79 = tpu.concatenate %75, %76, %77, %78 in 0 : vector<128x16xf32>, vector<128x16xf32>, vector<128x16xf32>, vector<128x16xf32> -> vector<512x16xf32>
    %c0_40 = arith.constant 0 : index
    %c0_41 = arith.constant 0 : index
    %80 = vector.load %arg14[%c0_40, %c0_41] : memref<2x16xf32, #tpu.memory_space<vmem>>, vector<1x16xf32>
    %c1_42 = arith.constant 1 : index
    %c0_43 = arith.constant 0 : index
    %81 = vector.load %arg14[%c1_42, %c0_43] : memref<2x16xf32, #tpu.memory_space<vmem>>, vector<1x16xf32>
    %cst_44 = arith.constant dense<0.000000e+00> : vector<512xf32>
    %82 = vector.multi_reduction <add>, %79, %cst_44 [1] : vector<512x16xf32> to vector<512xf32>
    %83 = vector.shape_cast %82 : vector<512xf32> to vector<512x1xf32>
    %cst_45 = arith.constant 1.600000e+01 : f32
    %84 = vector.broadcast %cst_45 : f32 to vector<512x1xf32>
    %85 = arith.divf %83, %84 : vector<512x1xf32>
    %86 = vector.broadcast %85 : vector<512x1xf32> to vector<512x16xf32>
    %87 = arith.subf %79, %86 : vector<512x16xf32>
    %88 = arith.mulf %87, %87 : vector<512x16xf32>
    %cst_46 = arith.constant dense<0.000000e+00> : vector<512xf32>
    %89 = vector.multi_reduction <add>, %88, %cst_46 [1] : vector<512x16xf32> to vector<512xf32>
    %90 = vector.shape_cast %89 : vector<512xf32> to vector<512x1xf32>
    %cst_47 = arith.constant 1.600000e+01 : f32
    %91 = vector.broadcast %cst_47 : f32 to vector<512x1xf32>
    %92 = arith.divf %90, %91 : vector<512x1xf32>
    %cst_48 = arith.constant 9.99999974E-6 : f32
    %93 = vector.broadcast %cst_48 : f32 to vector<512x1xf32>
    %94 = arith.addf %92, %93 : vector<512x1xf32>
    %95 = math.rsqrt %94 : vector<512x1xf32>
    %96 = vector.broadcast %95 : vector<512x1xf32> to vector<512x16xf32>
    %97 = arith.mulf %87, %96 : vector<512x16xf32>
    %98 = vector.broadcast %80 : vector<1x16xf32> to vector<512x16xf32>
    %99 = arith.mulf %97, %98 : vector<512x16xf32>
    %100 = vector.broadcast %81 : vector<1x16xf32> to vector<512x16xf32>
    %101 = arith.addf %99, %100 : vector<512x16xf32>
    %c0_49 = arith.constant 0 : index
    %c0_50 = arith.constant 0 : index
    %102 = vector.load %arg15[%c0_49, %c0_50] : memref<16x16xf32, #tpu.memory_space<vmem>>, vector<16x16xf32>
    %cst_51 = arith.constant dense<0.000000e+00> : vector<512x16xf32>
    %103 = tpu.matmul %101, %102, %cst_51 {dimension_numbers = #tpu.dot_dimension_numbers<[1], [0], [0], [1], [0, 0, 1, 1], [], []>} : vector<512x16xf32>, vector<16x16xf32>, vector<512x16xf32> -> vector<512x16xf32>
    %c0_52 = arith.constant 0 : index
    %c0_53 = arith.constant 0 : index
    %104 = vector.load %arg4[%c0_52, %c0_53] : memref<512x16xf32, #tpu.memory_space<vmem>>, vector<512x16xf32>
    %c0_54 = arith.constant 0 : index
    %c0_55 = arith.constant 0 : index
    %105 = vector.load %arg16[%c0_54, %c0_55] : memref<16x16xf32, #tpu.memory_space<vmem>>, vector<16x16xf32>
    %cst_56 = arith.constant dense<0.000000e+00> : vector<512x16xf32>
    %106 = tpu.matmul %104, %105, %cst_56 {dimension_numbers = #tpu.dot_dimension_numbers<[1], [0], [0], [1], [0, 0, 1, 1], [], []>} : vector<512x16xf32>, vector<16x16xf32>, vector<512x16xf32> -> vector<512x16xf32>
    %107 = arith.addf %103, %106 : vector<512x16xf32>
    %c0_57 = arith.constant 0 : index
    %c0_58 = arith.constant 0 : index
    %108 = vector.load %arg17[%c0_57, %c0_58] : memref<1x16xf32, #tpu.memory_space<vmem>>, vector<1x16xf32>
    %109 = vector.broadcast %108 : vector<1x16xf32> to vector<512x16xf32>
    %110 = arith.addf %107, %109 : vector<512x16xf32>
    %cst_59 = arith.constant dense<0.000000e+00> : vector<512xf32>
    %111 = vector.multi_reduction <add>, %110, %cst_59 [1] : vector<512x16xf32> to vector<512xf32>
    %112 = vector.shape_cast %111 : vector<512xf32> to vector<512x1xf32>
    %cst_60 = arith.constant 1.600000e+01 : f32
    %113 = vector.broadcast %cst_60 : f32 to vector<512x1xf32>
    %114 = arith.divf %112, %113 : vector<512x1xf32>
    %115 = vector.broadcast %114 : vector<512x1xf32> to vector<512x16xf32>
    %116 = arith.subf %110, %115 : vector<512x16xf32>
    %117 = arith.mulf %116, %116 : vector<512x16xf32>
    %cst_61 = arith.constant dense<0.000000e+00> : vector<512xf32>
    %118 = vector.multi_reduction <add>, %117, %cst_61 [1] : vector<512x16xf32> to vector<512xf32>
    %119 = vector.shape_cast %118 : vector<512xf32> to vector<512x1xf32>
    %cst_62 = arith.constant 1.600000e+01 : f32
    %120 = vector.broadcast %cst_62 : f32 to vector<512x1xf32>
    %121 = arith.divf %119, %120 : vector<512x1xf32>
    %cst_63 = arith.constant 9.99999974E-6 : f32
    %122 = vector.broadcast %cst_63 : f32 to vector<512x1xf32>
    %123 = arith.addf %121, %122 : vector<512x1xf32>
    %124 = math.rsqrt %123 : vector<512x1xf32>
    %125 = vector.broadcast %124 : vector<512x1xf32> to vector<512x16xf32>
    %126 = arith.mulf %116, %125 : vector<512x16xf32>
    %c0_64 = arith.constant 0 : index
    %c0_65 = arith.constant 0 : index
    %127 = vector.load %arg18[%c0_64, %c0_65] : memref<16x256xf32, #tpu.memory_space<vmem>>, vector<16x256xf32>
    %cst_66 = arith.constant dense<0.000000e+00> : vector<512x256xf32>
    %128 = tpu.matmul %126, %127, %cst_66 {dimension_numbers = #tpu.dot_dimension_numbers<[1], [0], [0], [1], [0, 0, 1, 1], [], []>} : vector<512x16xf32>, vector<16x256xf32>, vector<512x256xf32> -> vector<512x256xf32>
    %c0_67 = arith.constant 0 : index
    %c0_68 = arith.constant 0 : index
    %129 = vector.load %arg19[%c0_67, %c0_68] : memref<1x256xf32, #tpu.memory_space<vmem>>, vector<1x256xf32>
    %130 = vector.broadcast %129 : vector<1x256xf32> to vector<512x256xf32>
    %131 = arith.addf %128, %130 : vector<512x256xf32>
    %c0_69 = arith.constant 0 : index
    %c0_70 = arith.constant 0 : index
    %132 = vector.load %arg20[%c0_69, %c0_70] : memref<256x16xf32, #tpu.memory_space<vmem>>, vector<256x16xf32>
    %cst_71 = arith.constant dense<0.000000e+00> : vector<512x16xf32>
    %133 = tpu.matmul %131, %132, %cst_71 {dimension_numbers = #tpu.dot_dimension_numbers<[1], [0], [0], [1], [0, 0, 1, 1], [], []>} : vector<512x256xf32>, vector<256x16xf32>, vector<512x16xf32> -> vector<512x16xf32>
    %c0_72 = arith.constant 0 : index
    %c0_73 = arith.constant 0 : index
    %134 = vector.load %arg21[%c0_72, %c0_73] : memref<16x256xf32, #tpu.memory_space<vmem>>, vector<16x256xf32>
    %cst_74 = arith.constant dense<0.000000e+00> : vector<512x256xf32>
    %135 = tpu.matmul %133, %134, %cst_74 {dimension_numbers = #tpu.dot_dimension_numbers<[1], [0], [0], [1], [0, 0, 1, 1], [], []>} : vector<512x16xf32>, vector<16x256xf32>, vector<512x256xf32> -> vector<512x256xf32>
    %136 = arith.subf %131, %135 : vector<512x256xf32>
    %137 = arith.mulf %136, %136 : vector<512x256xf32>
    %c0_75 = arith.constant 0 : index
    %c0_76 = arith.constant 0 : index
    %138 = vector.load %arg20[%c0_75, %c0_76] : memref<256x16xf32, #tpu.memory_space<vmem>>, vector<256x16xf32>
    %cst_77 = arith.constant dense<0.000000e+00> : vector<512x16xf32>
    %139 = tpu.matmul %137, %138, %cst_77 {dimension_numbers = #tpu.dot_dimension_numbers<[1], [0], [0], [1], [0, 0, 1, 1], [], []>} : vector<512x256xf32>, vector<256x16xf32>, vector<512x16xf32> -> vector<512x16xf32>
    %c0_78 = arith.constant 0 : index
    %c0_79 = arith.constant 0 : index
    %140 = vector.load %arg21[%c0_78, %c0_79] : memref<16x256xf32, #tpu.memory_space<vmem>>, vector<16x256xf32>
    %cst_80 = arith.constant dense<0.000000e+00> : vector<512x256xf32>
    %141 = tpu.matmul %139, %140, %cst_80 {dimension_numbers = #tpu.dot_dimension_numbers<[1], [0], [0], [1], [0, 0, 1, 1], [], []>} : vector<512x16xf32>, vector<16x256xf32>, vector<512x256xf32> -> vector<512x256xf32>
    %cst_81 = arith.constant 9.99999974E-6 : f32
    %142 = vector.broadcast %cst_81 : f32 to vector<512x256xf32>
    %143 = arith.addf %141, %142 : vector<512x256xf32>
    %144 = math.rsqrt %143 : vector<512x256xf32>
    %145 = arith.mulf %136, %144 : vector<512x256xf32>
    %c0_82 = arith.constant 0 : index
    %c0_83 = arith.constant 0 : index
    %146 = vector.load %arg22[%c0_82, %c0_83] : memref<256x16xf32, #tpu.memory_space<vmem>>, vector<256x16xf32>
    %cst_84 = arith.constant dense<0.000000e+00> : vector<512x16xf32>
    %147 = tpu.matmul %145, %146, %cst_84 {dimension_numbers = #tpu.dot_dimension_numbers<[1], [0], [0], [1], [0, 0, 1, 1], [], []>} : vector<512x256xf32>, vector<256x16xf32>, vector<512x16xf32> -> vector<512x16xf32>
    %c0_85 = arith.constant 0 : index
    %c0_86 = arith.constant 0 : index
    %148 = vector.load %arg23[%c0_85, %c0_86] : memref<1x16xf32, #tpu.memory_space<vmem>>, vector<1x16xf32>
    %149 = vector.broadcast %148 : vector<1x16xf32> to vector<512x16xf32>
    %150 = arith.addf %147, %149 : vector<512x16xf32>
    %c0_87 = arith.constant 0 : index
    %c0_88 = arith.constant 0 : index
    %151 = vector.load %arg24[%c0_87, %c0_88] : memref<512x16xf32, #tpu.memory_space<vmem>>, vector<512x16xf32>
    tpu.vector_store %arg24[%c0_87, %c0_88], %150 {strides = array<i32>} : memref<512x16xf32, #tpu.memory_space<vmem>>, vector<512x16xf32>,
    return
  }
  func.func @transform_0(%arg0: i32) -> (i32, i32) {
    %c0_i32 = arith.constant 0 : i32
    %c0_i32_0 = arith.constant 0 : i32
    %c0_i32_1 = arith.constant 0 : i32
    return %c0_i32, %c0_i32_0 : i32, i32
  }
  func.func @transform_1(%arg0: i32) -> (i32, i32) {
    %c0_i32 = arith.constant 0 : i32
    %c0_i32_0 = arith.constant 0 : i32
    %c0_i32_1 = arith.constant 0 : i32
    return %c0_i32, %c0_i32_0 : i32, i32
  }
  func.func @transform_2(%arg0: i32) -> (i32, i32) {
    %c0_i32 = arith.constant 0 : i32
    %c0_i32_0 = arith.constant 0 : i32
    %c0_i32_1 = arith.constant 0 : i32
    return %c0_i32, %c0_i32_0 : i32, i32
  }
  func.func @transform_3(%arg0: i32) -> (i32, i32) {
    %c0_i32 = arith.constant 0 : i32
    %c0_i32_0 = arith.constant 0 : i32
    %c0_i32_1 = arith.constant 0 : i32
    return %c0_i32, %c0_i32_0 : i32, i32
  }
  func.func @transform_4(%arg0: i32) -> (i32, i32) {
    %c0_i32 = arith.constant 0 : i32
    %c0_i32_0 = arith.constant 0 : i32
    %c0_i32_1 = arith.constant 0 : i32
    return %c0_i32, %c0_i32_0 : i32, i32
  }
  func.func @transform_5(%arg0: i32) -> (i32, i32) {
    %c0_i32 = arith.constant 0 : i32
    %c0_i32_0 = arith.constant 0 : i32
    %c0_i32_1 = arith.constant 0 : i32
    return %c0_i32, %c0_i32_0 : i32, i32
  }
  func.func @transform_6(%arg0: i32) -> (i32, i32) {
    %c0_i32 = arith.constant 0 : i32
    %c0_i32_0 = arith.constant 0 : i32
    %c0_i32_1 = arith.constant 0 : i32
    return %c0_i32, %c0_i32_0 : i32, i32
  }
  func.func @transform_7(%arg0: i32) -> (i32, i32) {
    %c0_i32 = arith.constant 0 : i32
    %c0_i32_0 = arith.constant 0 : i32
    %c0_i32_1 = arith.constant 0 : i32
    return %c0_i32, %c0_i32_0 : i32, i32
  }
  func.func @transform_8(%arg0: i32) -> (i32, i32) {
    %c0_i32 = arith.constant 0 : i32
    %c0_i32_0 = arith.constant 0 : i32
    %c0_i32_1 = arith.constant 0 : i32
    return %c0_i32, %c0_i32_0 : i32, i32
  }
  func.func @transform_9(%arg0: i32) -> (i32, i32) {
    %c0_i32 = arith.constant 0 : i32
    %c0_i32_0 = arith.constant 0 : i32
    %c0_i32_1 = arith.constant 0 : i32
    return %c0_i32, %c0_i32_0 : i32, i32
  }
  func.func @transform_10(%arg0: i32) -> (i32, i32) {
    %c0_i32 = arith.constant 0 : i32
    %c0_i32_0 = arith.constant 0 : i32
    %c0_i32_1 = arith.constant 0 : i32
    return %c0_i32, %c0_i32_0 : i32, i32
  }
  func.func @transform_11(%arg0: i32) -> (i32, i32) {
    %c0_i32 = arith.constant 0 : i32
    %c0_i32_0 = arith.constant 0 : i32
    %c0_i32_1 = arith.constant 0 : i32
    return %c0_i32, %c0_i32_0 : i32, i32
  }
  func.func @transform_12(%arg0: i32) -> (i32, i32) {
    %c0_i32 = arith.constant 0 : i32
    %c0_i32_0 = arith.constant 0 : i32
    %c0_i32_1 = arith.constant 0 : i32
    return %c0_i32, %c0_i32_0 : i32, i32
  }
  func.func @transform_13(%arg0: i32) -> (i32, i32) {
    %c0_i32 = arith.constant 0 : i32
    %c0_i32_0 = arith.constant 0 : i32
    %c0_i32_1 = arith.constant 0 : i32
    return %c0_i32, %c0_i32_0 : i32, i32
  }
  func.func @transform_14(%arg0: i32) -> (i32, i32) {
    %c0_i32 = arith.constant 0 : i32
    %c0_i32_0 = arith.constant 0 : i32
    %c0_i32_1 = arith.constant 0 : i32
    return %c0_i32, %c0_i32_0 : i32, i32
  }
  func.func @transform_15(%arg0: i32) -> (i32, i32) {
    %c0_i32 = arith.constant 0 : i32
    %c0_i32_0 = arith.constant 0 : i32
    %c0_i32_1 = arith.constant 0 : i32
    return %c0_i32, %c0_i32_0 : i32, i32
  }
  func.func @transform_16(%arg0: i32) -> (i32, i32) {
    %c0_i32 = arith.constant 0 : i32
    %c0_i32_0 = arith.constant 0 : i32
    %c0_i32_1 = arith.constant 0 : i32
    return %c0_i32, %c0_i32_0 : i32, i32
  }
  func.func @transform_17(%arg0: i32) -> (i32, i32) {
    %c0_i32 = arith.constant 0 : i32
    %c0_i32_0 = arith.constant 0 : i32
    %c0_i32_1 = arith.constant 0 : i32
    return %c0_i32, %c0_i32_0 : i32, i32
  }
  func.func @transform_18(%arg0: i32) -> (i32, i32) {
    %c0_i32 = arith.constant 0 : i32
    %c0_i32_0 = arith.constant 0 : i32
    %c0_i32_1 = arith.constant 0 : i32
    return %c0_i32, %c0_i32_0 : i32, i32
  }
  func.func @transform_19(%arg0: i32) -> (i32, i32) {
    %c0_i32 = arith.constant 0 : i32
    %c0_i32_0 = arith.constant 0 : i32
    %c0_i32_1 = arith.constant 0 : i32
    return %c0_i32, %c0_i32_0 : i32, i32
  }
  func.func @transform_20(%arg0: i32) -> (i32, i32) {
    %c0_i32 = arith.constant 0 : i32
    %c0_i32_0 = arith.constant 0 : i32
    %c0_i32_1 = arith.constant 0 : i32
    return %c0_i32, %c0_i32_0 : i32, i32
  }
  func.func @transform_21(%arg0: i32) -> (i32, i32) {
    %c0_i32 = arith.constant 0 : i32
    %c0_i32_0 = arith.constant 0 : i32
    %c0_i32_1 = arith.constant 0 : i32
    return %c0_i32, %c0_i32_0 : i32, i32
  }
  func.func @transform_22(%arg0: i32) -> (i32, i32) {
    %c0_i32 = arith.constant 0 : i32
    %c0_i32_0 = arith.constant 0 : i32
    %c0_i32_1 = arith.constant 0 : i32
    return %c0_i32, %c0_i32_0 : i32, i32
  }
  func.func @transform_23(%arg0: i32) -> (i32, i32) {
    %c0_i32 = arith.constant 0 : i32
    %c0_i32_0 = arith.constant 0 : i32
    %c0_i32_1 = arith.constant 0 : i32
    return %c0_i32, %c0_i32_0 : i32, i32
  }
}

</mosaic_0001>

<llo_original>
// kernel: decoder_forward.1
$region0: #{decoder_forward.1}
  #allocation0 [shape = 'u32[]', space=smem, size = 0x4, offset = 0x4, fixed_abs, tag = 'smem constant byte address 0x4 - core index']
  #allocation1 [shape = 'u32[72,128]{1,0:T(1,128)}', space=vmem, size = 0x9000, scoped, tag = 'internal scratch']
  %s0 = inlined_call_operand.vmem [shape: f32[8,128], index: 0, kind: input, shape index: {}]
  %s1 = inlined_call_operand.vmem [shape: f32[32,64], index: 1, kind: input, shape index: {}]
  %s2 = inlined_call_operand.vmem [shape: f32[128,32], index: 2, kind: input, shape index: {}]
  %s3 = inlined_call_operand.vmem [shape: f32[512,16], index: 3, kind: input, shape index: {}]
  %s4 = inlined_call_operand.vmem [shape: f32[128,256], index: 4, kind: input, shape index: {}]
  %s5 = inlined_call_operand.vmem [shape: f32[2,64], index: 5, kind: input, shape index: {}]
  %s6 = inlined_call_operand.vmem [shape: f32[64,128], index: 6, kind: input, shape index: {}]
  %s7 = inlined_call_operand.vmem [shape: f32[64,128], index: 7, kind: input, shape index: {}]
  %s8 = inlined_call_operand.vmem [shape: f32[1,128], index: 8, kind: input, shape index: {}]
  %s9 = inlined_call_operand.vmem [shape: f32[2,32], index: 9, kind: input, shape index: {}]
  %s10 = inlined_call_operand.vmem [shape: f32[32,64], index: 10, kind: input, shape index: {}]
  %s11 = inlined_call_operand.vmem [shape: f32[32,64], index: 11, kind: input, shape index: {}]
  %s12 = inlined_call_operand.vmem [shape: f32[1,64], index: 12, kind: input, shape index: {}]
  %s13 = inlined_call_operand.vmem [shape: f32[2,16], index: 13, kind: input, shape index: {}]
  %s14 = inlined_call_operand.vmem [shape: f32[16,16], index: 14, kind: input, shape index: {}]
  %s15 = inlined_call_operand.vmem [shape: f32[16,16], index: 15, kind: input, shape index: {}]
  %s16 = inlined_call_operand.vmem [shape: f32[1,16], index: 16, kind: input, shape index: {}]
  %s17 = inlined_call_operand.vmem [shape: f32[16,256], index: 17, kind: input, shape index: {}]
  %s18 = inlined_call_operand.vmem [shape: f32[1,256], index: 18, kind: input, shape index: {}]
  %s19 = inlined_call_operand.vmem [shape: f32[256,16], index: 19, kind: input, shape index: {}]
  %s20 = inlined_call_operand.vmem [shape: f32[16,256], index: 20, kind: input, shape index: {}]
  %s21 = inlined_call_operand.vmem [shape: f32[256,16], index: 21, kind: input, shape index: {}]
  %s22 = inlined_call_operand.vmem [shape: f32[1,16], index: 22, kind: input, shape index: {}]
  %s23 = inlined_call_operand.vmem [shape: f32[512,16], index: 23, kind: output, shape index: {}]
  %s24 = sld [smem:[#allocation0]]
  $region102: #{decoder_forward.1} parent=0
    _
  %s26 = ssub.s32 1, %s24
  %s27 = scalar_select 0, %s26, %s24
  // Predicated region
  $region2: #{decoder_forward.1} parent=0 // pred_check
    _
  $region3: #{decoder_forward.1} parent=0 // pred_check_branch
    %29 = sbr.rel (0) target = $region5
  $region4: #{decoder_forward.1} parent=0 // pred_region
    _
  $region5: #{decoder_forward.1} parent=0 // pred_fallthru
    _
  // Predicated region
  $region6: #{decoder_forward.1} parent=0 // pred_check
    _
  $region7: #{decoder_forward.1} parent=0 // pred_check_branch
    %31 = sbr.rel (0) target = $region9
  $region8: #{decoder_forward.1} parent=0 // pred_region
    _
  $region9: #{decoder_forward.1} parent=0 // pred_fallthru
    _
  // Predicated region
  $region10: #{decoder_forward.1} parent=0 // pred_check
    _
  $region11: #{decoder_forward.1} parent=0 // pred_check_branch
    %33 = sbr.rel (0) target = $region13
  $region12: #{decoder_forward.1} parent=0 // pred_region
    _
  $region13: #{decoder_forward.1} parent=0 // pred_fallthru
    _
  // Predicated region
  $region14: #{decoder_forward.1} parent=0 // pred_check
    _
  $region15: #{decoder_forward.1} parent=0 // pred_check_branch
    %35 = sbr.rel (0) target = $region17
  $region16: #{decoder_forward.1} parent=0 // pred_region
    _
  $region17: #{decoder_forward.1} parent=0 // pred_fallthru
    _
  // Predicated region
  $region18: #{decoder_forward.1} parent=0 // pred_check
    _
  $region19: #{decoder_forward.1} parent=0 // pred_check_branch
    %37 = sbr.rel (0) target = $region21
  $region20: #{decoder_forward.1} parent=0 // pred_region
    _
  $region21: #{decoder_forward.1} parent=0 // pred_fallthru
    _
  // Predicated region
  $region22: #{decoder_forward.1} parent=0 // pred_check
    _
  $region23: #{decoder_forward.1} parent=0 // pred_check_branch
    %39 = sbr.rel (0) target = $region25
  $region24: #{decoder_forward.1} parent=0 // pred_region
    _
  $region25: #{decoder_forward.1} parent=0 // pred_fallthru
    _
  // Predicated region
  $region26: #{decoder_forward.1} parent=0 // pred_check
    _
  $region27: #{decoder_forward.1} parent=0 // pred_check_branch
    %41 = sbr.rel (0) target = $region29
  $region28: #{decoder_forward.1} parent=0 // pred_region
    _
  $region29: #{decoder_forward.1} parent=0 // pred_fallthru
    _
  // Predicated region
  $region30: #{decoder_forward.1} parent=0 // pred_check
    _
  $region31: #{decoder_forward.1} parent=0 // pred_check_branch
    %43 = sbr.rel (0) target = $region33
  $region32: #{decoder_forward.1} parent=0 // pred_region
    _
  $region33: #{decoder_forward.1} parent=0 // pred_fallthru
    _
  // Predicated region
  $region34: #{decoder_forward.1} parent=0 // pred_check
    _
  $region35: #{decoder_forward.1} parent=0 // pred_check_branch
    %45 = sbr.rel (0) target = $region37
  $region36: #{decoder_forward.1} parent=0 // pred_region
    _
  $region37: #{decoder_forward.1} parent=0 // pred_fallthru
    _
  // Predicated region
  $region38: #{decoder_forward.1} parent=0 // pred_check
    _
  $region39: #{decoder_forward.1} parent=0 // pred_check_branch
    %47 = sbr.rel (0) target = $region41
  $region40: #{decoder_forward.1} parent=0 // pred_region
    _
  $region41: #{decoder_forward.1} parent=0 // pred_fallthru
    _
  // Predicated region
  $region42: #{decoder_forward.1} parent=0 // pred_check
    _
  $region43: #{decoder_forward.1} parent=0 // pred_check_branch
    %49 = sbr.rel (0) target = $region45
  $region44: #{decoder_forward.1} parent=0 // pred_region
    _
  $region45: #{decoder_forward.1} parent=0 // pred_fallthru
    _
  // Predicated region
  $region46: #{decoder_forward.1} parent=0 // pred_check
    _
  $region47: #{decoder_forward.1} parent=0 // pred_check_branch
    %51 = sbr.rel (0) target = $region49
  $region48: #{decoder_forward.1} parent=0 // pred_region
    _
  $region49: #{decoder_forward.1} parent=0 // pred_fallthru
    _
  // Predicated region
  $region50: #{decoder_forward.1} parent=0 // pred_check
    _
  $region51: #{decoder_forward.1} parent=0 // pred_check_branch
    %53 = sbr.rel (0) target = $region53
  $region52: #{decoder_forward.1} parent=0 // pred_region
    _
  $region53: #{decoder_forward.1} parent=0 // pred_fallthru
    _
  // Predicated region
  $region54: #{decoder_forward.1} parent=0 // pred_check
    _
  $region55: #{decoder_forward.1} parent=0 // pred_check_branch
    %55 = sbr.rel (0) target = $region57
  $region56: #{decoder_forward.1} parent=0 // pred_region
    _
  $region57: #{decoder_forward.1} parent=0 // pred_fallthru
    _
  // Predicated region
  $region58: #{decoder_forward.1} parent=0 // pred_check
    _
  $region59: #{decoder_forward.1} parent=0 // pred_check_branch
    %57 = sbr.rel (0) target = $region61
  $region60: #{decoder_forward.1} parent=0 // pred_region
    _
  $region61: #{decoder_forward.1} parent=0 // pred_fallthru
    _
  // Predicated region
  $region62: #{decoder_forward.1} parent=0 // pred_check
    _
  $region63: #{decoder_forward.1} parent=0 // pred_check_branch
    %59 = sbr.rel (0) target = $region65
  $region64: #{decoder_forward.1} parent=0 // pred_region
    _
  $region65: #{decoder_forward.1} parent=0 // pred_fallthru
    _
  // Predicated region
  $region66: #{decoder_forward.1} parent=0 // pred_check
    _
  $region67: #{decoder_forward.1} parent=0 // pred_check_branch
    %61 = sbr.rel (0) target = $region69
  $region68: #{decoder_forward.1} parent=0 // pred_region
    _
  $region69: #{decoder_forward.1} parent=0 // pred_fallthru
    _
  // Predicated region
  $region70: #{decoder_forward.1} parent=0 // pred_check
    _
  $region71: #{decoder_forward.1} parent=0 // pred_check_branch
    %63 = sbr.rel (0) target = $region73
  $region72: #{decoder_forward.1} parent=0 // pred_region
    _
  $region73: #{decoder_forward.1} parent=0 // pred_fallthru
    _
  // Predicated region
  $region74: #{decoder_forward.1} parent=0 // pred_check
    _
  $region75: #{decoder_forward.1} parent=0 // pred_check_branch
    %65 = sbr.rel (0) target = $region77
  $region76: #{decoder_forward.1} parent=0 // pred_region
    _
  $region77: #{decoder_forward.1} parent=0 // pred_fallthru
    _
  // Predicated region
  $region78: #{decoder_forward.1} parent=0 // pred_check
    _
  $region79: #{decoder_forward.1} parent=0 // pred_check_branch
    %67 = sbr.rel (0) target = $region81
  $region80: #{decoder_forward.1} parent=0 // pred_region
    _
  $region81: #{decoder_forward.1} parent=0 // pred_fallthru
    _
  // Predicated region
  $region82: #{decoder_forward.1} parent=0 // pred_check
    _
  $region83: #{decoder_forward.1} parent=0 // pred_check_branch
    %69 = sbr.rel (0) target = $region85
  $region84: #{decoder_forward.1} parent=0 // pred_region
    _
  $region85: #{decoder_forward.1} parent=0 // pred_fallthru
    _
  // Predicated region
  $region86: #{decoder_forward.1} parent=0 // pred_check
    _
  $region87: #{decoder_forward.1} parent=0 // pred_check_branch
    %71 = sbr.rel (0) target = $region89
  $region88: #{decoder_forward.1} parent=0 // pred_region
    _
  $region89: #{decoder_forward.1} parent=0 // pred_fallthru
    _
  // Predicated region
  $region90: #{decoder_forward.1} parent=0 // pred_check
    _
  $region91: #{decoder_forward.1} parent=0 // pred_check_branch
    %73 = sbr.rel (0) target = $region93
  $region92: #{decoder_forward.1} parent=0 // pred_region
    _
  $region93: #{decoder_forward.1} parent=0 // pred_fallthru
    _
  %v74 = vld [vmem:[%s0] sm:$0xff]
  %v75 = vld [vmem:[%s4] sm:$0xff]
  %v76 = vld [vmem:[%s4 + $0x8] sm:$0xff]
  %v77 = vld [vmem:[%s4 + $0x10] sm:$0xff]
  %v78 = vld [vmem:[%s4 + $0x18] sm:$0xff]
  %v79 = vld [vmem:[%s4 + $0x20] sm:$0xff]
  %v80 = vld [vmem:[%s4 + $0x28] sm:$0xff]
  %v81 = vld [vmem:[%s4 + $0x30] sm:$0xff]
  %v82 = vld [vmem:[%s4 + $0x38] sm:$0xff]
  %v83 = vld [vmem:[%s4 + $0x40] sm:$0xff]
  %v84 = vld [vmem:[%s4 + $0x48] sm:$0xff]
  %v85 = vld [vmem:[%s4 + $0x50] sm:$0xff]
  %v86 = vld [vmem:[%s4 + $0x58] sm:$0xff]
  %v87 = vld [vmem:[%s4 + $0x60] sm:$0xff]
  %v88 = vld [vmem:[%s4 + $0x68] sm:$0xff]
  %v89 = vld [vmem:[%s4 + $0x70] sm:$0xff]
  %v90 = vld [vmem:[%s4 + $0x78] sm:$0xff]
  %v91 = vld [vmem:[%s4 + $0x80] sm:$0xff]
  %v92 = vld [vmem:[%s4 + $0x88] sm:$0xff]
  %v93 = vld [vmem:[%s4 + $0x90] sm:$0xff]
  %v94 = vld [vmem:[%s4 + $0x98] sm:$0xff]
  %v95 = vld [vmem:[%s4 + $0xa0] sm:$0xff]
  %v96 = vld [vmem:[%s4 + $0xa8] sm:$0xff]
  %v97 = vld [vmem:[%s4 + $0xb0] sm:$0xff]
  %v98 = vld [vmem:[%s4 + $0xb8] sm:$0xff]
  %v99 = vld [vmem:[%s4 + $0xc0] sm:$0xff]
  %v100 = vld [vmem:[%s4 + $0xc8] sm:$0xff]
  %v101 = vld [vmem:[%s4 + $0xd0] sm:$0xff]
  %v102 = vld [vmem:[%s4 + $0xd8] sm:$0xff]
  %v103 = vld [vmem:[%s4 + $0xe0] sm:$0xff]
  %v104 = vld [vmem:[%s4 + $0xe8] sm:$0xff]
  %v105 = vld [vmem:[%s4 + $0xf0] sm:$0xff]
  %v106 = vld [vmem:[%s4 + $0xf8] sm:$0xff]
  %107 = vmatpush.msra.mxu0 %v105
  %108 = vmatpush.msra.mxu0 %v103
  %109 = vmatpush.msra.mxu0 %v101
  %110 = vmatpush.msra.mxu0 %v99
  %111 = vmatpush.msra.mxu0 %v97
  %112 = vmatpush.msra.mxu0 %v95
  %113 = vmatpush.msra.mxu0 %v93
  %114 = vmatpush.msra.mxu0 %v91
  %115 = vmatpush.msra.mxu0 %v89
  %116 = vmatpush.msra.mxu0 %v87
  %117 = vmatpush.msra.mxu0 %v85
  %118 = vmatpush.msra.mxu0 %v83
  %119 = vmatpush.msra.mxu0 %v81
  %120 = vmatpush.msra.mxu0 %v79
  %121 = vmatpush.msra.mxu0 %v77
  %122 = vmatpush.msra.mxu0 %v75
  %123 = vmatmul.f32.gmra.mxu0 %v74
  %v124 = vpop.f32.mrf.mxu0
  %v125 = vadd.f32 0.0, %v124
  %126 = vdwg.mxu0
  %127 = vmatpush.msra.mxu0 %v106
  %128 = vmatpush.msra.mxu0 %v104
  %129 = vmatpush.msra.mxu0 %v102
  %130 = vmatpush.msra.mxu0 %v100
  %131 = vmatpush.msra.mxu0 %v98
  %132 = vmatpush.msra.mxu0 %v96
  %133 = vmatpush.msra.mxu0 %v94
  %134 = vmatpush.msra.mxu0 %v92
  %135 = vmatpush.msra.mxu0 %v90
  %136 = vmatpush.msra.mxu0 %v88
  %137 = vmatpush.msra.mxu0 %v86
  %138 = vmatpush.msra.mxu0 %v84
  %139 = vmatpush.msra.mxu0 %v82
  %140 = vmatpush.msra.mxu0 %v80
  %141 = vmatpush.msra.mxu0 %v78
  %142 = vmatpush.msra.mxu0 %v76
  %143 = vmatmul.f32.gmra.mxu0 %v74
  %v144 = vpop.f32.mrf.mxu0
  %v145 = vadd.f32 0.0, %v144
  %146 = vdwg.mxu0
  %148 = vrot.lane.b32.xlu0 %v125, 64
  %v149 = vpop.permute.xlu0 %148
  %152 = vrot.lane.b32.xlu0 %v145, 64
  %v153 = vpop.permute.xlu0 %152
  %v155 = vld [vmem:[%s5] sm:$0x1]
  %v156 = vld [vmem:[%s5 + $0x1] sm:$0x1]
  %vm157 = vcmask 523264
  %v158 = vsel %vm157, %v125, 0.0
  %159 = vadd.xlane.f32.xlu0 %v158
  %v160 = vpop.xlane.xlu0 %159
  %v161 = vsel %vm157, %v149, 0.0
  %162 = vadd.xlane.f32.xlu0 %v161
  %v163 = vpop.xlane.xlu0 %162
  %v164 = vsel %vm157, %v145, 0.0
  %165 = vadd.xlane.f32.xlu0 %v164
  %v166 = vpop.xlane.xlu0 %165
  %v167 = vsel %vm157, %v153, 0.0
  %168 = vadd.xlane.f32.xlu0 %v167
  %v169 = vpop.xlane.xlu0 %168
  %v170 = vrcp.pop 64.0
  %v171 = vmul.f32 64.0, %v170
  %v172 = vsub.f32 1.0, %v171
  %v173 = vmul.f32 %v170, %v172
  %v174 = vadd.f32 %v170, %v173
  %vm175 = vweird.f32 %v170
  %v176 = vsel %vm175, %v170, %v174
  %v177 = vmul.f32 %v160, %v176
  %v178 = vmul.f32 %v163, %v176
  %v179 = vmul.f32 %v166, %v176
  %v180 = vmul.f32 %v169, %v176
  %v181 = vsub.f32 %v125, %v177
  %v182 = vsub.f32 %v149, %v178
  %v183 = vsub.f32 %v145, %v179
  %v184 = vsub.f32 %v153, %v180
  %v185 = vmul.f32 %v181, %v181
  %v186 = vmul.f32 %v182, %v182
  %v187 = vmul.f32 %v183, %v183
  %v188 = vmul.f32 %v184, %v184
  %v189 = vsel %vm157, %v185, 0.0
  %190 = vadd.xlane.f32.xlu0 %v189
  %v191 = vpop.xlane.xlu0 %190
  %v192 = vsel %vm157, %v186, 0.0
  %193 = vadd.xlane.f32.xlu0 %v192
  %v194 = vpop.xlane.xlu0 %193
  %v195 = vsel %vm157, %v187, 0.0
  %196 = vadd.xlane.f32.xlu0 %v195
  %v197 = vpop.xlane.xlu0 %196
  %v198 = vsel %vm157, %v188, 0.0
  %199 = vadd.xlane.f32.xlu0 %v198
  %v200 = vpop.xlane.xlu0 %199
  %v201 = vmul.f32 %v191, %v176
  %v202 = vmul.f32 %v194, %v176
  %v203 = vmul.f32 %v197, %v176
  %v204 = vmul.f32 %v200, %v176
  %v205 = vadd.f32 %v201, 1e-05
  %v206 = vadd.f32 %v202, 1e-05
  %v207 = vadd.f32 %v203, 1e-05
  %v208 = vadd.f32 %v204, 1e-05
  %v209 = vrsqrt.pop %v205
  %v210 = vmul.f32 %v209, %v205
  %v211 = vmul.f32 %v210, %v209
  %v212 = vmul.f32 0.5, %v211
  %v213 = vsub.f32 1.5, %v212
  %v214 = vmul.f32 %v209, %v213
  %vm215 = vweird.f32 %v205
  %vm216 = vweird.f32 %v209
  %vm217 = vmor %vm215, %vm216
  %v218 = vsel %vm217, %v209, %v214
  %v219 = vrsqrt.pop %v206
  %v220 = vmul.f32 %v219, %v206
  %v221 = vmul.f32 %v220, %v219
  %v222 = vmul.f32 0.5, %v221
  %v223 = vsub.f32 1.5, %v222
  %v224 = vmul.f32 %v219, %v223
  %vm225 = vweird.f32 %v206
  %vm226 = vweird.f32 %v219
  %vm227 = vmor %vm225, %vm226
  %v228 = vsel %vm227, %v219, %v224
  %v229 = vrsqrt.pop %v207
  %v230 = vmul.f32 %v229, %v207
  %v231 = vmul.f32 %v230, %v229
  %v232 = vmul.f32 0.5, %v231
  %v233 = vsub.f32 1.5, %v232
  %v234 = vmul.f32 %v229, %v233
  %vm235 = vweird.f32 %v207
  %vm236 = vweird.f32 %v229
  %vm237 = vmor %vm235, %vm236
  %v238 = vsel %vm237, %v229, %v234
  %v239 = vrsqrt.pop %v208
  %v240 = vmul.f32 %v239, %v208
  %v241 = vmul.f32 %v240, %v239
  %v242 = vmul.f32 0.5, %v241
  %v243 = vsub.f32 1.5, %v242
  %v244 = vmul.f32 %v239, %v243
  %vm245 = vweird.f32 %v208
  %vm246 = vweird.f32 %v239
  %vm247 = vmor %vm245, %vm246
  %v248 = vsel %vm247, %v239, %v244
  %v249 = vmul.f32 %v181, %v218
  %v250 = vmul.f32 %v182, %v228
  %v251 = vmul.f32 %v183, %v238
  %v252 = vmul.f32 %v184, %v248
  %v253 = vperm.slane %v155, 0
  %v254 = vmul.f32 %v249, %v253
  %v255 = vmul.f32 %v250, %v253
  %v256 = vmul.f32 %v251, %v253
  %v257 = vmul.f32 %v252, %v253
  %v258 = vperm.slane %v156, 0
  %v259 = vadd.f32 %v254, %v258
  %v260 = vadd.f32 %v255, %v258
  %v261 = vadd.f32 %v256, %v258
  %v262 = vadd.f32 %v257, %v258
  %v263 = vld [vmem:[%s6] sm:$0xff]
  %v264 = vld [vmem:[%s6 + $0x8] sm:$0xff]
  %v265 = vld [vmem:[%s6 + $0x10] sm:$0xff]
  %v266 = vld [vmem:[%s6 + $0x18] sm:$0xff]
  %v267 = vld [vmem:[%s6 + $0x20] sm:$0xff]
  %v268 = vld [vmem:[%s6 + $0x28] sm:$0xff]
  %v269 = vld [vmem:[%s6 + $0x30] sm:$0xff]
  %v270 = vld [vmem:[%s6 + $0x38] sm:$0xff]
  %v271 = vld [vmem:[%s1] sm:$0xff]
  %v272 = vld [vmem:[%s1 + $0x8] sm:$0xff]
  %v273 = vld [vmem:[%s1 + $0x10] sm:$0xff]
  %v274 = vld [vmem:[%s1 + $0x18] sm:$0xff]
  %v275 = vld [vmem:[%s7] sm:$0xff]
  %v276 = vld [vmem:[%s7 + $0x8] sm:$0xff]
  %v277 = vld [vmem:[%s7 + $0x10] sm:$0xff]
  %v278 = vld [vmem:[%s7 + $0x18] sm:$0xff]
  %v279 = vld [vmem:[%s7 + $0x20] sm:$0xff]
  %v280 = vld [vmem:[%s7 + $0x28] sm:$0xff]
  %v281 = vld [vmem:[%s7 + $0x30] sm:$0xff]
  %v282 = vld [vmem:[%s7 + $0x38] sm:$0xff]
  %v284 = vsel %vm157, %v271, 0
  %v287 = vsel %vm157, %v272, 0
  %v290 = vsel %vm157, %v273, 0
  %v293 = vsel %vm157, %v274, 0
  %295 = vmatpush.msra.mxu0 0.0
  %296 = vmatpush.msra.mxu0 0.0
  %297 = vmatpush.msra.mxu0 0.0
  %298 = vmatpush.msra.mxu0 0.0
  %299 = vmatpush.msra.mxu0 0.0
  %300 = vmatpush.msra.mxu0 0.0
  %301 = vmatpush.msra.mxu0 0.0
  %302 = vmatpush.msra.mxu0 0.0
  %303 = vmatpush.msra.mxu0 %v282
  %304 = vmatpush.msra.mxu0 %v281
  %305 = vmatpush.msra.mxu0 %v280
  %306 = vmatpush.msra.mxu0 %v279
  %307 = vmatpush.msra.mxu0 %v278
  %308 = vmatpush.msra.mxu0 %v277
  %309 = vmatpush.msra.mxu0 %v276
  %310 = vmatpush.msra.mxu0 %v275
  %311 = vmatmul.f32.gmra.mxu0 %v284
  %v312 = vpop.f32.mrf.mxu0
  %v313 = vadd.f32 0.0, %v312
  %314 = vmatmul.f32.gmra.mxu0 %v287
  %v315 = vpop.f32.mrf.mxu0
  %v316 = vadd.f32 0.0, %v315
  %317 = vmatmul.f32.gmra.mxu0 %v290
  %v318 = vpop.f32.mrf.mxu0
  %v319 = vadd.f32 0.0, %v318
  %320 = vmatmul.f32.gmra.mxu0 %v293
  %v321 = vpop.f32.mrf.mxu0
  %v322 = vadd.f32 0.0, %v321
  %323 = vdwg.mxu0
  %v325 = vsel %vm157, %v259, 0
  %v328 = vsel %vm157, %v260, 0
  %v331 = vsel %vm157, %v261, 0
  %v334 = vsel %vm157, %v262, 0
  %336 = vmatpush.msra.mxu0 0.0
  %337 = vmatpush.msra.mxu0 0.0
  %338 = vmatpush.msra.mxu0 0.0
  %339 = vmatpush.msra.mxu0 0.0
  %340 = vmatpush.msra.mxu0 0.0
  %341 = vmatpush.msra.mxu0 0.0
  %342 = vmatpush.msra.mxu0 0.0
  %343 = vmatpush.msra.mxu0 0.0
  %344 = vmatpush.msra.mxu0 %v270
  %345 = vmatpush.msra.mxu0 %v269
  %346 = vmatpush.msra.mxu0 %v268
  %347 = vmatpush.msra.mxu0 %v267
  %348 = vmatpush.msra.mxu0 %v266
  %349 = vmatpush.msra.mxu0 %v265
  %350 = vmatpush.msra.mxu0 %v264
  %351 = vmatpush.msra.mxu0 %v263
  %352 = vmatmul.f32.gmra.mxu0 %v325
  %v353 = vpop.f32.mrf.mxu0
  %v354 = vadd.f32 %v313, %v353
  %355 = vmatmul.f32.gmra.mxu0 %v328
  %v356 = vpop.f32.mrf.mxu0
  %v357 = vadd.f32 %v316, %v356
  %358 = vmatmul.f32.gmra.mxu0 %v331
  %v359 = vpop.f32.mrf.mxu0
  %v360 = vadd.f32 %v319, %v359
  %361 = vmatmul.f32.gmra.mxu0 %v334
  %v362 = vpop.f32.mrf.mxu0
  %v363 = vadd.f32 %v322, %v362
  %364 = vdwg.mxu0
  %v365 = vld [vmem:[%s8] sm:$0x1]
  %v367 = vperm.slane %v365, 0
  %v369 = vadd.f32 %v354, %v367
  %v370 = vadd.f32 %v357, %v367
  %v371 = vadd.f32 %v360, %v367
  %v372 = vadd.f32 %v363, %v367
  %377 = vrot.lane.b32.xlu0 %v369, 96
  %v378 = vpop.permute.xlu0 %377
  %379 = vrot.lane.b32.xlu0 %v370, 96
  %v380 = vpop.permute.xlu0 %379
  %381 = vrot.lane.b32.xlu0 %v371, 96
  %v382 = vpop.permute.xlu0 %381
  %383 = vrot.lane.b32.xlu0 %v372, 96
  %v384 = vpop.permute.xlu0 %383
  %389 = vrot.lane.b32.xlu0 %v369, 64
  %v390 = vpop.permute.xlu0 %389
  %391 = vrot.lane.b32.xlu0 %v370, 64
  %v392 = vpop.permute.xlu0 %391
  %393 = vrot.lane.b32.xlu0 %v371, 64
  %v394 = vpop.permute.xlu0 %393
  %395 = vrot.lane.b32.xlu0 %v372, 64
  %v396 = vpop.permute.xlu0 %395
  %401 = vrot.lane.b32.xlu0 %v369, 32
  %v402 = vpop.permute.xlu0 %401
  %403 = vrot.lane.b32.xlu0 %v370, 32
  %v404 = vpop.permute.xlu0 %403
  %405 = vrot.lane.b32.xlu0 %v371, 32
  %v406 = vpop.permute.xlu0 %405
  %407 = vrot.lane.b32.xlu0 %v372, 32
  %v408 = vpop.permute.xlu0 %407
  %v413 = vld [vmem:[%s9] sm:$0x1]
  %v414 = vld [vmem:[%s9 + $0x1] sm:$0x1]
  %vm415 = vcmask 261120
  %v416 = vsel %vm415, %v369, 0.0
  %417 = vadd.xlane.f32.xlu0 %v416
  %v418 = vpop.xlane.xlu0 %417
  %v419 = vsel %vm415, %v370, 0.0
  %420 = vadd.xlane.f32.xlu0 %v419
  %v421 = vpop.xlane.xlu0 %420
  %v422 = vsel %vm415, %v371, 0.0
  %423 = vadd.xlane.f32.xlu0 %v422
  %v424 = vpop.xlane.xlu0 %423
  %v425 = vsel %vm415, %v372, 0.0
  %426 = vadd.xlane.f32.xlu0 %v425
  %v427 = vpop.xlane.xlu0 %426
  %v428 = vsel %vm415, %v378, 0.0
  %429 = vadd.xlane.f32.xlu0 %v428
  %v430 = vpop.xlane.xlu0 %429
  %v431 = vsel %vm415, %v380, 0.0
  %432 = vadd.xlane.f32.xlu0 %v431
  %v433 = vpop.xlane.xlu0 %432
  %v434 = vsel %vm415, %v382, 0.0
  %435 = vadd.xlane.f32.xlu0 %v434
  %v436 = vpop.xlane.xlu0 %435
  %v437 = vsel %vm415, %v384, 0.0
  %438 = vadd.xlane.f32.xlu0 %v437
  %v439 = vpop.xlane.xlu0 %438
  %v440 = vsel %vm415, %v390, 0.0
  %441 = vadd.xlane.f32.xlu0 %v440
  %v442 = vpop.xlane.xlu0 %441
  %v443 = vsel %vm415, %v392, 0.0
  %444 = vadd.xlane.f32.xlu0 %v443
  %v445 = vpop.xlane.xlu0 %444
  %v446 = vsel %vm415, %v394, 0.0
  %447 = vadd.xlane.f32.xlu0 %v446
  %v448 = vpop.xlane.xlu0 %447
  %v449 = vsel %vm415, %v396, 0.0
  %450 = vadd.xlane.f32.xlu0 %v449
  %v451 = vpop.xlane.xlu0 %450
  %v452 = vsel %vm415, %v402, 0.0
  %453 = vadd.xlane.f32.xlu0 %v452
  %v454 = vpop.xlane.xlu0 %453
  %v455 = vsel %vm415, %v404, 0.0
  %456 = vadd.xlane.f32.xlu0 %v455
  %v457 = vpop.xlane.xlu0 %456
  %v458 = vsel %vm415, %v406, 0.0
  %459 = vadd.xlane.f32.xlu0 %v458
  %v460 = vpop.xlane.xlu0 %459
  %v461 = vsel %vm415, %v408, 0.0
  %462 = vadd.xlane.f32.xlu0 %v461
  %v463 = vpop.xlane.xlu0 %462
  %v464 = vrcp.pop 32.0
  %v465 = vmul.f32 32.0, %v464
  %v466 = vsub.f32 1.0, %v465
  %v467 = vmul.f32 %v464, %v466
  %v468 = vadd.f32 %v464, %v467
  %vm469 = vweird.f32 %v464
  %v470 = vsel %vm469, %v464, %v468
  %v471 = vmul.f32 %v418, %v470
  %v472 = vmul.f32 %v421, %v470
  %v473 = vmul.f32 %v424, %v470
  %v474 = vmul.f32 %v427, %v470
  %v475 = vmul.f32 %v430, %v470
  %v476 = vmul.f32 %v433, %v470
  %v477 = vmul.f32 %v436, %v470
  %v478 = vmul.f32 %v439, %v470
  %v479 = vmul.f32 %v442, %v470
  %v480 = vmul.f32 %v445, %v470
  %v481 = vmul.f32 %v448, %v470
  %v482 = vmul.f32 %v451, %v470
  %v483 = vmul.f32 %v454, %v470
  %v484 = vmul.f32 %v457, %v470
  %v485 = vmul.f32 %v460, %v470
  %v486 = vmul.f32 %v463, %v470
  %v487 = vsub.f32 %v369, %v471
  %v488 = vsub.f32 %v370, %v472
  %v489 = vsub.f32 %v371, %v473
  %v490 = vsub.f32 %v372, %v474
  %v491 = vsub.f32 %v378, %v475
  %v492 = vsub.f32 %v380, %v476
  %v493 = vsub.f32 %v382, %v477
  %v494 = vsub.f32 %v384, %v478
  %v495 = vsub.f32 %v390, %v479
  %v496 = vsub.f32 %v392, %v480
  %v497 = vsub.f32 %v394, %v481
  %v498 = vsub.f32 %v396, %v482
  %v499 = vsub.f32 %v402, %v483
  %v500 = vsub.f32 %v404, %v484
  %v501 = vsub.f32 %v406, %v485
  %v502 = vsub.f32 %v408, %v486
  %v503 = vmul.f32 %v487, %v487
  %v504 = vmul.f32 %v488, %v488
  %v505 = vmul.f32 %v489, %v489
  %v506 = vmul.f32 %v490, %v490
  %v507 = vmul.f32 %v491, %v491
  %v508 = vmul.f32 %v492, %v492
  %v509 = vmul.f32 %v493, %v493
  %v510 = vmul.f32 %v494, %v494
  %v511 = vmul.f32 %v495, %v495
  %v512 = vmul.f32 %v496, %v496
  %v513 = vmul.f32 %v497, %v497
  %v514 = vmul.f32 %v498, %v498
  %v515 = vmul.f32 %v499, %v499
  %v516 = vmul.f32 %v500, %v500
  %v517 = vmul.f32 %v501, %v501
  %v518 = vmul.f32 %v502, %v502
  %v519 = vsel %vm415, %v503, 0.0
  %520 = vadd.xlane.f32.xlu0 %v519
  %v521 = vpop.xlane.xlu0 %520
  %v522 = vsel %vm415, %v504, 0.0
  %523 = vadd.xlane.f32.xlu0 %v522
  %v524 = vpop.xlane.xlu0 %523
  %v525 = vsel %vm415, %v505, 0.0
  %526 = vadd.xlane.f32.xlu0 %v525
  %v527 = vpop.xlane.xlu0 %526
  %v528 = vsel %vm415, %v506, 0.0
  %529 = vadd.xlane.f32.xlu0 %v528
  %v530 = vpop.xlane.xlu0 %529
  %v531 = vsel %vm415, %v507, 0.0
  %532 = vadd.xlane.f32.xlu0 %v531
  %v533 = vpop.xlane.xlu0 %532
  %v534 = vsel %vm415, %v508, 0.0
  %535 = vadd.xlane.f32.xlu0 %v534
  %v536 = vpop.xlane.xlu0 %535
  %v537 = vsel %vm415, %v509, 0.0
  %538 = vadd.xlane.f32.xlu0 %v537
  %v539 = vpop.xlane.xlu0 %538
  %v540 = vsel %vm415, %v510, 0.0
  %541 = vadd.xlane.f32.xlu0 %v540
  %v542 = vpop.xlane.xlu0 %541
  %v543 = vsel %vm415, %v511, 0.0
  %544 = vadd.xlane.f32.xlu0 %v543
  %v545 = vpop.xlane.xlu0 %544
  %v546 = vsel %vm415, %v512, 0.0
  %547 = vadd.xlane.f32.xlu0 %v546
  %v548 = vpop.xlane.xlu0 %547
  %v549 = vsel %vm415, %v513, 0.0
  %550 = vadd.xlane.f32.xlu0 %v549
  %v551 = vpop.xlane.xlu0 %550
  %v552 = vsel %vm415, %v514, 0.0
  %553 = vadd.xlane.f32.xlu0 %v552
  %v554 = vpop.xlane.xlu0 %553
  %v555 = vsel %vm415, %v515, 0.0
  %556 = vadd.xlane.f32.xlu0 %v555
  %v557 = vpop.xlane.xlu0 %556
  %v558 = vsel %vm415, %v516, 0.0
  %559 = vadd.xlane.f32.xlu0 %v558
  %v560 = vpop.xlane.xlu0 %559
  %v561 = vsel %vm415, %v517, 0.0
  %562 = vadd.xlane.f32.xlu0 %v561
  %v563 = vpop.xlane.xlu0 %562
  %v564 = vsel %vm415, %v518, 0.0
  %565 = vadd.xlane.f32.xlu0 %v564
  %v566 = vpop.xlane.xlu0 %565
  %v567 = vmul.f32 %v521, %v470
  %v568 = vmul.f32 %v524, %v470
  %v569 = vmul.f32 %v527, %v470
  %v570 = vmul.f32 %v530, %v470
  %v571 = vmul.f32 %v533, %v470
  %v572 = vmul.f32 %v536, %v470
  %v573 = vmul.f32 %v539, %v470
  %v574 = vmul.f32 %v542, %v470
  %v575 = vmul.f32 %v545, %v470
  %v576 = vmul.f32 %v548, %v470
  %v577 = vmul.f32 %v551, %v470
  %v578 = vmul.f32 %v554, %v470
  %v579 = vmul.f32 %v557, %v470
  %v580 = vmul.f32 %v560, %v470
  %v581 = vmul.f32 %v563, %v470
  %v582 = vmul.f32 %v566, %v470
  %v583 = vadd.f32 %v567, 1e-05
  %v584 = vadd.f32 %v568, 1e-05
  %v585 = vadd.f32 %v569, 1e-05
  %v586 = vadd.f32 %v570, 1e-05
  %v587 = vadd.f32 %v571, 1e-05
  %v588 = vadd.f32 %v572, 1e-05
  %v589 = vadd.f32 %v573, 1e-05
  %v590 = vadd.f32 %v574, 1e-05
  %v591 = vadd.f32 %v575, 1e-05
  %v592 = vadd.f32 %v576, 1e-05
  %v593 = vadd.f32 %v577, 1e-05
  %v594 = vadd.f32 %v578, 1e-05
  %v595 = vadd.f32 %v579, 1e-05
  %v596 = vadd.f32 %v580, 1e-05
  %v597 = vadd.f32 %v581, 1e-05
  %v598 = vadd.f32 %v582, 1e-05
  %v599 = vrsqrt.pop %v583
  %v600 = vmul.f32 %v599, %v583
  %v601 = vmul.f32 %v600, %v599
  %v602 = vmul.f32 0.5, %v601
  %v603 = vsub.f32 1.5, %v602
  %v604 = vmul.f32 %v599, %v603
  %vm605 = vweird.f32 %v583
  %vm606 = vweird.f32 %v599
  %vm607 = vmor %vm605, %vm606
  %v608 = vsel %vm607, %v599, %v604
  %v609 = vrsqrt.pop %v584
  %v610 = vmul.f32 %v609, %v584
  %v611 = vmul.f32 %v610, %v609
  %v612 = vmul.f32 0.5, %v611
  %v613 = vsub.f32 1.5, %v612
  %v614 = vmul.f32 %v609, %v613
  %vm615 = vweird.f32 %v584
  %vm616 = vweird.f32 %v609
  %vm617 = vmor %vm615, %vm616
  %v618 = vsel %vm617, %v609, %v614
  %v619 = vrsqrt.pop %v585
  %v620 = vmul.f32 %v619, %v585
  %v621 = vmul.f32 %v620, %v619
  %v622 = vmul.f32 0.5, %v621
  %v623 = vsub.f32 1.5, %v622
  %v624 = vmul.f32 %v619, %v623
  %vm625 = vweird.f32 %v585
  %vm626 = vweird.f32 %v619
  %vm627 = vmor %vm625, %vm626
  %v628 = vsel %vm627, %v619, %v624
  %v629 = vrsqrt.pop %v586
  %v630 = vmul.f32 %v629, %v586
  %v631 = vmul.f32 %v630, %v629
  %v632 = vmul.f32 0.5, %v631
  %v633 = vsub.f32 1.5, %v632
  %v634 = vmul.f32 %v629, %v633
  %vm635 = vweird.f32 %v586
  %vm636 = vweird.f32 %v629
  %vm637 = vmor %vm635, %vm636
  %v638 = vsel %vm637, %v629, %v634
  %v639 = vrsqrt.pop %v587
  %v640 = vmul.f32 %v639, %v587
  %v641 = vmul.f32 %v640, %v639
  %v642 = vmul.f32 0.5, %v641
  %v643 = vsub.f32 1.5, %v642
  %v644 = vmul.f32 %v639, %v643
  %vm645 = vweird.f32 %v587
  %vm646 = vweird.f32 %v639
  %vm647 = vmor %vm645, %vm646
  %v648 = vsel %vm647, %v639, %v644
  %v649 = vrsqrt.pop %v588
  %v650 = vmul.f32 %v649, %v588
  %v651 = vmul.f32 %v650, %v649
  %v652 = vmul.f32 0.5, %v651
  %v653 = vsub.f32 1.5, %v652
  %v654 = vmul.f32 %v649, %v653
  %vm655 = vweird.f32 %v588
  %vm656 = vweird.f32 %v649
  %vm657 = vmor %vm655, %vm656
  %v658 = vsel %vm657, %v649, %v654
  %v659 = vrsqrt.pop %v589
  %v660 = vmul.f32 %v659, %v589
  %v661 = vmul.f32 %v660, %v659
  %v662 = vmul.f32 0.5, %v661
  %v663 = vsub.f32 1.5, %v662
  %v664 = vmul.f32 %v659, %v663
  %vm665 = vweird.f32 %v589
  %vm666 = vweird.f32 %v659
  %vm667 = vmor %vm665, %vm666
  %v668 = vsel %vm667, %v659, %v664
  %v669 = vrsqrt.pop %v590
  %v670 = vmul.f32 %v669, %v590
  %v671 = vmul.f32 %v670, %v669
  %v672 = vmul.f32 0.5, %v671
  %v673 = vsub.f32 1.5, %v672
  %v674 = vmul.f32 %v669, %v673
  %vm675 = vweird.f32 %v590
  %vm676 = vweird.f32 %v669
  %vm677 = vmor %vm675, %vm676
  %v678 = vsel %vm677, %v669, %v674
  %v679 = vrsqrt.pop %v591
  %v680 = vmul.f32 %v679, %v591
  %v681 = vmul.f32 %v680, %v679
  %v682 = vmul.f32 0.5, %v681
  %v683 = vsub.f32 1.5, %v682
  %v684 = vmul.f32 %v679, %v683
  %vm685 = vweird.f32 %v591
  %vm686 = vweird.f32 %v679
  %vm687 = vmor %vm685, %vm686
  %v688 = vsel %vm687, %v679, %v684
  %v689 = vrsqrt.pop %v592
  %v690 = vmul.f32 %v689, %v592
  %v691 = vmul.f32 %v690, %v689
  %v692 = vmul.f32 0.5, %v691
  %v693 = vsub.f32 1.5, %v692
  %v694 = vmul.f32 %v689, %v693
  %vm695 = vweird.f32 %v592
  %vm696 = vweird.f32 %v689
  %vm697 = vmor %vm695, %vm696
  %v698 = vsel %vm697, %v689, %v694
  %v699 = vrsqrt.pop %v593
  %v700 = vmul.f32 %v699, %v593
  %v701 = vmul.f32 %v700, %v699
  %v702 = vmul.f32 0.5, %v701
  %v703 = vsub.f32 1.5, %v702
  %v704 = vmul.f32 %v699, %v703
  %vm705 = vweird.f32 %v593
  %vm706 = vweird.f32 %v699
  %vm707 = vmor %vm705, %vm706
  %v708 = vsel %vm707, %v699, %v704
  %v709 = vrsqrt.pop %v594
  %v710 = vmul.f32 %v709, %v594
  %v711 = vmul.f32 %v710, %v709
  %v712 = vmul.f32 0.5, %v711
  %v713 = vsub.f32 1.5, %v712
  %v714 = vmul.f32 %v709, %v713
  %vm715 = vweird.f32 %v594
  %vm716 = vweird.f32 %v709
  %vm717 = vmor %vm715, %vm716
  %v718 = vsel %vm717, %v709, %v714
  %v719 = vrsqrt.pop %v595
  %v720 = vmul.f32 %v719, %v595
  %v721 = vmul.f32 %v720, %v719
  %v722 = vmul.f32 0.5, %v721
  %v723 = vsub.f32 1.5, %v722
  %v724 = vmul.f32 %v719, %v723
  %vm725 = vweird.f32 %v595
  %vm726 = vweird.f32 %v719
  %vm727 = vmor %vm725, %vm726
  %v728 = vsel %vm727, %v719, %v724
  %v729 = vrsqrt.pop %v596
  %v730 = vmul.f32 %v729, %v596
  %v731 = vmul.f32 %v730, %v729
  %v732 = vmul.f32 0.5, %v731
  %v733 = vsub.f32 1.5, %v732
  %v734 = vmul.f32 %v729, %v733
  %vm735 = vweird.f32 %v596
  %vm736 = vweird.f32 %v729
  %vm737 = vmor %vm735, %vm736
  %v738 = vsel %vm737, %v729, %v734
  %v739 = vrsqrt.pop %v597
  %v740 = vmul.f32 %v739, %v597
  %v741 = vmul.f32 %v740, %v739
  %v742 = vmul.f32 0.5, %v741
  %v743 = vsub.f32 1.5, %v742
  %v744 = vmul.f32 %v739, %v743
  %vm745 = vweird.f32 %v597
  %vm746 = vweird.f32 %v739
  %vm747 = vmor %vm745, %vm746
  %v748 = vsel %vm747, %v739, %v744
  %v749 = vrsqrt.pop %v598
  %v750 = vmul.f32 %v749, %v598
  %v751 = vmul.f32 %v750, %v749
  %v752 = vmul.f32 0.5, %v751
  %v753 = vsub.f32 1.5, %v752
  %v754 = vmul.f32 %v749, %v753
  %vm755 = vweird.f32 %v598
  %vm756 = vweird.f32 %v749
  %vm757 = vmor %vm755, %vm756
  %v758 = vsel %vm757, %v749, %v754
  %v759 = vmul.f32 %v487, %v608
  %v760 = vmul.f32 %v488, %v618
  %v761 = vmul.f32 %v489, %v628
  %v762 = vmul.f32 %v490, %v638
  %v763 = vmul.f32 %v491, %v648
  %v764 = vmul.f32 %v492, %v658
  %v765 = vmul.f32 %v493, %v668
  %v766 = vmul.f32 %v494, %v678
  %v767 = vmul.f32 %v495, %v688
  %v768 = vmul.f32 %v496, %v698
  %v769 = vmul.f32 %v497, %v708
  %v770 = vmul.f32 %v498, %v718
  %v771 = vmul.f32 %v499, %v728
  %v772 = vmul.f32 %v500, %v738
  %v773 = vmul.f32 %v501, %v748
  %v774 = vmul.f32 %v502, %v758
  %v775 = vperm.slane %v413, 0
  %v776 = vmul.f32 %v759, %v775
  %v777 = vmul.f32 %v760, %v775
  %v778 = vmul.f32 %v761, %v775
  %v779 = vmul.f32 %v762, %v775
  %v780 = vmul.f32 %v763, %v775
  %v781 = vmul.f32 %v764, %v775
  %v782 = vmul.f32 %v765, %v775
  %v783 = vmul.f32 %v766, %v775
  %v784 = vmul.f32 %v767, %v775
  %v785 = vmul.f32 %v768, %v775
  %v786 = vmul.f32 %v769, %v775
  %v787 = vmul.f32 %v770, %v775
  %v788 = vmul.f32 %v771, %v775
  %v789 = vmul.f32 %v772, %v775
  %v790 = vmul.f32 %v773, %v775
  %v791 = vmul.f32 %v774, %v775
  %v792 = vperm.slane %v414, 0
  %v793 = vadd.f32 %v776, %v792
  %v794 = vadd.f32 %v777, %v792
  %v795 = vadd.f32 %v778, %v792
  %v796 = vadd.f32 %v779, %v792
  %v797 = vadd.f32 %v780, %v792
  %v798 = vadd.f32 %v781, %v792
  %v799 = vadd.f32 %v782, %v792
  %v800 = vadd.f32 %v783, %v792
  %v801 = vadd.f32 %v784, %v792
  %v802 = vadd.f32 %v785, %v792
  %v803 = vadd.f32 %v786, %v792
  %v804 = vadd.f32 %v787, %v792
  %v805 = vadd.f32 %v788, %v792
  %v806 = vadd.f32 %v789, %v792
  %v807 = vadd.f32 %v790, %v792
  %v808 = vadd.f32 %v791, %v792
  %v809 = vld [vmem:[%s10] sm:$0xff]
  %v810 = vld [vmem:[%s10 + $0x8] sm:$0xff]
  %v811 = vld [vmem:[%s10 + $0x10] sm:$0xff]
  %v812 = vld [vmem:[%s10 + $0x18] sm:$0xff]
  %v813 = vld [vmem:[%s2] sm:$0xff]
  %v814 = vld [vmem:[%s2 + $0x8] sm:$0xff]
  %v815 = vld [vmem:[%s2 + $0x10] sm:$0xff]
  %v816 = vld [vmem:[%s2 + $0x18] sm:$0xff]
  %v817 = vld [vmem:[%s2 + $0x20] sm:$0xff]
  %v818 = vld [vmem:[%s2 + $0x28] sm:$0xff]
  %v819 = vld [vmem:[%s2 + $0x30] sm:$0xff]
  %v820 = vld [vmem:[%s2 + $0x38] sm:$0xff]
  %v821 = vld [vmem:[%s2 + $0x40] sm:$0xff]
  %v822 = vld [vmem:[%s2 + $0x48] sm:$0xff]
  %v823 = vld [vmem:[%s2 + $0x50] sm:$0xff]
  %v824 = vld [vmem:[%s2 + $0x58] sm:$0xff]
  %v825 = vld [vmem:[%s2 + $0x60] sm:$0xff]
  %v826 = vld [vmem:[%s2 + $0x68] sm:$0xff]
  %v827 = vld [vmem:[%s2 + $0x70] sm:$0xff]
  %v828 = vld [vmem:[%s2 + $0x78] sm:$0xff]
  %v829 = vld [vmem:[%s11] sm:$0xff]
  %v830 = vld [vmem:[%s11 + $0x8] sm:$0xff]
  %v831 = vld [vmem:[%s11 + $0x10] sm:$0xff]
  %v832 = vld [vmem:[%s11 + $0x18] sm:$0xff]
  %v834 = vsel %vm415, %v813, 0
  %v837 = vsel %vm415, %v814, 0
  %v840 = vsel %vm415, %v815, 0
  %v843 = vsel %vm415, %v816, 0
  %v846 = vsel %vm415, %v817, 0
  %v849 = vsel %vm415, %v818, 0
  %v852 = vsel %vm415, %v819, 0
  %v855 = vsel %vm415, %v820, 0
  %v858 = vsel %vm415, %v821, 0
  %v861 = vsel %vm415, %v822, 0
  %v864 = vsel %vm415, %v823, 0
  %v867 = vsel %vm415, %v824, 0
  %v870 = vsel %vm415, %v825, 0
  %v873 = vsel %vm415, %v826, 0
  %v876 = vsel %vm415, %v827, 0
  %v879 = vsel %vm415, %v828, 0
  %881 = vmatpush.msra.mxu0 0.0
  %882 = vmatpush.msra.mxu0 0.0
  %883 = vmatpush.msra.mxu0 0.0
  %884 = vmatpush.msra.mxu0 0.0
  %885 = vmatpush.msra.mxu0 0.0
  %886 = vmatpush.msra.mxu0 0.0
  %887 = vmatpush.msra.mxu0 0.0
  %888 = vmatpush.msra.mxu0 0.0
  %889 = vmatpush.msra.mxu0 0.0
  %890 = vmatpush.msra.mxu0 0.0
  %891 = vmatpush.msra.mxu0 0.0
  %892 = vmatpush.msra.mxu0 0.0
  %893 = vmatpush.msra.mxu0 %v832
  %894 = vmatpush.msra.mxu0 %v831
  %895 = vmatpush.msra.mxu0 %v830
  %896 = vmatpush.msra.mxu0 %v829
  %897 = vmatmul.f32.gmra.mxu0 %v834
  %v898 = vpop.f32.mrf.mxu0
  %v899 = vadd.f32 0.0, %v898
  %900 = vmatmul.f32.gmra.mxu0 %v837
  %v901 = vpop.f32.mrf.mxu0
  %v902 = vadd.f32 0.0, %v901
  %903 = vmatmul.f32.gmra.mxu0 %v840
  %v904 = vpop.f32.mrf.mxu0
  %v905 = vadd.f32 0.0, %v904
  %906 = vmatmul.f32.gmra.mxu0 %v843
  %v907 = vpop.f32.mrf.mxu0
  %v908 = vadd.f32 0.0, %v907
  %909 = vmatmul.f32.gmra.mxu0 %v846
  %v910 = vpop.f32.mrf.mxu0
  %v911 = vadd.f32 0.0, %v910
  %912 = vmatmul.f32.gmra.mxu0 %v849
  %v913 = vpop.f32.mrf.mxu0
  %v914 = vadd.f32 0.0, %v913
  %915 = vmatmul.f32.gmra.mxu0 %v852
  %v916 = vpop.f32.mrf.mxu0
  %v917 = vadd.f32 0.0, %v916
  %918 = vmatmul.f32.gmra.mxu0 %v855
  %v919 = vpop.f32.mrf.mxu0
  %v920 = vadd.f32 0.0, %v919
  %921 = vmatmul.f32.gmra.mxu0 %v858
  %v922 = vpop.f32.mrf.mxu0
  %v923 = vadd.f32 0.0, %v922
  %924 = vmatmul.f32.gmra.mxu0 %v861
  %v925 = vpop.f32.mrf.mxu0
  %v926 = vadd.f32 0.0, %v925
  %927 = vmatmul.f32.gmra.mxu0 %v864
  %v928 = vpop.f32.mrf.mxu0
  %v929 = vadd.f32 0.0, %v928
  %930 = vmatmul.f32.gmra.mxu0 %v867
  %v931 = vpop.f32.mrf.mxu0
  %v932 = vadd.f32 0.0, %v931
  %933 = vmatmul.f32.gmra.mxu0 %v870
  %v934 = vpop.f32.mrf.mxu0
  %v935 = vadd.f32 0.0, %v934
  %936 = vmatmul.f32.gmra.mxu0 %v873
  %v937 = vpop.f32.mrf.mxu0
  %v938 = vadd.f32 0.0, %v937
  %939 = vmatmul.f32.gmra.mxu0 %v876
  %v940 = vpop.f32.mrf.mxu0
  %v941 = vadd.f32 0.0, %v940
  %942 = vmatmul.f32.gmra.mxu0 %v879
  %v943 = vpop.f32.mrf.mxu0
  %v944 = vadd.f32 0.0, %v943
  %945 = vdwg.mxu0
  %v947 = vsel %vm415, %v793, 0
  %v950 = vsel %vm415, %v794, 0
  %v953 = vsel %vm415, %v795, 0
  %v956 = vsel %vm415, %v796, 0
  %v959 = vsel %vm415, %v797, 0
  %v962 = vsel %vm415, %v798, 0
  %v965 = vsel %vm415, %v799, 0
  %v968 = vsel %vm415, %v800, 0
  %v971 = vsel %vm415, %v801, 0
  %v974 = vsel %vm415, %v802, 0
  %v977 = vsel %vm415, %v803, 0
  %v980 = vsel %vm415, %v804, 0
  %v983 = vsel %vm415, %v805, 0
  %v986 = vsel %vm415, %v806, 0
  %v989 = vsel %vm415, %v807, 0
  %v992 = vsel %vm415, %v808, 0
  %994 = vmatpush.msra.mxu0 0.0
  %995 = vmatpush.msra.mxu0 0.0
  %996 = vmatpush.msra.mxu0 0.0
  %997 = vmatpush.msra.mxu0 0.0
  %998 = vmatpush.msra.mxu0 0.0
  %999 = vmatpush.msra.mxu0 0.0
  %1000 = vmatpush.msra.mxu0 0.0
  %1001 = vmatpush.msra.mxu0 0.0
  %1002 = vmatpush.msra.mxu0 0.0
  %1003 = vmatpush.msra.mxu0 0.0
  %1004 = vmatpush.msra.mxu0 0.0
  %1005 = vmatpush.msra.mxu0 0.0
  %1006 = vmatpush.msra.mxu0 %v812
  %1007 = vmatpush.msra.mxu0 %v811
  %1008 = vmatpush.msra.mxu0 %v810
  %1009 = vmatpush.msra.mxu0 %v809
  %1010 = vmatmul.f32.gmra.mxu0 %v947
  %v1011 = vpop.f32.mrf.mxu0
  %v1012 = vadd.f32 %v899, %v1011
  %1013 = vmatmul.f32.gmra.mxu0 %v950
  %v1014 = vpop.f32.mrf.mxu0
  %v1015 = vadd.f32 %v902, %v1014
  %1016 = vmatmul.f32.gmra.mxu0 %v953
  %v1017 = vpop.f32.mrf.mxu0
  %v1018 = vadd.f32 %v905, %v1017
  %1019 = vmatmul.f32.gmra.mxu0 %v956
  %v1020 = vpop.f32.mrf.mxu0
  %v1021 = vadd.f32 %v908, %v1020
  %1022 = vmatmul.f32.gmra.mxu0 %v959
  %v1023 = vpop.f32.mrf.mxu0
  %v1024 = vadd.f32 %v911, %v1023
  %1025 = vmatmul.f32.gmra.mxu0 %v962
  %v1026 = vpop.f32.mrf.mxu0
  %v1027 = vadd.f32 %v914, %v1026
  %1028 = vmatmul.f32.gmra.mxu0 %v965
  %v1029 = vpop.f32.mrf.mxu0
  %v1030 = vadd.f32 %v917, %v1029
  %1031 = vmatmul.f32.gmra.mxu0 %v968
  %v1032 = vpop.f32.mrf.mxu0
  %v1033 = vadd.f32 %v920, %v1032
  %1034 = vmatmul.f32.gmra.mxu0 %v971
  %v1035 = vpop.f32.mrf.mxu0
  %v1036 = vadd.f32 %v923, %v1035
  %1037 = vmatmul.f32.gmra.mxu0 %v974
  %v1038 = vpop.f32.mrf.mxu0
  %v1039 = vadd.f32 %v926, %v1038
  %1040 = vmatmul.f32.gmra.mxu0 %v977
  %v1041 = vpop.f32.mrf.mxu0
  %v1042 = vadd.f32 %v929, %v1041
  %1043 = vmatmul.f32.gmra.mxu0 %v980
  %v1044 = vpop.f32.mrf.mxu0
  %v1045 = vadd.f32 %v932, %v1044
  %1046 = vmatmul.f32.gmra.mxu0 %v983
  %v1047 = vpop.f32.mrf.mxu0
  %v1048 = vadd.f32 %v935, %v1047
  %1049 = vmatmul.f32.gmra.mxu0 %v986
  %v1050 = vpop.f32.mrf.mxu0
  %v1051 = vadd.f32 %v938, %v1050
  %1052 = vmatmul.f32.gmra.mxu0 %v989
  %v1053 = vpop.f32.mrf.mxu0
  %v1054 = vadd.f32 %v941, %v1053
  %1055 = vmatmul.f32.gmra.mxu0 %v992
  %v1056 = vpop.f32.mrf.mxu0
  %v1057 = vadd.f32 %v944, %v1056
  %1058 = vdwg.mxu0
  %v1059 = vld [vmem:[%s12] sm:$0x1]
  %v1061 = vperm.slane %v1059, 0
  %v1063 = vadd.f32 %v1012, %v1061
  %v1064 = vadd.f32 %v1015, %v1061
  %v1065 = vadd.f32 %v1018, %v1061
  %v1066 = vadd.f32 %v1021, %v1061
  %v1067 = vadd.f32 %v1024, %v1061
  %v1068 = vadd.f32 %v1027, %v1061
  %v1069 = vadd.f32 %v1030, %v1061
  %v1070 = vadd.f32 %v1033, %v1061
  %v1071 = vadd.f32 %v1036, %v1061
  %v1072 = vadd.f32 %v1039, %v1061
  %v1073 = vadd.f32 %v1042, %v1061
  %v1074 = vadd.f32 %v1045, %v1061
  %v1075 = vadd.f32 %v1048, %v1061
  %v1076 = vadd.f32 %v1051, %v1061
  %v1077 = vadd.f32 %v1054, %v1061
  %v1078 = vadd.f32 %v1057, %v1061
  %1095 = vrot.lane.b32.xlu0 %v1063, 112
  %v1096 = vpop.permute.xlu0 %1095
  %1097 = vrot.lane.b32.xlu0 %v1064, 112
  %v1098 = vpop.permute.xlu0 %1097
  %1099 = vrot.lane.b32.xlu0 %v1065, 112
  %v1100 = vpop.permute.xlu0 %1099
  %1101 = vrot.lane.b32.xlu0 %v1066, 112
  %v1102 = vpop.permute.xlu0 %1101
  %1103 = vrot.lane.b32.xlu0 %v1067, 112
  %v1104 = vpop.permute.xlu0 %1103
  %1105 = vrot.lane.b32.xlu0 %v1068, 112
  %v1106 = vpop.permute.xlu0 %1105
  %1107 = vrot.lane.b32.xlu0 %v1069, 112
  %v1108 = vpop.permute.xlu0 %1107
  %1109 = vrot.lane.b32.xlu0 %v1070, 112
  %v1110 = vpop.permute.xlu0 %1109
  %1111 = vrot.lane.b32.xlu0 %v1071, 112
  %v1112 = vpop.permute.xlu0 %1111
  %1113 = vrot.lane.b32.xlu0 %v1072, 112
  %v1114 = vpop.permute.xlu0 %1113
  %1115 = vrot.lane.b32.xlu0 %v1073, 112
  %v1116 = vpop.permute.xlu0 %1115
  %1117 = vrot.lane.b32.xlu0 %v1074, 112
  %v1118 = vpop.permute.xlu0 %1117
  %1119 = vrot.lane.b32.xlu0 %v1075, 112
  %v1120 = vpop.permute.xlu0 %1119
  %1121 = vrot.lane.b32.xlu0 %v1076, 112
  %v1122 = vpop.permute.xlu0 %1121
  %1123 = vrot.lane.b32.xlu0 %v1077, 112
  %v1124 = vpop.permute.xlu0 %1123
  %1125 = vrot.lane.b32.xlu0 %v1078, 112
  %v1126 = vpop.permute.xlu0 %1125
  %1143 = vrot.lane.b32.xlu0 %v1063, 96
  %v1144 = vpop.permute.xlu0 %1143
  %1145 = vrot.lane.b32.xlu0 %v1064, 96
  %v1146 = vpop.permute.xlu0 %1145
  %1147 = vrot.lane.b32.xlu0 %v1065, 96
  %v1148 = vpop.permute.xlu0 %1147
  %1149 = vrot.lane.b32.xlu0 %v1066, 96
  %v1150 = vpop.permute.xlu0 %1149
  %1151 = vrot.lane.b32.xlu0 %v1067, 96
  %v1152 = vpop.permute.xlu0 %1151
  %1153 = vrot.lane.b32.xlu0 %v1068, 96
  %v1154 = vpop.permute.xlu0 %1153
  %1155 = vrot.lane.b32.xlu0 %v1069, 96
  %v1156 = vpop.permute.xlu0 %1155
  %1157 = vrot.lane.b32.xlu0 %v1070, 96
  %v1158 = vpop.permute.xlu0 %1157
  %1159 = vrot.lane.b32.xlu0 %v1071, 96
  %v1160 = vpop.permute.xlu0 %1159
  %1161 = vrot.lane.b32.xlu0 %v1072, 96
  %v1162 = vpop.permute.xlu0 %1161
  %1163 = vrot.lane.b32.xlu0 %v1073, 96
  %v1164 = vpop.permute.xlu0 %1163
  %1165 = vrot.lane.b32.xlu0 %v1074, 96
  %v1166 = vpop.permute.xlu0 %1165
  %1167 = vrot.lane.b32.xlu0 %v1075, 96
  %v1168 = vpop.permute.xlu0 %1167
  %1169 = vrot.lane.b32.xlu0 %v1076, 96
  %v1170 = vpop.permute.xlu0 %1169
  %1171 = vrot.lane.b32.xlu0 %v1077, 96
  %v1172 = vpop.permute.xlu0 %1171
  %1173 = vrot.lane.b32.xlu0 %v1078, 96
  %v1174 = vpop.permute.xlu0 %1173
  %1191 = vrot.lane.b32.xlu0 %v1063, 80
  %v1192 = vpop.permute.xlu0 %1191
  %1193 = vrot.lane.b32.xlu0 %v1064, 80
  %v1194 = vpop.permute.xlu0 %1193
  %1195 = vrot.lane.b32.xlu0 %v1065, 80
  %v1196 = vpop.permute.xlu0 %1195
  %1197 = vrot.lane.b32.xlu0 %v1066, 80
  %v1198 = vpop.permute.xlu0 %1197
  %1199 = vrot.lane.b32.xlu0 %v1067, 80
  %v1200 = vpop.permute.xlu0 %1199
  %1201 = vrot.lane.b32.xlu0 %v1068, 80
  %v1202 = vpop.permute.xlu0 %1201
  %1203 = vrot.lane.b32.xlu0 %v1069, 80
  %v1204 = vpop.permute.xlu0 %1203
  %1205 = vrot.lane.b32.xlu0 %v1070, 80
  %v1206 = vpop.permute.xlu0 %1205
  %1207 = vrot.lane.b32.xlu0 %v1071, 80
  %v1208 = vpop.permute.xlu0 %1207
  %1209 = vrot.lane.b32.xlu0 %v1072, 80
  %v1210 = vpop.permute.xlu0 %1209
  %1211 = vrot.lane.b32.xlu0 %v1073, 80
  %v1212 = vpop.permute.xlu0 %1211
  %1213 = vrot.lane.b32.xlu0 %v1074, 80
  %v1214 = vpop.permute.xlu0 %1213
  %1215 = vrot.lane.b32.xlu0 %v1075, 80
  %v1216 = vpop.permute.xlu0 %1215
  %1217 = vrot.lane.b32.xlu0 %v1076, 80
  %v1218 = vpop.permute.xlu0 %1217
  %1219 = vrot.lane.b32.xlu0 %v1077, 80
  %v1220 = vpop.permute.xlu0 %1219
  %1221 = vrot.lane.b32.xlu0 %v1078, 80
  %v1222 = vpop.permute.xlu0 %1221
  %v1239 = vld [vmem:[%s13] sm:$0x1]
  %v1240 = vld [vmem:[%s13 + $0x1] sm:$0x1]
  %vm1241 = vcmask 130048
  %v1242 = vsel %vm1241, %v1063, 0.0
  %1243 = vadd.xlane.f32.xlu0 %v1242
  %v1244 = vpop.xlane.xlu0 %1243
  %v1245 = vsel %vm1241, %v1064, 0.0
  %1246 = vadd.xlane.f32.xlu0 %v1245
  %v1247 = vpop.xlane.xlu0 %1246
  %v1248 = vsel %vm1241, %v1065, 0.0
  %1249 = vadd.xlane.f32.xlu0 %v1248
  %v1250 = vpop.xlane.xlu0 %1249
  %v1251 = vsel %vm1241, %v1066, 0.0
  %1252 = vadd.xlane.f32.xlu0 %v1251
  %v1253 = vpop.xlane.xlu0 %1252
  %v1254 = vsel %vm1241, %v1067, 0.0
  %1255 = vadd.xlane.f32.xlu0 %v1254
  %v1256 = vpop.xlane.xlu0 %1255
  %v1257 = vsel %vm1241, %v1068, 0.0
  %1258 = vadd.xlane.f32.xlu0 %v1257
  %v1259 = vpop.xlane.xlu0 %1258
  %v1260 = vsel %vm1241, %v1069, 0.0
  %1261 = vadd.xlane.f32.xlu0 %v1260
  %v1262 = vpop.xlane.xlu0 %1261
  %v1263 = vsel %vm1241, %v1070, 0.0
  %1264 = vadd.xlane.f32.xlu0 %v1263
  %v1265 = vpop.xlane.xlu0 %1264
  %v1266 = vsel %vm1241, %v1071, 0.0
  %1267 = vadd.xlane.f32.xlu0 %v1266
  %v1268 = vpop.xlane.xlu0 %1267
  %v1269 = vsel %vm1241, %v1072, 0.0
  %1270 = vadd.xlane.f32.xlu0 %v1269
  %v1271 = vpop.xlane.xlu0 %1270
  %v1272 = vsel %vm1241, %v1073, 0.0
  %1273 = vadd.xlane.f32.xlu0 %v1272
  %v1274 = vpop.xlane.xlu0 %1273
  %v1275 = vsel %vm1241, %v1074, 0.0
  %1276 = vadd.xlane.f32.xlu0 %v1275
  %v1277 = vpop.xlane.xlu0 %1276
  %v1278 = vsel %vm1241, %v1075, 0.0
  %1279 = vadd.xlane.f32.xlu0 %v1278
  %v1280 = vpop.xlane.xlu0 %1279
  %v1281 = vsel %vm1241, %v1076, 0.0
  %1282 = vadd.xlane.f32.xlu0 %v1281
  %v1283 = vpop.xlane.xlu0 %1282
  %v1284 = vsel %vm1241, %v1077, 0.0
  %1285 = vadd.xlane.f32.xlu0 %v1284
  %v1286 = vpop.xlane.xlu0 %1285
  %v1287 = vsel %vm1241, %v1078, 0.0
  %1288 = vadd.xlane.f32.xlu0 %v1287
  %v1289 = vpop.xlane.xlu0 %1288
  %v1290 = vsel %vm1241, %v1096, 0.0
  %1291 = vadd.xlane.f32.xlu0 %v1290
  %v1292 = vpop.xlane.xlu0 %1291
  %v1293 = vsel %vm1241, %v1098, 0.0
  %1294 = vadd.xlane.f32.xlu0 %v1293
  %v1295 = vpop.xlane.xlu0 %1294
  %v1296 = vsel %vm1241, %v1100, 0.0
  %1297 = vadd.xlane.f32.xlu0 %v1296
  %v1298 = vpop.xlane.xlu0 %1297
  %v1299 = vsel %vm1241, %v1102, 0.0
  %1300 = vadd.xlane.f32.xlu0 %v1299
  %v1301 = vpop.xlane.xlu0 %1300
  %v1302 = vsel %vm1241, %v1104, 0.0
  %1303 = vadd.xlane.f32.xlu0 %v1302
  %v1304 = vpop.xlane.xlu0 %1303
  %v1305 = vsel %vm1241, %v1106, 0.0
  %1306 = vadd.xlane.f32.xlu0 %v1305
  %v1307 = vpop.xlane.xlu0 %1306
  %v1308 = vsel %vm1241, %v1108, 0.0
  %1309 = vadd.xlane.f32.xlu0 %v1308
  %v1310 = vpop.xlane.xlu0 %1309
  %v1311 = vsel %vm1241, %v1110, 0.0
  %1312 = vadd.xlane.f32.xlu0 %v1311
  %v1313 = vpop.xlane.xlu0 %1312
  %v1314 = vsel %vm1241, %v1112, 0.0
  %1315 = vadd.xlane.f32.xlu0 %v1314
  %v1316 = vpop.xlane.xlu0 %1315
  %v1317 = vsel %vm1241, %v1114, 0.0
  %1318 = vadd.xlane.f32.xlu0 %v1317
  %v1319 = vpop.xlane.xlu0 %1318
  %v1320 = vsel %vm1241, %v1116, 0.0
  %1321 = vadd.xlane.f32.xlu0 %v1320
  %v1322 = vpop.xlane.xlu0 %1321
  %v1323 = vsel %vm1241, %v1118, 0.0
  %1324 = vadd.xlane.f32.xlu0 %v1323
  %v1325 = vpop.xlane.xlu0 %1324
  %v1326 = vsel %vm1241, %v1120, 0.0
  %1327 = vadd.xlane.f32.xlu0 %v1326
  %v1328 = vpop.xlane.xlu0 %1327
  %v1329 = vsel %vm1241, %v1122, 0.0
  %1330 = vadd.xlane.f32.xlu0 %v1329
  %v1331 = vpop.xlane.xlu0 %1330
  %v1332 = vsel %vm1241, %v1124, 0.0
  %1333 = vadd.xlane.f32.xlu0 %v1332
  %v1334 = vpop.xlane.xlu0 %1333
  %v1335 = vsel %vm1241, %v1126, 0.0
  %1336 = vadd.xlane.f32.xlu0 %v1335
  %v1337 = vpop.xlane.xlu0 %1336
  %v1338 = vsel %vm1241, %v1144, 0.0
  %1339 = vadd.xlane.f32.xlu0 %v1338
  %v1340 = vpop.xlane.xlu0 %1339
  %v1341 = vsel %vm1241, %v1146, 0.0
  %1342 = vadd.xlane.f32.xlu0 %v1341
  %v1343 = vpop.xlane.xlu0 %1342
  %v1344 = vsel %vm1241, %v1148, 0.0
  %1345 = vadd.xlane.f32.xlu0 %v1344
  %v1346 = vpop.xlane.xlu0 %1345
  %v1347 = vsel %vm1241, %v1150, 0.0
  %1348 = vadd.xlane.f32.xlu0 %v1347
  %v1349 = vpop.xlane.xlu0 %1348
  %v1350 = vsel %vm1241, %v1152, 0.0
  %1351 = vadd.xlane.f32.xlu0 %v1350
  %v1352 = vpop.xlane.xlu0 %1351
  %v1353 = vsel %vm1241, %v1154, 0.0
  %1354 = vadd.xlane.f32.xlu0 %v1353
  %v1355 = vpop.xlane.xlu0 %1354
  %v1356 = vsel %vm1241, %v1156, 0.0
  %1357 = vadd.xlane.f32.xlu0 %v1356
  %v1358 = vpop.xlane.xlu0 %1357
  %v1359 = vsel %vm1241, %v1158, 0.0
  %1360 = vadd.xlane.f32.xlu0 %v1359
  %v1361 = vpop.xlane.xlu0 %1360
  %v1362 = vsel %vm1241, %v1160, 0.0
  %1363 = vadd.xlane.f32.xlu0 %v1362
  %v1364 = vpop.xlane.xlu0 %1363
  %v1365 = vsel %vm1241, %v1162, 0.0
  %1366 = vadd.xlane.f32.xlu0 %v1365
  %v1367 = vpop.xlane.xlu0 %1366
  %v1368 = vsel %vm1241, %v1164, 0.0
  %1369 = vadd.xlane.f32.xlu0 %v1368
  %v1370 = vpop.xlane.xlu0 %1369
  %v1371 = vsel %vm1241, %v1166, 0.0
  %1372 = vadd.xlane.f32.xlu0 %v1371
  %v1373 = vpop.xlane.xlu0 %1372
  %v1374 = vsel %vm1241, %v1168, 0.0
  %1375 = vadd.xlane.f32.xlu0 %v1374
  %v1376 = vpop.xlane.xlu0 %1375
  %v1377 = vsel %vm1241, %v1170, 0.0
  %1378 = vadd.xlane.f32.xlu0 %v1377
  %v1379 = vpop.xlane.xlu0 %1378
  %v1380 = vsel %vm1241, %v1172, 0.0
  %1381 = vadd.xlane.f32.xlu0 %v1380
  %v1382 = vpop.xlane.xlu0 %1381
  %v1383 = vsel %vm1241, %v1174, 0.0
  %1384 = vadd.xlane.f32.xlu0 %v1383
  %v1385 = vpop.xlane.xlu0 %1384
  %v1386 = vsel %vm1241, %v1192, 0.0
  %1387 = vadd.xlane.f32.xlu0 %v1386
  %v1388 = vpop.xlane.xlu0 %1387
  %v1389 = vsel %vm1241, %v1194, 0.0
  %1390 = vadd.xlane.f32.xlu0 %v1389
  %v1391 = vpop.xlane.xlu0 %1390
  %v1392 = vsel %vm1241, %v1196, 0.0
  %1393 = vadd.xlane.f32.xlu0 %v1392
  %v1394 = vpop.xlane.xlu0 %1393
  %v1395 = vsel %vm1241, %v1198, 0.0
  %1396 = vadd.xlane.f32.xlu0 %v1395
  %v1397 = vpop.xlane.xlu0 %1396
  %v1398 = vsel %vm1241, %v1200, 0.0
  %1399 = vadd.xlane.f32.xlu0 %v1398
  %v1400 = vpop.xlane.xlu0 %1399
  %v1401 = vsel %vm1241, %v1202, 0.0
  %1402 = vadd.xlane.f32.xlu0 %v1401
  %v1403 = vpop.xlane.xlu0 %1402
  %v1404 = vsel %vm1241, %v1204, 0.0
  %1405 = vadd.xlane.f32.xlu0 %v1404
  %v1406 = vpop.xlane.xlu0 %1405
  %v1407 = vsel %vm1241, %v1206, 0.0
  %1408 = vadd.xlane.f32.xlu0 %v1407
  %v1409 = vpop.xlane.xlu0 %1408
  %v1410 = vsel %vm1241, %v1208, 0.0
  %1411 = vadd.xlane.f32.xlu0 %v1410
  %v1412 = vpop.xlane.xlu0 %1411
  %v1413 = vsel %vm1241, %v1210, 0.0
  %1414 = vadd.xlane.f32.xlu0 %v1413
  %v1415 = vpop.xlane.xlu0 %1414
  %v1416 = vsel %vm1241, %v1212, 0.0
  %1417 = vadd.xlane.f32.xlu0 %v1416
  %v1418 = vpop.xlane.xlu0 %1417
  %v1419 = vsel %vm1241, %v1214, 0.0
  %1420 = vadd.xlane.f32.xlu0 %v1419
  %v1421 = vpop.xlane.xlu0 %1420
  %v1422 = vsel %vm1241, %v1216, 0.0
  %1423 = vadd.xlane.f32.xlu0 %v1422
  %v1424 = vpop.xlane.xlu0 %1423
  %v1425 = vsel %vm1241, %v1218, 0.0
  %1426 = vadd.xlane.f32.xlu0 %v1425
  %v1427 = vpop.xlane.xlu0 %1426
  %v1428 = vsel %vm1241, %v1220, 0.0
  %1429 = vadd.xlane.f32.xlu0 %v1428
  %v1430 = vpop.xlane.xlu0 %1429
  %v1431 = vsel %vm1241, %v1222, 0.0
  %1432 = vadd.xlane.f32.xlu0 %v1431
  %v1433 = vpop.xlane.xlu0 %1432
  %v1434 = vrcp.pop 16.0
  %v1435 = vmul.f32 16.0, %v1434
  %v1436 = vsub.f32 1.0, %v1435
  %v1437 = vmul.f32 %v1434, %v1436
  %v1438 = vadd.f32 %v1434, %v1437
  %vm1439 = vweird.f32 %v1434
  %v1440 = vsel %vm1439, %v1434, %v1438
  %v1441 = vmul.f32 %v1244, %v1440
  %v1442 = vmul.f32 %v1247, %v1440
  %v1443 = vmul.f32 %v1250, %v1440
  %v1444 = vmul.f32 %v1253, %v1440
  %v1445 = vmul.f32 %v1256, %v1440
  %v1446 = vmul.f32 %v1259, %v1440
  %v1447 = vmul.f32 %v1262, %v1440
  %v1448 = vmul.f32 %v1265, %v1440
  %v1449 = vmul.f32 %v1268, %v1440
  %v1450 = vmul.f32 %v1271, %v1440
  %v1451 = vmul.f32 %v1274, %v1440
  %v1452 = vmul.f32 %v1277, %v1440
  %v1453 = vmul.f32 %v1280, %v1440
  %v1454 = vmul.f32 %v1283, %v1440
  %v1455 = vmul.f32 %v1286, %v1440
  %v1456 = vmul.f32 %v1289, %v1440
  %v1457 = vmul.f32 %v1292, %v1440
  %v1458 = vmul.f32 %v1295, %v1440
  %v1459 = vmul.f32 %v1298, %v1440
  %v1460 = vmul.f32 %v1301, %v1440
  %v1461 = vmul.f32 %v1304, %v1440
  %v1462 = vmul.f32 %v1307, %v1440
  %v1463 = vmul.f32 %v1310, %v1440
  %v1464 = vmul.f32 %v1313, %v1440
  %v1465 = vmul.f32 %v1316, %v1440
  %v1466 = vmul.f32 %v1319, %v1440
  %v1467 = vmul.f32 %v1322, %v1440
  %v1468 = vmul.f32 %v1325, %v1440
  %v1469 = vmul.f32 %v1328, %v1440
  %v1470 = vmul.f32 %v1331, %v1440
  %v1471 = vmul.f32 %v1334, %v1440
  %v1472 = vmul.f32 %v1337, %v1440
  %v1473 = vmul.f32 %v1340, %v1440
  %v1474 = vmul.f32 %v1343, %v1440
  %v1475 = vmul.f32 %v1346, %v1440
  %v1476 = vmul.f32 %v1349, %v1440
  %v1477 = vmul.f32 %v1352, %v1440
  %v1478 = vmul.f32 %v1355, %v1440
  %v1479 = vmul.f32 %v1358, %v1440
  %v1480 = vmul.f32 %v1361, %v1440
  %v1481 = vmul.f32 %v1364, %v1440
  %v1482 = vmul.f32 %v1367, %v1440
  %v1483 = vmul.f32 %v1370, %v1440
  %v1484 = vmul.f32 %v1373, %v1440
  %v1485 = vmul.f32 %v1376, %v1440
  %v1486 = vmul.f32 %v1379, %v1440
  %v1487 = vmul.f32 %v1382, %v1440
  %v1488 = vmul.f32 %v1385, %v1440
  %v1489 = vmul.f32 %v1388, %v1440
  %v1490 = vmul.f32 %v1391, %v1440
  %v1491 = vmul.f32 %v1394, %v1440
  %v1492 = vmul.f32 %v1397, %v1440
  %v1493 = vmul.f32 %v1400, %v1440
  %v1494 = vmul.f32 %v1403, %v1440
  %v1495 = vmul.f32 %v1406, %v1440
  %v1496 = vmul.f32 %v1409, %v1440
  %v1497 = vmul.f32 %v1412, %v1440
  %v1498 = vmul.f32 %v1415, %v1440
  %v1499 = vmul.f32 %v1418, %v1440
  %v1500 = vmul.f32 %v1421, %v1440
  %v1501 = vmul.f32 %v1424, %v1440
  %v1502 = vmul.f32 %v1427, %v1440
  %v1503 = vmul.f32 %v1430, %v1440
  %v1504 = vmul.f32 %v1433, %v1440
  %v1505 = vsub.f32 %v1063, %v1441
  %v1506 = vsub.f32 %v1064, %v1442
  %v1507 = vsub.f32 %v1065, %v1443
  %v1508 = vsub.f32 %v1066, %v1444
  %v1509 = vsub.f32 %v1067, %v1445
  %v1510 = vsub.f32 %v1068, %v1446
  %v1511 = vsub.f32 %v1069, %v1447
  %v1512 = vsub.f32 %v1070, %v1448
  %v1513 = vsub.f32 %v1071, %v1449
  %v1514 = vsub.f32 %v1072, %v1450
  %v1515 = vsub.f32 %v1073, %v1451
  %v1516 = vsub.f32 %v1074, %v1452
  %v1517 = vsub.f32 %v1075, %v1453
  %v1518 = vsub.f32 %v1076, %v1454
  %v1519 = vsub.f32 %v1077, %v1455
  %v1520 = vsub.f32 %v1078, %v1456
  %v1521 = vsub.f32 %v1096, %v1457
  %v1522 = vsub.f32 %v1098, %v1458
  %v1523 = vsub.f32 %v1100, %v1459
  %v1524 = vsub.f32 %v1102, %v1460
  %v1525 = vsub.f32 %v1104, %v1461
  %v1526 = vsub.f32 %v1106, %v1462
  %v1527 = vsub.f32 %v1108, %v1463
  %v1528 = vsub.f32 %v1110, %v1464
  %v1529 = vsub.f32 %v1112, %v1465
  %v1530 = vsub.f32 %v1114, %v1466
  %v1531 = vsub.f32 %v1116, %v1467
  %v1532 = vsub.f32 %v1118, %v1468
  %v1533 = vsub.f32 %v1120, %v1469
  %v1534 = vsub.f32 %v1122, %v1470
  %v1535 = vsub.f32 %v1124, %v1471
  %v1536 = vsub.f32 %v1126, %v1472
  %v1537 = vsub.f32 %v1144, %v1473
  %v1538 = vsub.f32 %v1146, %v1474
  %v1539 = vsub.f32 %v1148, %v1475
  %v1540 = vsub.f32 %v1150, %v1476
  %v1541 = vsub.f32 %v1152, %v1477
  %v1542 = vsub.f32 %v1154, %v1478
  %v1543 = vsub.f32 %v1156, %v1479
  %v1544 = vsub.f32 %v1158, %v1480
  %v1545 = vsub.f32 %v1160, %v1481
  %v1546 = vsub.f32 %v1162, %v1482
  %v1547 = vsub.f32 %v1164, %v1483
  %v1548 = vsub.f32 %v1166, %v1484
  %v1549 = vsub.f32 %v1168, %v1485
  %v1550 = vsub.f32 %v1170, %v1486
  %v1551 = vsub.f32 %v1172, %v1487
  %v1552 = vsub.f32 %v1174, %v1488
  %v1553 = vsub.f32 %v1192, %v1489
  %v1554 = vsub.f32 %v1194, %v1490
  %v1555 = vsub.f32 %v1196, %v1491
  %v1556 = vsub.f32 %v1198, %v1492
  %v1557 = vsub.f32 %v1200, %v1493
  %v1558 = vsub.f32 %v1202, %v1494
  %v1559 = vsub.f32 %v1204, %v1495
  %v1560 = vsub.f32 %v1206, %v1496
  %v1561 = vsub.f32 %v1208, %v1497
  %v1562 = vsub.f32 %v1210, %v1498
  %v1563 = vsub.f32 %v1212, %v1499
  %v1564 = vsub.f32 %v1214, %v1500
  %v1565 = vsub.f32 %v1216, %v1501
  %v1566 = vsub.f32 %v1218, %v1502
  %v1567 = vsub.f32 %v1220, %v1503
  %v1568 = vsub.f32 %v1222, %v1504
  %v1569 = vmul.f32 %v1505, %v1505
  %v1570 = vmul.f32 %v1506, %v1506
  %v1571 = vmul.f32 %v1507, %v1507
  %v1572 = vmul.f32 %v1508, %v1508
  %v1573 = vmul.f32 %v1509, %v1509
  %v1574 = vmul.f32 %v1510, %v1510
  %v1575 = vmul.f32 %v1511, %v1511
  %v1576 = vmul.f32 %v1512, %v1512
  %v1577 = vmul.f32 %v1513, %v1513
  %v1578 = vmul.f32 %v1514, %v1514
  %v1579 = vmul.f32 %v1515, %v1515
  %v1580 = vmul.f32 %v1516, %v1516
  %v1581 = vmul.f32 %v1517, %v1517
  %v1582 = vmul.f32 %v1518, %v1518
  %v1583 = vmul.f32 %v1519, %v1519
  %v1584 = vmul.f32 %v1520, %v1520
  %v1585 = vmul.f32 %v1521, %v1521
  %v1586 = vmul.f32 %v1522, %v1522
  %v1587 = vmul.f32 %v1523, %v1523
  %v1588 = vmul.f32 %v1524, %v1524
  %v1589 = vmul.f32 %v1525, %v1525
  %v1590 = vmul.f32 %v1526, %v1526
  %v1591 = vmul.f32 %v1527, %v1527
  %v1592 = vmul.f32 %v1528, %v1528
  %v1593 = vmul.f32 %v1529, %v1529
  %v1594 = vmul.f32 %v1530, %v1530
  %v1595 = vmul.f32 %v1531, %v1531
  %v1596 = vmul.f32 %v1532, %v1532
  %v1597 = vmul.f32 %v1533, %v1533
  %v1598 = vmul.f32 %v1534, %v1534
  %v1599 = vmul.f32 %v1535, %v1535
  %v1600 = vmul.f32 %v1536, %v1536
  %v1601 = vmul.f32 %v1537, %v1537
  %v1602 = vmul.f32 %v1538, %v1538
  %v1603 = vmul.f32 %v1539, %v1539
  %v1604 = vmul.f32 %v1540, %v1540
  %v1605 = vmul.f32 %v1541, %v1541
  %v1606 = vmul.f32 %v1542, %v1542
  %v1607 = vmul.f32 %v1543, %v1543
  %v1608 = vmul.f32 %v1544, %v1544
  %v1609 = vmul.f32 %v1545, %v1545
  %v1610 = vmul.f32 %v1546, %v1546
  %v1611 = vmul.f32 %v1547, %v1547
  %v1612 = vmul.f32 %v1548, %v1548
  %v1613 = vmul.f32 %v1549, %v1549
  %v1614 = vmul.f32 %v1550, %v1550
  %v1615 = vmul.f32 %v1551, %v1551
  %v1616 = vmul.f32 %v1552, %v1552
  %v1617 = vmul.f32 %v1553, %v1553
  %v1618 = vmul.f32 %v1554, %v1554
  %v1619 = vmul.f32 %v1555, %v1555
  %v1620 = vmul.f32 %v1556, %v1556
  %v1621 = vmul.f32 %v1557, %v1557
  %v1622 = vmul.f32 %v1558, %v1558
  %v1623 = vmul.f32 %v1559, %v1559
  %v1624 = vmul.f32 %v1560, %v1560
  %v1625 = vmul.f32 %v1561, %v1561
  %v1626 = vmul.f32 %v1562, %v1562
  %v1627 = vmul.f32 %v1563, %v1563
  %v1628 = vmul.f32 %v1564, %v1564
  %v1629 = vmul.f32 %v1565, %v1565
  %v1630 = vmul.f32 %v1566, %v1566
  %v1631 = vmul.f32 %v1567, %v1567
  %v1632 = vmul.f32 %v1568, %v1568
  %v1633 = vsel %vm1241, %v1569, 0.0
  %1634 = vadd.xlane.f32.xlu0 %v1633
  %v1635 = vpop.xlane.xlu0 %1634
  %v1636 = vsel %vm1241, %v1570, 0.0
  %1637 = vadd.xlane.f32.xlu0 %v1636
  %v1638 = vpop.xlane.xlu0 %1637
  %v1639 = vsel %vm1241, %v1571, 0.0
  %1640 = vadd.xlane.f32.xlu0 %v1639
  %v1641 = vpop.xlane.xlu0 %1640
  %v1642 = vsel %vm1241, %v1572, 0.0
  %1643 = vadd.xlane.f32.xlu0 %v1642
  %v1644 = vpop.xlane.xlu0 %1643
  %v1645 = vsel %vm1241, %v1573, 0.0
  %1646 = vadd.xlane.f32.xlu0 %v1645
  %v1647 = vpop.xlane.xlu0 %1646
  %v1648 = vsel %vm1241, %v1574, 0.0
  %1649 = vadd.xlane.f32.xlu0 %v1648
  %v1650 = vpop.xlane.xlu0 %1649
  %v1651 = vsel %vm1241, %v1575, 0.0
  %1652 = vadd.xlane.f32.xlu0 %v1651
  %v1653 = vpop.xlane.xlu0 %1652
  %v1654 = vsel %vm1241, %v1576, 0.0
  %1655 = vadd.xlane.f32.xlu0 %v1654
  %v1656 = vpop.xlane.xlu0 %1655
  %v1657 = vsel %vm1241, %v1577, 0.0
  %1658 = vadd.xlane.f32.xlu0 %v1657
  %v1659 = vpop.xlane.xlu0 %1658
  %v1660 = vsel %vm1241, %v1578, 0.0
  %1661 = vadd.xlane.f32.xlu0 %v1660
  %v1662 = vpop.xlane.xlu0 %1661
  %v1663 = vsel %vm1241, %v1579, 0.0
  %1664 = vadd.xlane.f32.xlu0 %v1663
  %v1665 = vpop.xlane.xlu0 %1664
  %v1666 = vsel %vm1241, %v1580, 0.0
  %1667 = vadd.xlane.f32.xlu0 %v1666
  %v1668 = vpop.xlane.xlu0 %1667
  %v1669 = vsel %vm1241, %v1581, 0.0
  %1670 = vadd.xlane.f32.xlu0 %v1669
  %v1671 = vpop.xlane.xlu0 %1670
  %v1672 = vsel %vm1241, %v1582, 0.0
  %1673 = vadd.xlane.f32.xlu0 %v1672
  %v1674 = vpop.xlane.xlu0 %1673
  %v1675 = vsel %vm1241, %v1583, 0.0
  %1676 = vadd.xlane.f32.xlu0 %v1675
  %v1677 = vpop.xlane.xlu0 %1676
  %v1678 = vsel %vm1241, %v1584, 0.0
  %1679 = vadd.xlane.f32.xlu0 %v1678
  %v1680 = vpop.xlane.xlu0 %1679
  %v1681 = vsel %vm1241, %v1585, 0.0
  %1682 = vadd.xlane.f32.xlu0 %v1681
  %v1683 = vpop.xlane.xlu0 %1682
  %v1684 = vsel %vm1241, %v1586, 0.0
  %1685 = vadd.xlane.f32.xlu0 %v1684
  %v1686 = vpop.xlane.xlu0 %1685
  %v1687 = vsel %vm1241, %v1587, 0.0
  %1688 = vadd.xlane.f32.xlu0 %v1687
  %v1689 = vpop.xlane.xlu0 %1688
  %v1690 = vsel %vm1241, %v1588, 0.0
  %1691 = vadd.xlane.f32.xlu0 %v1690
  %v1692 = vpop.xlane.xlu0 %1691
  %v1693 = vsel %vm1241, %v1589, 0.0
  %1694 = vadd.xlane.f32.xlu0 %v1693
  %v1695 = vpop.xlane.xlu0 %1694
  %v1696 = vsel %vm1241, %v1590, 0.0
  %1697 = vadd.xlane.f32.xlu0 %v1696
  %v1698 = vpop.xlane.xlu0 %1697
  %v1699 = vsel %vm1241, %v1591, 0.0
  %1700 = vadd.xlane.f32.xlu0 %v1699
  %v1701 = vpop.xlane.xlu0 %1700
  %v1702 = vsel %vm1241, %v1592, 0.0
  %1703 = vadd.xlane.f32.xlu0 %v1702
  %v1704 = vpop.xlane.xlu0 %1703
  %v1705 = vsel %vm1241, %v1593, 0.0
  %1706 = vadd.xlane.f32.xlu0 %v1705
  %v1707 = vpop.xlane.xlu0 %1706
  %v1708 = vsel %vm1241, %v1594, 0.0
  %1709 = vadd.xlane.f32.xlu0 %v1708
  %v1710 = vpop.xlane.xlu0 %1709
  %v1711 = vsel %vm1241, %v1595, 0.0
  %1712 = vadd.xlane.f32.xlu0 %v1711
  %v1713 = vpop.xlane.xlu0 %1712
  %v1714 = vsel %vm1241, %v1596, 0.0
  %1715 = vadd.xlane.f32.xlu0 %v1714
  %v1716 = vpop.xlane.xlu0 %1715
  %v1717 = vsel %vm1241, %v1597, 0.0
  %1718 = vadd.xlane.f32.xlu0 %v1717
  %v1719 = vpop.xlane.xlu0 %1718
  %v1720 = vsel %vm1241, %v1598, 0.0
  %1721 = vadd.xlane.f32.xlu0 %v1720
  %v1722 = vpop.xlane.xlu0 %1721
  %v1723 = vsel %vm1241, %v1599, 0.0
  %1724 = vadd.xlane.f32.xlu0 %v1723
  %v1725 = vpop.xlane.xlu0 %1724
  %v1726 = vsel %vm1241, %v1600, 0.0
  %1727 = vadd.xlane.f32.xlu0 %v1726
  %v1728 = vpop.xlane.xlu0 %1727
  %v1729 = vsel %vm1241, %v1601, 0.0
  %1730 = vadd.xlane.f32.xlu0 %v1729
  %v1731 = vpop.xlane.xlu0 %1730
  %v1732 = vsel %vm1241, %v1602, 0.0
  %1733 = vadd.xlane.f32.xlu0 %v1732
  %v1734 = vpop.xlane.xlu0 %1733
  %v1735 = vsel %vm1241, %v1603, 0.0
  %1736 = vadd.xlane.f32.xlu0 %v1735
  %v1737 = vpop.xlane.xlu0 %1736
  %v1738 = vsel %vm1241, %v1604, 0.0
  %1739 = vadd.xlane.f32.xlu0 %v1738
  %v1740 = vpop.xlane.xlu0 %1739
  %v1741 = vsel %vm1241, %v1605, 0.0
  %1742 = vadd.xlane.f32.xlu0 %v1741
  %v1743 = vpop.xlane.xlu0 %1742
  %v1744 = vsel %vm1241, %v1606, 0.0
  %1745 = vadd.xlane.f32.xlu0 %v1744
  %v1746 = vpop.xlane.xlu0 %1745
  %v1747 = vsel %vm1241, %v1607, 0.0
  %1748 = vadd.xlane.f32.xlu0 %v1747
  %v1749 = vpop.xlane.xlu0 %1748
  %v1750 = vsel %vm1241, %v1608, 0.0
  %1751 = vadd.xlane.f32.xlu0 %v1750
  %v1752 = vpop.xlane.xlu0 %1751
  %v1753 = vsel %vm1241, %v1609, 0.0
  %1754 = vadd.xlane.f32.xlu0 %v1753
  %v1755 = vpop.xlane.xlu0 %1754
  %v1756 = vsel %vm1241, %v1610, 0.0
  %1757 = vadd.xlane.f32.xlu0 %v1756
  %v1758 = vpop.xlane.xlu0 %1757
  %v1759 = vsel %vm1241, %v1611, 0.0
  %1760 = vadd.xlane.f32.xlu0 %v1759
  %v1761 = vpop.xlane.xlu0 %1760
  %v1762 = vsel %vm1241, %v1612, 0.0
  %1763 = vadd.xlane.f32.xlu0 %v1762
  %v1764 = vpop.xlane.xlu0 %1763
  %v1765 = vsel %vm1241, %v1613, 0.0
  %1766 = vadd.xlane.f32.xlu0 %v1765
  %v1767 = vpop.xlane.xlu0 %1766
  %v1768 = vsel %vm1241, %v1614, 0.0
  %1769 = vadd.xlane.f32.xlu0 %v1768
  %v1770 = vpop.xlane.xlu0 %1769
  %v1771 = vsel %vm1241, %v1615, 0.0
  %1772 = vadd.xlane.f32.xlu0 %v1771
  %v1773 = vpop.xlane.xlu0 %1772
  %v1774 = vsel %vm1241, %v1616, 0.0
  %1775 = vadd.xlane.f32.xlu0 %v1774
  %v1776 = vpop.xlane.xlu0 %1775
  %v1777 = vsel %vm1241, %v1617, 0.0
  %1778 = vadd.xlane.f32.xlu0 %v1777
  %v1779 = vpop.xlane.xlu0 %1778
  %v1780 = vsel %vm1241, %v1618, 0.0
  %1781 = vadd.xlane.f32.xlu0 %v1780
  %v1782 = vpop.xlane.xlu0 %1781
  %v1783 = vsel %vm1241, %v1619, 0.0
  %1784 = vadd.xlane.f32.xlu0 %v1783
  %v1785 = vpop.xlane.xlu0 %1784
  %v1786 = vsel %vm1241, %v1620, 0.0
  %1787 = vadd.xlane.f32.xlu0 %v1786
  %v1788 = vpop.xlane.xlu0 %1787
  %v1789 = vsel %vm1241, %v1621, 0.0
  %1790 = vadd.xlane.f32.xlu0 %v1789
  %v1791 = vpop.xlane.xlu0 %1790
  %v1792 = vsel %vm1241, %v1622, 0.0
  %1793 = vadd.xlane.f32.xlu0 %v1792
  %v1794 = vpop.xlane.xlu0 %1793
  %v1795 = vsel %vm1241, %v1623, 0.0
  %1796 = vadd.xlane.f32.xlu0 %v1795
  %v1797 = vpop.xlane.xlu0 %1796
  %v1798 = vsel %vm1241, %v1624, 0.0
  %1799 = vadd.xlane.f32.xlu0 %v1798
  %v1800 = vpop.xlane.xlu0 %1799
  %v1801 = vsel %vm1241, %v1625, 0.0
  %1802 = vadd.xlane.f32.xlu0 %v1801
  %v1803 = vpop.xlane.xlu0 %1802
  %v1804 = vsel %vm1241, %v1626, 0.0
  %1805 = vadd.xlane.f32.xlu0 %v1804
  %v1806 = vpop.xlane.xlu0 %1805
  %v1807 = vsel %vm1241, %v1627, 0.0
  %1808 = vadd.xlane.f32.xlu0 %v1807
  %v1809 = vpop.xlane.xlu0 %1808
  %v1810 = vsel %vm1241, %v1628, 0.0
  %1811 = vadd.xlane.f32.xlu0 %v1810
  %v1812 = vpop.xlane.xlu0 %1811
  %v1813 = vsel %vm1241, %v1629, 0.0
  %1814 = vadd.xlane.f32.xlu0 %v1813
  %v1815 = vpop.xlane.xlu0 %1814
  %v1816 = vsel %vm1241, %v1630, 0.0
  %1817 = vadd.xlane.f32.xlu0 %v1816
  %v1818 = vpop.xlane.xlu0 %1817
  %v1819 = vsel %vm1241, %v1631, 0.0
  %1820 = vadd.xlane.f32.xlu0 %v1819
  %v1821 = vpop.xlane.xlu0 %1820
  %v1822 = vsel %vm1241, %v1632, 0.0
  %1823 = vadd.xlane.f32.xlu0 %v1822
  %v1824 = vpop.xlane.xlu0 %1823
  %v1825 = vmul.f32 %v1635, %v1440
  %v1826 = vmul.f32 %v1638, %v1440
  %v1827 = vmul.f32 %v1641, %v1440
  %v1828 = vmul.f32 %v1644, %v1440
  %v1829 = vmul.f32 %v1647, %v1440
  %v1830 = vmul.f32 %v1650, %v1440
  %v1831 = vmul.f32 %v1653, %v1440
  %v1832 = vmul.f32 %v1656, %v1440
  %v1833 = vmul.f32 %v1659, %v1440
  %v1834 = vmul.f32 %v1662, %v1440
  %v1835 = vmul.f32 %v1665, %v1440
  %v1836 = vmul.f32 %v1668, %v1440
  %v1837 = vmul.f32 %v1671, %v1440
  %v1838 = vmul.f32 %v1674, %v1440
  %v1839 = vmul.f32 %v1677, %v1440
  %v1840 = vmul.f32 %v1680, %v1440
  %v1841 = vmul.f32 %v1683, %v1440
  %v1842 = vmul.f32 %v1686, %v1440
  %v1843 = vmul.f32 %v1689, %v1440
  %v1844 = vmul.f32 %v1692, %v1440
  %v1845 = vmul.f32 %v1695, %v1440
  %v1846 = vmul.f32 %v1698, %v1440
  %v1847 = vmul.f32 %v1701, %v1440
  %v1848 = vmul.f32 %v1704, %v1440
  %v1849 = vmul.f32 %v1707, %v1440
  %v1850 = vmul.f32 %v1710, %v1440
  %v1851 = vmul.f32 %v1713, %v1440
  %v1852 = vmul.f32 %v1716, %v1440
  %v1853 = vmul.f32 %v1719, %v1440
  %v1854 = vmul.f32 %v1722, %v1440
  %v1855 = vmul.f32 %v1725, %v1440
  %v1856 = vmul.f32 %v1728, %v1440
  %v1857 = vmul.f32 %v1731, %v1440
  %v1858 = vmul.f32 %v1734, %v1440
  %v1859 = vmul.f32 %v1737, %v1440
  %v1860 = vmul.f32 %v1740, %v1440
  %v1861 = vmul.f32 %v1743, %v1440
  %v1862 = vmul.f32 %v1746, %v1440
  %v1863 = vmul.f32 %v1749, %v1440
  %v1864 = vmul.f32 %v1752, %v1440
  %v1865 = vmul.f32 %v1755, %v1440
  %v1866 = vmul.f32 %v1758, %v1440
  %v1867 = vmul.f32 %v1761, %v1440
  %v1868 = vmul.f32 %v1764, %v1440
  %v1869 = vmul.f32 %v1767, %v1440
  %v1870 = vmul.f32 %v1770, %v1440
  %v1871 = vmul.f32 %v1773, %v1440
  %v1872 = vmul.f32 %v1776, %v1440
  %v1873 = vmul.f32 %v1779, %v1440
  %v1874 = vmul.f32 %v1782, %v1440
  %v1875 = vmul.f32 %v1785, %v1440
  %v1876 = vmul.f32 %v1788, %v1440
  %v1877 = vmul.f32 %v1791, %v1440
  %v1878 = vmul.f32 %v1794, %v1440
  %v1879 = vmul.f32 %v1797, %v1440
  %v1880 = vmul.f32 %v1800, %v1440
  %v1881 = vmul.f32 %v1803, %v1440
  %v1882 = vmul.f32 %v1806, %v1440
  %v1883 = vmul.f32 %v1809, %v1440
  %v1884 = vmul.f32 %v1812, %v1440
  %v1885 = vmul.f32 %v1815, %v1440
  %v1886 = vmul.f32 %v1818, %v1440
  %v1887 = vmul.f32 %v1821, %v1440
  %v1888 = vmul.f32 %v1824, %v1440
  %v1889 = vadd.f32 %v1825, 1e-05
  %v1890 = vadd.f32 %v1826, 1e-05
  %v1891 = vadd.f32 %v1827, 1e-05
  %v1892 = vadd.f32 %v1828, 1e-05
  %v1893 = vadd.f32 %v1829, 1e-05
  %v1894 = vadd.f32 %v1830, 1e-05
  %v1895 = vadd.f32 %v1831, 1e-05
  %v1896 = vadd.f32 %v1832, 1e-05
  %v1897 = vadd.f32 %v1833, 1e-05
  %v1898 = vadd.f32 %v1834, 1e-05
  %v1899 = vadd.f32 %v1835, 1e-05
  %v1900 = vadd.f32 %v1836, 1e-05
  %v1901 = vadd.f32 %v1837, 1e-05
  %v1902 = vadd.f32 %v1838, 1e-05
  %v1903 = vadd.f32 %v1839, 1e-05
  %v1904 = vadd.f32 %v1840, 1e-05
  %v1905 = vadd.f32 %v1841, 1e-05
  %v1906 = vadd.f32 %v1842, 1e-05
  %v1907 = vadd.f32 %v1843, 1e-05
  %v1908 = vadd.f32 %v1844, 1e-05
  %v1909 = vadd.f32 %v1845, 1e-05
  %v1910 = vadd.f32 %v1846, 1e-05
  %v1911 = vadd.f32 %v1847, 1e-05
  %v1912 = vadd.f32 %v1848, 1e-05
  %v1913 = vadd.f32 %v1849, 1e-05
  %v1914 = vadd.f32 %v1850, 1e-05
  %v1915 = vadd.f32 %v1851, 1e-05
  %v1916 = vadd.f32 %v1852, 1e-05
  %v1917 = vadd.f32 %v1853, 1e-05
  %v1918 = vadd.f32 %v1854, 1e-05
  %v1919 = vadd.f32 %v1855, 1e-05
  %v1920 = vadd.f32 %v1856, 1e-05
  %v1921 = vadd.f32 %v1857, 1e-05
  %v1922 = vadd.f32 %v1858, 1e-05
  %v1923 = vadd.f32 %v1859, 1e-05
  %v1924 = vadd.f32 %v1860, 1e-05
  %v1925 = vadd.f32 %v1861, 1e-05
  %v1926 = vadd.f32 %v1862, 1e-05
  %v1927 = vadd.f32 %v1863, 1e-05
  %v1928 = vadd.f32 %v1864, 1e-05
  %v1929 = vadd.f32 %v1865, 1e-05
  %v1930 = vadd.f32 %v1866, 1e-05
  %v1931 = vadd.f32 %v1867, 1e-05
  %v1932 = vadd.f32 %v1868, 1e-05
  %v1933 = vadd.f32 %v1869, 1e-05
  %v1934 = vadd.f32 %v1870, 1e-05
  %v1935 = vadd.f32 %v1871, 1e-05
  %v1936 = vadd.f32 %v1872, 1e-05
  %v1937 = vadd.f32 %v1873, 1e-05
  %v1938 = vadd.f32 %v1874, 1e-05
  %v1939 = vadd.f32 %v1875, 1e-05
  %v1940 = vadd.f32 %v1876, 1e-05
  %v1941 = vadd.f32 %v1877, 1e-05
  %v1942 = vadd.f32 %v1878, 1e-05
  %v1943 = vadd.f32 %v1879, 1e-05
  %v1944 = vadd.f32 %v1880, 1e-05
  %v1945 = vadd.f32 %v1881, 1e-05
  %v1946 = vadd.f32 %v1882, 1e-05
  %v1947 = vadd.f32 %v1883, 1e-05
  %v1948 = vadd.f32 %v1884, 1e-05
  %v1949 = vadd.f32 %v1885, 1e-05
  %v1950 = vadd.f32 %v1886, 1e-05
  %v1951 = vadd.f32 %v1887, 1e-05
  %v1952 = vadd.f32 %v1888, 1e-05
  %v1953 = vrsqrt.pop %v1889
  %v1954 = vmul.f32 %v1953, %v1889
  %v1955 = vmul.f32 %v1954, %v1953
  %v1956 = vmul.f32 0.5, %v1955
  %v1957 = vsub.f32 1.5, %v1956
  %v1958 = vmul.f32 %v1953, %v1957
  %vm1959 = vweird.f32 %v1889
  %vm1960 = vweird.f32 %v1953
  %vm1961 = vmor %vm1959, %vm1960
  %v1962 = vsel %vm1961, %v1953, %v1958
  %v1963 = vrsqrt.pop %v1890
  %v1964 = vmul.f32 %v1963, %v1890
  %v1965 = vmul.f32 %v1964, %v1963
  %v1966 = vmul.f32 0.5, %v1965
  %v1967 = vsub.f32 1.5, %v1966
  %v1968 = vmul.f32 %v1963, %v1967
  %vm1969 = vweird.f32 %v1890
  %vm1970 = vweird.f32 %v1963
  %vm1971 = vmor %vm1969, %vm1970
  %v1972 = vsel %vm1971, %v1963, %v1968
  %v1973 = vrsqrt.pop %v1891
  %v1974 = vmul.f32 %v1973, %v1891
  %v1975 = vmul.f32 %v1974, %v1973
  %v1976 = vmul.f32 0.5, %v1975
  %v1977 = vsub.f32 1.5, %v1976
  %v1978 = vmul.f32 %v1973, %v1977
  %vm1979 = vweird.f32 %v1891
  %vm1980 = vweird.f32 %v1973
  %vm1981 = vmor %vm1979, %vm1980
  %v1982 = vsel %vm1981, %v1973, %v1978
  %v1983 = vrsqrt.pop %v1892
  %v1984 = vmul.f32 %v1983, %v1892
  %v1985 = vmul.f32 %v1984, %v1983
  %v1986 = vmul.f32 0.5, %v1985
  %v1987 = vsub.f32 1.5, %v1986
  %v1988 = vmul.f32 %v1983, %v1987
  %vm1989 = vweird.f32 %v1892
  %vm1990 = vweird.f32 %v1983
  %vm1991 = vmor %vm1989, %vm1990
  %v1992 = vsel %vm1991, %v1983, %v1988
  %v1993 = vrsqrt.pop %v1893
  %v1994 = vmul.f32 %v1993, %v1893
  %v1995 = vmul.f32 %v1994, %v1993
  %v1996 = vmul.f32 0.5, %v1995
  %v1997 = vsub.f32 1.5, %v1996
  %v1998 = vmul.f32 %v1993, %v1997
  %vm1999 = vweird.f32 %v1893
  %vm2000 = vweird.f32 %v1993
  %vm2001 = vmor %vm1999, %vm2000
  %v2002 = vsel %vm2001, %v1993, %v1998
  %v2003 = vrsqrt.pop %v1894
  %v2004 = vmul.f32 %v2003, %v1894
  %v2005 = vmul.f32 %v2004, %v2003
  %v2006 = vmul.f32 0.5, %v2005
  %v2007 = vsub.f32 1.5, %v2006
  %v2008 = vmul.f32 %v2003, %v2007
  %vm2009 = vweird.f32 %v1894
  %vm2010 = vweird.f32 %v2003
  %vm2011 = vmor %vm2009, %vm2010
  %v2012 = vsel %vm2011, %v2003, %v2008
  %v2013 = vrsqrt.pop %v1895
  %v2014 = vmul.f32 %v2013, %v1895
  %v2015 = vmul.f32 %v2014, %v2013
  %v2016 = vmul.f32 0.5, %v2015
  %v2017 = vsub.f32 1.5, %v2016
  %v2018 = vmul.f32 %v2013, %v2017
  %vm2019 = vweird.f32 %v1895
  %vm2020 = vweird.f32 %v2013
  %vm2021 = vmor %vm2019, %vm2020
  %v2022 = vsel %vm2021, %v2013, %v2018
  %v2023 = vrsqrt.pop %v1896
  %v2024 = vmul.f32 %v2023, %v1896
  %v2025 = vmul.f32 %v2024, %v2023
  %v2026 = vmul.f32 0.5, %v2025
  %v2027 = vsub.f32 1.5, %v2026
  %v2028 = vmul.f32 %v2023, %v2027
  %vm2029 = vweird.f32 %v1896
  %vm2030 = vweird.f32 %v2023
  %vm2031 = vmor %vm2029, %vm2030
  %v2032 = vsel %vm2031, %v2023, %v2028
  %v2033 = vrsqrt.pop %v1897
  %v2034 = vmul.f32 %v2033, %v1897
  %v2035 = vmul.f32 %v2034, %v2033
  %v2036 = vmul.f32 0.5, %v2035
  %v2037 = vsub.f32 1.5, %v2036
  %v2038 = vmul.f32 %v2033, %v2037
  %vm2039 = vweird.f32 %v1897
  %vm2040 = vweird.f32 %v2033
  %vm2041 = vmor %vm2039, %vm2040
  %v2042 = vsel %vm2041, %v2033, %v2038
  %v2043 = vrsqrt.pop %v1898
  %v2044 = vmul.f32 %v2043, %v1898
  %v2045 = vmul.f32 %v2044, %v2043
  %v2046 = vmul.f32 0.5, %v2045
  %v2047 = vsub.f32 1.5, %v2046
  %v2048 = vmul.f32 %v2043, %v2047
  %vm2049 = vweird.f32 %v1898
  %vm2050 = vweird.f32 %v2043
  %vm2051 = vmor %vm2049, %vm2050
  %v2052 = vsel %vm2051, %v2043, %v2048
  %v2053 = vrsqrt.pop %v1899
  %v2054 = vmul.f32 %v2053, %v1899
  %v2055 = vmul.f32 %v2054, %v2053
  %v2056 = vmul.f32 0.5, %v2055
  %v2057 = vsub.f32 1.5, %v2056
  %v2058 = vmul.f32 %v2053, %v2057
  %vm2059 = vweird.f32 %v1899
  %vm2060 = vweird.f32 %v2053
  %vm2061 = vmor %vm2059, %vm2060
  %v2062 = vsel %vm2061, %v2053, %v2058
  %v2063 = vrsqrt.pop %v1900
  %v2064 = vmul.f32 %v2063, %v1900
  %v2065 = vmul.f32 %v2064, %v2063
  %v2066 = vmul.f32 0.5, %v2065
  %v2067 = vsub.f32 1.5, %v2066
  %v2068 = vmul.f32 %v2063, %v2067
  %vm2069 = vweird.f32 %v1900
  %vm2070 = vweird.f32 %v2063
  %vm2071 = vmor %vm2069, %vm2070
  %v2072 = vsel %vm2071, %v2063, %v2068
  %v2073 = vrsqrt.pop %v1901
  %v2074 = vmul.f32 %v2073, %v1901
  %v2075 = vmul.f32 %v2074, %v2073
  %v2076 = vmul.f32 0.5, %v2075
  %v2077 = vsub.f32 1.5, %v2076
  %v2078 = vmul.f32 %v2073, %v2077
  %vm2079 = vweird.f32 %v1901
  %vm2080 = vweird.f32 %v2073
  %vm2081 = vmor %vm2079, %vm2080
  %v2082 = vsel %vm2081, %v2073, %v2078
  %v2083 = vrsqrt.pop %v1902
  %v2084 = vmul.f32 %v2083, %v1902
  %v2085 = vmul.f32 %v2084, %v2083
  %v2086 = vmul.f32 0.5, %v2085
  %v2087 = vsub.f32 1.5, %v2086
  %v2088 = vmul.f32 %v2083, %v2087
  %vm2089 = vweird.f32 %v1902
  %vm2090 = vweird.f32 %v2083
  %vm2091 = vmor %vm2089, %vm2090
  %v2092 = vsel %vm2091, %v2083, %v2088
  %v2093 = vrsqrt.pop %v1903
  %v2094 = vmul.f32 %v2093, %v1903
  %v2095 = vmul.f32 %v2094, %v2093
  %v2096 = vmul.f32 0.5, %v2095
  %v2097 = vsub.f32 1.5, %v2096
  %v2098 = vmul.f32 %v2093, %v2097
  %vm2099 = vweird.f32 %v1903
  %vm2100 = vweird.f32 %v2093
  %vm2101 = vmor %vm2099, %vm2100
  %v2102 = vsel %vm2101, %v2093, %v2098
  %v2103 = vrsqrt.pop %v1904
  %v2104 = vmul.f32 %v2103, %v1904
  %v2105 = vmul.f32 %v2104, %v2103
  %v2106 = vmul.f32 0.5, %v2105
  %v2107 = vsub.f32 1.5, %v2106
  %v2108 = vmul.f32 %v2103, %v2107
  %vm2109 = vweird.f32 %v1904
  %vm2110 = vweird.f32 %v2103
  %vm2111 = vmor %vm2109, %vm2110
  %v2112 = vsel %vm2111, %v2103, %v2108
  %v2113 = vrsqrt.pop %v1905
  %v2114 = vmul.f32 %v2113, %v1905
  %v2115 = vmul.f32 %v2114, %v2113
  %v2116 = vmul.f32 0.5, %v2115
  %v2117 = vsub.f32 1.5, %v2116
  %v2118 = vmul.f32 %v2113, %v2117
  %vm2119 = vweird.f32 %v1905
  %vm2120 = vweird.f32 %v2113
  %vm2121 = vmor %vm2119, %vm2120
  %v2122 = vsel %vm2121, %v2113, %v2118
  %v2123 = vrsqrt.pop %v1906
  %v2124 = vmul.f32 %v2123, %v1906
  %v2125 = vmul.f32 %v2124, %v2123
  %v2126 = vmul.f32 0.5, %v2125
  %v2127 = vsub.f32 1.5, %v2126
  %v2128 = vmul.f32 %v2123, %v2127
  %vm2129 = vweird.f32 %v1906
  %vm2130 = vweird.f32 %v2123
  %vm2131 = vmor %vm2129, %vm2130
  %v2132 = vsel %vm2131, %v2123, %v2128
  %v2133 = vrsqrt.pop %v1907
  %v2134 = vmul.f32 %v2133, %v1907
  %v2135 = vmul.f32 %v2134, %v2133
  %v2136 = vmul.f32 0.5, %v2135
  %v2137 = vsub.f32 1.5, %v2136
  %v2138 = vmul.f32 %v2133, %v2137
  %vm2139 = vweird.f32 %v1907
  %vm2140 = vweird.f32 %v2133
  %vm2141 = vmor %vm2139, %vm2140
  %v2142 = vsel %vm2141, %v2133, %v2138
  %v2143 = vrsqrt.pop %v1908
  %v2144 = vmul.f32 %v2143, %v1908
  %v2145 = vmul.f32 %v2144, %v2143
  %v2146 = vmul.f32 0.5, %v2145
  %v2147 = vsub.f32 1.5, %v2146
  %v2148 = vmul.f32 %v2143, %v2147
  %vm2149 = vweird.f32 %v1908
  %vm2150 = vweird.f32 %v2143
  %vm2151 = vmor %vm2149, %vm2150
  %v2152 = vsel %vm2151, %v2143, %v2148
  %v2153 = vrsqrt.pop %v1909
  %v2154 = vmul.f32 %v2153, %v1909
  %v2155 = vmul.f32 %v2154, %v2153
  %v2156 = vmul.f32 0.5, %v2155
  %v2157 = vsub.f32 1.5, %v2156
  %v2158 = vmul.f32 %v2153, %v2157
  %vm2159 = vweird.f32 %v1909
  %vm2160 = vweird.f32 %v2153
  %vm2161 = vmor %vm2159, %vm2160
  %v2162 = vsel %vm2161, %v2153, %v2158
  %v2163 = vrsqrt.pop %v1910
  %v2164 = vmul.f32 %v2163, %v1910
  %v2165 = vmul.f32 %v2164, %v2163
  %v2166 = vmul.f32 0.5, %v2165
  %v2167 = vsub.f32 1.5, %v2166
  %v2168 = vmul.f32 %v2163, %v2167
  %vm2169 = vweird.f32 %v1910
  %vm2170 = vweird.f32 %v2163
  %vm2171 = vmor %vm2169, %vm2170
  %v2172 = vsel %vm2171, %v2163, %v2168
  %v2173 = vrsqrt.pop %v1911
  %v2174 = vmul.f32 %v2173, %v1911
  %v2175 = vmul.f32 %v2174, %v2173
  %v2176 = vmul.f32 0.5, %v2175
  %v2177 = vsub.f32 1.5, %v2176
  %v2178 = vmul.f32 %v2173, %v2177
  %vm2179 = vweird.f32 %v1911
  %vm2180 = vweird.f32 %v2173
  %vm2181 = vmor %vm2179, %vm2180
  %v2182 = vsel %vm2181, %v2173, %v2178
  %v2183 = vrsqrt.pop %v1912
  %v2184 = vmul.f32 %v2183, %v1912
  %v2185 = vmul.f32 %v2184, %v2183
  %v2186 = vmul.f32 0.5, %v2185
  %v2187 = vsub.f32 1.5, %v2186
  %v2188 = vmul.f32 %v2183, %v2187
  %vm2189 = vweird.f32 %v1912
  %vm2190 = vweird.f32 %v2183
  %vm2191 = vmor %vm2189, %vm2190
  %v2192 = vsel %vm2191, %v2183, %v2188
  %v2193 = vrsqrt.pop %v1913
  %v2194 = vmul.f32 %v2193, %v1913
  %v2195 = vmul.f32 %v2194, %v2193
  %v2196 = vmul.f32 0.5, %v2195
  %v2197 = vsub.f32 1.5, %v2196
  %v2198 = vmul.f32 %v2193, %v2197
  %vm2199 = vweird.f32 %v1913
  %vm2200 = vweird.f32 %v2193
  %vm2201 = vmor %vm2199, %vm2200
  %v2202 = vsel %vm2201, %v2193, %v2198
  %v2203 = vrsqrt.pop %v1914
  %v2204 = vmul.f32 %v2203, %v1914
  %v2205 = vmul.f32 %v2204, %v2203
  %v2206 = vmul.f32 0.5, %v2205
  %v2207 = vsub.f32 1.5, %v2206
  %v2208 = vmul.f32 %v2203, %v2207
  %vm2209 = vweird.f32 %v1914
  %vm2210 = vweird.f32 %v2203
  %vm2211 = vmor %vm2209, %vm2210
  %v2212 = vsel %vm2211, %v2203, %v2208
  %v2213 = vrsqrt.pop %v1915
  %v2214 = vmul.f32 %v2213, %v1915
  %v2215 = vmul.f32 %v2214, %v2213
  %v2216 = vmul.f32 0.5, %v2215
  %v2217 = vsub.f32 1.5, %v2216
  %v2218 = vmul.f32 %v2213, %v2217
  %vm2219 = vweird.f32 %v1915
  %vm2220 = vweird.f32 %v2213
  %vm2221 = vmor %vm2219, %vm2220
  %v2222 = vsel %vm2221, %v2213, %v2218
  %v2223 = vrsqrt.pop %v1916
  %v2224 = vmul.f32 %v2223, %v1916
  %v2225 = vmul.f32 %v2224, %v2223
  %v2226 = vmul.f32 0.5, %v2225
  %v2227 = vsub.f32 1.5, %v2226
  %v2228 = vmul.f32 %v2223, %v2227
  %vm2229 = vweird.f32 %v1916
  %vm2230 = vweird.f32 %v2223
  %vm2231 = vmor %vm2229, %vm2230
  %v2232 = vsel %vm2231, %v2223, %v2228
  %v2233 = vrsqrt.pop %v1917
  %v2234 = vmul.f32 %v2233, %v1917
  %v2235 = vmul.f32 %v2234, %v2233
  %v2236 = vmul.f32 0.5, %v2235
  %v2237 = vsub.f32 1.5, %v2236
  %v2238 = vmul.f32 %v2233, %v2237
  %vm2239 = vweird.f32 %v1917
  %vm2240 = vweird.f32 %v2233
  %vm2241 = vmor %vm2239, %vm2240
  %v2242 = vsel %vm2241, %v2233, %v2238
  %v2243 = vrsqrt.pop %v1918
  %v2244 = vmul.f32 %v2243, %v1918
  %v2245 = vmul.f32 %v2244, %v2243
  %v2246 = vmul.f32 0.5, %v2245
  %v2247 = vsub.f32 1.5, %v2246
  %v2248 = vmul.f32 %v2243, %v2247
  %vm2249 = vweird.f32 %v1918
  %vm2250 = vweird.f32 %v2243
  %vm2251 = vmor %vm2249, %vm2250
  %v2252 = vsel %vm2251, %v2243, %v2248
  %v2253 = vrsqrt.pop %v1919
  %v2254 = vmul.f32 %v2253, %v1919
  %v2255 = vmul.f32 %v2254, %v2253
  %v2256 = vmul.f32 0.5, %v2255
  %v2257 = vsub.f32 1.5, %v2256
  %v2258 = vmul.f32 %v2253, %v2257
  %vm2259 = vweird.f32 %v1919
  %vm2260 = vweird.f32 %v2253
  %vm2261 = vmor %vm2259, %vm2260
  %v2262 = vsel %vm2261, %v2253, %v2258
  %v2263 = vrsqrt.pop %v1920
  %v2264 = vmul.f32 %v2263, %v1920
  %v2265 = vmul.f32 %v2264, %v2263
  %v2266 = vmul.f32 0.5, %v2265
  %v2267 = vsub.f32 1.5, %v2266
  %v2268 = vmul.f32 %v2263, %v2267
  %vm2269 = vweird.f32 %v1920
  %vm2270 = vweird.f32 %v2263
  %vm2271 = vmor %vm2269, %vm2270
  %v2272 = vsel %vm2271, %v2263, %v2268
  %v2273 = vrsqrt.pop %v1921
  %v2274 = vmul.f32 %v2273, %v1921
  %v2275 = vmul.f32 %v2274, %v2273
  %v2276 = vmul.f32 0.5, %v2275
  %v2277 = vsub.f32 1.5, %v2276
  %v2278 = vmul.f32 %v2273, %v2277
  %vm2279 = vweird.f32 %v1921
  %vm2280 = vweird.f32 %v2273
  %vm2281 = vmor %vm2279, %vm2280
  %v2282 = vsel %vm2281, %v2273, %v2278
  %v2283 = vrsqrt.pop %v1922
  %v2284 = vmul.f32 %v2283, %v1922
  %v2285 = vmul.f32 %v2284, %v2283
  %v2286 = vmul.f32 0.5, %v2285
  %v2287 = vsub.f32 1.5, %v2286
  %v2288 = vmul.f32 %v2283, %v2287
  %vm2289 = vweird.f32 %v1922
  %vm2290 = vweird.f32 %v2283
  %vm2291 = vmor %vm2289, %vm2290
  %v2292 = vsel %vm2291, %v2283, %v2288
  %v2293 = vrsqrt.pop %v1923
  %v2294 = vmul.f32 %v2293, %v1923
  %v2295 = vmul.f32 %v2294, %v2293
  %v2296 = vmul.f32 0.5, %v2295
  %v2297 = vsub.f32 1.5, %v2296
  %v2298 = vmul.f32 %v2293, %v2297
  %vm2299 = vweird.f32 %v1923
  %vm2300 = vweird.f32 %v2293
  %vm2301 = vmor %vm2299, %vm2300
  %v2302 = vsel %vm2301, %v2293, %v2298
  %v2303 = vrsqrt.pop %v1924
  %v2304 = vmul.f32 %v2303, %v1924
  %v2305 = vmul.f32 %v2304, %v2303
  %v2306 = vmul.f32 0.5, %v2305
  %v2307 = vsub.f32 1.5, %v2306
  %v2308 = vmul.f32 %v2303, %v2307
  %vm2309 = vweird.f32 %v1924
  %vm2310 = vweird.f32 %v2303
  %vm2311 = vmor %vm2309, %vm2310
  %v2312 = vsel %vm2311, %v2303, %v2308
  %v2313 = vrsqrt.pop %v1925
  %v2314 = vmul.f32 %v2313, %v1925
  %v2315 = vmul.f32 %v2314, %v2313
  %v2316 = vmul.f32 0.5, %v2315
  %v2317 = vsub.f32 1.5, %v2316
  %v2318 = vmul.f32 %v2313, %v2317
  %vm2319 = vweird.f32 %v1925
  %vm2320 = vweird.f32 %v2313
  %vm2321 = vmor %vm2319, %vm2320
  %v2322 = vsel %vm2321, %v2313, %v2318
  %v2323 = vrsqrt.pop %v1926
  %v2324 = vmul.f32 %v2323, %v1926
  %v2325 = vmul.f32 %v2324, %v2323
  %v2326 = vmul.f32 0.5, %v2325
  %v2327 = vsub.f32 1.5, %v2326
  %v2328 = vmul.f32 %v2323, %v2327
  %vm2329 = vweird.f32 %v1926
  %vm2330 = vweird.f32 %v2323
  %vm2331 = vmor %vm2329, %vm2330
  %v2332 = vsel %vm2331, %v2323, %v2328
  %v2333 = vrsqrt.pop %v1927
  %v2334 = vmul.f32 %v2333, %v1927
  %v2335 = vmul.f32 %v2334, %v2333
  %v2336 = vmul.f32 0.5, %v2335
  %v2337 = vsub.f32 1.5, %v2336
  %v2338 = vmul.f32 %v2333, %v2337
  %vm2339 = vweird.f32 %v1927
  %vm2340 = vweird.f32 %v2333
  %vm2341 = vmor %vm2339, %vm2340
  %v2342 = vsel %vm2341, %v2333, %v2338
  %v2343 = vrsqrt.pop %v1928
  %v2344 = vmul.f32 %v2343, %v1928
  %v2345 = vmul.f32 %v2344, %v2343
  %v2346 = vmul.f32 0.5, %v2345
  %v2347 = vsub.f32 1.5, %v2346
  %v2348 = vmul.f32 %v2343, %v2347
  %vm2349 = vweird.f32 %v1928
  %vm2350 = vweird.f32 %v2343
  %vm2351 = vmor %vm2349, %vm2350
  %v2352 = vsel %vm2351, %v2343, %v2348
  %v2353 = vrsqrt.pop %v1929
  %v2354 = vmul.f32 %v2353, %v1929
  %v2355 = vmul.f32 %v2354, %v2353
  %v2356 = vmul.f32 0.5, %v2355
  %v2357 = vsub.f32 1.5, %v2356
  %v2358 = vmul.f32 %v2353, %v2357
  %vm2359 = vweird.f32 %v1929
  %vm2360 = vweird.f32 %v2353
  %vm2361 = vmor %vm2359, %vm2360
  %v2362 = vsel %vm2361, %v2353, %v2358
  %v2363 = vrsqrt.pop %v1930
  %v2364 = vmul.f32 %v2363, %v1930
  %v2365 = vmul.f32 %v2364, %v2363
  %v2366 = vmul.f32 0.5, %v2365
  %v2367 = vsub.f32 1.5, %v2366
  %v2368 = vmul.f32 %v2363, %v2367
  %vm2369 = vweird.f32 %v1930
  %vm2370 = vweird.f32 %v2363
  %vm2371 = vmor %vm2369, %vm2370
  %v2372 = vsel %vm2371, %v2363, %v2368
  %v2373 = vrsqrt.pop %v1931
  %v2374 = vmul.f32 %v2373, %v1931
  %v2375 = vmul.f32 %v2374, %v2373
  %v2376 = vmul.f32 0.5, %v2375
  %v2377 = vsub.f32 1.5, %v2376
  %v2378 = vmul.f32 %v2373, %v2377
  %vm2379 = vweird.f32 %v1931
  %vm2380 = vweird.f32 %v2373
  %vm2381 = vmor %vm2379, %vm2380
  %v2382 = vsel %vm2381, %v2373, %v2378
  %v2383 = vrsqrt.pop %v1932
  %v2384 = vmul.f32 %v2383, %v1932
  %v2385 = vmul.f32 %v2384, %v2383
  %v2386 = vmul.f32 0.5, %v2385
  %v2387 = vsub.f32 1.5, %v2386
  %v2388 = vmul.f32 %v2383, %v2387
  %vm2389 = vweird.f32 %v1932
  %vm2390 = vweird.f32 %v2383
  %vm2391 = vmor %vm2389, %vm2390
  %v2392 = vsel %vm2391, %v2383, %v2388
  %v2393 = vrsqrt.pop %v1933
  %v2394 = vmul.f32 %v2393, %v1933
  %v2395 = vmul.f32 %v2394, %v2393
  %v2396 = vmul.f32 0.5, %v2395
  %v2397 = vsub.f32 1.5, %v2396
  %v2398 = vmul.f32 %v2393, %v2397
  %vm2399 = vweird.f32 %v1933
  %vm2400 = vweird.f32 %v2393
  %vm2401 = vmor %vm2399, %vm2400
  %v2402 = vsel %vm2401, %v2393, %v2398
  %v2403 = vrsqrt.pop %v1934
  %v2404 = vmul.f32 %v2403, %v1934
  %v2405 = vmul.f32 %v2404, %v2403
  %v2406 = vmul.f32 0.5, %v2405
  %v2407 = vsub.f32 1.5, %v2406
  %v2408 = vmul.f32 %v2403, %v2407
  %vm2409 = vweird.f32 %v1934
  %vm2410 = vweird.f32 %v2403
  %vm2411 = vmor %vm2409, %vm2410
  %v2412 = vsel %vm2411, %v2403, %v2408
  %v2413 = vrsqrt.pop %v1935
  %v2414 = vmul.f32 %v2413, %v1935
  %v2415 = vmul.f32 %v2414, %v2413
  %v2416 = vmul.f32 0.5, %v2415
  %v2417 = vsub.f32 1.5, %v2416
  %v2418 = vmul.f32 %v2413, %v2417
  %vm2419 = vweird.f32 %v1935
  %vm2420 = vweird.f32 %v2413
  %vm2421 = vmor %vm2419, %vm2420
  %v2422 = vsel %vm2421, %v2413, %v2418
  %v2423 = vrsqrt.pop %v1936
  %v2424 = vmul.f32 %v2423, %v1936
  %v2425 = vmul.f32 %v2424, %v2423
  %v2426 = vmul.f32 0.5, %v2425
  %v2427 = vsub.f32 1.5, %v2426
  %v2428 = vmul.f32 %v2423, %v2427
  %vm2429 = vweird.f32 %v1936
  %vm2430 = vweird.f32 %v2423
  %vm2431 = vmor %vm2429, %vm2430
  %v2432 = vsel %vm2431, %v2423, %v2428
  %v2433 = vrsqrt.pop %v1937
  %v2434 = vmul.f32 %v2433, %v1937
  %v2435 = vmul.f32 %v2434, %v2433
  %v2436 = vmul.f32 0.5, %v2435
  %v2437 = vsub.f32 1.5, %v2436
  %v2438 = vmul.f32 %v2433, %v2437
  %vm2439 = vweird.f32 %v1937
  %vm2440 = vweird.f32 %v2433
  %vm2441 = vmor %vm2439, %vm2440
  %v2442 = vsel %vm2441, %v2433, %v2438
  %v2443 = vrsqrt.pop %v1938
  %v2444 = vmul.f32 %v2443, %v1938
  %v2445 = vmul.f32 %v2444, %v2443
  %v2446 = vmul.f32 0.5, %v2445
  %v2447 = vsub.f32 1.5, %v2446
  %v2448 = vmul.f32 %v2443, %v2447
  %vm2449 = vweird.f32 %v1938
  %vm2450 = vweird.f32 %v2443
  %vm2451 = vmor %vm2449, %vm2450
  %v2452 = vsel %vm2451, %v2443, %v2448
  %v2453 = vrsqrt.pop %v1939
  %v2454 = vmul.f32 %v2453, %v1939
  %v2455 = vmul.f32 %v2454, %v2453
  %v2456 = vmul.f32 0.5, %v2455
  %v2457 = vsub.f32 1.5, %v2456
  %v2458 = vmul.f32 %v2453, %v2457
  %vm2459 = vweird.f32 %v1939
  %vm2460 = vweird.f32 %v2453
  %vm2461 = vmor %vm2459, %vm2460
  %v2462 = vsel %vm2461, %v2453, %v2458
  %v2463 = vrsqrt.pop %v1940
  %v2464 = vmul.f32 %v2463, %v1940
  %v2465 = vmul.f32 %v2464, %v2463
  %v2466 = vmul.f32 0.5, %v2465
  %v2467 = vsub.f32 1.5, %v2466
  %v2468 = vmul.f32 %v2463, %v2467
  %vm2469 = vweird.f32 %v1940
  %vm2470 = vweird.f32 %v2463
  %vm2471 = vmor %vm2469, %vm2470
  %v2472 = vsel %vm2471, %v2463, %v2468
  %v2473 = vrsqrt.pop %v1941
  %v2474 = vmul.f32 %v2473, %v1941
  %v2475 = vmul.f32 %v2474, %v2473
  %v2476 = vmul.f32 0.5, %v2475
  %v2477 = vsub.f32 1.5, %v2476
  %v2478 = vmul.f32 %v2473, %v2477
  %vm2479 = vweird.f32 %v1941
  %vm2480 = vweird.f32 %v2473
  %vm2481 = vmor %vm2479, %vm2480
  %v2482 = vsel %vm2481, %v2473, %v2478
  %v2483 = vrsqrt.pop %v1942
  %v2484 = vmul.f32 %v2483, %v1942
  %v2485 = vmul.f32 %v2484, %v2483
  %v2486 = vmul.f32 0.5, %v2485
  %v2487 = vsub.f32 1.5, %v2486
  %v2488 = vmul.f32 %v2483, %v2487
  %vm2489 = vweird.f32 %v1942
  %vm2490 = vweird.f32 %v2483
  %vm2491 = vmor %vm2489, %vm2490
  %v2492 = vsel %vm2491, %v2483, %v2488
  %v2493 = vrsqrt.pop %v1943
  %v2494 = vmul.f32 %v2493, %v1943
  %v2495 = vmul.f32 %v2494, %v2493
  %v2496 = vmul.f32 0.5, %v2495
  %v2497 = vsub.f32 1.5, %v2496
  %v2498 = vmul.f32 %v2493, %v2497
  %vm2499 = vweird.f32 %v1943
  %vm2500 = vweird.f32 %v2493
  %vm2501 = vmor %vm2499, %vm2500
  %v2502 = vsel %vm2501, %v2493, %v2498
  %v2503 = vrsqrt.pop %v1944
  %v2504 = vmul.f32 %v2503, %v1944
  %v2505 = vmul.f32 %v2504, %v2503
  %v2506 = vmul.f32 0.5, %v2505
  %v2507 = vsub.f32 1.5, %v2506
  %v2508 = vmul.f32 %v2503, %v2507
  %vm2509 = vweird.f32 %v1944
  %vm2510 = vweird.f32 %v2503
  %vm2511 = vmor %vm2509, %vm2510
  %v2512 = vsel %vm2511, %v2503, %v2508
  %v2513 = vrsqrt.pop %v1945
  %v2514 = vmul.f32 %v2513, %v1945
  %v2515 = vmul.f32 %v2514, %v2513
  %v2516 = vmul.f32 0.5, %v2515
  %v2517 = vsub.f32 1.5, %v2516
  %v2518 = vmul.f32 %v2513, %v2517
  %vm2519 = vweird.f32 %v1945
  %vm2520 = vweird.f32 %v2513
  %vm2521 = vmor %vm2519, %vm2520
  %v2522 = vsel %vm2521, %v2513, %v2518
  %v2523 = vrsqrt.pop %v1946
  %v2524 = vmul.f32 %v2523, %v1946
  %v2525 = vmul.f32 %v2524, %v2523
  %v2526 = vmul.f32 0.5, %v2525
  %v2527 = vsub.f32 1.5, %v2526
  %v2528 = vmul.f32 %v2523, %v2527
  %vm2529 = vweird.f32 %v1946
  %vm2530 = vweird.f32 %v2523
  %vm2531 = vmor %vm2529, %vm2530
  %v2532 = vsel %vm2531, %v2523, %v2528
  %v2533 = vrsqrt.pop %v1947
  %v2534 = vmul.f32 %v2533, %v1947
  %v2535 = vmul.f32 %v2534, %v2533
  %v2536 = vmul.f32 0.5, %v2535
  %v2537 = vsub.f32 1.5, %v2536
  %v2538 = vmul.f32 %v2533, %v2537
  %vm2539 = vweird.f32 %v1947
  %vm2540 = vweird.f32 %v2533
  %vm2541 = vmor %vm2539, %vm2540
  %v2542 = vsel %vm2541, %v2533, %v2538
  %v2543 = vrsqrt.pop %v1948
  %v2544 = vmul.f32 %v2543, %v1948
  %v2545 = vmul.f32 %v2544, %v2543
  %v2546 = vmul.f32 0.5, %v2545
  %v2547 = vsub.f32 1.5, %v2546
  %v2548 = vmul.f32 %v2543, %v2547
  %vm2549 = vweird.f32 %v1948
  %vm2550 = vweird.f32 %v2543
  %vm2551 = vmor %vm2549, %vm2550
  %v2552 = vsel %vm2551, %v2543, %v2548
  %v2553 = vrsqrt.pop %v1949
  %v2554 = vmul.f32 %v2553, %v1949
  %v2555 = vmul.f32 %v2554, %v2553
  %v2556 = vmul.f32 0.5, %v2555
  %v2557 = vsub.f32 1.5, %v2556
  %v2558 = vmul.f32 %v2553, %v2557
  %vm2559 = vweird.f32 %v1949
  %vm2560 = vweird.f32 %v2553
  %vm2561 = vmor %vm2559, %vm2560
  %v2562 = vsel %vm2561, %v2553, %v2558
  %v2563 = vrsqrt.pop %v1950
  %v2564 = vmul.f32 %v2563, %v1950
  %v2565 = vmul.f32 %v2564, %v2563
  %v2566 = vmul.f32 0.5, %v2565
  %v2567 = vsub.f32 1.5, %v2566
  %v2568 = vmul.f32 %v2563, %v2567
  %vm2569 = vweird.f32 %v1950
  %vm2570 = vweird.f32 %v2563
  %vm2571 = vmor %vm2569, %vm2570
  %v2572 = vsel %vm2571, %v2563, %v2568
  %v2573 = vrsqrt.pop %v1951
  %v2574 = vmul.f32 %v2573, %v1951
  %v2575 = vmul.f32 %v2574, %v2573
  %v2576 = vmul.f32 0.5, %v2575
  %v2577 = vsub.f32 1.5, %v2576
  %v2578 = vmul.f32 %v2573, %v2577
  %vm2579 = vweird.f32 %v1951
  %vm2580 = vweird.f32 %v2573
  %vm2581 = vmor %vm2579, %vm2580
  %v2582 = vsel %vm2581, %v2573, %v2578
  %v2583 = vrsqrt.pop %v1952
  %v2584 = vmul.f32 %v2583, %v1952
  %v2585 = vmul.f32 %v2584, %v2583
  %v2586 = vmul.f32 0.5, %v2585
  %v2587 = vsub.f32 1.5, %v2586
  %v2588 = vmul.f32 %v2583, %v2587
  %vm2589 = vweird.f32 %v1952
  %vm2590 = vweird.f32 %v2583
  %vm2591 = vmor %vm2589, %vm2590
  %v2592 = vsel %vm2591, %v2583, %v2588
  %v2593 = vmul.f32 %v1505, %v1962
  %v2594 = vmul.f32 %v1506, %v1972
  %v2595 = vmul.f32 %v1507, %v1982
  %v2596 = vmul.f32 %v1508, %v1992
  %v2597 = vmul.f32 %v1509, %v2002
  %v2598 = vmul.f32 %v1510, %v2012
  %v2599 = vmul.f32 %v1511, %v2022
  %v2600 = vmul.f32 %v1512, %v2032
  %v2601 = vmul.f32 %v1513, %v2042
  %v2602 = vmul.f32 %v1514, %v2052
  %v2603 = vmul.f32 %v1515, %v2062
  %v2604 = vmul.f32 %v1516, %v2072
  %v2605 = vmul.f32 %v1517, %v2082
  %v2606 = vmul.f32 %v1518, %v2092
  %v2607 = vmul.f32 %v1519, %v2102
  %v2608 = vmul.f32 %v1520, %v2112
  %v2609 = vmul.f32 %v1521, %v2122
  %v2610 = vmul.f32 %v1522, %v2132
  %v2611 = vmul.f32 %v1523, %v2142
  %v2612 = vmul.f32 %v1524, %v2152
  %v2613 = vmul.f32 %v1525, %v2162
  %v2614 = vmul.f32 %v1526, %v2172
  %v2615 = vmul.f32 %v1527, %v2182
  %v2616 = vmul.f32 %v1528, %v2192
  %v2617 = vmul.f32 %v1529, %v2202
  %v2618 = vmul.f32 %v1530, %v2212
  %v2619 = vmul.f32 %v1531, %v2222
  %v2620 = vmul.f32 %v1532, %v2232
  %v2621 = vmul.f32 %v1533, %v2242
  %v2622 = vmul.f32 %v1534, %v2252
  %v2623 = vmul.f32 %v1535, %v2262
  %v2624 = vmul.f32 %v1536, %v2272
  %v2625 = vmul.f32 %v1537, %v2282
  %v2626 = vmul.f32 %v1538, %v2292
  %v2627 = vmul.f32 %v1539, %v2302
  %v2628 = vmul.f32 %v1540, %v2312
  %v2629 = vmul.f32 %v1541, %v2322
  %v2630 = vmul.f32 %v1542, %v2332
  %v2631 = vmul.f32 %v1543, %v2342
  %v2632 = vmul.f32 %v1544, %v2352
  %v2633 = vmul.f32 %v1545, %v2362
  %v2634 = vmul.f32 %v1546, %v2372
  %v2635 = vmul.f32 %v1547, %v2382
  %v2636 = vmul.f32 %v1548, %v2392
  %v2637 = vmul.f32 %v1549, %v2402
  %v2638 = vmul.f32 %v1550, %v2412
  %v2639 = vmul.f32 %v1551, %v2422
  %v2640 = vmul.f32 %v1552, %v2432
  %v2641 = vmul.f32 %v1553, %v2442
  %v2642 = vmul.f32 %v1554, %v2452
  %v2643 = vmul.f32 %v1555, %v2462
  %v2644 = vmul.f32 %v1556, %v2472
  %v2645 = vmul.f32 %v1557, %v2482
  %v2646 = vmul.f32 %v1558, %v2492
  %v2647 = vmul.f32 %v1559, %v2502
  %v2648 = vmul.f32 %v1560, %v2512
  %v2649 = vmul.f32 %v1561, %v2522
  %v2650 = vmul.f32 %v1562, %v2532
  %v2651 = vmul.f32 %v1563, %v2542
  %v2652 = vmul.f32 %v1564, %v2552
  %v2653 = vmul.f32 %v1565, %v2562
  %v2654 = vmul.f32 %v1566, %v2572
  %v2655 = vmul.f32 %v1567, %v2582
  %v2656 = vmul.f32 %v1568, %v2592
  %v2657 = vperm.slane %v1239, 0
  %v2658 = vmul.f32 %v2593, %v2657
  %v2659 = vmul.f32 %v2594, %v2657
  %v2660 = vmul.f32 %v2595, %v2657
  %v2661 = vmul.f32 %v2596, %v2657
  %v2662 = vmul.f32 %v2597, %v2657
  %v2663 = vmul.f32 %v2598, %v2657
  %v2664 = vmul.f32 %v2599, %v2657
  %v2665 = vmul.f32 %v2600, %v2657
  %v2666 = vmul.f32 %v2601, %v2657
  %v2667 = vmul.f32 %v2602, %v2657
  %v2668 = vmul.f32 %v2603, %v2657
  %v2669 = vmul.f32 %v2604, %v2657
  %v2670 = vmul.f32 %v2605, %v2657
  %v2671 = vmul.f32 %v2606, %v2657
  %v2672 = vmul.f32 %v2607, %v2657
  %v2673 = vmul.f32 %v2608, %v2657
  %v2674 = vmul.f32 %v2609, %v2657
  %v2675 = vmul.f32 %v2610, %v2657
  %v2676 = vmul.f32 %v2611, %v2657
  %v2677 = vmul.f32 %v2612, %v2657
  %v2678 = vmul.f32 %v2613, %v2657
  %v2679 = vmul.f32 %v2614, %v2657
  %v2680 = vmul.f32 %v2615, %v2657
  %v2681 = vmul.f32 %v2616, %v2657
  %v2682 = vmul.f32 %v2617, %v2657
  %v2683 = vmul.f32 %v2618, %v2657
  %v2684 = vmul.f32 %v2619, %v2657
  %v2685 = vmul.f32 %v2620, %v2657
  %v2686 = vmul.f32 %v2621, %v2657
  %v2687 = vmul.f32 %v2622, %v2657
  %v2688 = vmul.f32 %v2623, %v2657
  %v2689 = vmul.f32 %v2624, %v2657
  %v2690 = vmul.f32 %v2625, %v2657
  %v2691 = vmul.f32 %v2626, %v2657
  %v2692 = vmul.f32 %v2627, %v2657
  %v2693 = vmul.f32 %v2628, %v2657
  %v2694 = vmul.f32 %v2629, %v2657
  %v2695 = vmul.f32 %v2630, %v2657
  %v2696 = vmul.f32 %v2631, %v2657
  %v2697 = vmul.f32 %v2632, %v2657
  %v2698 = vmul.f32 %v2633, %v2657
  %v2699 = vmul.f32 %v2634, %v2657
  %v2700 = vmul.f32 %v2635, %v2657
  %v2701 = vmul.f32 %v2636, %v2657
  %v2702 = vmul.f32 %v2637, %v2657
  %v2703 = vmul.f32 %v2638, %v2657
  %v2704 = vmul.f32 %v2639, %v2657
  %v2705 = vmul.f32 %v2640, %v2657
  %v2706 = vmul.f32 %v2641, %v2657
  %v2707 = vmul.f32 %v2642, %v2657
  %v2708 = vmul.f32 %v2643, %v2657
  %v2709 = vmul.f32 %v2644, %v2657
  %v2710 = vmul.f32 %v2645, %v2657
  %v2711 = vmul.f32 %v2646, %v2657
  %v2712 = vmul.f32 %v2647, %v2657
  %v2713 = vmul.f32 %v2648, %v2657
  %v2714 = vmul.f32 %v2649, %v2657
  %v2715 = vmul.f32 %v2650, %v2657
  %v2716 = vmul.f32 %v2651, %v2657
  %v2717 = vmul.f32 %v2652, %v2657
  %v2718 = vmul.f32 %v2653, %v2657
  %v2719 = vmul.f32 %v2654, %v2657
  %v2720 = vmul.f32 %v2655, %v2657
  %v2721 = vmul.f32 %v2656, %v2657
  %v2722 = vperm.slane %v1240, 0
  %v2723 = vadd.f32 %v2658, %v2722
  %v2724 = vadd.f32 %v2659, %v2722
  %v2725 = vadd.f32 %v2660, %v2722
  %v2726 = vadd.f32 %v2661, %v2722
  %v2727 = vadd.f32 %v2662, %v2722
  %v2728 = vadd.f32 %v2663, %v2722
  %v2729 = vadd.f32 %v2664, %v2722
  %v2730 = vadd.f32 %v2665, %v2722
  %v2731 = vadd.f32 %v2666, %v2722
  %v2732 = vadd.f32 %v2667, %v2722
  %v2733 = vadd.f32 %v2668, %v2722
  %v2734 = vadd.f32 %v2669, %v2722
  %v2735 = vadd.f32 %v2670, %v2722
  %v2736 = vadd.f32 %v2671, %v2722
  %v2737 = vadd.f32 %v2672, %v2722
  %v2738 = vadd.f32 %v2673, %v2722
  %v2739 = vadd.f32 %v2674, %v2722
  %v2740 = vadd.f32 %v2675, %v2722
  %v2741 = vadd.f32 %v2676, %v2722
  %v2742 = vadd.f32 %v2677, %v2722
  %v2743 = vadd.f32 %v2678, %v2722
  %v2744 = vadd.f32 %v2679, %v2722
  %v2745 = vadd.f32 %v2680, %v2722
  %v2746 = vadd.f32 %v2681, %v2722
  %v2747 = vadd.f32 %v2682, %v2722
  %v2748 = vadd.f32 %v2683, %v2722
  %v2749 = vadd.f32 %v2684, %v2722
  %v2750 = vadd.f32 %v2685, %v2722
  %v2751 = vadd.f32 %v2686, %v2722
  %v2752 = vadd.f32 %v2687, %v2722
  %v2753 = vadd.f32 %v2688, %v2722
  %v2754 = vadd.f32 %v2689, %v2722
  %v2755 = vadd.f32 %v2690, %v2722
  %v2756 = vadd.f32 %v2691, %v2722
  %v2757 = vadd.f32 %v2692, %v2722
  %v2758 = vadd.f32 %v2693, %v2722
  %v2759 = vadd.f32 %v2694, %v2722
  %v2760 = vadd.f32 %v2695, %v2722
  %v2761 = vadd.f32 %v2696, %v2722
  %v2762 = vadd.f32 %v2697, %v2722
  %v2763 = vadd.f32 %v2698, %v2722
  %v2764 = vadd.f32 %v2699, %v2722
  %v2765 = vadd.f32 %v2700, %v2722
  %v2766 = vadd.f32 %v2701, %v2722
  %v2767 = vadd.f32 %v2702, %v2722
  %v2768 = vadd.f32 %v2703, %v2722
  %v2769 = vadd.f32 %v2704, %v2722
  %v2770 = vadd.f32 %v2705, %v2722
  %v2771 = vadd.f32 %v2706, %v2722
  %v2772 = vadd.f32 %v2707, %v2722
  %v2773 = vadd.f32 %v2708, %v2722
  %v2774 = vadd.f32 %v2709, %v2722
  %v2775 = vadd.f32 %v2710, %v2722
  %v2776 = vadd.f32 %v2711, %v2722
  %v2777 = vadd.f32 %v2712, %v2722
  %v2778 = vadd.f32 %v2713, %v2722
  %v2779 = vadd.f32 %v2714, %v2722
  %v2780 = vadd.f32 %v2715, %v2722
  %v2781 = vadd.f32 %v2716, %v2722
  %v2782 = vadd.f32 %v2717, %v2722
  %v2783 = vadd.f32 %v2718, %v2722
  %v2784 = vadd.f32 %v2719, %v2722
  %v2785 = vadd.f32 %v2720, %v2722
  %v2786 = vadd.f32 %v2721, %v2722
  %v2787 = vld [vmem:[%s14] sm:$0xff]
  %v2788 = vld [vmem:[%s14 + $0x8] sm:$0xff]
  %v2789 = vld [vmem:[%s3] sm:$0xff]
  %v2790 = vld [vmem:[%s3 + $0x8] sm:$0xff]
  %v2791 = vld [vmem:[%s3 + $0x10] sm:$0xff]
  %v2792 = vld [vmem:[%s3 + $0x18] sm:$0xff]
  %v2793 = vld [vmem:[%s3 + $0x20] sm:$0xff]
  %v2794 = vld [vmem:[%s3 + $0x28] sm:$0xff]
  %v2795 = vld [vmem:[%s3 + $0x30] sm:$0xff]
  %v2796 = vld [vmem:[%s3 + $0x38] sm:$0xff]
  %v2797 = vld [vmem:[%s3 + $0x40] sm:$0xff]
  %v2798 = vld [vmem:[%s3 + $0x48] sm:$0xff]
  %v2799 = vld [vmem:[%s3 + $0x50] sm:$0xff]
  %v2800 = vld [vmem:[%s3 + $0x58] sm:$0xff]
  %v2801 = vld [vmem:[%s3 + $0x60] sm:$0xff]
  %v2802 = vld [vmem:[%s3 + $0x68] sm:$0xff]
  %v2803 = vld [vmem:[%s3 + $0x70] sm:$0xff]
  %v2804 = vld [vmem:[%s3 + $0x78] sm:$0xff]
  %v2805 = vld [vmem:[%s3 + $0x80] sm:$0xff]
  %v2806 = vld [vmem:[%s3 + $0x88] sm:$0xff]
  %v2807 = vld [vmem:[%s3 + $0x90] sm:$0xff]
  %v2808 = vld [vmem:[%s3 + $0x98] sm:$0xff]
  %v2809 = vld [vmem:[%s3 + $0xa0] sm:$0xff]
  %v2810 = vld [vmem:[%s3 + $0xa8] sm:$0xff]
  %v2811 = vld [vmem:[%s3 + $0xb0] sm:$0xff]
  %v2812 = vld [vmem:[%s3 + $0xb8] sm:$0xff]
  %v2813 = vld [vmem:[%s3 + $0xc0] sm:$0xff]
  %v2814 = vld [vmem:[%s3 + $0xc8] sm:$0xff]
  %v2815 = vld [vmem:[%s3 + $0xd0] sm:$0xff]
  %v2816 = vld [vmem:[%s3 + $0xd8] sm:$0xff]
  %v2817 = vld [vmem:[%s3 + $0xe0] sm:$0xff]
  %v2818 = vld [vmem:[%s3 + $0xe8] sm:$0xff]
  %v2819 = vld [vmem:[%s3 + $0xf0] sm:$0xff]
  %v2820 = vld [vmem:[%s3 + $0xf8] sm:$0xff]
  %v2821 = vld [vmem:[%s3 + $0x100] sm:$0xff]
  %v2822 = vld [vmem:[%s3 + $0x108] sm:$0xff]
  %v2823 = vld [vmem:[%s3 + $0x110] sm:$0xff]
  %v2824 = vld [vmem:[%s3 + $0x118] sm:$0xff]
  %v2825 = vld [vmem:[%s3 + $0x120] sm:$0xff]
  %v2826 = vld [vmem:[%s3 + $0x128] sm:$0xff]
  %v2827 = vld [vmem:[%s3 + $0x130] sm:$0xff]
  %v2828 = vld [vmem:[%s3 + $0x138] sm:$0xff]
  %v2829 = vld [vmem:[%s3 + $0x140] sm:$0xff]
  %v2830 = vld [vmem:[%s3 + $0x148] sm:$0xff]
  %v2831 = vld [vmem:[%s3 + $0x150] sm:$0xff]
  %v2832 = vld [vmem:[%s3 + $0x158] sm:$0xff]
  %v2833 = vld [vmem:[%s3 + $0x160] sm:$0xff]
  %v2834 = vld [vmem:[%s3 + $0x168] sm:$0xff]
  %v2835 = vld [vmem:[%s3 + $0x170] sm:$0xff]
  %v2836 = vld [vmem:[%s3 + $0x178] sm:$0xff]
  %v2837 = vld [vmem:[%s3 + $0x180] sm:$0xff]
  %v2838 = vld [vmem:[%s3 + $0x188] sm:$0xff]
  %v2839 = vld [vmem:[%s3 + $0x190] sm:$0xff]
  %v2840 = vld [vmem:[%s3 + $0x198] sm:$0xff]
  %v2841 = vld [vmem:[%s3 + $0x1a0] sm:$0xff]
  %v2842 = vld [vmem:[%s3 + $0x1a8] sm:$0xff]
  %v2843 = vld [vmem:[%s3 + $0x1b0] sm:$0xff]
  %v2844 = vld [vmem:[%s3 + $0x1b8] sm:$0xff]
  %v2845 = vld [vmem:[%s3 + $0x1c0] sm:$0xff]
  %v2846 = vld [vmem:[%s3 + $0x1c8] sm:$0xff]
  %v2847 = vld [vmem:[%s3 + $0x1d0] sm:$0xff]
  %v2848 = vld [vmem:[%s3 + $0x1d8] sm:$0xff]
  %v2849 = vld [vmem:[%s3 + $0x1e0] sm:$0xff]
  %v2850 = vld [vmem:[%s3 + $0x1e8] sm:$0xff]
  %v2851 = vld [vmem:[%s3 + $0x1f0] sm:$0xff]
  %v2852 = vld [vmem:[%s3 + $0x1f8] sm:$0xff]
  %v2853 = vld [vmem:[%s15] sm:$0xff]
  %v2854 = vld [vmem:[%s15 + $0x8] sm:$0xff]
  %v2856 = vsel %vm1241, %v2789, 0
  %v2859 = vsel %vm1241, %v2790, 0
  %v2862 = vsel %vm1241, %v2791, 0
  %v2865 = vsel %vm1241, %v2792, 0
  %v2868 = vsel %vm1241, %v2793, 0
  %v2871 = vsel %vm1241, %v2794, 0
  %v2874 = vsel %vm1241, %v2795, 0
  %v2877 = vsel %vm1241, %v2796, 0
  %v2880 = vsel %vm1241, %v2797, 0
  %v2883 = vsel %vm1241, %v2798, 0
  %v2886 = vsel %vm1241, %v2799, 0
  %v2889 = vsel %vm1241, %v2800, 0
  %v2892 = vsel %vm1241, %v2801, 0
  %v2895 = vsel %vm1241, %v2802, 0
  %v2898 = vsel %vm1241, %v2803, 0
  %v2901 = vsel %vm1241, %v2804, 0
  %v2904 = vsel %vm1241, %v2805, 0
  %v2907 = vsel %vm1241, %v2806, 0
  %v2910 = vsel %vm1241, %v2807, 0
  %v2913 = vsel %vm1241, %v2808, 0
  %v2916 = vsel %vm1241, %v2809, 0
  %v2919 = vsel %vm1241, %v2810, 0
  %v2922 = vsel %vm1241, %v2811, 0
  %v2925 = vsel %vm1241, %v2812, 0
  %v2928 = vsel %vm1241, %v2813, 0
  %v2931 = vsel %vm1241, %v2814, 0
  %v2934 = vsel %vm1241, %v2815, 0
  %v2937 = vsel %vm1241, %v2816, 0
  %v2940 = vsel %vm1241, %v2817, 0
  %v2943 = vsel %vm1241, %v2818, 0
  %v2946 = vsel %vm1241, %v2819, 0
  %v2949 = vsel %vm1241, %v2820, 0
  %v2952 = vsel %vm1241, %v2821, 0
  %v2955 = vsel %vm1241, %v2822, 0
  %v2958 = vsel %vm1241, %v2823, 0
  %v2961 = vsel %vm1241, %v2824, 0
  %v2964 = vsel %vm1241, %v2825, 0
  %v2967 = vsel %vm1241, %v2826, 0
  %v2970 = vsel %vm1241, %v2827, 0
  %v2973 = vsel %vm1241, %v2828, 0
  %v2976 = vsel %vm1241, %v2829, 0
  %v2979 = vsel %vm1241, %v2830, 0
  %v2982 = vsel %vm1241, %v2831, 0
  %v2985 = vsel %vm1241, %v2832, 0
  %v2988 = vsel %vm1241, %v2833, 0
  %v2991 = vsel %vm1241, %v2834, 0
  %v2994 = vsel %vm1241, %v2835, 0
  %v2997 = vsel %vm1241, %v2836, 0
  %v3000 = vsel %vm1241, %v2837, 0
  %v3003 = vsel %vm1241, %v2838, 0
  %v3006 = vsel %vm1241, %v2839, 0
  %v3009 = vsel %vm1241, %v2840, 0
  %v3012 = vsel %vm1241, %v2841, 0
  %v3015 = vsel %vm1241, %v2842, 0
  %v3018 = vsel %vm1241, %v2843, 0
  %v3021 = vsel %vm1241, %v2844, 0
  %v3024 = vsel %vm1241, %v2845, 0
  %v3027 = vsel %vm1241, %v2846, 0
  %v3030 = vsel %vm1241, %v2847, 0
  %v3033 = vsel %vm1241, %v2848, 0
  %v3036 = vsel %vm1241, %v2849, 0
  %v3039 = vsel %vm1241, %v2850, 0
  %v3042 = vsel %vm1241, %v2851, 0
  %v3045 = vsel %vm1241, %v2852, 0
  %3047 = vmatpush.msra.mxu0 0.0
  %3048 = vmatpush.msra.mxu0 0.0
  %3049 = vmatpush.msra.mxu0 0.0
  %3050 = vmatpush.msra.mxu0 0.0
  %3051 = vmatpush.msra.mxu0 0.0
  %3052 = vmatpush.msra.mxu0 0.0
  %3053 = vmatpush.msra.mxu0 0.0
  %3054 = vmatpush.msra.mxu0 0.0
  %3055 = vmatpush.msra.mxu0 0.0
  %3056 = vmatpush.msra.mxu0 0.0
  %3057 = vmatpush.msra.mxu0 0.0
  %3058 = vmatpush.msra.mxu0 0.0
  %3059 = vmatpush.msra.mxu0 0.0
  %3060 = vmatpush.msra.mxu0 0.0
  %3061 = vmatpush.msra.mxu0 %v2854
  %3062 = vmatpush.msra.mxu0 %v2853
  %3063 = vmatmul.f32.gmra.mxu0 %v2856
  %v3064 = vpop.f32.mrf.mxu0
  %v3065 = vadd.f32 0.0, %v3064
  %3066 = vmatmul.f32.gmra.mxu0 %v2859
  %v3067 = vpop.f32.mrf.mxu0
  %v3068 = vadd.f32 0.0, %v3067
  %3069 = vmatmul.f32.gmra.mxu0 %v2862
  %v3070 = vpop.f32.mrf.mxu0
  %v3071 = vadd.f32 0.0, %v3070
  %3072 = vmatmul.f32.gmra.mxu0 %v2865
  %v3073 = vpop.f32.mrf.mxu0
  %v3074 = vadd.f32 0.0, %v3073
  %3075 = vmatmul.f32.gmra.mxu0 %v2868
  %v3076 = vpop.f32.mrf.mxu0
  %v3077 = vadd.f32 0.0, %v3076
  %3078 = vmatmul.f32.gmra.mxu0 %v2871
  %v3079 = vpop.f32.mrf.mxu0
  %v3080 = vadd.f32 0.0, %v3079
  %3081 = vmatmul.f32.gmra.mxu0 %v2874
  %v3082 = vpop.f32.mrf.mxu0
  %v3083 = vadd.f32 0.0, %v3082
  %3084 = vmatmul.f32.gmra.mxu0 %v2877
  %v3085 = vpop.f32.mrf.mxu0
  %v3086 = vadd.f32 0.0, %v3085
  %3087 = vmatmul.f32.gmra.mxu0 %v2880
  %v3088 = vpop.f32.mrf.mxu0
  %v3089 = vadd.f32 0.0, %v3088
  %3090 = vmatmul.f32.gmra.mxu0 %v2883
  %v3091 = vpop.f32.mrf.mxu0
  %v3092 = vadd.f32 0.0, %v3091
  %3093 = vmatmul.f32.gmra.mxu0 %v2886
  %v3094 = vpop.f32.mrf.mxu0
  %v3095 = vadd.f32 0.0, %v3094
  %3096 = vmatmul.f32.gmra.mxu0 %v2889
  %v3097 = vpop.f32.mrf.mxu0
  %v3098 = vadd.f32 0.0, %v3097
  %3099 = vmatmul.f32.gmra.mxu0 %v2892
  %v3100 = vpop.f32.mrf.mxu0
  %v3101 = vadd.f32 0.0, %v3100
  %3102 = vmatmul.f32.gmra.mxu0 %v2895
  %v3103 = vpop.f32.mrf.mxu0
  %v3104 = vadd.f32 0.0, %v3103
  %3105 = vmatmul.f32.gmra.mxu0 %v2898
  %v3106 = vpop.f32.mrf.mxu0
  %v3107 = vadd.f32 0.0, %v3106
  %3108 = vmatmul.f32.gmra.mxu0 %v2901
  %v3109 = vpop.f32.mrf.mxu0
  %v3110 = vadd.f32 0.0, %v3109
  %3111 = vmatmul.f32.gmra.mxu0 %v2904
  %v3112 = vpop.f32.mrf.mxu0
  %v3113 = vadd.f32 0.0, %v3112
  %3114 = vmatmul.f32.gmra.mxu0 %v2907
  %v3115 = vpop.f32.mrf.mxu0
  %v3116 = vadd.f32 0.0, %v3115
  %3117 = vmatmul.f32.gmra.mxu0 %v2910
  %v3118 = vpop.f32.mrf.mxu0
  %v3119 = vadd.f32 0.0, %v3118
  %3120 = vmatmul.f32.gmra.mxu0 %v2913
  %v3121 = vpop.f32.mrf.mxu0
  %v3122 = vadd.f32 0.0, %v3121
  %3123 = vmatmul.f32.gmra.mxu0 %v2916
  %v3124 = vpop.f32.mrf.mxu0
  %v3125 = vadd.f32 0.0, %v3124
  %3126 = vmatmul.f32.gmra.mxu0 %v2919
  %v3127 = vpop.f32.mrf.mxu0
  %v3128 = vadd.f32 0.0, %v3127
  %3129 = vmatmul.f32.gmra.mxu0 %v2922
  %v3130 = vpop.f32.mrf.mxu0
  %v3131 = vadd.f32 0.0, %v3130
  %3132 = vmatmul.f32.gmra.mxu0 %v2925
  %v3133 = vpop.f32.mrf.mxu0
  %v3134 = vadd.f32 0.0, %v3133
  %3135 = vmatmul.f32.gmra.mxu0 %v2928
  %v3136 = vpop.f32.mrf.mxu0
  %v3137 = vadd.f32 0.0, %v3136
  %3138 = vmatmul.f32.gmra.mxu0 %v2931
  %v3139 = vpop.f32.mrf.mxu0
  %v3140 = vadd.f32 0.0, %v3139
  %3141 = vmatmul.f32.gmra.mxu0 %v2934
  %v3142 = vpop.f32.mrf.mxu0
  %v3143 = vadd.f32 0.0, %v3142
  %3144 = vmatmul.f32.gmra.mxu0 %v2937
  %v3145 = vpop.f32.mrf.mxu0
  %v3146 = vadd.f32 0.0, %v3145
  %3147 = vmatmul.f32.gmra.mxu0 %v2940
  %v3148 = vpop.f32.mrf.mxu0
  %v3149 = vadd.f32 0.0, %v3148
  %3150 = vmatmul.f32.gmra.mxu0 %v2943
  %v3151 = vpop.f32.mrf.mxu0
  %v3152 = vadd.f32 0.0, %v3151
  %3153 = vmatmul.f32.gmra.mxu0 %v2946
  %v3154 = vpop.f32.mrf.mxu0
  %v3155 = vadd.f32 0.0, %v3154
  %3156 = vmatmul.f32.gmra.mxu0 %v2949
  %v3157 = vpop.f32.mrf.mxu0
  %v3158 = vadd.f32 0.0, %v3157
  %3159 = vmatmul.f32.gmra.mxu0 %v2952
  %v3160 = vpop.f32.mrf.mxu0
  %v3161 = vadd.f32 0.0, %v3160
  %3162 = vmatmul.f32.gmra.mxu0 %v2955
  %v3163 = vpop.f32.mrf.mxu0
  %v3164 = vadd.f32 0.0, %v3163
  %3165 = vmatmul.f32.gmra.mxu0 %v2958
  %v3166 = vpop.f32.mrf.mxu0
  %v3167 = vadd.f32 0.0, %v3166
  %3168 = vmatmul.f32.gmra.mxu0 %v2961
  %v3169 = vpop.f32.mrf.mxu0
  %v3170 = vadd.f32 0.0, %v3169
  %3171 = vmatmul.f32.gmra.mxu0 %v2964
  %v3172 = vpop.f32.mrf.mxu0
  %v3173 = vadd.f32 0.0, %v3172
  %3174 = vmatmul.f32.gmra.mxu0 %v2967
  %v3175 = vpop.f32.mrf.mxu0
  %v3176 = vadd.f32 0.0, %v3175
  %3177 = vmatmul.f32.gmra.mxu0 %v2970
  %v3178 = vpop.f32.mrf.mxu0
  %v3179 = vadd.f32 0.0, %v3178
  %3180 = vmatmul.f32.gmra.mxu0 %v2973
  %v3181 = vpop.f32.mrf.mxu0
  %v3182 = vadd.f32 0.0, %v3181
  %3183 = vmatmul.f32.gmra.mxu0 %v2976
  %v3184 = vpop.f32.mrf.mxu0
  %v3185 = vadd.f32 0.0, %v3184
  %3186 = vmatmul.f32.gmra.mxu0 %v2979
  %v3187 = vpop.f32.mrf.mxu0
  %v3188 = vadd.f32 0.0, %v3187
  %3189 = vmatmul.f32.gmra.mxu0 %v2982
  %v3190 = vpop.f32.mrf.mxu0
  %v3191 = vadd.f32 0.0, %v3190
  %3192 = vmatmul.f32.gmra.mxu0 %v2985
  %v3193 = vpop.f32.mrf.mxu0
  %v3194 = vadd.f32 0.0, %v3193
  %3195 = vmatmul.f32.gmra.mxu0 %v2988
  %v3196 = vpop.f32.mrf.mxu0
  %v3197 = vadd.f32 0.0, %v3196
  %3198 = vmatmul.f32.gmra.mxu0 %v2991
  %v3199 = vpop.f32.mrf.mxu0
  %v3200 = vadd.f32 0.0, %v3199
  %3201 = vmatmul.f32.gmra.mxu0 %v2994
  %v3202 = vpop.f32.mrf.mxu0
  %v3203 = vadd.f32 0.0, %v3202
  %3204 = vmatmul.f32.gmra.mxu0 %v2997
  %v3205 = vpop.f32.mrf.mxu0
  %v3206 = vadd.f32 0.0, %v3205
  %3207 = vmatmul.f32.gmra.mxu0 %v3000
  %v3208 = vpop.f32.mrf.mxu0
  %v3209 = vadd.f32 0.0, %v3208
  %3210 = vmatmul.f32.gmra.mxu0 %v3003
  %v3211 = vpop.f32.mrf.mxu0
  %v3212 = vadd.f32 0.0, %v3211
  %3213 = vmatmul.f32.gmra.mxu0 %v3006
  %v3214 = vpop.f32.mrf.mxu0
  %v3215 = vadd.f32 0.0, %v3214
  %3216 = vmatmul.f32.gmra.mxu0 %v3009
  %v3217 = vpop.f32.mrf.mxu0
  %v3218 = vadd.f32 0.0, %v3217
  %3219 = vmatmul.f32.gmra.mxu0 %v3012
  %v3220 = vpop.f32.mrf.mxu0
  %v3221 = vadd.f32 0.0, %v3220
  %3222 = vmatmul.f32.gmra.mxu0 %v3015
  %v3223 = vpop.f32.mrf.mxu0
  %v3224 = vadd.f32 0.0, %v3223
  %3225 = vmatmul.f32.gmra.mxu0 %v3018
  %v3226 = vpop.f32.mrf.mxu0
  %v3227 = vadd.f32 0.0, %v3226
  %3228 = vmatmul.f32.gmra.mxu0 %v3021
  %v3229 = vpop.f32.mrf.mxu0
  %v3230 = vadd.f32 0.0, %v3229
  %3231 = vmatmul.f32.gmra.mxu0 %v3024
  %v3232 = vpop.f32.mrf.mxu0
  %v3233 = vadd.f32 0.0, %v3232
  %3234 = vmatmul.f32.gmra.mxu0 %v3027
  %v3235 = vpop.f32.mrf.mxu0
  %v3236 = vadd.f32 0.0, %v3235
  %3237 = vmatmul.f32.gmra.mxu0 %v3030
  %v3238 = vpop.f32.mrf.mxu0
  %v3239 = vadd.f32 0.0, %v3238
  %3240 = vmatmul.f32.gmra.mxu0 %v3033
  %v3241 = vpop.f32.mrf.mxu0
  %v3242 = vadd.f32 0.0, %v3241
  %3243 = vmatmul.f32.gmra.mxu0 %v3036
  %v3244 = vpop.f32.mrf.mxu0
  %v3245 = vadd.f32 0.0, %v3244
  %3246 = vmatmul.f32.gmra.mxu0 %v3039
  %v3247 = vpop.f32.mrf.mxu0
  %v3248 = vadd.f32 0.0, %v3247
  %3249 = vmatmul.f32.gmra.mxu0 %v3042
  %v3250 = vpop.f32.mrf.mxu0
  %v3251 = vadd.f32 0.0, %v3250
  %3252 = vmatmul.f32.gmra.mxu0 %v3045
  %v3253 = vpop.f32.mrf.mxu0
  %v3254 = vadd.f32 0.0, %v3253
  %3255 = vdwg.mxu0
  %v3257 = vsel %vm1241, %v2723, 0
  %v3260 = vsel %vm1241, %v2724, 0
  %v3263 = vsel %vm1241, %v2725, 0
  %v3266 = vsel %vm1241, %v2726, 0
  %v3269 = vsel %vm1241, %v2727, 0
  %v3272 = vsel %vm1241, %v2728, 0
  %v3275 = vsel %vm1241, %v2729, 0
  %v3278 = vsel %vm1241, %v2730, 0
  %v3281 = vsel %vm1241, %v2731, 0
  %v3284 = vsel %vm1241, %v2732, 0
  %v3287 = vsel %vm1241, %v2733, 0
  %v3290 = vsel %vm1241, %v2734, 0
  %v3293 = vsel %vm1241, %v2735, 0
  %v3296 = vsel %vm1241, %v2736, 0
  %v3299 = vsel %vm1241, %v2737, 0
  %v3302 = vsel %vm1241, %v2738, 0
  %v3305 = vsel %vm1241, %v2739, 0
  %v3308 = vsel %vm1241, %v2740, 0
  %v3311 = vsel %vm1241, %v2741, 0
  %v3314 = vsel %vm1241, %v2742, 0
  %v3317 = vsel %vm1241, %v2743, 0
  %v3320 = vsel %vm1241, %v2744, 0
  %v3323 = vsel %vm1241, %v2745, 0
  %v3326 = vsel %vm1241, %v2746, 0
  %v3329 = vsel %vm1241, %v2747, 0
  %v3332 = vsel %vm1241, %v2748, 0
  %v3335 = vsel %vm1241, %v2749, 0
  %v3338 = vsel %vm1241, %v2750, 0
  %v3341 = vsel %vm1241, %v2751, 0
  %v3344 = vsel %vm1241, %v2752, 0
  %v3347 = vsel %vm1241, %v2753, 0
  %v3350 = vsel %vm1241, %v2754, 0
  %v3353 = vsel %vm1241, %v2755, 0
  %v3356 = vsel %vm1241, %v2756, 0
  %v3359 = vsel %vm1241, %v2757, 0
  %v3362 = vsel %vm1241, %v2758, 0
  %v3365 = vsel %vm1241, %v2759, 0
  %v3368 = vsel %vm1241, %v2760, 0
  %v3371 = vsel %vm1241, %v2761, 0
  %v3374 = vsel %vm1241, %v2762, 0
  %v3377 = vsel %vm1241, %v2763, 0
  %v3380 = vsel %vm1241, %v2764, 0
  %v3383 = vsel %vm1241, %v2765, 0
  %v3386 = vsel %vm1241, %v2766, 0
  %v3389 = vsel %vm1241, %v2767, 0
  %v3392 = vsel %vm1241, %v2768, 0
  %v3395 = vsel %vm1241, %v2769, 0
  %v3398 = vsel %vm1241, %v2770, 0
  %v3401 = vsel %vm1241, %v2771, 0
  %v3404 = vsel %vm1241, %v2772, 0
  %v3407 = vsel %vm1241, %v2773, 0
  %v3410 = vsel %vm1241, %v2774, 0
  %v3413 = vsel %vm1241, %v2775, 0
  %v3416 = vsel %vm1241, %v2776, 0
  %v3419 = vsel %vm1241, %v2777, 0
  %v3422 = vsel %vm1241, %v2778, 0
  %v3425 = vsel %vm1241, %v2779, 0
  %v3428 = vsel %vm1241, %v2780, 0
  %v3431 = vsel %vm1241, %v2781, 0
  %v3434 = vsel %vm1241, %v2782, 0
  %v3437 = vsel %vm1241, %v2783, 0
  %v3440 = vsel %vm1241, %v2784, 0
  %v3443 = vsel %vm1241, %v2785, 0
  %v3446 = vsel %vm1241, %v2786, 0
  %3448 = vmatpush.msra.mxu0 0.0
  %3449 = vmatpush.msra.mxu0 0.0
  %3450 = vmatpush.msra.mxu0 0.0
  %3451 = vmatpush.msra.mxu0 0.0
  %3452 = vmatpush.msra.mxu0 0.0
  %3453 = vmatpush.msra.mxu0 0.0
  %3454 = vmatpush.msra.mxu0 0.0
  %3455 = vmatpush.msra.mxu0 0.0
  %3456 = vmatpush.msra.mxu0 0.0
  %3457 = vmatpush.msra.mxu0 0.0
  %3458 = vmatpush.msra.mxu0 0.0
  %3459 = vmatpush.msra.mxu0 0.0
  %3460 = vmatpush.msra.mxu0 0.0
  %3461 = vmatpush.msra.mxu0 0.0
  %3462 = vmatpush.msra.mxu0 %v2788
  %3463 = vmatpush.msra.mxu0 %v2787
  %3464 = vmatmul.f32.gmra.mxu0 %v3257
  %v3465 = vpop.f32.mrf.mxu0
  %v3466 = vadd.f32 %v3065, %v3465
  %3467 = vmatmul.f32.gmra.mxu0 %v3260
  %v3468 = vpop.f32.mrf.mxu0
  %v3469 = vadd.f32 %v3068, %v3468
  %3470 = vmatmul.f32.gmra.mxu0 %v3263
  %v3471 = vpop.f32.mrf.mxu0
  %v3472 = vadd.f32 %v3071, %v3471
  %3473 = vmatmul.f32.gmra.mxu0 %v3266
  %v3474 = vpop.f32.mrf.mxu0
  %v3475 = vadd.f32 %v3074, %v3474
  %3476 = vmatmul.f32.gmra.mxu0 %v3269
  %v3477 = vpop.f32.mrf.mxu0
  %v3478 = vadd.f32 %v3077, %v3477
  %3479 = vmatmul.f32.gmra.mxu0 %v3272
  %v3480 = vpop.f32.mrf.mxu0
  %v3481 = vadd.f32 %v3080, %v3480
  %3482 = vmatmul.f32.gmra.mxu0 %v3275
  %v3483 = vpop.f32.mrf.mxu0
  %v3484 = vadd.f32 %v3083, %v3483
  %3485 = vmatmul.f32.gmra.mxu0 %v3278
  %v3486 = vpop.f32.mrf.mxu0
  %v3487 = vadd.f32 %v3086, %v3486
  %3488 = vmatmul.f32.gmra.mxu0 %v3281
  %v3489 = vpop.f32.mrf.mxu0
  %v3490 = vadd.f32 %v3089, %v3489
  %3491 = vmatmul.f32.gmra.mxu0 %v3284
  %v3492 = vpop.f32.mrf.mxu0
  %v3493 = vadd.f32 %v3092, %v3492
  %3494 = vmatmul.f32.gmra.mxu0 %v3287
  %v3495 = vpop.f32.mrf.mxu0
  %v3496 = vadd.f32 %v3095, %v3495
  %3497 = vmatmul.f32.gmra.mxu0 %v3290
  %v3498 = vpop.f32.mrf.mxu0
  %v3499 = vadd.f32 %v3098, %v3498
  %3500 = vmatmul.f32.gmra.mxu0 %v3293
  %v3501 = vpop.f32.mrf.mxu0
  %v3502 = vadd.f32 %v3101, %v3501
  %3503 = vmatmul.f32.gmra.mxu0 %v3296
  %v3504 = vpop.f32.mrf.mxu0
  %v3505 = vadd.f32 %v3104, %v3504
  %3506 = vmatmul.f32.gmra.mxu0 %v3299
  %v3507 = vpop.f32.mrf.mxu0
  %v3508 = vadd.f32 %v3107, %v3507
  %3509 = vmatmul.f32.gmra.mxu0 %v3302
  %v3510 = vpop.f32.mrf.mxu0
  %v3511 = vadd.f32 %v3110, %v3510
  %3512 = vmatmul.f32.gmra.mxu0 %v3305
  %v3513 = vpop.f32.mrf.mxu0
  %v3514 = vadd.f32 %v3113, %v3513
  %3515 = vmatmul.f32.gmra.mxu0 %v3308
  %v3516 = vpop.f32.mrf.mxu0
  %v3517 = vadd.f32 %v3116, %v3516
  %3518 = vmatmul.f32.gmra.mxu0 %v3311
  %v3519 = vpop.f32.mrf.mxu0
  %v3520 = vadd.f32 %v3119, %v3519
  %3521 = vmatmul.f32.gmra.mxu0 %v3314
  %v3522 = vpop.f32.mrf.mxu0
  %v3523 = vadd.f32 %v3122, %v3522
  %3524 = vmatmul.f32.gmra.mxu0 %v3317
  %v3525 = vpop.f32.mrf.mxu0
  %v3526 = vadd.f32 %v3125, %v3525
  %3527 = vmatmul.f32.gmra.mxu0 %v3320
  %v3528 = vpop.f32.mrf.mxu0
  %v3529 = vadd.f32 %v3128, %v3528
  %3530 = vmatmul.f32.gmra.mxu0 %v3323
  %v3531 = vpop.f32.mrf.mxu0
  %v3532 = vadd.f32 %v3131, %v3531
  %3533 = vmatmul.f32.gmra.mxu0 %v3326
  %v3534 = vpop.f32.mrf.mxu0
  %v3535 = vadd.f32 %v3134, %v3534
  %3536 = vmatmul.f32.gmra.mxu0 %v3329
  %v3537 = vpop.f32.mrf.mxu0
  %v3538 = vadd.f32 %v3137, %v3537
  %3539 = vmatmul.f32.gmra.mxu0 %v3332
  %v3540 = vpop.f32.mrf.mxu0
  %v3541 = vadd.f32 %v3140, %v3540
  %3542 = vmatmul.f32.gmra.mxu0 %v3335
  %v3543 = vpop.f32.mrf.mxu0
  %v3544 = vadd.f32 %v3143, %v3543
  %3545 = vmatmul.f32.gmra.mxu0 %v3338
  %v3546 = vpop.f32.mrf.mxu0
  %v3547 = vadd.f32 %v3146, %v3546
  %3548 = vmatmul.f32.gmra.mxu0 %v3341
  %v3549 = vpop.f32.mrf.mxu0
  %v3550 = vadd.f32 %v3149, %v3549
  %3551 = vmatmul.f32.gmra.mxu0 %v3344
  %v3552 = vpop.f32.mrf.mxu0
  %v3553 = vadd.f32 %v3152, %v3552
  %3554 = vmatmul.f32.gmra.mxu0 %v3347
  %v3555 = vpop.f32.mrf.mxu0
  %v3556 = vadd.f32 %v3155, %v3555
  %3557 = vmatmul.f32.gmra.mxu0 %v3350
  %v3558 = vpop.f32.mrf.mxu0
  %v3559 = vadd.f32 %v3158, %v3558
  %3560 = vmatmul.f32.gmra.mxu0 %v3353
  %v3561 = vpop.f32.mrf.mxu0
  %v3562 = vadd.f32 %v3161, %v3561
  %3563 = vmatmul.f32.gmra.mxu0 %v3356
  %v3564 = vpop.f32.mrf.mxu0
  %v3565 = vadd.f32 %v3164, %v3564
  %3566 = vmatmul.f32.gmra.mxu0 %v3359
  %v3567 = vpop.f32.mrf.mxu0
  %v3568 = vadd.f32 %v3167, %v3567
  %3569 = vmatmul.f32.gmra.mxu0 %v3362
  %v3570 = vpop.f32.mrf.mxu0
  %v3571 = vadd.f32 %v3170, %v3570
  %3572 = vmatmul.f32.gmra.mxu0 %v3365
  %v3573 = vpop.f32.mrf.mxu0
  %v3574 = vadd.f32 %v3173, %v3573
  %3575 = vmatmul.f32.gmra.mxu0 %v3368
  %v3576 = vpop.f32.mrf.mxu0
  %v3577 = vadd.f32 %v3176, %v3576
  %3578 = vmatmul.f32.gmra.mxu0 %v3371
  %v3579 = vpop.f32.mrf.mxu0
  %v3580 = vadd.f32 %v3179, %v3579
  %3581 = vmatmul.f32.gmra.mxu0 %v3374
  %v3582 = vpop.f32.mrf.mxu0
  %v3583 = vadd.f32 %v3182, %v3582
  %3584 = vmatmul.f32.gmra.mxu0 %v3377
  %v3585 = vpop.f32.mrf.mxu0
  %v3586 = vadd.f32 %v3185, %v3585
  %3587 = vmatmul.f32.gmra.mxu0 %v3380
  %v3588 = vpop.f32.mrf.mxu0
  %v3589 = vadd.f32 %v3188, %v3588
  %3590 = vmatmul.f32.gmra.mxu0 %v3383
  %v3591 = vpop.f32.mrf.mxu0
  %v3592 = vadd.f32 %v3191, %v3591
  %3593 = vmatmul.f32.gmra.mxu0 %v3386
  %v3594 = vpop.f32.mrf.mxu0
  %v3595 = vadd.f32 %v3194, %v3594
  %3596 = vmatmul.f32.gmra.mxu0 %v3389
  %v3597 = vpop.f32.mrf.mxu0
  %v3598 = vadd.f32 %v3197, %v3597
  %3599 = vmatmul.f32.gmra.mxu0 %v3392
  %v3600 = vpop.f32.mrf.mxu0
  %v3601 = vadd.f32 %v3200, %v3600
  %3602 = vmatmul.f32.gmra.mxu0 %v3395
  %v3603 = vpop.f32.mrf.mxu0
  %v3604 = vadd.f32 %v3203, %v3603
  %3605 = vmatmul.f32.gmra.mxu0 %v3398
  %v3606 = vpop.f32.mrf.mxu0
  %v3607 = vadd.f32 %v3206, %v3606
  %3608 = vmatmul.f32.gmra.mxu0 %v3401
  %v3609 = vpop.f32.mrf.mxu0
  %v3610 = vadd.f32 %v3209, %v3609
  %3611 = vmatmul.f32.gmra.mxu0 %v3404
  %v3612 = vpop.f32.mrf.mxu0
  %v3613 = vadd.f32 %v3212, %v3612
  %3614 = vmatmul.f32.gmra.mxu0 %v3407
  %v3615 = vpop.f32.mrf.mxu0
  %v3616 = vadd.f32 %v3215, %v3615
  %3617 = vmatmul.f32.gmra.mxu0 %v3410
  %v3618 = vpop.f32.mrf.mxu0
  %v3619 = vadd.f32 %v3218, %v3618
  %3620 = vmatmul.f32.gmra.mxu0 %v3413
  %v3621 = vpop.f32.mrf.mxu0
  %v3622 = vadd.f32 %v3221, %v3621
  %3623 = vmatmul.f32.gmra.mxu0 %v3416
  %v3624 = vpop.f32.mrf.mxu0
  %v3625 = vadd.f32 %v3224, %v3624
  %3626 = vmatmul.f32.gmra.mxu0 %v3419
  %v3627 = vpop.f32.mrf.mxu0
  %v3628 = vadd.f32 %v3227, %v3627
  %3629 = vmatmul.f32.gmra.mxu0 %v3422
  %v3630 = vpop.f32.mrf.mxu0
  %v3631 = vadd.f32 %v3230, %v3630
  %3632 = vmatmul.f32.gmra.mxu0 %v3425
  %v3633 = vpop.f32.mrf.mxu0
  %v3634 = vadd.f32 %v3233, %v3633
  %3635 = vmatmul.f32.gmra.mxu0 %v3428
  %v3636 = vpop.f32.mrf.mxu0
  %v3637 = vadd.f32 %v3236, %v3636
  %3638 = vmatmul.f32.gmra.mxu0 %v3431
  %v3639 = vpop.f32.mrf.mxu0
  %v3640 = vadd.f32 %v3239, %v3639
  %3641 = vmatmul.f32.gmra.mxu0 %v3434
  %v3642 = vpop.f32.mrf.mxu0
  %v3643 = vadd.f32 %v3242, %v3642
  %3644 = vmatmul.f32.gmra.mxu0 %v3437
  %v3645 = vpop.f32.mrf.mxu0
  %v3646 = vadd.f32 %v3245, %v3645
  %3647 = vmatmul.f32.gmra.mxu0 %v3440
  %v3648 = vpop.f32.mrf.mxu0
  %v3649 = vadd.f32 %v3248, %v3648
  %3650 = vmatmul.f32.gmra.mxu0 %v3443
  %v3651 = vpop.f32.mrf.mxu0
  %v3652 = vadd.f32 %v3251, %v3651
  %3653 = vmatmul.f32.gmra.mxu0 %v3446
  %v3654 = vpop.f32.mrf.mxu0
  %v3655 = vadd.f32 %v3254, %v3654
  %3656 = vdwg.mxu0
  %v3657 = vld [vmem:[%s16] sm:$0x1]
  %v3659 = vperm.slane %v3657, 0
  %v3661 = vadd.f32 %v3466, %v3659
  %v3662 = vadd.f32 %v3469, %v3659
  %v3663 = vadd.f32 %v3472, %v3659
  %v3664 = vadd.f32 %v3475, %v3659
  %v3665 = vadd.f32 %v3478, %v3659
  %v3666 = vadd.f32 %v3481, %v3659
  %v3667 = vadd.f32 %v3484, %v3659
  %v3668 = vadd.f32 %v3487, %v3659
  %v3669 = vadd.f32 %v3490, %v3659
  %v3670 = vadd.f32 %v3493, %v3659
  %v3671 = vadd.f32 %v3496, %v3659
  %v3672 = vadd.f32 %v3499, %v3659
  %v3673 = vadd.f32 %v3502, %v3659
  %v3674 = vadd.f32 %v3505, %v3659
  %v3675 = vadd.f32 %v3508, %v3659
  %v3676 = vadd.f32 %v3511, %v3659
  %v3677 = vadd.f32 %v3514, %v3659
  %v3678 = vadd.f32 %v3517, %v3659
  %v3679 = vadd.f32 %v3520, %v3659
  %v3680 = vadd.f32 %v3523, %v3659
  %v3681 = vadd.f32 %v3526, %v3659
  %v3682 = vadd.f32 %v3529, %v3659
  %v3683 = vadd.f32 %v3532, %v3659
  %v3684 = vadd.f32 %v3535, %v3659
  %v3685 = vadd.f32 %v3538, %v3659
  %v3686 = vadd.f32 %v3541, %v3659
  %v3687 = vadd.f32 %v3544, %v3659
  %v3688 = vadd.f32 %v3547, %v3659
  %v3689 = vadd.f32 %v3550, %v3659
  %v3690 = vadd.f32 %v3553, %v3659
  %v3691 = vadd.f32 %v3556, %v3659
  %v3692 = vadd.f32 %v3559, %v3659
  %v3693 = vadd.f32 %v3562, %v3659
  %v3694 = vadd.f32 %v3565, %v3659
  %v3695 = vadd.f32 %v3568, %v3659
  %v3696 = vadd.f32 %v3571, %v3659
  %v3697 = vadd.f32 %v3574, %v3659
  %v3698 = vadd.f32 %v3577, %v3659
  %v3699 = vadd.f32 %v3580, %v3659
  %v3700 = vadd.f32 %v3583, %v3659
  %v3701 = vadd.f32 %v3586, %v3659
  %v3702 = vadd.f32 %v3589, %v3659
  %v3703 = vadd.f32 %v3592, %v3659
  %v3704 = vadd.f32 %v3595, %v3659
  %v3705 = vadd.f32 %v3598, %v3659
  %v3706 = vadd.f32 %v3601, %v3659
  %v3707 = vadd.f32 %v3604, %v3659
  %v3708 = vadd.f32 %v3607, %v3659
  %v3709 = vadd.f32 %v3610, %v3659
  %v3710 = vadd.f32 %v3613, %v3659
  %v3711 = vadd.f32 %v3616, %v3659
  %v3712 = vadd.f32 %v3619, %v3659
  %v3713 = vadd.f32 %v3622, %v3659
  %v3714 = vadd.f32 %v3625, %v3659
  %v3715 = vadd.f32 %v3628, %v3659
  %v3716 = vadd.f32 %v3631, %v3659
  %v3717 = vadd.f32 %v3634, %v3659
  %v3718 = vadd.f32 %v3637, %v3659
  %v3719 = vadd.f32 %v3640, %v3659
  %v3720 = vadd.f32 %v3643, %v3659
  %v3721 = vadd.f32 %v3646, %v3659
  %v3722 = vadd.f32 %v3649, %v3659
  %v3723 = vadd.f32 %v3652, %v3659
  %v3724 = vadd.f32 %v3655, %v3659
  %v3725 = vsel %vm1241, %v3661, 0.0
  %3726 = vadd.xlane.f32.xlu0 %v3725
  %v3727 = vpop.xlane.xlu0 %3726
  %v3728 = vsel %vm1241, %v3662, 0.0
  %3729 = vadd.xlane.f32.xlu0 %v3728
  %v3730 = vpop.xlane.xlu0 %3729
  %v3731 = vsel %vm1241, %v3663, 0.0
  %3732 = vadd.xlane.f32.xlu0 %v3731
  %v3733 = vpop.xlane.xlu0 %3732
  %v3734 = vsel %vm1241, %v3664, 0.0
  %3735 = vadd.xlane.f32.xlu0 %v3734
  %v3736 = vpop.xlane.xlu0 %3735
  %v3737 = vsel %vm1241, %v3665, 0.0
  %3738 = vadd.xlane.f32.xlu0 %v3737
  %v3739 = vpop.xlane.xlu0 %3738
  %v3740 = vsel %vm1241, %v3666, 0.0
  %3741 = vadd.xlane.f32.xlu0 %v3740
  %v3742 = vpop.xlane.xlu0 %3741
  %v3743 = vsel %vm1241, %v3667, 0.0
  %3744 = vadd.xlane.f32.xlu0 %v3743
  %v3745 = vpop.xlane.xlu0 %3744
  %v3746 = vsel %vm1241, %v3668, 0.0
  %3747 = vadd.xlane.f32.xlu0 %v3746
  %v3748 = vpop.xlane.xlu0 %3747
  %v3749 = vsel %vm1241, %v3669, 0.0
  %3750 = vadd.xlane.f32.xlu0 %v3749
  %v3751 = vpop.xlane.xlu0 %3750
  %v3752 = vsel %vm1241, %v3670, 0.0
  %3753 = vadd.xlane.f32.xlu0 %v3752
  %v3754 = vpop.xlane.xlu0 %3753
  %v3755 = vsel %vm1241, %v3671, 0.0
  %3756 = vadd.xlane.f32.xlu0 %v3755
  %v3757 = vpop.xlane.xlu0 %3756
  %v3758 = vsel %vm1241, %v3672, 0.0
  %3759 = vadd.xlane.f32.xlu0 %v3758
  %v3760 = vpop.xlane.xlu0 %3759
  %v3761 = vsel %vm1241, %v3673, 0.0
  %3762 = vadd.xlane.f32.xlu0 %v3761
  %v3763 = vpop.xlane.xlu0 %3762
  %v3764 = vsel %vm1241, %v3674, 0.0
  %3765 = vadd.xlane.f32.xlu0 %v3764
  %v3766 = vpop.xlane.xlu0 %3765
  %v3767 = vsel %vm1241, %v3675, 0.0
  %3768 = vadd.xlane.f32.xlu0 %v3767
  %v3769 = vpop.xlane.xlu0 %3768
  %v3770 = vsel %vm1241, %v3676, 0.0
  %3771 = vadd.xlane.f32.xlu0 %v3770
  %v3772 = vpop.xlane.xlu0 %3771
  %v3773 = vsel %vm1241, %v3677, 0.0
  %3774 = vadd.xlane.f32.xlu0 %v3773
  %v3775 = vpop.xlane.xlu0 %3774
  %v3776 = vsel %vm1241, %v3678, 0.0
  %3777 = vadd.xlane.f32.xlu0 %v3776
  %v3778 = vpop.xlane.xlu0 %3777
  %v3779 = vsel %vm1241, %v3679, 0.0
  %3780 = vadd.xlane.f32.xlu0 %v3779
  %v3781 = vpop.xlane.xlu0 %3780
  %v3782 = vsel %vm1241, %v3680, 0.0
  %3783 = vadd.xlane.f32.xlu0 %v3782
  %v3784 = vpop.xlane.xlu0 %3783
  %v3785 = vsel %vm1241, %v3681, 0.0
  %3786 = vadd.xlane.f32.xlu0 %v3785
  %v3787 = vpop.xlane.xlu0 %3786
  %v3788 = vsel %vm1241, %v3682, 0.0
  %3789 = vadd.xlane.f32.xlu0 %v3788
  %v3790 = vpop.xlane.xlu0 %3789
  %v3791 = vsel %vm1241, %v3683, 0.0
  %3792 = vadd.xlane.f32.xlu0 %v3791
  %v3793 = vpop.xlane.xlu0 %3792
  %v3794 = vsel %vm1241, %v3684, 0.0
  %3795 = vadd.xlane.f32.xlu0 %v3794
  %v3796 = vpop.xlane.xlu0 %3795
  %v3797 = vsel %vm1241, %v3685, 0.0
  %3798 = vadd.xlane.f32.xlu0 %v3797
  %v3799 = vpop.xlane.xlu0 %3798
  %v3800 = vsel %vm1241, %v3686, 0.0
  %3801 = vadd.xlane.f32.xlu0 %v3800
  %v3802 = vpop.xlane.xlu0 %3801
  %v3803 = vsel %vm1241, %v3687, 0.0
  %3804 = vadd.xlane.f32.xlu0 %v3803
  %v3805 = vpop.xlane.xlu0 %3804
  %v3806 = vsel %vm1241, %v3688, 0.0
  %3807 = vadd.xlane.f32.xlu0 %v3806
  %v3808 = vpop.xlane.xlu0 %3807
  %v3809 = vsel %vm1241, %v3689, 0.0
  %3810 = vadd.xlane.f32.xlu0 %v3809
  %v3811 = vpop.xlane.xlu0 %3810
  %v3812 = vsel %vm1241, %v3690, 0.0
  %3813 = vadd.xlane.f32.xlu0 %v3812
  %v3814 = vpop.xlane.xlu0 %3813
  %v3815 = vsel %vm1241, %v3691, 0.0
  %3816 = vadd.xlane.f32.xlu0 %v3815
  %v3817 = vpop.xlane.xlu0 %3816
  %v3818 = vsel %vm1241, %v3692, 0.0
  %3819 = vadd.xlane.f32.xlu0 %v3818
  %v3820 = vpop.xlane.xlu0 %3819
  %v3821 = vsel %vm1241, %v3693, 0.0
  %3822 = vadd.xlane.f32.xlu0 %v3821
  %v3823 = vpop.xlane.xlu0 %3822
  %v3824 = vsel %vm1241, %v3694, 0.0
  %3825 = vadd.xlane.f32.xlu0 %v3824
  %v3826 = vpop.xlane.xlu0 %3825
  %v3827 = vsel %vm1241, %v3695, 0.0
  %3828 = vadd.xlane.f32.xlu0 %v3827
  %v3829 = vpop.xlane.xlu0 %3828
  %v3830 = vsel %vm1241, %v3696, 0.0
  %3831 = vadd.xlane.f32.xlu0 %v3830
  %v3832 = vpop.xlane.xlu0 %3831
  %v3833 = vsel %vm1241, %v3697, 0.0
  %3834 = vadd.xlane.f32.xlu0 %v3833
  %v3835 = vpop.xlane.xlu0 %3834
  %v3836 = vsel %vm1241, %v3698, 0.0
  %3837 = vadd.xlane.f32.xlu0 %v3836
  %v3838 = vpop.xlane.xlu0 %3837
  %v3839 = vsel %vm1241, %v3699, 0.0
  %3840 = vadd.xlane.f32.xlu0 %v3839
  %v3841 = vpop.xlane.xlu0 %3840
  %v3842 = vsel %vm1241, %v3700, 0.0
  %3843 = vadd.xlane.f32.xlu0 %v3842
  %v3844 = vpop.xlane.xlu0 %3843
  %v3845 = vsel %vm1241, %v3701, 0.0
  %3846 = vadd.xlane.f32.xlu0 %v3845
  %v3847 = vpop.xlane.xlu0 %3846
  %v3848 = vsel %vm1241, %v3702, 0.0
  %3849 = vadd.xlane.f32.xlu0 %v3848
  %v3850 = vpop.xlane.xlu0 %3849
  %v3851 = vsel %vm1241, %v3703, 0.0
  %3852 = vadd.xlane.f32.xlu0 %v3851
  %v3853 = vpop.xlane.xlu0 %3852
  %v3854 = vsel %vm1241, %v3704, 0.0
  %3855 = vadd.xlane.f32.xlu0 %v3854
  %v3856 = vpop.xlane.xlu0 %3855
  %v3857 = vsel %vm1241, %v3705, 0.0
  %3858 = vadd.xlane.f32.xlu0 %v3857
  %v3859 = vpop.xlane.xlu0 %3858
  %v3860 = vsel %vm1241, %v3706, 0.0
  %3861 = vadd.xlane.f32.xlu0 %v3860
  %v3862 = vpop.xlane.xlu0 %3861
  %v3863 = vsel %vm1241, %v3707, 0.0
  %3864 = vadd.xlane.f32.xlu0 %v3863
  %v3865 = vpop.xlane.xlu0 %3864
  %v3866 = vsel %vm1241, %v3708, 0.0
  %3867 = vadd.xlane.f32.xlu0 %v3866
  %v3868 = vpop.xlane.xlu0 %3867
  %v3869 = vsel %vm1241, %v3709, 0.0
  %3870 = vadd.xlane.f32.xlu0 %v3869
  %v3871 = vpop.xlane.xlu0 %3870
  %v3872 = vsel %vm1241, %v3710, 0.0
  %3873 = vadd.xlane.f32.xlu0 %v3872
  %v3874 = vpop.xlane.xlu0 %3873
  %v3875 = vsel %vm1241, %v3711, 0.0
  %3876 = vadd.xlane.f32.xlu0 %v3875
  %v3877 = vpop.xlane.xlu0 %3876
  %v3878 = vsel %vm1241, %v3712, 0.0
  %3879 = vadd.xlane.f32.xlu0 %v3878
  %v3880 = vpop.xlane.xlu0 %3879
  %v3881 = vsel %vm1241, %v3713, 0.0
  %3882 = vadd.xlane.f32.xlu0 %v3881
  %v3883 = vpop.xlane.xlu0 %3882
  %v3884 = vsel %vm1241, %v3714, 0.0
  %3885 = vadd.xlane.f32.xlu0 %v3884
  %v3886 = vpop.xlane.xlu0 %3885
  %v3887 = vsel %vm1241, %v3715, 0.0
  %3888 = vadd.xlane.f32.xlu0 %v3887
  %v3889 = vpop.xlane.xlu0 %3888
  %v3890 = vsel %vm1241, %v3716, 0.0
  %3891 = vadd.xlane.f32.xlu0 %v3890
  %v3892 = vpop.xlane.xlu0 %3891
  %v3893 = vsel %vm1241, %v3717, 0.0
  %3894 = vadd.xlane.f32.xlu0 %v3893
  %v3895 = vpop.xlane.xlu0 %3894
  %v3896 = vsel %vm1241, %v3718, 0.0
  %3897 = vadd.xlane.f32.xlu0 %v3896
  %v3898 = vpop.xlane.xlu0 %3897
  %v3899 = vsel %vm1241, %v3719, 0.0
  %3900 = vadd.xlane.f32.xlu0 %v3899
  %v3901 = vpop.xlane.xlu0 %3900
  %v3902 = vsel %vm1241, %v3720, 0.0
  %3903 = vadd.xlane.f32.xlu0 %v3902
  %v3904 = vpop.xlane.xlu0 %3903
  %v3905 = vsel %vm1241, %v3721, 0.0
  %3906 = vadd.xlane.f32.xlu0 %v3905
  %v3907 = vpop.xlane.xlu0 %3906
  %v3908 = vsel %vm1241, %v3722, 0.0
  %3909 = vadd.xlane.f32.xlu0 %v3908
  %v3910 = vpop.xlane.xlu0 %3909
  %v3911 = vsel %vm1241, %v3723, 0.0
  %3912 = vadd.xlane.f32.xlu0 %v3911
  %v3913 = vpop.xlane.xlu0 %3912
  %v3914 = vsel %vm1241, %v3724, 0.0
  %3915 = vadd.xlane.f32.xlu0 %v3914
  %v3916 = vpop.xlane.xlu0 %3915
  %v3917 = vmul.f32 %v3727, %v1440
  %v3918 = vmul.f32 %v3730, %v1440
  %v3919 = vmul.f32 %v3733, %v1440
  %v3920 = vmul.f32 %v3736, %v1440
  %v3921 = vmul.f32 %v3739, %v1440
  %v3922 = vmul.f32 %v3742, %v1440
  %v3923 = vmul.f32 %v3745, %v1440
  %v3924 = vmul.f32 %v3748, %v1440
  %v3925 = vmul.f32 %v3751, %v1440
  %v3926 = vmul.f32 %v3754, %v1440
  %v3927 = vmul.f32 %v3757, %v1440
  %v3928 = vmul.f32 %v3760, %v1440
  %v3929 = vmul.f32 %v3763, %v1440
  %v3930 = vmul.f32 %v3766, %v1440
  %v3931 = vmul.f32 %v3769, %v1440
  %v3932 = vmul.f32 %v3772, %v1440
  %v3933 = vmul.f32 %v3775, %v1440
  %v3934 = vmul.f32 %v3778, %v1440
  %v3935 = vmul.f32 %v3781, %v1440
  %v3936 = vmul.f32 %v3784, %v1440
  %v3937 = vmul.f32 %v3787, %v1440
  %v3938 = vmul.f32 %v3790, %v1440
  %v3939 = vmul.f32 %v3793, %v1440
  %v3940 = vmul.f32 %v3796, %v1440
  %v3941 = vmul.f32 %v3799, %v1440
  %v3942 = vmul.f32 %v3802, %v1440
  %v3943 = vmul.f32 %v3805, %v1440
  %v3944 = vmul.f32 %v3808, %v1440
  %v3945 = vmul.f32 %v3811, %v1440
  %v3946 = vmul.f32 %v3814, %v1440
  %v3947 = vmul.f32 %v3817, %v1440
  %v3948 = vmul.f32 %v3820, %v1440
  %v3949 = vmul.f32 %v3823, %v1440
  %v3950 = vmul.f32 %v3826, %v1440
  %v3951 = vmul.f32 %v3829, %v1440
  %v3952 = vmul.f32 %v3832, %v1440
  %v3953 = vmul.f32 %v3835, %v1440
  %v3954 = vmul.f32 %v3838, %v1440
  %v3955 = vmul.f32 %v3841, %v1440
  %v3956 = vmul.f32 %v3844, %v1440
  %v3957 = vmul.f32 %v3847, %v1440
  %v3958 = vmul.f32 %v3850, %v1440
  %v3959 = vmul.f32 %v3853, %v1440
  %v3960 = vmul.f32 %v3856, %v1440
  %v3961 = vmul.f32 %v3859, %v1440
  %v3962 = vmul.f32 %v3862, %v1440
  %v3963 = vmul.f32 %v3865, %v1440
  %v3964 = vmul.f32 %v3868, %v1440
  %v3965 = vmul.f32 %v3871, %v1440
  %v3966 = vmul.f32 %v3874, %v1440
  %v3967 = vmul.f32 %v3877, %v1440
  %v3968 = vmul.f32 %v3880, %v1440
  %v3969 = vmul.f32 %v3883, %v1440
  %v3970 = vmul.f32 %v3886, %v1440
  %v3971 = vmul.f32 %v3889, %v1440
  %v3972 = vmul.f32 %v3892, %v1440
  %v3973 = vmul.f32 %v3895, %v1440
  %v3974 = vmul.f32 %v3898, %v1440
  %v3975 = vmul.f32 %v3901, %v1440
  %v3976 = vmul.f32 %v3904, %v1440
  %v3977 = vmul.f32 %v3907, %v1440
  %v3978 = vmul.f32 %v3910, %v1440
  %v3979 = vmul.f32 %v3913, %v1440
  %v3980 = vmul.f32 %v3916, %v1440
  %v3981 = vsub.f32 %v3661, %v3917
  %v3982 = vsub.f32 %v3662, %v3918
  %v3983 = vsub.f32 %v3663, %v3919
  %v3984 = vsub.f32 %v3664, %v3920
  %v3985 = vsub.f32 %v3665, %v3921
  %v3986 = vsub.f32 %v3666, %v3922
  %v3987 = vsub.f32 %v3667, %v3923
  %v3988 = vsub.f32 %v3668, %v3924
  %v3989 = vsub.f32 %v3669, %v3925
  %v3990 = vsub.f32 %v3670, %v3926
  %v3991 = vsub.f32 %v3671, %v3927
  %v3992 = vsub.f32 %v3672, %v3928
  %v3993 = vsub.f32 %v3673, %v3929
  %v3994 = vsub.f32 %v3674, %v3930
  %v3995 = vsub.f32 %v3675, %v3931
  %v3996 = vsub.f32 %v3676, %v3932
  %v3997 = vsub.f32 %v3677, %v3933
  %v3998 = vsub.f32 %v3678, %v3934
  %v3999 = vsub.f32 %v3679, %v3935
  %v4000 = vsub.f32 %v3680, %v3936
  %v4001 = vsub.f32 %v3681, %v3937
  %v4002 = vsub.f32 %v3682, %v3938
  %v4003 = vsub.f32 %v3683, %v3939
  %v4004 = vsub.f32 %v3684, %v3940
  %v4005 = vsub.f32 %v3685, %v3941
  %v4006 = vsub.f32 %v3686, %v3942
  %v4007 = vsub.f32 %v3687, %v3943
  %v4008 = vsub.f32 %v3688, %v3944
  %v4009 = vsub.f32 %v3689, %v3945
  %v4010 = vsub.f32 %v3690, %v3946
  %v4011 = vsub.f32 %v3691, %v3947
  %v4012 = vsub.f32 %v3692, %v3948
  %v4013 = vsub.f32 %v3693, %v3949
  %v4014 = vsub.f32 %v3694, %v3950
  %v4015 = vsub.f32 %v3695, %v3951
  %v4016 = vsub.f32 %v3696, %v3952
  %v4017 = vsub.f32 %v3697, %v3953
  %v4018 = vsub.f32 %v3698, %v3954
  %v4019 = vsub.f32 %v3699, %v3955
  %v4020 = vsub.f32 %v3700, %v3956
  %v4021 = vsub.f32 %v3701, %v3957
  %v4022 = vsub.f32 %v3702, %v3958
  %v4023 = vsub.f32 %v3703, %v3959
  %v4024 = vsub.f32 %v3704, %v3960
  %v4025 = vsub.f32 %v3705, %v3961
  %v4026 = vsub.f32 %v3706, %v3962
  %v4027 = vsub.f32 %v3707, %v3963
  %v4028 = vsub.f32 %v3708, %v3964
  %v4029 = vsub.f32 %v3709, %v3965
  %v4030 = vsub.f32 %v3710, %v3966
  %v4031 = vsub.f32 %v3711, %v3967
  %v4032 = vsub.f32 %v3712, %v3968
  %v4033 = vsub.f32 %v3713, %v3969
  %v4034 = vsub.f32 %v3714, %v3970
  %v4035 = vsub.f32 %v3715, %v3971
  %v4036 = vsub.f32 %v3716, %v3972
  %v4037 = vsub.f32 %v3717, %v3973
  %v4038 = vsub.f32 %v3718, %v3974
  %v4039 = vsub.f32 %v3719, %v3975
  %v4040 = vsub.f32 %v3720, %v3976
  %v4041 = vsub.f32 %v3721, %v3977
  %v4042 = vsub.f32 %v3722, %v3978
  %v4043 = vsub.f32 %v3723, %v3979
  %v4044 = vsub.f32 %v3724, %v3980
  %v4045 = vmul.f32 %v3981, %v3981
  %v4046 = vmul.f32 %v3982, %v3982
  %v4047 = vmul.f32 %v3983, %v3983
  %v4048 = vmul.f32 %v3984, %v3984
  %v4049 = vmul.f32 %v3985, %v3985
  %v4050 = vmul.f32 %v3986, %v3986
  %v4051 = vmul.f32 %v3987, %v3987
  %v4052 = vmul.f32 %v3988, %v3988
  %v4053 = vmul.f32 %v3989, %v3989
  %v4054 = vmul.f32 %v3990, %v3990
  %v4055 = vmul.f32 %v3991, %v3991
  %v4056 = vmul.f32 %v3992, %v3992
  %v4057 = vmul.f32 %v3993, %v3993
  %v4058 = vmul.f32 %v3994, %v3994
  %v4059 = vmul.f32 %v3995, %v3995
  %v4060 = vmul.f32 %v3996, %v3996
  %v4061 = vmul.f32 %v3997, %v3997
  %v4062 = vmul.f32 %v3998, %v3998
  %v4063 = vmul.f32 %v3999, %v3999
  %v4064 = vmul.f32 %v4000, %v4000
  %v4065 = vmul.f32 %v4001, %v4001
  %v4066 = vmul.f32 %v4002, %v4002
  %v4067 = vmul.f32 %v4003, %v4003
  %v4068 = vmul.f32 %v4004, %v4004
  %v4069 = vmul.f32 %v4005, %v4005
  %v4070 = vmul.f32 %v4006, %v4006
  %v4071 = vmul.f32 %v4007, %v4007
  %v4072 = vmul.f32 %v4008, %v4008
  %v4073 = vmul.f32 %v4009, %v4009
  %v4074 = vmul.f32 %v4010, %v4010
  %v4075 = vmul.f32 %v4011, %v4011
  %v4076 = vmul.f32 %v4012, %v4012
  %v4077 = vmul.f32 %v4013, %v4013
  %v4078 = vmul.f32 %v4014, %v4014
  %v4079 = vmul.f32 %v4015, %v4015
  %v4080 = vmul.f32 %v4016, %v4016
  %v4081 = vmul.f32 %v4017, %v4017
  %v4082 = vmul.f32 %v4018, %v4018
  %v4083 = vmul.f32 %v4019, %v4019
  %v4084 = vmul.f32 %v4020, %v4020
  %v4085 = vmul.f32 %v4021, %v4021
  %v4086 = vmul.f32 %v4022, %v4022
  %v4087 = vmul.f32 %v4023, %v4023
  %v4088 = vmul.f32 %v4024, %v4024
  %v4089 = vmul.f32 %v4025, %v4025
  %v4090 = vmul.f32 %v4026, %v4026
  %v4091 = vmul.f32 %v4027, %v4027
  %v4092 = vmul.f32 %v4028, %v4028
  %v4093 = vmul.f32 %v4029, %v4029
  %v4094 = vmul.f32 %v4030, %v4030
  %v4095 = vmul.f32 %v4031, %v4031
  %v4096 = vmul.f32 %v4032, %v4032
  %v4097 = vmul.f32 %v4033, %v4033
  %v4098 = vmul.f32 %v4034, %v4034
  %v4099 = vmul.f32 %v4035, %v4035
  %v4100 = vmul.f32 %v4036, %v4036
  %v4101 = vmul.f32 %v4037, %v4037
  %v4102 = vmul.f32 %v4038, %v4038
  %v4103 = vmul.f32 %v4039, %v4039
  %v4104 = vmul.f32 %v4040, %v4040
  %v4105 = vmul.f32 %v4041, %v4041
  %v4106 = vmul.f32 %v4042, %v4042
  %v4107 = vmul.f32 %v4043, %v4043
  %v4108 = vmul.f32 %v4044, %v4044
  %v4109 = vsel %vm1241, %v4045, 0.0
  %4110 = vadd.xlane.f32.xlu0 %v4109
  %v4111 = vpop.xlane.xlu0 %4110
  %v4112 = vsel %vm1241, %v4046, 0.0
  %4113 = vadd.xlane.f32.xlu0 %v4112
  %v4114 = vpop.xlane.xlu0 %4113
  %v4115 = vsel %vm1241, %v4047, 0.0
  %4116 = vadd.xlane.f32.xlu0 %v4115
  %v4117 = vpop.xlane.xlu0 %4116
  %v4118 = vsel %vm1241, %v4048, 0.0
  %4119 = vadd.xlane.f32.xlu0 %v4118
  %v4120 = vpop.xlane.xlu0 %4119
  %v4121 = vsel %vm1241, %v4049, 0.0
  %4122 = vadd.xlane.f32.xlu0 %v4121
  %v4123 = vpop.xlane.xlu0 %4122
  %v4124 = vsel %vm1241, %v4050, 0.0
  %4125 = vadd.xlane.f32.xlu0 %v4124
  %v4126 = vpop.xlane.xlu0 %4125
  %v4127 = vsel %vm1241, %v4051, 0.0
  %4128 = vadd.xlane.f32.xlu0 %v4127
  %v4129 = vpop.xlane.xlu0 %4128
  %v4130 = vsel %vm1241, %v4052, 0.0
  %4131 = vadd.xlane.f32.xlu0 %v4130
  %v4132 = vpop.xlane.xlu0 %4131
  %v4133 = vsel %vm1241, %v4053, 0.0
  %4134 = vadd.xlane.f32.xlu0 %v4133
  %v4135 = vpop.xlane.xlu0 %4134
  %v4136 = vsel %vm1241, %v4054, 0.0
  %4137 = vadd.xlane.f32.xlu0 %v4136
  %v4138 = vpop.xlane.xlu0 %4137
  %v4139 = vsel %vm1241, %v4055, 0.0
  %4140 = vadd.xlane.f32.xlu0 %v4139
  %v4141 = vpop.xlane.xlu0 %4140
  %v4142 = vsel %vm1241, %v4056, 0.0
  %4143 = vadd.xlane.f32.xlu0 %v4142
  %v4144 = vpop.xlane.xlu0 %4143
  %v4145 = vsel %vm1241, %v4057, 0.0
  %4146 = vadd.xlane.f32.xlu0 %v4145
  %v4147 = vpop.xlane.xlu0 %4146
  %v4148 = vsel %vm1241, %v4058, 0.0
  %4149 = vadd.xlane.f32.xlu0 %v4148
  %v4150 = vpop.xlane.xlu0 %4149
  %v4151 = vsel %vm1241, %v4059, 0.0
  %4152 = vadd.xlane.f32.xlu0 %v4151
  %v4153 = vpop.xlane.xlu0 %4152
  %v4154 = vsel %vm1241, %v4060, 0.0
  %4155 = vadd.xlane.f32.xlu0 %v4154
  %v4156 = vpop.xlane.xlu0 %4155
  %v4157 = vsel %vm1241, %v4061, 0.0
  %4158 = vadd.xlane.f32.xlu0 %v4157
  %v4159 = vpop.xlane.xlu0 %4158
  %v4160 = vsel %vm1241, %v4062, 0.0
  %4161 = vadd.xlane.f32.xlu0 %v4160
  %v4162 = vpop.xlane.xlu0 %4161
  %v4163 = vsel %vm1241, %v4063, 0.0
  %4164 = vadd.xlane.f32.xlu0 %v4163
  %v4165 = vpop.xlane.xlu0 %4164
  %v4166 = vsel %vm1241, %v4064, 0.0
  %4167 = vadd.xlane.f32.xlu0 %v4166
  %v4168 = vpop.xlane.xlu0 %4167
  %v4169 = vsel %vm1241, %v4065, 0.0
  %4170 = vadd.xlane.f32.xlu0 %v4169
  %v4171 = vpop.xlane.xlu0 %4170
  %v4172 = vsel %vm1241, %v4066, 0.0
  %4173 = vadd.xlane.f32.xlu0 %v4172
  %v4174 = vpop.xlane.xlu0 %4173
  %v4175 = vsel %vm1241, %v4067, 0.0
  %4176 = vadd.xlane.f32.xlu0 %v4175
  %v4177 = vpop.xlane.xlu0 %4176
  %v4178 = vsel %vm1241, %v4068, 0.0
  %4179 = vadd.xlane.f32.xlu0 %v4178
  %v4180 = vpop.xlane.xlu0 %4179
  %v4181 = vsel %vm1241, %v4069, 0.0
  %4182 = vadd.xlane.f32.xlu0 %v4181
  %v4183 = vpop.xlane.xlu0 %4182
  %v4184 = vsel %vm1241, %v4070, 0.0
  %4185 = vadd.xlane.f32.xlu0 %v4184
  %v4186 = vpop.xlane.xlu0 %4185
  %v4187 = vsel %vm1241, %v4071, 0.0
  %4188 = vadd.xlane.f32.xlu0 %v4187
  %v4189 = vpop.xlane.xlu0 %4188
  %v4190 = vsel %vm1241, %v4072, 0.0
  %4191 = vadd.xlane.f32.xlu0 %v4190
  %v4192 = vpop.xlane.xlu0 %4191
  %v4193 = vsel %vm1241, %v4073, 0.0
  %4194 = vadd.xlane.f32.xlu0 %v4193
  %v4195 = vpop.xlane.xlu0 %4194
  %v4196 = vsel %vm1241, %v4074, 0.0
  %4197 = vadd.xlane.f32.xlu0 %v4196
  %v4198 = vpop.xlane.xlu0 %4197
  %v4199 = vsel %vm1241, %v4075, 0.0
  %4200 = vadd.xlane.f32.xlu0 %v4199
  %v4201 = vpop.xlane.xlu0 %4200
  %v4202 = vsel %vm1241, %v4076, 0.0
  %4203 = vadd.xlane.f32.xlu0 %v4202
  %v4204 = vpop.xlane.xlu0 %4203
  %v4205 = vsel %vm1241, %v4077, 0.0
  %4206 = vadd.xlane.f32.xlu0 %v4205
  %v4207 = vpop.xlane.xlu0 %4206
  %v4208 = vsel %vm1241, %v4078, 0.0
  %4209 = vadd.xlane.f32.xlu0 %v4208
  %v4210 = vpop.xlane.xlu0 %4209
  %v4211 = vsel %vm1241, %v4079, 0.0
  %4212 = vadd.xlane.f32.xlu0 %v4211
  %v4213 = vpop.xlane.xlu0 %4212
  %v4214 = vsel %vm1241, %v4080, 0.0
  %4215 = vadd.xlane.f32.xlu0 %v4214
  %v4216 = vpop.xlane.xlu0 %4215
  %v4217 = vsel %vm1241, %v4081, 0.0
  %4218 = vadd.xlane.f32.xlu0 %v4217
  %v4219 = vpop.xlane.xlu0 %4218
  %v4220 = vsel %vm1241, %v4082, 0.0
  %4221 = vadd.xlane.f32.xlu0 %v4220
  %v4222 = vpop.xlane.xlu0 %4221
  %v4223 = vsel %vm1241, %v4083, 0.0
  %4224 = vadd.xlane.f32.xlu0 %v4223
  %v4225 = vpop.xlane.xlu0 %4224
  %v4226 = vsel %vm1241, %v4084, 0.0
  %4227 = vadd.xlane.f32.xlu0 %v4226
  %v4228 = vpop.xlane.xlu0 %4227
  %v4229 = vsel %vm1241, %v4085, 0.0
  %4230 = vadd.xlane.f32.xlu0 %v4229
  %v4231 = vpop.xlane.xlu0 %4230
  %v4232 = vsel %vm1241, %v4086, 0.0
  %4233 = vadd.xlane.f32.xlu0 %v4232
  %v4234 = vpop.xlane.xlu0 %4233
  %v4235 = vsel %vm1241, %v4087, 0.0
  %4236 = vadd.xlane.f32.xlu0 %v4235
  %v4237 = vpop.xlane.xlu0 %4236
  %v4238 = vsel %vm1241, %v4088, 0.0
  %4239 = vadd.xlane.f32.xlu0 %v4238
  %v4240 = vpop.xlane.xlu0 %4239
  %v4241 = vsel %vm1241, %v4089, 0.0
  %4242 = vadd.xlane.f32.xlu0 %v4241
  %v4243 = vpop.xlane.xlu0 %4242
  %v4244 = vsel %vm1241, %v4090, 0.0
  %4245 = vadd.xlane.f32.xlu0 %v4244
  %v4246 = vpop.xlane.xlu0 %4245
  %v4247 = vsel %vm1241, %v4091, 0.0
  %4248 = vadd.xlane.f32.xlu0 %v4247
  %v4249 = vpop.xlane.xlu0 %4248
  %v4250 = vsel %vm1241, %v4092, 0.0
  %4251 = vadd.xlane.f32.xlu0 %v4250
  %v4252 = vpop.xlane.xlu0 %4251
  %v4253 = vsel %vm1241, %v4093, 0.0
  %4254 = vadd.xlane.f32.xlu0 %v4253
  %v4255 = vpop.xlane.xlu0 %4254
  %v4256 = vsel %vm1241, %v4094, 0.0
  %4257 = vadd.xlane.f32.xlu0 %v4256
  %v4258 = vpop.xlane.xlu0 %4257
  %v4259 = vsel %vm1241, %v4095, 0.0
  %4260 = vadd.xlane.f32.xlu0 %v4259
  %v4261 = vpop.xlane.xlu0 %4260
  %v4262 = vsel %vm1241, %v4096, 0.0
  %4263 = vadd.xlane.f32.xlu0 %v4262
  %v4264 = vpop.xlane.xlu0 %4263
  %v4265 = vsel %vm1241, %v4097, 0.0
  %4266 = vadd.xlane.f32.xlu0 %v4265
  %v4267 = vpop.xlane.xlu0 %4266
  %v4268 = vsel %vm1241, %v4098, 0.0
  %4269 = vadd.xlane.f32.xlu0 %v4268
  %v4270 = vpop.xlane.xlu0 %4269
  %v4271 = vsel %vm1241, %v4099, 0.0
  %4272 = vadd.xlane.f32.xlu0 %v4271
  %v4273 = vpop.xlane.xlu0 %4272
  %v4274 = vsel %vm1241, %v4100, 0.0
  %4275 = vadd.xlane.f32.xlu0 %v4274
  %v4276 = vpop.xlane.xlu0 %4275
  %v4277 = vsel %vm1241, %v4101, 0.0
  %4278 = vadd.xlane.f32.xlu0 %v4277
  %v4279 = vpop.xlane.xlu0 %4278
  %v4280 = vsel %vm1241, %v4102, 0.0
  %4281 = vadd.xlane.f32.xlu0 %v4280
  %v4282 = vpop.xlane.xlu0 %4281
  %v4283 = vsel %vm1241, %v4103, 0.0
  %4284 = vadd.xlane.f32.xlu0 %v4283
  %v4285 = vpop.xlane.xlu0 %4284
  %v4286 = vsel %vm1241, %v4104, 0.0
  %4287 = vadd.xlane.f32.xlu0 %v4286
  %v4288 = vpop.xlane.xlu0 %4287
  %v4289 = vsel %vm1241, %v4105, 0.0
  %4290 = vadd.xlane.f32.xlu0 %v4289
  %v4291 = vpop.xlane.xlu0 %4290
  %v4292 = vsel %vm1241, %v4106, 0.0
  %4293 = vadd.xlane.f32.xlu0 %v4292
  %v4294 = vpop.xlane.xlu0 %4293
  %v4295 = vsel %vm1241, %v4107, 0.0
  %4296 = vadd.xlane.f32.xlu0 %v4295
  %v4297 = vpop.xlane.xlu0 %4296
  %v4298 = vsel %vm1241, %v4108, 0.0
  %4299 = vadd.xlane.f32.xlu0 %v4298
  %v4300 = vpop.xlane.xlu0 %4299
  %v4301 = vmul.f32 %v4111, %v1440
  %v4302 = vmul.f32 %v4114, %v1440
  %v4303 = vmul.f32 %v4117, %v1440
  %v4304 = vmul.f32 %v4120, %v1440
  %v4305 = vmul.f32 %v4123, %v1440
  %v4306 = vmul.f32 %v4126, %v1440
  %v4307 = vmul.f32 %v4129, %v1440
  %v4308 = vmul.f32 %v4132, %v1440
  %v4309 = vmul.f32 %v4135, %v1440
  %v4310 = vmul.f32 %v4138, %v1440
  %v4311 = vmul.f32 %v4141, %v1440
  %v4312 = vmul.f32 %v4144, %v1440
  %v4313 = vmul.f32 %v4147, %v1440
  %v4314 = vmul.f32 %v4150, %v1440
  %v4315 = vmul.f32 %v4153, %v1440
  %v4316 = vmul.f32 %v4156, %v1440
  %v4317 = vmul.f32 %v4159, %v1440
  %v4318 = vmul.f32 %v4162, %v1440
  %v4319 = vmul.f32 %v4165, %v1440
  %v4320 = vmul.f32 %v4168, %v1440
  %v4321 = vmul.f32 %v4171, %v1440
  %v4322 = vmul.f32 %v4174, %v1440
  %v4323 = vmul.f32 %v4177, %v1440
  %v4324 = vmul.f32 %v4180, %v1440
  %v4325 = vmul.f32 %v4183, %v1440
  %v4326 = vmul.f32 %v4186, %v1440
  %v4327 = vmul.f32 %v4189, %v1440
  %v4328 = vmul.f32 %v4192, %v1440
  %v4329 = vmul.f32 %v4195, %v1440
  %v4330 = vmul.f32 %v4198, %v1440
  %v4331 = vmul.f32 %v4201, %v1440
  %v4332 = vmul.f32 %v4204, %v1440
  %v4333 = vmul.f32 %v4207, %v1440
  %v4334 = vmul.f32 %v4210, %v1440
  %v4335 = vmul.f32 %v4213, %v1440
  %v4336 = vmul.f32 %v4216, %v1440
  %v4337 = vmul.f32 %v4219, %v1440
  %v4338 = vmul.f32 %v4222, %v1440
  %v4339 = vmul.f32 %v4225, %v1440
  %v4340 = vmul.f32 %v4228, %v1440
  %v4341 = vmul.f32 %v4231, %v1440
  %v4342 = vmul.f32 %v4234, %v1440
  %v4343 = vmul.f32 %v4237, %v1440
  %v4344 = vmul.f32 %v4240, %v1440
  %v4345 = vmul.f32 %v4243, %v1440
  %v4346 = vmul.f32 %v4246, %v1440
  %v4347 = vmul.f32 %v4249, %v1440
  %v4348 = vmul.f32 %v4252, %v1440
  %v4349 = vmul.f32 %v4255, %v1440
  %v4350 = vmul.f32 %v4258, %v1440
  %v4351 = vmul.f32 %v4261, %v1440
  %v4352 = vmul.f32 %v4264, %v1440
  %v4353 = vmul.f32 %v4267, %v1440
  %v4354 = vmul.f32 %v4270, %v1440
  %v4355 = vmul.f32 %v4273, %v1440
  %v4356 = vmul.f32 %v4276, %v1440
  %v4357 = vmul.f32 %v4279, %v1440
  %v4358 = vmul.f32 %v4282, %v1440
  %v4359 = vmul.f32 %v4285, %v1440
  %v4360 = vmul.f32 %v4288, %v1440
  %v4361 = vmul.f32 %v4291, %v1440
  %v4362 = vmul.f32 %v4294, %v1440
  %v4363 = vmul.f32 %v4297, %v1440
  %v4364 = vmul.f32 %v4300, %v1440
  %v4365 = vadd.f32 %v4301, 1e-05
  %v4366 = vadd.f32 %v4302, 1e-05
  %v4367 = vadd.f32 %v4303, 1e-05
  %v4368 = vadd.f32 %v4304, 1e-05
  %v4369 = vadd.f32 %v4305, 1e-05
  %v4370 = vadd.f32 %v4306, 1e-05
  %v4371 = vadd.f32 %v4307, 1e-05
  %v4372 = vadd.f32 %v4308, 1e-05
  %v4373 = vadd.f32 %v4309, 1e-05
  %v4374 = vadd.f32 %v4310, 1e-05
  %v4375 = vadd.f32 %v4311, 1e-05
  %v4376 = vadd.f32 %v4312, 1e-05
  %v4377 = vadd.f32 %v4313, 1e-05
  %v4378 = vadd.f32 %v4314, 1e-05
  %v4379 = vadd.f32 %v4315, 1e-05
  %v4380 = vadd.f32 %v4316, 1e-05
  %v4381 = vadd.f32 %v4317, 1e-05
  %v4382 = vadd.f32 %v4318, 1e-05
  %v4383 = vadd.f32 %v4319, 1e-05
  %v4384 = vadd.f32 %v4320, 1e-05
  %v4385 = vadd.f32 %v4321, 1e-05
  %v4386 = vadd.f32 %v4322, 1e-05
  %v4387 = vadd.f32 %v4323, 1e-05
  %v4388 = vadd.f32 %v4324, 1e-05
  %v4389 = vadd.f32 %v4325, 1e-05
  %v4390 = vadd.f32 %v4326, 1e-05
  %v4391 = vadd.f32 %v4327, 1e-05
  %v4392 = vadd.f32 %v4328, 1e-05
  %v4393 = vadd.f32 %v4329, 1e-05
  %v4394 = vadd.f32 %v4330, 1e-05
  %v4395 = vadd.f32 %v4331, 1e-05
  %v4396 = vadd.f32 %v4332, 1e-05
  %v4397 = vadd.f32 %v4333, 1e-05
  %v4398 = vadd.f32 %v4334, 1e-05
  %v4399 = vadd.f32 %v4335, 1e-05
  %v4400 = vadd.f32 %v4336, 1e-05
  %v4401 = vadd.f32 %v4337, 1e-05
  %v4402 = vadd.f32 %v4338, 1e-05
  %v4403 = vadd.f32 %v4339, 1e-05
  %v4404 = vadd.f32 %v4340, 1e-05
  %v4405 = vadd.f32 %v4341, 1e-05
  %v4406 = vadd.f32 %v4342, 1e-05
  %v4407 = vadd.f32 %v4343, 1e-05
  %v4408 = vadd.f32 %v4344, 1e-05
  %v4409 = vadd.f32 %v4345, 1e-05
  %v4410 = vadd.f32 %v4346, 1e-05
  %v4411 = vadd.f32 %v4347, 1e-05
  %v4412 = vadd.f32 %v4348, 1e-05
  %v4413 = vadd.f32 %v4349, 1e-05
  %v4414 = vadd.f32 %v4350, 1e-05
  %v4415 = vadd.f32 %v4351, 1e-05
  %v4416 = vadd.f32 %v4352, 1e-05
  %v4417 = vadd.f32 %v4353, 1e-05
  %v4418 = vadd.f32 %v4354, 1e-05
  %v4419 = vadd.f32 %v4355, 1e-05
  %v4420 = vadd.f32 %v4356, 1e-05
  %v4421 = vadd.f32 %v4357, 1e-05
  %v4422 = vadd.f32 %v4358, 1e-05
  %v4423 = vadd.f32 %v4359, 1e-05
  %v4424 = vadd.f32 %v4360, 1e-05
  %v4425 = vadd.f32 %v4361, 1e-05
  %v4426 = vadd.f32 %v4362, 1e-05
  %v4427 = vadd.f32 %v4363, 1e-05
  %v4428 = vadd.f32 %v4364, 1e-05
  %v4429 = vrsqrt.pop %v4365
  %v4430 = vmul.f32 %v4429, %v4365
  %v4431 = vmul.f32 %v4430, %v4429
  %v4432 = vmul.f32 0.5, %v4431
  %v4433 = vsub.f32 1.5, %v4432
  %v4434 = vmul.f32 %v4429, %v4433
  %vm4435 = vweird.f32 %v4365
  %vm4436 = vweird.f32 %v4429
  %vm4437 = vmor %vm4435, %vm4436
  %v4438 = vsel %vm4437, %v4429, %v4434
  %v4439 = vrsqrt.pop %v4366
  %v4440 = vmul.f32 %v4439, %v4366
  %v4441 = vmul.f32 %v4440, %v4439
  %v4442 = vmul.f32 0.5, %v4441
  %v4443 = vsub.f32 1.5, %v4442
  %v4444 = vmul.f32 %v4439, %v4443
  %vm4445 = vweird.f32 %v4366
  %vm4446 = vweird.f32 %v4439
  %vm4447 = vmor %vm4445, %vm4446
  %v4448 = vsel %vm4447, %v4439, %v4444
  %v4449 = vrsqrt.pop %v4367
  %v4450 = vmul.f32 %v4449, %v4367
  %v4451 = vmul.f32 %v4450, %v4449
  %v4452 = vmul.f32 0.5, %v4451
  %v4453 = vsub.f32 1.5, %v4452
  %v4454 = vmul.f32 %v4449, %v4453
  %vm4455 = vweird.f32 %v4367
  %vm4456 = vweird.f32 %v4449
  %vm4457 = vmor %vm4455, %vm4456
  %v4458 = vsel %vm4457, %v4449, %v4454
  %v4459 = vrsqrt.pop %v4368
  %v4460 = vmul.f32 %v4459, %v4368
  %v4461 = vmul.f32 %v4460, %v4459
  %v4462 = vmul.f32 0.5, %v4461
  %v4463 = vsub.f32 1.5, %v4462
  %v4464 = vmul.f32 %v4459, %v4463
  %vm4465 = vweird.f32 %v4368
  %vm4466 = vweird.f32 %v4459
  %vm4467 = vmor %vm4465, %vm4466
  %v4468 = vsel %vm4467, %v4459, %v4464
  %v4469 = vrsqrt.pop %v4369
  %v4470 = vmul.f32 %v4469, %v4369
  %v4471 = vmul.f32 %v4470, %v4469
  %v4472 = vmul.f32 0.5, %v4471
  %v4473 = vsub.f32 1.5, %v4472
  %v4474 = vmul.f32 %v4469, %v4473
  %vm4475 = vweird.f32 %v4369
  %vm4476 = vweird.f32 %v4469
  %vm4477 = vmor %vm4475, %vm4476
  %v4478 = vsel %vm4477, %v4469, %v4474
  %v4479 = vrsqrt.pop %v4370
  %v4480 = vmul.f32 %v4479, %v4370
  %v4481 = vmul.f32 %v4480, %v4479
  %v4482 = vmul.f32 0.5, %v4481
  %v4483 = vsub.f32 1.5, %v4482
  %v4484 = vmul.f32 %v4479, %v4483
  %vm4485 = vweird.f32 %v4370
  %vm4486 = vweird.f32 %v4479
  %vm4487 = vmor %vm4485, %vm4486
  %v4488 = vsel %vm4487, %v4479, %v4484
  %v4489 = vrsqrt.pop %v4371
  %v4490 = vmul.f32 %v4489, %v4371
  %v4491 = vmul.f32 %v4490, %v4489
  %v4492 = vmul.f32 0.5, %v4491
  %v4493 = vsub.f32 1.5, %v4492
  %v4494 = vmul.f32 %v4489, %v4493
  %vm4495 = vweird.f32 %v4371
  %vm4496 = vweird.f32 %v4489
  %vm4497 = vmor %vm4495, %vm4496
  %v4498 = vsel %vm4497, %v4489, %v4494
  %v4499 = vrsqrt.pop %v4372
  %v4500 = vmul.f32 %v4499, %v4372
  %v4501 = vmul.f32 %v4500, %v4499
  %v4502 = vmul.f32 0.5, %v4501
  %v4503 = vsub.f32 1.5, %v4502
  %v4504 = vmul.f32 %v4499, %v4503
  %vm4505 = vweird.f32 %v4372
  %vm4506 = vweird.f32 %v4499
  %vm4507 = vmor %vm4505, %vm4506
  %v4508 = vsel %vm4507, %v4499, %v4504
  %v4509 = vrsqrt.pop %v4373
  %v4510 = vmul.f32 %v4509, %v4373
  %v4511 = vmul.f32 %v4510, %v4509
  %v4512 = vmul.f32 0.5, %v4511
  %v4513 = vsub.f32 1.5, %v4512
  %v4514 = vmul.f32 %v4509, %v4513
  %vm4515 = vweird.f32 %v4373
  %vm4516 = vweird.f32 %v4509
  %vm4517 = vmor %vm4515, %vm4516
  %v4518 = vsel %vm4517, %v4509, %v4514
  %v4519 = vrsqrt.pop %v4374
  %v4520 = vmul.f32 %v4519, %v4374
  %v4521 = vmul.f32 %v4520, %v4519
  %v4522 = vmul.f32 0.5, %v4521
  %v4523 = vsub.f32 1.5, %v4522
  %v4524 = vmul.f32 %v4519, %v4523
  %vm4525 = vweird.f32 %v4374
  %vm4526 = vweird.f32 %v4519
  %vm4527 = vmor %vm4525, %vm4526
  %v4528 = vsel %vm4527, %v4519, %v4524
  %v4529 = vrsqrt.pop %v4375
  %v4530 = vmul.f32 %v4529, %v4375
  %v4531 = vmul.f32 %v4530, %v4529
  %v4532 = vmul.f32 0.5, %v4531
  %v4533 = vsub.f32 1.5, %v4532
  %v4534 = vmul.f32 %v4529, %v4533
  %vm4535 = vweird.f32 %v4375
  %vm4536 = vweird.f32 %v4529
  %vm4537 = vmor %vm4535, %vm4536
  %v4538 = vsel %vm4537, %v4529, %v4534
  %v4539 = vrsqrt.pop %v4376
  %v4540 = vmul.f32 %v4539, %v4376
  %v4541 = vmul.f32 %v4540, %v4539
  %v4542 = vmul.f32 0.5, %v4541
  %v4543 = vsub.f32 1.5, %v4542
  %v4544 = vmul.f32 %v4539, %v4543
  %vm4545 = vweird.f32 %v4376
  %vm4546 = vweird.f32 %v4539
  %vm4547 = vmor %vm4545, %vm4546
  %v4548 = vsel %vm4547, %v4539, %v4544
  %v4549 = vrsqrt.pop %v4377
  %v4550 = vmul.f32 %v4549, %v4377
  %v4551 = vmul.f32 %v4550, %v4549
  %v4552 = vmul.f32 0.5, %v4551
  %v4553 = vsub.f32 1.5, %v4552
  %v4554 = vmul.f32 %v4549, %v4553
  %vm4555 = vweird.f32 %v4377
  %vm4556 = vweird.f32 %v4549
  %vm4557 = vmor %vm4555, %vm4556
  %v4558 = vsel %vm4557, %v4549, %v4554
  %v4559 = vrsqrt.pop %v4378
  %v4560 = vmul.f32 %v4559, %v4378
  %v4561 = vmul.f32 %v4560, %v4559
  %v4562 = vmul.f32 0.5, %v4561
  %v4563 = vsub.f32 1.5, %v4562
  %v4564 = vmul.f32 %v4559, %v4563
  %vm4565 = vweird.f32 %v4378
  %vm4566 = vweird.f32 %v4559
  %vm4567 = vmor %vm4565, %vm4566
  %v4568 = vsel %vm4567, %v4559, %v4564
  %v4569 = vrsqrt.pop %v4379
  %v4570 = vmul.f32 %v4569, %v4379
  %v4571 = vmul.f32 %v4570, %v4569
  %v4572 = vmul.f32 0.5, %v4571
  %v4573 = vsub.f32 1.5, %v4572
  %v4574 = vmul.f32 %v4569, %v4573
  %vm4575 = vweird.f32 %v4379
  %vm4576 = vweird.f32 %v4569
  %vm4577 = vmor %vm4575, %vm4576
  %v4578 = vsel %vm4577, %v4569, %v4574
  %v4579 = vrsqrt.pop %v4380
  %v4580 = vmul.f32 %v4579, %v4380
  %v4581 = vmul.f32 %v4580, %v4579
  %v4582 = vmul.f32 0.5, %v4581
  %v4583 = vsub.f32 1.5, %v4582
  %v4584 = vmul.f32 %v4579, %v4583
  %vm4585 = vweird.f32 %v4380
  %vm4586 = vweird.f32 %v4579
  %vm4587 = vmor %vm4585, %vm4586
  %v4588 = vsel %vm4587, %v4579, %v4584
  %v4589 = vrsqrt.pop %v4381
  %v4590 = vmul.f32 %v4589, %v4381
  %v4591 = vmul.f32 %v4590, %v4589
  %v4592 = vmul.f32 0.5, %v4591
  %v4593 = vsub.f32 1.5, %v4592
  %v4594 = vmul.f32 %v4589, %v4593
  %vm4595 = vweird.f32 %v4381
  %vm4596 = vweird.f32 %v4589
  %vm4597 = vmor %vm4595, %vm4596
  %v4598 = vsel %vm4597, %v4589, %v4594
  %v4599 = vrsqrt.pop %v4382
  %v4600 = vmul.f32 %v4599, %v4382
  %v4601 = vmul.f32 %v4600, %v4599
  %v4602 = vmul.f32 0.5, %v4601
  %v4603 = vsub.f32 1.5, %v4602
  %v4604 = vmul.f32 %v4599, %v4603
  %vm4605 = vweird.f32 %v4382
  %vm4606 = vweird.f32 %v4599
  %vm4607 = vmor %vm4605, %vm4606
  %v4608 = vsel %vm4607, %v4599, %v4604
  %v4609 = vrsqrt.pop %v4383
  %v4610 = vmul.f32 %v4609, %v4383
  %v4611 = vmul.f32 %v4610, %v4609
  %v4612 = vmul.f32 0.5, %v4611
  %v4613 = vsub.f32 1.5, %v4612
  %v4614 = vmul.f32 %v4609, %v4613
  %vm4615 = vweird.f32 %v4383
  %vm4616 = vweird.f32 %v4609
  %vm4617 = vmor %vm4615, %vm4616
  %v4618 = vsel %vm4617, %v4609, %v4614
  %v4619 = vrsqrt.pop %v4384
  %v4620 = vmul.f32 %v4619, %v4384
  %v4621 = vmul.f32 %v4620, %v4619
  %v4622 = vmul.f32 0.5, %v4621
  %v4623 = vsub.f32 1.5, %v4622
  %v4624 = vmul.f32 %v4619, %v4623
  %vm4625 = vweird.f32 %v4384
  %vm4626 = vweird.f32 %v4619
  %vm4627 = vmor %vm4625, %vm4626
  %v4628 = vsel %vm4627, %v4619, %v4624
  %v4629 = vrsqrt.pop %v4385
  %v4630 = vmul.f32 %v4629, %v4385
  %v4631 = vmul.f32 %v4630, %v4629
  %v4632 = vmul.f32 0.5, %v4631
  %v4633 = vsub.f32 1.5, %v4632
  %v4634 = vmul.f32 %v4629, %v4633
  %vm4635 = vweird.f32 %v4385
  %vm4636 = vweird.f32 %v4629
  %vm4637 = vmor %vm4635, %vm4636
  %v4638 = vsel %vm4637, %v4629, %v4634
  %v4639 = vrsqrt.pop %v4386
  %v4640 = vmul.f32 %v4639, %v4386
  %v4641 = vmul.f32 %v4640, %v4639
  %v4642 = vmul.f32 0.5, %v4641
  %v4643 = vsub.f32 1.5, %v4642
  %v4644 = vmul.f32 %v4639, %v4643
  %vm4645 = vweird.f32 %v4386
  %vm4646 = vweird.f32 %v4639
  %vm4647 = vmor %vm4645, %vm4646
  %v4648 = vsel %vm4647, %v4639, %v4644
  %v4649 = vrsqrt.pop %v4387
  %v4650 = vmul.f32 %v4649, %v4387
  %v4651 = vmul.f32 %v4650, %v4649
  %v4652 = vmul.f32 0.5, %v4651
  %v4653 = vsub.f32 1.5, %v4652
  %v4654 = vmul.f32 %v4649, %v4653
  %vm4655 = vweird.f32 %v4387
  %vm4656 = vweird.f32 %v4649
  %vm4657 = vmor %vm4655, %vm4656
  %v4658 = vsel %vm4657, %v4649, %v4654
  %v4659 = vrsqrt.pop %v4388
  %v4660 = vmul.f32 %v4659, %v4388
  %v4661 = vmul.f32 %v4660, %v4659
  %v4662 = vmul.f32 0.5, %v4661
  %v4663 = vsub.f32 1.5, %v4662
  %v4664 = vmul.f32 %v4659, %v4663
  %vm4665 = vweird.f32 %v4388
  %vm4666 = vweird.f32 %v4659
  %vm4667 = vmor %vm4665, %vm4666
  %v4668 = vsel %vm4667, %v4659, %v4664
  %v4669 = vrsqrt.pop %v4389
  %v4670 = vmul.f32 %v4669, %v4389
  %v4671 = vmul.f32 %v4670, %v4669
  %v4672 = vmul.f32 0.5, %v4671
  %v4673 = vsub.f32 1.5, %v4672
  %v4674 = vmul.f32 %v4669, %v4673
  %vm4675 = vweird.f32 %v4389
  %vm4676 = vweird.f32 %v4669
  %vm4677 = vmor %vm4675, %vm4676
  %v4678 = vsel %vm4677, %v4669, %v4674
  %v4679 = vrsqrt.pop %v4390
  %v4680 = vmul.f32 %v4679, %v4390
  %v4681 = vmul.f32 %v4680, %v4679
  %v4682 = vmul.f32 0.5, %v4681
  %v4683 = vsub.f32 1.5, %v4682
  %v4684 = vmul.f32 %v4679, %v4683
  %vm4685 = vweird.f32 %v4390
  %vm4686 = vweird.f32 %v4679
  %vm4687 = vmor %vm4685, %vm4686
  %v4688 = vsel %vm4687, %v4679, %v4684
  %v4689 = vrsqrt.pop %v4391
  %v4690 = vmul.f32 %v4689, %v4391
  %v4691 = vmul.f32 %v4690, %v4689
  %v4692 = vmul.f32 0.5, %v4691
  %v4693 = vsub.f32 1.5, %v4692
  %v4694 = vmul.f32 %v4689, %v4693
  %vm4695 = vweird.f32 %v4391
  %vm4696 = vweird.f32 %v4689
  %vm4697 = vmor %vm4695, %vm4696
  %v4698 = vsel %vm4697, %v4689, %v4694
  %v4699 = vrsqrt.pop %v4392
  %v4700 = vmul.f32 %v4699, %v4392
  %v4701 = vmul.f32 %v4700, %v4699
  %v4702 = vmul.f32 0.5, %v4701
  %v4703 = vsub.f32 1.5, %v4702
  %v4704 = vmul.f32 %v4699, %v4703
  %vm4705 = vweird.f32 %v4392
  %vm4706 = vweird.f32 %v4699
  %vm4707 = vmor %vm4705, %vm4706
  %v4708 = vsel %vm4707, %v4699, %v4704
  %v4709 = vrsqrt.pop %v4393
  %v4710 = vmul.f32 %v4709, %v4393
  %v4711 = vmul.f32 %v4710, %v4709
  %v4712 = vmul.f32 0.5, %v4711
  %v4713 = vsub.f32 1.5, %v4712
  %v4714 = vmul.f32 %v4709, %v4713
  %vm4715 = vweird.f32 %v4393
  %vm4716 = vweird.f32 %v4709
  %vm4717 = vmor %vm4715, %vm4716
  %v4718 = vsel %vm4717, %v4709, %v4714
  %v4719 = vrsqrt.pop %v4394
  %v4720 = vmul.f32 %v4719, %v4394
  %v4721 = vmul.f32 %v4720, %v4719
  %v4722 = vmul.f32 0.5, %v4721
  %v4723 = vsub.f32 1.5, %v4722
  %v4724 = vmul.f32 %v4719, %v4723
  %vm4725 = vweird.f32 %v4394
  %vm4726 = vweird.f32 %v4719
  %vm4727 = vmor %vm4725, %vm4726
  %v4728 = vsel %vm4727, %v4719, %v4724
  %v4729 = vrsqrt.pop %v4395
  %v4730 = vmul.f32 %v4729, %v4395
  %v4731 = vmul.f32 %v4730, %v4729
  %v4732 = vmul.f32 0.5, %v4731
  %v4733 = vsub.f32 1.5, %v4732
  %v4734 = vmul.f32 %v4729, %v4733
  %vm4735 = vweird.f32 %v4395
  %vm4736 = vweird.f32 %v4729
  %vm4737 = vmor %vm4735, %vm4736
  %v4738 = vsel %vm4737, %v4729, %v4734
  %v4739 = vrsqrt.pop %v4396
  %v4740 = vmul.f32 %v4739, %v4396
  %v4741 = vmul.f32 %v4740, %v4739
  %v4742 = vmul.f32 0.5, %v4741
  %v4743 = vsub.f32 1.5, %v4742
  %v4744 = vmul.f32 %v4739, %v4743
  %vm4745 = vweird.f32 %v4396
  %vm4746 = vweird.f32 %v4739
  %vm4747 = vmor %vm4745, %vm4746
  %v4748 = vsel %vm4747, %v4739, %v4744
  %v4749 = vrsqrt.pop %v4397
  %v4750 = vmul.f32 %v4749, %v4397
  %v4751 = vmul.f32 %v4750, %v4749
  %v4752 = vmul.f32 0.5, %v4751
  %v4753 = vsub.f32 1.5, %v4752
  %v4754 = vmul.f32 %v4749, %v4753
  %vm4755 = vweird.f32 %v4397
  %vm4756 = vweird.f32 %v4749
  %vm4757 = vmor %vm4755, %vm4756
  %v4758 = vsel %vm4757, %v4749, %v4754
  %v4759 = vrsqrt.pop %v4398
  %v4760 = vmul.f32 %v4759, %v4398
  %v4761 = vmul.f32 %v4760, %v4759
  %v4762 = vmul.f32 0.5, %v4761
  %v4763 = vsub.f32 1.5, %v4762
  %v4764 = vmul.f32 %v4759, %v4763
  %vm4765 = vweird.f32 %v4398
  %vm4766 = vweird.f32 %v4759
  %vm4767 = vmor %vm4765, %vm4766
  %v4768 = vsel %vm4767, %v4759, %v4764
  %v4769 = vrsqrt.pop %v4399
  %v4770 = vmul.f32 %v4769, %v4399
  %v4771 = vmul.f32 %v4770, %v4769
  %v4772 = vmul.f32 0.5, %v4771
  %v4773 = vsub.f32 1.5, %v4772
  %v4774 = vmul.f32 %v4769, %v4773
  %vm4775 = vweird.f32 %v4399
  %vm4776 = vweird.f32 %v4769
  %vm4777 = vmor %vm4775, %vm4776
  %v4778 = vsel %vm4777, %v4769, %v4774
  %v4779 = vrsqrt.pop %v4400
  %v4780 = vmul.f32 %v4779, %v4400
  %v4781 = vmul.f32 %v4780, %v4779
  %v4782 = vmul.f32 0.5, %v4781
  %v4783 = vsub.f32 1.5, %v4782
  %v4784 = vmul.f32 %v4779, %v4783
  %vm4785 = vweird.f32 %v4400
  %vm4786 = vweird.f32 %v4779
  %vm4787 = vmor %vm4785, %vm4786
  %v4788 = vsel %vm4787, %v4779, %v4784
  %v4789 = vrsqrt.pop %v4401
  %v4790 = vmul.f32 %v4789, %v4401
  %v4791 = vmul.f32 %v4790, %v4789
  %v4792 = vmul.f32 0.5, %v4791
  %v4793 = vsub.f32 1.5, %v4792
  %v4794 = vmul.f32 %v4789, %v4793
  %vm4795 = vweird.f32 %v4401
  %vm4796 = vweird.f32 %v4789
  %vm4797 = vmor %vm4795, %vm4796
  %v4798 = vsel %vm4797, %v4789, %v4794
  %v4799 = vrsqrt.pop %v4402
  %v4800 = vmul.f32 %v4799, %v4402
  %v4801 = vmul.f32 %v4800, %v4799
  %v4802 = vmul.f32 0.5, %v4801
  %v4803 = vsub.f32 1.5, %v4802
  %v4804 = vmul.f32 %v4799, %v4803
  %vm4805 = vweird.f32 %v4402
  %vm4806 = vweird.f32 %v4799
  %vm4807 = vmor %vm4805, %vm4806
  %v4808 = vsel %vm4807, %v4799, %v4804
  %v4809 = vrsqrt.pop %v4403
  %v4810 = vmul.f32 %v4809, %v4403
  %v4811 = vmul.f32 %v4810, %v4809
  %v4812 = vmul.f32 0.5, %v4811
  %v4813 = vsub.f32 1.5, %v4812
  %v4814 = vmul.f32 %v4809, %v4813
  %vm4815 = vweird.f32 %v4403
  %vm4816 = vweird.f32 %v4809
  %vm4817 = vmor %vm4815, %vm4816
  %v4818 = vsel %vm4817, %v4809, %v4814
  %v4819 = vrsqrt.pop %v4404
  %v4820 = vmul.f32 %v4819, %v4404
  %v4821 = vmul.f32 %v4820, %v4819
  %v4822 = vmul.f32 0.5, %v4821
  %v4823 = vsub.f32 1.5, %v4822
  %v4824 = vmul.f32 %v4819, %v4823
  %vm4825 = vweird.f32 %v4404
  %vm4826 = vweird.f32 %v4819
  %vm4827 = vmor %vm4825, %vm4826
  %v4828 = vsel %vm4827, %v4819, %v4824
  %v4829 = vrsqrt.pop %v4405
  %v4830 = vmul.f32 %v4829, %v4405
  %v4831 = vmul.f32 %v4830, %v4829
  %v4832 = vmul.f32 0.5, %v4831
  %v4833 = vsub.f32 1.5, %v4832
  %v4834 = vmul.f32 %v4829, %v4833
  %vm4835 = vweird.f32 %v4405
  %vm4836 = vweird.f32 %v4829
  %vm4837 = vmor %vm4835, %vm4836
  %v4838 = vsel %vm4837, %v4829, %v4834
  %v4839 = vrsqrt.pop %v4406
  %v4840 = vmul.f32 %v4839, %v4406
  %v4841 = vmul.f32 %v4840, %v4839
  %v4842 = vmul.f32 0.5, %v4841
  %v4843 = vsub.f32 1.5, %v4842
  %v4844 = vmul.f32 %v4839, %v4843
  %vm4845 = vweird.f32 %v4406
  %vm4846 = vweird.f32 %v4839
  %vm4847 = vmor %vm4845, %vm4846
  %v4848 = vsel %vm4847, %v4839, %v4844
  %v4849 = vrsqrt.pop %v4407
  %v4850 = vmul.f32 %v4849, %v4407
  %v4851 = vmul.f32 %v4850, %v4849
  %v4852 = vmul.f32 0.5, %v4851
  %v4853 = vsub.f32 1.5, %v4852
  %v4854 = vmul.f32 %v4849, %v4853
  %vm4855 = vweird.f32 %v4407
  %vm4856 = vweird.f32 %v4849
  %vm4857 = vmor %vm4855, %vm4856
  %v4858 = vsel %vm4857, %v4849, %v4854
  %v4859 = vrsqrt.pop %v4408
  %v4860 = vmul.f32 %v4859, %v4408
  %v4861 = vmul.f32 %v4860, %v4859
  %v4862 = vmul.f32 0.5, %v4861
  %v4863 = vsub.f32 1.5, %v4862
  %v4864 = vmul.f32 %v4859, %v4863
  %vm4865 = vweird.f32 %v4408
  %vm4866 = vweird.f32 %v4859
  %vm4867 = vmor %vm4865, %vm4866
  %v4868 = vsel %vm4867, %v4859, %v4864
  %v4869 = vrsqrt.pop %v4409
  %v4870 = vmul.f32 %v4869, %v4409
  %v4871 = vmul.f32 %v4870, %v4869
  %v4872 = vmul.f32 0.5, %v4871
  %v4873 = vsub.f32 1.5, %v4872
  %v4874 = vmul.f32 %v4869, %v4873
  %vm4875 = vweird.f32 %v4409
  %vm4876 = vweird.f32 %v4869
  %vm4877 = vmor %vm4875, %vm4876
  %v4878 = vsel %vm4877, %v4869, %v4874
  %v4879 = vrsqrt.pop %v4410
  %v4880 = vmul.f32 %v4879, %v4410
  %v4881 = vmul.f32 %v4880, %v4879
  %v4882 = vmul.f32 0.5, %v4881
  %v4883 = vsub.f32 1.5, %v4882
  %v4884 = vmul.f32 %v4879, %v4883
  %vm4885 = vweird.f32 %v4410
  %vm4886 = vweird.f32 %v4879
  %vm4887 = vmor %vm4885, %vm4886
  %v4888 = vsel %vm4887, %v4879, %v4884
  %v4889 = vrsqrt.pop %v4411
  %v4890 = vmul.f32 %v4889, %v4411
  %v4891 = vmul.f32 %v4890, %v4889
  %v4892 = vmul.f32 0.5, %v4891
  %v4893 = vsub.f32 1.5, %v4892
  %v4894 = vmul.f32 %v4889, %v4893
  %vm4895 = vweird.f32 %v4411
  %vm4896 = vweird.f32 %v4889
  %vm4897 = vmor %vm4895, %vm4896
  %v4898 = vsel %vm4897, %v4889, %v4894
  %v4899 = vrsqrt.pop %v4412
  %v4900 = vmul.f32 %v4899, %v4412
  %v4901 = vmul.f32 %v4900, %v4899
  %v4902 = vmul.f32 0.5, %v4901
  %v4903 = vsub.f32 1.5, %v4902
  %v4904 = vmul.f32 %v4899, %v4903
  %vm4905 = vweird.f32 %v4412
  %vm4906 = vweird.f32 %v4899
  %vm4907 = vmor %vm4905, %vm4906
  %v4908 = vsel %vm4907, %v4899, %v4904
  %v4909 = vrsqrt.pop %v4413
  %v4910 = vmul.f32 %v4909, %v4413
  %v4911 = vmul.f32 %v4910, %v4909
  %v4912 = vmul.f32 0.5, %v4911
  %v4913 = vsub.f32 1.5, %v4912
  %v4914 = vmul.f32 %v4909, %v4913
  %vm4915 = vweird.f32 %v4413
  %vm4916 = vweird.f32 %v4909
  %vm4917 = vmor %vm4915, %vm4916
  %v4918 = vsel %vm4917, %v4909, %v4914
  %v4919 = vrsqrt.pop %v4414
  %v4920 = vmul.f32 %v4919, %v4414
  %v4921 = vmul.f32 %v4920, %v4919
  %v4922 = vmul.f32 0.5, %v4921
  %v4923 = vsub.f32 1.5, %v4922
  %v4924 = vmul.f32 %v4919, %v4923
  %vm4925 = vweird.f32 %v4414
  %vm4926 = vweird.f32 %v4919
  %vm4927 = vmor %vm4925, %vm4926
  %v4928 = vsel %vm4927, %v4919, %v4924
  %v4929 = vrsqrt.pop %v4415
  %v4930 = vmul.f32 %v4929, %v4415
  %v4931 = vmul.f32 %v4930, %v4929
  %v4932 = vmul.f32 0.5, %v4931
  %v4933 = vsub.f32 1.5, %v4932
  %v4934 = vmul.f32 %v4929, %v4933
  %vm4935 = vweird.f32 %v4415
  %vm4936 = vweird.f32 %v4929
  %vm4937 = vmor %vm4935, %vm4936
  %v4938 = vsel %vm4937, %v4929, %v4934
  %v4939 = vrsqrt.pop %v4416
  %v4940 = vmul.f32 %v4939, %v4416
  %v4941 = vmul.f32 %v4940, %v4939
  %v4942 = vmul.f32 0.5, %v4941
  %v4943 = vsub.f32 1.5, %v4942
  %v4944 = vmul.f32 %v4939, %v4943
  %vm4945 = vweird.f32 %v4416
  %vm4946 = vweird.f32 %v4939
  %vm4947 = vmor %vm4945, %vm4946
  %v4948 = vsel %vm4947, %v4939, %v4944
  %v4949 = vrsqrt.pop %v4417
  %v4950 = vmul.f32 %v4949, %v4417
  %v4951 = vmul.f32 %v4950, %v4949
  %v4952 = vmul.f32 0.5, %v4951
  %v4953 = vsub.f32 1.5, %v4952
  %v4954 = vmul.f32 %v4949, %v4953
  %vm4955 = vweird.f32 %v4417
  %vm4956 = vweird.f32 %v4949
  %vm4957 = vmor %vm4955, %vm4956
  %v4958 = vsel %vm4957, %v4949, %v4954
  %v4959 = vrsqrt.pop %v4418
  %v4960 = vmul.f32 %v4959, %v4418
  %v4961 = vmul.f32 %v4960, %v4959
  %v4962 = vmul.f32 0.5, %v4961
  %v4963 = vsub.f32 1.5, %v4962
  %v4964 = vmul.f32 %v4959, %v4963
  %vm4965 = vweird.f32 %v4418
  %vm4966 = vweird.f32 %v4959
  %vm4967 = vmor %vm4965, %vm4966
  %v4968 = vsel %vm4967, %v4959, %v4964
  %v4969 = vrsqrt.pop %v4419
  %v4970 = vmul.f32 %v4969, %v4419
  %v4971 = vmul.f32 %v4970, %v4969
  %v4972 = vmul.f32 0.5, %v4971
  %v4973 = vsub.f32 1.5, %v4972
  %v4974 = vmul.f32 %v4969, %v4973
  %vm4975 = vweird.f32 %v4419
  %vm4976 = vweird.f32 %v4969
  %vm4977 = vmor %vm4975, %vm4976
  %v4978 = vsel %vm4977, %v4969, %v4974
  %v4979 = vrsqrt.pop %v4420
  %v4980 = vmul.f32 %v4979, %v4420
  %v4981 = vmul.f32 %v4980, %v4979
  %v4982 = vmul.f32 0.5, %v4981
  %v4983 = vsub.f32 1.5, %v4982
  %v4984 = vmul.f32 %v4979, %v4983
  %vm4985 = vweird.f32 %v4420
  %vm4986 = vweird.f32 %v4979
  %vm4987 = vmor %vm4985, %vm4986
  %v4988 = vsel %vm4987, %v4979, %v4984
  %v4989 = vrsqrt.pop %v4421
  %v4990 = vmul.f32 %v4989, %v4421
  %v4991 = vmul.f32 %v4990, %v4989
  %v4992 = vmul.f32 0.5, %v4991
  %v4993 = vsub.f32 1.5, %v4992
  %v4994 = vmul.f32 %v4989, %v4993
  %vm4995 = vweird.f32 %v4421
  %vm4996 = vweird.f32 %v4989
  %vm4997 = vmor %vm4995, %vm4996
  %v4998 = vsel %vm4997, %v4989, %v4994
  %v4999 = vrsqrt.pop %v4422
  %v5000 = vmul.f32 %v4999, %v4422
  %v5001 = vmul.f32 %v5000, %v4999
  %v5002 = vmul.f32 0.5, %v5001
  %v5003 = vsub.f32 1.5, %v5002
  %v5004 = vmul.f32 %v4999, %v5003
  %vm5005 = vweird.f32 %v4422
  %vm5006 = vweird.f32 %v4999
  %vm5007 = vmor %vm5005, %vm5006
  %v5008 = vsel %vm5007, %v4999, %v5004
  %v5009 = vrsqrt.pop %v4423
  %v5010 = vmul.f32 %v5009, %v4423
  %v5011 = vmul.f32 %v5010, %v5009
  %v5012 = vmul.f32 0.5, %v5011
  %v5013 = vsub.f32 1.5, %v5012
  %v5014 = vmul.f32 %v5009, %v5013
  %vm5015 = vweird.f32 %v4423
  %vm5016 = vweird.f32 %v5009
  %vm5017 = vmor %vm5015, %vm5016
  %v5018 = vsel %vm5017, %v5009, %v5014
  %v5019 = vrsqrt.pop %v4424
  %v5020 = vmul.f32 %v5019, %v4424
  %v5021 = vmul.f32 %v5020, %v5019
  %v5022 = vmul.f32 0.5, %v5021
  %v5023 = vsub.f32 1.5, %v5022
  %v5024 = vmul.f32 %v5019, %v5023
  %vm5025 = vweird.f32 %v4424
  %vm5026 = vweird.f32 %v5019
  %vm5027 = vmor %vm5025, %vm5026
  %v5028 = vsel %vm5027, %v5019, %v5024
  %v5029 = vrsqrt.pop %v4425
  %v5030 = vmul.f32 %v5029, %v4425
  %v5031 = vmul.f32 %v5030, %v5029
  %v5032 = vmul.f32 0.5, %v5031
  %v5033 = vsub.f32 1.5, %v5032
  %v5034 = vmul.f32 %v5029, %v5033
  %vm5035 = vweird.f32 %v4425
  %vm5036 = vweird.f32 %v5029
  %vm5037 = vmor %vm5035, %vm5036
  %v5038 = vsel %vm5037, %v5029, %v5034
  %v5039 = vrsqrt.pop %v4426
  %v5040 = vmul.f32 %v5039, %v4426
  %v5041 = vmul.f32 %v5040, %v5039
  %v5042 = vmul.f32 0.5, %v5041
  %v5043 = vsub.f32 1.5, %v5042
  %v5044 = vmul.f32 %v5039, %v5043
  %vm5045 = vweird.f32 %v4426
  %vm5046 = vweird.f32 %v5039
  %vm5047 = vmor %vm5045, %vm5046
  %v5048 = vsel %vm5047, %v5039, %v5044
  %v5049 = vrsqrt.pop %v4427
  %v5050 = vmul.f32 %v5049, %v4427
  %v5051 = vmul.f32 %v5050, %v5049
  %v5052 = vmul.f32 0.5, %v5051
  %v5053 = vsub.f32 1.5, %v5052
  %v5054 = vmul.f32 %v5049, %v5053
  %vm5055 = vweird.f32 %v4427
  %vm5056 = vweird.f32 %v5049
  %vm5057 = vmor %vm5055, %vm5056
  %v5058 = vsel %vm5057, %v5049, %v5054
  %v5059 = vrsqrt.pop %v4428
  %v5060 = vmul.f32 %v5059, %v4428
  %v5061 = vmul.f32 %v5060, %v5059
  %v5062 = vmul.f32 0.5, %v5061
  %v5063 = vsub.f32 1.5, %v5062
  %v5064 = vmul.f32 %v5059, %v5063
  %vm5065 = vweird.f32 %v4428
  %vm5066 = vweird.f32 %v5059
  %vm5067 = vmor %vm5065, %vm5066
  %v5068 = vsel %vm5067, %v5059, %v5064
  %v5069 = vmul.f32 %v3981, %v4438
  %v5070 = vmul.f32 %v3982, %v4448
  %v5071 = vmul.f32 %v3983, %v4458
  %v5072 = vmul.f32 %v3984, %v4468
  %v5073 = vmul.f32 %v3985, %v4478
  %v5074 = vmul.f32 %v3986, %v4488
  %v5075 = vmul.f32 %v3987, %v4498
  %v5076 = vmul.f32 %v3988, %v4508
  %v5077 = vmul.f32 %v3989, %v4518
  %v5078 = vmul.f32 %v3990, %v4528
  %v5079 = vmul.f32 %v3991, %v4538
  %v5080 = vmul.f32 %v3992, %v4548
  %v5081 = vmul.f32 %v3993, %v4558
  %v5082 = vmul.f32 %v3994, %v4568
  %v5083 = vmul.f32 %v3995, %v4578
  %v5084 = vmul.f32 %v3996, %v4588
  %v5085 = vmul.f32 %v3997, %v4598
  %v5086 = vmul.f32 %v3998, %v4608
  %v5087 = vmul.f32 %v3999, %v4618
  %v5088 = vmul.f32 %v4000, %v4628
  %v5089 = vmul.f32 %v4001, %v4638
  %v5090 = vmul.f32 %v4002, %v4648
  %v5091 = vmul.f32 %v4003, %v4658
  %v5092 = vmul.f32 %v4004, %v4668
  %v5093 = vmul.f32 %v4005, %v4678
  %v5094 = vmul.f32 %v4006, %v4688
  %v5095 = vmul.f32 %v4007, %v4698
  %v5096 = vmul.f32 %v4008, %v4708
  %v5097 = vmul.f32 %v4009, %v4718
  %v5098 = vmul.f32 %v4010, %v4728
  %v5099 = vmul.f32 %v4011, %v4738
  %v5100 = vmul.f32 %v4012, %v4748
  %v5101 = vmul.f32 %v4013, %v4758
  %v5102 = vmul.f32 %v4014, %v4768
  %v5103 = vmul.f32 %v4015, %v4778
  %v5104 = vmul.f32 %v4016, %v4788
  %v5105 = vmul.f32 %v4017, %v4798
  %v5106 = vmul.f32 %v4018, %v4808
  %v5107 = vmul.f32 %v4019, %v4818
  %v5108 = vmul.f32 %v4020, %v4828
  %v5109 = vmul.f32 %v4021, %v4838
  %v5110 = vmul.f32 %v4022, %v4848
  %v5111 = vmul.f32 %v4023, %v4858
  %v5112 = vmul.f32 %v4024, %v4868
  %v5113 = vmul.f32 %v4025, %v4878
  %v5114 = vmul.f32 %v4026, %v4888
  %v5115 = vmul.f32 %v4027, %v4898
  %v5116 = vmul.f32 %v4028, %v4908
  %v5117 = vmul.f32 %v4029, %v4918
  %v5118 = vmul.f32 %v4030, %v4928
  %v5119 = vmul.f32 %v4031, %v4938
  %v5120 = vmul.f32 %v4032, %v4948
  %v5121 = vmul.f32 %v4033, %v4958
  %v5122 = vmul.f32 %v4034, %v4968
  %v5123 = vmul.f32 %v4035, %v4978
  %v5124 = vmul.f32 %v4036, %v4988
  %v5125 = vmul.f32 %v4037, %v4998
  %v5126 = vmul.f32 %v4038, %v5008
  %v5127 = vmul.f32 %v4039, %v5018
  %v5128 = vmul.f32 %v4040, %v5028
  %v5129 = vmul.f32 %v4041, %v5038
  %v5130 = vmul.f32 %v4042, %v5048
  %v5131 = vmul.f32 %v4043, %v5058
  %v5132 = vmul.f32 %v4044, %v5068
  %v5133 = vld [vmem:[%s17] sm:$0xff]
  %v5134 = vld [vmem:[%s17 + $0x8] sm:$0xff]
  %v5135 = vld [vmem:[%s17 + $0x10] sm:$0xff]
  %v5136 = vld [vmem:[%s17 + $0x18] sm:$0xff]
  %v5137 = vld [vmem:[%s18] sm:$0x3]
  %v5139 = vperm.slane %v5137, 0
  %v5140 = vperm.slane %v5137, 1
  %v5144 = vsel %vm1241, %v5069, 0
  %v5147 = vsel %vm1241, %v5070, 0
  %v5150 = vsel %vm1241, %v5071, 0
  %v5153 = vsel %vm1241, %v5072, 0
  %v5156 = vsel %vm1241, %v5073, 0
  %v5159 = vsel %vm1241, %v5074, 0
  %v5162 = vsel %vm1241, %v5075, 0
  %v5165 = vsel %vm1241, %v5076, 0
  %v5168 = vsel %vm1241, %v5077, 0
  %v5171 = vsel %vm1241, %v5078, 0
  %v5174 = vsel %vm1241, %v5079, 0
  %v5177 = vsel %vm1241, %v5080, 0
  %v5180 = vsel %vm1241, %v5081, 0
  %v5183 = vsel %vm1241, %v5082, 0
  %v5186 = vsel %vm1241, %v5083, 0
  %v5189 = vsel %vm1241, %v5084, 0
  %v5192 = vsel %vm1241, %v5085, 0
  %v5195 = vsel %vm1241, %v5086, 0
  %v5198 = vsel %vm1241, %v5087, 0
  %v5201 = vsel %vm1241, %v5088, 0
  %v5204 = vsel %vm1241, %v5089, 0
  %v5207 = vsel %vm1241, %v5090, 0
  %v5210 = vsel %vm1241, %v5091, 0
  %v5213 = vsel %vm1241, %v5092, 0
  %v5216 = vsel %vm1241, %v5093, 0
  %v5219 = vsel %vm1241, %v5094, 0
  %v5222 = vsel %vm1241, %v5095, 0
  %v5225 = vsel %vm1241, %v5096, 0
  %v5228 = vsel %vm1241, %v5097, 0
  %v5231 = vsel %vm1241, %v5098, 0
  %v5234 = vsel %vm1241, %v5099, 0
  %v5237 = vsel %vm1241, %v5100, 0
  %v5240 = vsel %vm1241, %v5101, 0
  %v5243 = vsel %vm1241, %v5102, 0
  %v5246 = vsel %vm1241, %v5103, 0
  %v5249 = vsel %vm1241, %v5104, 0
  %v5252 = vsel %vm1241, %v5105, 0
  %v5255 = vsel %vm1241, %v5106, 0
  %v5258 = vsel %vm1241, %v5107, 0
  %v5261 = vsel %vm1241, %v5108, 0
  %v5264 = vsel %vm1241, %v5109, 0
  %v5267 = vsel %vm1241, %v5110, 0
  %v5270 = vsel %vm1241, %v5111, 0
  %v5273 = vsel %vm1241, %v5112, 0
  %v5276 = vsel %vm1241, %v5113, 0
  %v5279 = vsel %vm1241, %v5114, 0
  %v5282 = vsel %vm1241, %v5115, 0
  %v5285 = vsel %vm1241, %v5116, 0
  %v5288 = vsel %vm1241, %v5117, 0
  %v5291 = vsel %vm1241, %v5118, 0
  %v5294 = vsel %vm1241, %v5119, 0
  %v5297 = vsel %vm1241, %v5120, 0
  %v5300 = vsel %vm1241, %v5121, 0
  %v5303 = vsel %vm1241, %v5122, 0
  %v5306 = vsel %vm1241, %v5123, 0
  %v5309 = vsel %vm1241, %v5124, 0
  %v5312 = vsel %vm1241, %v5125, 0
  %v5315 = vsel %vm1241, %v5126, 0
  %v5318 = vsel %vm1241, %v5127, 0
  %v5321 = vsel %vm1241, %v5128, 0
  %v5324 = vsel %vm1241, %v5129, 0
  %v5327 = vsel %vm1241, %v5130, 0
  %v5330 = vsel %vm1241, %v5131, 0
  %v5333 = vsel %vm1241, %v5132, 0
  %5335 = vmatpush.msra.mxu0 0.0
  %5336 = vmatpush.msra.mxu0 0.0
  %5337 = vmatpush.msra.mxu0 0.0
  %5338 = vmatpush.msra.mxu0 0.0
  %5339 = vmatpush.msra.mxu0 0.0
  %5340 = vmatpush.msra.mxu0 0.0
  %5341 = vmatpush.msra.mxu0 0.0
  %5342 = vmatpush.msra.mxu0 0.0
  %5343 = vmatpush.msra.mxu0 0.0
  %5344 = vmatpush.msra.mxu0 0.0
  %5345 = vmatpush.msra.mxu0 0.0
  %5346 = vmatpush.msra.mxu0 0.0
  %5347 = vmatpush.msra.mxu0 0.0
  %5348 = vmatpush.msra.mxu0 0.0
  %5349 = vmatpush.msra.mxu0 %v5135
  %5350 = vmatpush.msra.mxu0 %v5133
  %5351 = vmatmul.f32.gmra.mxu0 %v5144
  %v5352 = vpop.f32.mrf.mxu0
  %v5353 = vadd.f32 %v5139, %v5352
  %5354 = vmatmul.f32.gmra.mxu0 %v5147
  %v5355 = vpop.f32.mrf.mxu0
  %v5356 = vadd.f32 %v5139, %v5355
  %5357 = vmatmul.f32.gmra.mxu0 %v5150
  %v5358 = vpop.f32.mrf.mxu0
  %v5359 = vadd.f32 %v5139, %v5358
  %5360 = vmatmul.f32.gmra.mxu0 %v5153
  %v5361 = vpop.f32.mrf.mxu0
  %v5362 = vadd.f32 %v5139, %v5361
  %5363 = vmatmul.f32.gmra.mxu0 %v5156
  %v5364 = vpop.f32.mrf.mxu0
  %v5365 = vadd.f32 %v5139, %v5364
  %5366 = vmatmul.f32.gmra.mxu0 %v5159
  %v5367 = vpop.f32.mrf.mxu0
  %v5368 = vadd.f32 %v5139, %v5367
  %5369 = vmatmul.f32.gmra.mxu0 %v5162
  %v5370 = vpop.f32.mrf.mxu0
  %v5371 = vadd.f32 %v5139, %v5370
  %5372 = vmatmul.f32.gmra.mxu0 %v5165
  %v5373 = vpop.f32.mrf.mxu0
  %v5374 = vadd.f32 %v5139, %v5373
  %5375 = vmatmul.f32.gmra.mxu0 %v5168
  %v5376 = vpop.f32.mrf.mxu0
  %v5377 = vadd.f32 %v5139, %v5376
  %5378 = vmatmul.f32.gmra.mxu0 %v5171
  %v5379 = vpop.f32.mrf.mxu0
  %v5380 = vadd.f32 %v5139, %v5379
  %5381 = vmatmul.f32.gmra.mxu0 %v5174
  %v5382 = vpop.f32.mrf.mxu0
  %v5383 = vadd.f32 %v5139, %v5382
  %5384 = vmatmul.f32.gmra.mxu0 %v5177
  %v5385 = vpop.f32.mrf.mxu0
  %v5386 = vadd.f32 %v5139, %v5385
  %5387 = vmatmul.f32.gmra.mxu0 %v5180
  %v5388 = vpop.f32.mrf.mxu0
  %v5389 = vadd.f32 %v5139, %v5388
  %5390 = vmatmul.f32.gmra.mxu0 %v5183
  %v5391 = vpop.f32.mrf.mxu0
  %v5392 = vadd.f32 %v5139, %v5391
  %5393 = vmatmul.f32.gmra.mxu0 %v5186
  %v5394 = vpop.f32.mrf.mxu0
  %v5395 = vadd.f32 %v5139, %v5394
  %5396 = vmatmul.f32.gmra.mxu0 %v5189
  %v5397 = vpop.f32.mrf.mxu0
  %v5398 = vadd.f32 %v5139, %v5397
  %5399 = vmatmul.f32.gmra.mxu0 %v5192
  %v5400 = vpop.f32.mrf.mxu0
  %v5401 = vadd.f32 %v5139, %v5400
  %5402 = vmatmul.f32.gmra.mxu0 %v5195
  %v5403 = vpop.f32.mrf.mxu0
  %v5404 = vadd.f32 %v5139, %v5403
  %5405 = vmatmul.f32.gmra.mxu0 %v5198
  %v5406 = vpop.f32.mrf.mxu0
  %v5407 = vadd.f32 %v5139, %v5406
  %5408 = vmatmul.f32.gmra.mxu0 %v5201
  %v5409 = vpop.f32.mrf.mxu0
  %v5410 = vadd.f32 %v5139, %v5409
  %5411 = vmatmul.f32.gmra.mxu0 %v5204
  %v5412 = vpop.f32.mrf.mxu0
  %v5413 = vadd.f32 %v5139, %v5412
  %5414 = vmatmul.f32.gmra.mxu0 %v5207
  %v5415 = vpop.f32.mrf.mxu0
  %v5416 = vadd.f32 %v5139, %v5415
  %5417 = vmatmul.f32.gmra.mxu0 %v5210
  %v5418 = vpop.f32.mrf.mxu0
  %v5419 = vadd.f32 %v5139, %v5418
  %5420 = vmatmul.f32.gmra.mxu0 %v5213
  %v5421 = vpop.f32.mrf.mxu0
  %v5422 = vadd.f32 %v5139, %v5421
  %5423 = vmatmul.f32.gmra.mxu0 %v5216
  %v5424 = vpop.f32.mrf.mxu0
  %v5425 = vadd.f32 %v5139, %v5424
  %5426 = vmatmul.f32.gmra.mxu0 %v5219
  %v5427 = vpop.f32.mrf.mxu0
  %v5428 = vadd.f32 %v5139, %v5427
  %5429 = vmatmul.f32.gmra.mxu0 %v5222
  %v5430 = vpop.f32.mrf.mxu0
  %v5431 = vadd.f32 %v5139, %v5430
  %5432 = vmatmul.f32.gmra.mxu0 %v5225
  %v5433 = vpop.f32.mrf.mxu0
  %v5434 = vadd.f32 %v5139, %v5433
  %5435 = vmatmul.f32.gmra.mxu0 %v5228
  %v5436 = vpop.f32.mrf.mxu0
  %v5437 = vadd.f32 %v5139, %v5436
  %5438 = vmatmul.f32.gmra.mxu0 %v5231
  %v5439 = vpop.f32.mrf.mxu0
  %v5440 = vadd.f32 %v5139, %v5439
  %5441 = vmatmul.f32.gmra.mxu0 %v5234
  %v5442 = vpop.f32.mrf.mxu0
  %v5443 = vadd.f32 %v5139, %v5442
  %5444 = vmatmul.f32.gmra.mxu0 %v5237
  %v5445 = vpop.f32.mrf.mxu0
  %v5446 = vadd.f32 %v5139, %v5445
  %5447 = vmatmul.f32.gmra.mxu0 %v5240
  %v5448 = vpop.f32.mrf.mxu0
  %v5449 = vadd.f32 %v5139, %v5448
  %5450 = vmatmul.f32.gmra.mxu0 %v5243
  %v5451 = vpop.f32.mrf.mxu0
  %v5452 = vadd.f32 %v5139, %v5451
  %5453 = vmatmul.f32.gmra.mxu0 %v5246
  %v5454 = vpop.f32.mrf.mxu0
  %v5455 = vadd.f32 %v5139, %v5454
  %5456 = vmatmul.f32.gmra.mxu0 %v5249
  %v5457 = vpop.f32.mrf.mxu0
  %v5458 = vadd.f32 %v5139, %v5457
  %5459 = vmatmul.f32.gmra.mxu0 %v5252
  %v5460 = vpop.f32.mrf.mxu0
  %v5461 = vadd.f32 %v5139, %v5460
  %5462 = vmatmul.f32.gmra.mxu0 %v5255
  %v5463 = vpop.f32.mrf.mxu0
  %v5464 = vadd.f32 %v5139, %v5463
  %5465 = vmatmul.f32.gmra.mxu0 %v5258
  %v5466 = vpop.f32.mrf.mxu0
  %v5467 = vadd.f32 %v5139, %v5466
  %5468 = vmatmul.f32.gmra.mxu0 %v5261
  %v5469 = vpop.f32.mrf.mxu0
  %v5470 = vadd.f32 %v5139, %v5469
  %5471 = vmatmul.f32.gmra.mxu0 %v5264
  %v5472 = vpop.f32.mrf.mxu0
  %v5473 = vadd.f32 %v5139, %v5472
  %5474 = vmatmul.f32.gmra.mxu0 %v5267
  %v5475 = vpop.f32.mrf.mxu0
  %v5476 = vadd.f32 %v5139, %v5475
  %5477 = vmatmul.f32.gmra.mxu0 %v5270
  %v5478 = vpop.f32.mrf.mxu0
  %v5479 = vadd.f32 %v5139, %v5478
  %5480 = vmatmul.f32.gmra.mxu0 %v5273
  %v5481 = vpop.f32.mrf.mxu0
  %v5482 = vadd.f32 %v5139, %v5481
  %5483 = vmatmul.f32.gmra.mxu0 %v5276
  %v5484 = vpop.f32.mrf.mxu0
  %v5485 = vadd.f32 %v5139, %v5484
  %5486 = vmatmul.f32.gmra.mxu0 %v5279
  %v5487 = vpop.f32.mrf.mxu0
  %v5488 = vadd.f32 %v5139, %v5487
  %5489 = vmatmul.f32.gmra.mxu0 %v5282
  %v5490 = vpop.f32.mrf.mxu0
  %v5491 = vadd.f32 %v5139, %v5490
  %5492 = vmatmul.f32.gmra.mxu0 %v5285
  %v5493 = vpop.f32.mrf.mxu0
  %v5494 = vadd.f32 %v5139, %v5493
  %5495 = vmatmul.f32.gmra.mxu0 %v5288
  %v5496 = vpop.f32.mrf.mxu0
  %v5497 = vadd.f32 %v5139, %v5496
  %5498 = vmatmul.f32.gmra.mxu0 %v5291
  %v5499 = vpop.f32.mrf.mxu0
  %v5500 = vadd.f32 %v5139, %v5499
  %5501 = vmatmul.f32.gmra.mxu0 %v5294
  %v5502 = vpop.f32.mrf.mxu0
  %v5503 = vadd.f32 %v5139, %v5502
  %5504 = vmatmul.f32.gmra.mxu0 %v5297
  %v5505 = vpop.f32.mrf.mxu0
  %v5506 = vadd.f32 %v5139, %v5505
  %5507 = vmatmul.f32.gmra.mxu0 %v5300
  %v5508 = vpop.f32.mrf.mxu0
  %v5509 = vadd.f32 %v5139, %v5508
  %5510 = vmatmul.f32.gmra.mxu0 %v5303
  %v5511 = vpop.f32.mrf.mxu0
  %v5512 = vadd.f32 %v5139, %v5511
  %5513 = vmatmul.f32.gmra.mxu0 %v5306
  %v5514 = vpop.f32.mrf.mxu0
  %v5515 = vadd.f32 %v5139, %v5514
  %5516 = vmatmul.f32.gmra.mxu0 %v5309
  %v5517 = vpop.f32.mrf.mxu0
  %v5518 = vadd.f32 %v5139, %v5517
  %5519 = vmatmul.f32.gmra.mxu0 %v5312
  %v5520 = vpop.f32.mrf.mxu0
  %v5521 = vadd.f32 %v5139, %v5520
  %5522 = vmatmul.f32.gmra.mxu0 %v5315
  %v5523 = vpop.f32.mrf.mxu0
  %v5524 = vadd.f32 %v5139, %v5523
  %5525 = vmatmul.f32.gmra.mxu0 %v5318
  %v5526 = vpop.f32.mrf.mxu0
  %v5527 = vadd.f32 %v5139, %v5526
  %5528 = vmatmul.f32.gmra.mxu0 %v5321
  %v5529 = vpop.f32.mrf.mxu0
  %v5530 = vadd.f32 %v5139, %v5529
  %5531 = vmatmul.f32.gmra.mxu0 %v5324
  %v5532 = vpop.f32.mrf.mxu0
  %v5533 = vadd.f32 %v5139, %v5532
  %5534 = vmatmul.f32.gmra.mxu0 %v5327
  %v5535 = vpop.f32.mrf.mxu0
  %v5536 = vadd.f32 %v5139, %v5535
  %5537 = vmatmul.f32.gmra.mxu0 %v5330
  %v5538 = vpop.f32.mrf.mxu0
  %v5539 = vadd.f32 %v5139, %v5538
  %5540 = vmatmul.f32.gmra.mxu0 %v5333
  %v5541 = vpop.f32.mrf.mxu0
  %v5542 = vadd.f32 %v5139, %v5541
  %5543 = vdwg.mxu0
  %5544 = vmatpush.msra.mxu0 0.0
  %5545 = vmatpush.msra.mxu0 0.0
  %5546 = vmatpush.msra.mxu0 0.0
  %5547 = vmatpush.msra.mxu0 0.0
  %5548 = vmatpush.msra.mxu0 0.0
  %5549 = vmatpush.msra.mxu0 0.0
  %5550 = vmatpush.msra.mxu0 0.0
  %5551 = vmatpush.msra.mxu0 0.0
  %5552 = vmatpush.msra.mxu0 0.0
  %5553 = vmatpush.msra.mxu0 0.0
  %5554 = vmatpush.msra.mxu0 0.0
  %5555 = vmatpush.msra.mxu0 0.0
  %5556 = vmatpush.msra.mxu0 0.0
  %5557 = vmatpush.msra.mxu0 0.0
  %5558 = vmatpush.msra.mxu0 %v5136
  %5559 = vmatpush.msra.mxu0 %v5134
  %5560 = vmatmul.f32.gmra.mxu0 %v5144
  %v5561 = vpop.f32.mrf.mxu0
  %v5562 = vadd.f32 %v5140, %v5561
  %5563 = vmatmul.f32.gmra.mxu0 %v5147
  %v5564 = vpop.f32.mrf.mxu0
  %v5565 = vadd.f32 %v5140, %v5564
  %5566 = vmatmul.f32.gmra.mxu0 %v5150
  %v5567 = vpop.f32.mrf.mxu0
  %v5568 = vadd.f32 %v5140, %v5567
  %5569 = vmatmul.f32.gmra.mxu0 %v5153
  %v5570 = vpop.f32.mrf.mxu0
  %v5571 = vadd.f32 %v5140, %v5570
  %5572 = vmatmul.f32.gmra.mxu0 %v5156
  %v5573 = vpop.f32.mrf.mxu0
  %v5574 = vadd.f32 %v5140, %v5573
  %5575 = vmatmul.f32.gmra.mxu0 %v5159
  %v5576 = vpop.f32.mrf.mxu0
  %v5577 = vadd.f32 %v5140, %v5576
  %5578 = vmatmul.f32.gmra.mxu0 %v5162
  %v5579 = vpop.f32.mrf.mxu0
  %v5580 = vadd.f32 %v5140, %v5579
  %5581 = vmatmul.f32.gmra.mxu0 %v5165
  %v5582 = vpop.f32.mrf.mxu0
  %v5583 = vadd.f32 %v5140, %v5582
  %5584 = vmatmul.f32.gmra.mxu0 %v5168
  %v5585 = vpop.f32.mrf.mxu0
  %v5586 = vadd.f32 %v5140, %v5585
  %5587 = vmatmul.f32.gmra.mxu0 %v5171
  %v5588 = vpop.f32.mrf.mxu0
  %v5589 = vadd.f32 %v5140, %v5588
  %5590 = vmatmul.f32.gmra.mxu0 %v5174
  %v5591 = vpop.f32.mrf.mxu0
  %v5592 = vadd.f32 %v5140, %v5591
  %5593 = vmatmul.f32.gmra.mxu0 %v5177
  %v5594 = vpop.f32.mrf.mxu0
  %v5595 = vadd.f32 %v5140, %v5594
  %5596 = vmatmul.f32.gmra.mxu0 %v5180
  %v5597 = vpop.f32.mrf.mxu0
  %v5598 = vadd.f32 %v5140, %v5597
  %5599 = vmatmul.f32.gmra.mxu0 %v5183
  %v5600 = vpop.f32.mrf.mxu0
  %v5601 = vadd.f32 %v5140, %v5600
  %5602 = vmatmul.f32.gmra.mxu0 %v5186
  %v5603 = vpop.f32.mrf.mxu0
  %v5604 = vadd.f32 %v5140, %v5603
  %5605 = vmatmul.f32.gmra.mxu0 %v5189
  %v5606 = vpop.f32.mrf.mxu0
  %v5607 = vadd.f32 %v5140, %v5606
  %5608 = vmatmul.f32.gmra.mxu0 %v5192
  %v5609 = vpop.f32.mrf.mxu0
  %v5610 = vadd.f32 %v5140, %v5609
  %5611 = vmatmul.f32.gmra.mxu0 %v5195
  %v5612 = vpop.f32.mrf.mxu0
  %v5613 = vadd.f32 %v5140, %v5612
  %5614 = vmatmul.f32.gmra.mxu0 %v5198
  %v5615 = vpop.f32.mrf.mxu0
  %v5616 = vadd.f32 %v5140, %v5615
  %5617 = vmatmul.f32.gmra.mxu0 %v5201
  %v5618 = vpop.f32.mrf.mxu0
  %v5619 = vadd.f32 %v5140, %v5618
  %5620 = vmatmul.f32.gmra.mxu0 %v5204
  %v5621 = vpop.f32.mrf.mxu0
  %v5622 = vadd.f32 %v5140, %v5621
  %5623 = vmatmul.f32.gmra.mxu0 %v5207
  %v5624 = vpop.f32.mrf.mxu0
  %v5625 = vadd.f32 %v5140, %v5624
  %5626 = vmatmul.f32.gmra.mxu0 %v5210
  %v5627 = vpop.f32.mrf.mxu0
  %v5628 = vadd.f32 %v5140, %v5627
  %5629 = vmatmul.f32.gmra.mxu0 %v5213
  %v5630 = vpop.f32.mrf.mxu0
  %v5631 = vadd.f32 %v5140, %v5630
  %5632 = vmatmul.f32.gmra.mxu0 %v5216
  %v5633 = vpop.f32.mrf.mxu0
  %v5634 = vadd.f32 %v5140, %v5633
  %5635 = vmatmul.f32.gmra.mxu0 %v5219
  %v5636 = vpop.f32.mrf.mxu0
  %v5637 = vadd.f32 %v5140, %v5636
  %5638 = vmatmul.f32.gmra.mxu0 %v5222
  %v5639 = vpop.f32.mrf.mxu0
  %v5640 = vadd.f32 %v5140, %v5639
  %5641 = vmatmul.f32.gmra.mxu0 %v5225
  %v5642 = vpop.f32.mrf.mxu0
  %v5643 = vadd.f32 %v5140, %v5642
  %5644 = vmatmul.f32.gmra.mxu0 %v5228
  %v5645 = vpop.f32.mrf.mxu0
  %v5646 = vadd.f32 %v5140, %v5645
  %5647 = vmatmul.f32.gmra.mxu0 %v5231
  %v5648 = vpop.f32.mrf.mxu0
  %v5649 = vadd.f32 %v5140, %v5648
  %5650 = vmatmul.f32.gmra.mxu0 %v5234
  %v5651 = vpop.f32.mrf.mxu0
  %v5652 = vadd.f32 %v5140, %v5651
  %5653 = vmatmul.f32.gmra.mxu0 %v5237
  %v5654 = vpop.f32.mrf.mxu0
  %v5655 = vadd.f32 %v5140, %v5654
  %5656 = vmatmul.f32.gmra.mxu0 %v5240
  %v5657 = vpop.f32.mrf.mxu0
  %v5658 = vadd.f32 %v5140, %v5657
  %5659 = vmatmul.f32.gmra.mxu0 %v5243
  %v5660 = vpop.f32.mrf.mxu0
  %v5661 = vadd.f32 %v5140, %v5660
  %5662 = vmatmul.f32.gmra.mxu0 %v5246
  %v5663 = vpop.f32.mrf.mxu0
  %v5664 = vadd.f32 %v5140, %v5663
  %5665 = vmatmul.f32.gmra.mxu0 %v5249
  %v5666 = vpop.f32.mrf.mxu0
  %v5667 = vadd.f32 %v5140, %v5666
  %5668 = vmatmul.f32.gmra.mxu0 %v5252
  %v5669 = vpop.f32.mrf.mxu0
  %v5670 = vadd.f32 %v5140, %v5669
  %5671 = vmatmul.f32.gmra.mxu0 %v5255
  %v5672 = vpop.f32.mrf.mxu0
  %v5673 = vadd.f32 %v5140, %v5672
  %5674 = vmatmul.f32.gmra.mxu0 %v5258
  %v5675 = vpop.f32.mrf.mxu0
  %v5676 = vadd.f32 %v5140, %v5675
  %5677 = vmatmul.f32.gmra.mxu0 %v5261
  %v5678 = vpop.f32.mrf.mxu0
  %v5679 = vadd.f32 %v5140, %v5678
  %5680 = vmatmul.f32.gmra.mxu0 %v5264
  %v5681 = vpop.f32.mrf.mxu0
  %v5682 = vadd.f32 %v5140, %v5681
  %5683 = vmatmul.f32.gmra.mxu0 %v5267
  %v5684 = vpop.f32.mrf.mxu0
  %v5685 = vadd.f32 %v5140, %v5684
  %5686 = vmatmul.f32.gmra.mxu0 %v5270
  %v5687 = vpop.f32.mrf.mxu0
  %v5688 = vadd.f32 %v5140, %v5687
  %5689 = vmatmul.f32.gmra.mxu0 %v5273
  %v5690 = vpop.f32.mrf.mxu0
  %v5691 = vadd.f32 %v5140, %v5690
  %5692 = vmatmul.f32.gmra.mxu0 %v5276
  %v5693 = vpop.f32.mrf.mxu0
  %v5694 = vadd.f32 %v5140, %v5693
  %5695 = vmatmul.f32.gmra.mxu0 %v5279
  %v5696 = vpop.f32.mrf.mxu0
  %v5697 = vadd.f32 %v5140, %v5696
  %5698 = vmatmul.f32.gmra.mxu0 %v5282
  %v5699 = vpop.f32.mrf.mxu0
  %v5700 = vadd.f32 %v5140, %v5699
  %5701 = vmatmul.f32.gmra.mxu0 %v5285
  %v5702 = vpop.f32.mrf.mxu0
  %v5703 = vadd.f32 %v5140, %v5702
  %5704 = vmatmul.f32.gmra.mxu0 %v5288
  %v5705 = vpop.f32.mrf.mxu0
  %v5706 = vadd.f32 %v5140, %v5705
  %5707 = vmatmul.f32.gmra.mxu0 %v5291
  %v5708 = vpop.f32.mrf.mxu0
  %v5709 = vadd.f32 %v5140, %v5708
  %5710 = vmatmul.f32.gmra.mxu0 %v5294
  %v5711 = vpop.f32.mrf.mxu0
  %v5712 = vadd.f32 %v5140, %v5711
  %5713 = vmatmul.f32.gmra.mxu0 %v5297
  %v5714 = vpop.f32.mrf.mxu0
  %v5715 = vadd.f32 %v5140, %v5714
  %5716 = vmatmul.f32.gmra.mxu0 %v5300
  %v5717 = vpop.f32.mrf.mxu0
  %v5718 = vadd.f32 %v5140, %v5717
  %5719 = vmatmul.f32.gmra.mxu0 %v5303
  %v5720 = vpop.f32.mrf.mxu0
  %v5721 = vadd.f32 %v5140, %v5720
  %5722 = vmatmul.f32.gmra.mxu0 %v5306
  %v5723 = vpop.f32.mrf.mxu0
  %v5724 = vadd.f32 %v5140, %v5723
  %5725 = vmatmul.f32.gmra.mxu0 %v5309
  %v5726 = vpop.f32.mrf.mxu0
  %v5727 = vadd.f32 %v5140, %v5726
  %5728 = vmatmul.f32.gmra.mxu0 %v5312
  %v5729 = vpop.f32.mrf.mxu0
  %v5730 = vadd.f32 %v5140, %v5729
  %5731 = vmatmul.f32.gmra.mxu0 %v5315
  %v5732 = vpop.f32.mrf.mxu0
  %v5733 = vadd.f32 %v5140, %v5732
  %5734 = vmatmul.f32.gmra.mxu0 %v5318
  %v5735 = vpop.f32.mrf.mxu0
  %v5736 = vadd.f32 %v5140, %v5735
  %5737 = vmatmul.f32.gmra.mxu0 %v5321
  %v5738 = vpop.f32.mrf.mxu0
  %v5739 = vadd.f32 %v5140, %v5738
  %5740 = vmatmul.f32.gmra.mxu0 %v5324
  %v5741 = vpop.f32.mrf.mxu0
  %v5742 = vadd.f32 %v5140, %v5741
  %5743 = vmatmul.f32.gmra.mxu0 %v5327
  %v5744 = vpop.f32.mrf.mxu0
  %v5745 = vadd.f32 %v5140, %v5744
  %5746 = vmatmul.f32.gmra.mxu0 %v5330
  %v5747 = vpop.f32.mrf.mxu0
  %v5748 = vadd.f32 %v5140, %v5747
  %5749 = vmatmul.f32.gmra.mxu0 %v5333
  %v5750 = vpop.f32.mrf.mxu0
  %v5751 = vadd.f32 %v5140, %v5750
  %5752 = vdwg.mxu0
  %v5753 = vld [vmem:[%s19] sm:$0xff]
  %v5754 = vld [vmem:[%s19 + $0x8] sm:$0xff]
  %v5755 = vld [vmem:[%s19 + $0x10] sm:$0xff]
  %v5756 = vld [vmem:[%s19 + $0x18] sm:$0xff]
  %v5757 = vld [vmem:[%s19 + $0x20] sm:$0xff]
  %v5758 = vld [vmem:[%s19 + $0x28] sm:$0xff]
  %v5759 = vld [vmem:[%s19 + $0x30] sm:$0xff]
  %v5760 = vld [vmem:[%s19 + $0x38] sm:$0xff]
  %v5761 = vld [vmem:[%s19 + $0x40] sm:$0xff]
  %v5762 = vld [vmem:[%s19 + $0x48] sm:$0xff]
  %v5763 = vld [vmem:[%s19 + $0x50] sm:$0xff]
  %v5764 = vld [vmem:[%s19 + $0x58] sm:$0xff]
  %v5765 = vld [vmem:[%s19 + $0x60] sm:$0xff]
  %v5766 = vld [vmem:[%s19 + $0x68] sm:$0xff]
  %v5767 = vld [vmem:[%s19 + $0x70] sm:$0xff]
  %v5768 = vld [vmem:[%s19 + $0x78] sm:$0xff]
  %v5769 = vld [vmem:[%s19 + $0x80] sm:$0xff]
  %v5770 = vld [vmem:[%s19 + $0x88] sm:$0xff]
  %v5771 = vld [vmem:[%s19 + $0x90] sm:$0xff]
  %v5772 = vld [vmem:[%s19 + $0x98] sm:$0xff]
  %v5773 = vld [vmem:[%s19 + $0xa0] sm:$0xff]
  %v5774 = vld [vmem:[%s19 + $0xa8] sm:$0xff]
  %v5775 = vld [vmem:[%s19 + $0xb0] sm:$0xff]
  %v5776 = vld [vmem:[%s19 + $0xb8] sm:$0xff]
  %v5777 = vld [vmem:[%s19 + $0xc0] sm:$0xff]
  %v5778 = vld [vmem:[%s19 + $0xc8] sm:$0xff]
  %v5779 = vld [vmem:[%s19 + $0xd0] sm:$0xff]
  %v5780 = vld [vmem:[%s19 + $0xd8] sm:$0xff]
  %v5781 = vld [vmem:[%s19 + $0xe0] sm:$0xff]
  %v5782 = vld [vmem:[%s19 + $0xe8] sm:$0xff]
  %v5783 = vld [vmem:[%s19 + $0xf0] sm:$0xff]
  %v5784 = vld [vmem:[%s19 + $0xf8] sm:$0xff]
  %5785 = vmatpush.msra.mxu0 %v5768
  %5786 = vmatpush.msra.mxu0 %v5767
  %5787 = vmatpush.msra.mxu0 %v5766
  %5788 = vmatpush.msra.mxu0 %v5765
  %5789 = vmatpush.msra.mxu0 %v5764
  %5790 = vmatpush.msra.mxu0 %v5763
  %5791 = vmatpush.msra.mxu0 %v5762
  %5792 = vmatpush.msra.mxu0 %v5761
  %5793 = vmatpush.msra.mxu0 %v5760
  %5794 = vmatpush.msra.mxu0 %v5759
  %5795 = vmatpush.msra.mxu0 %v5758
  %5796 = vmatpush.msra.mxu0 %v5757
  %5797 = vmatpush.msra.mxu0 %v5756
  %5798 = vmatpush.msra.mxu0 %v5755
  %5799 = vmatpush.msra.mxu0 %v5754
  %5800 = vmatpush.msra.mxu0 %v5753
  %5801 = vmatmul.f32.gmra.mxu0 %v5353
  %v5802 = vpop.f32.mrf.mxu0
  %v5803 = vadd.f32 0.0, %v5802
  %5804 = vmatmul.f32.gmra.mxu0 %v5356
  %v5805 = vpop.f32.mrf.mxu0
  %v5806 = vadd.f32 0.0, %v5805
  %5807 = vmatmul.f32.gmra.mxu0 %v5359
  %v5808 = vpop.f32.mrf.mxu0
  %v5809 = vadd.f32 0.0, %v5808
  %5810 = vmatmul.f32.gmra.mxu0 %v5362
  %v5811 = vpop.f32.mrf.mxu0
  %v5812 = vadd.f32 0.0, %v5811
  %5813 = vmatmul.f32.gmra.mxu0 %v5365
  %v5814 = vpop.f32.mrf.mxu0
  %v5815 = vadd.f32 0.0, %v5814
  %5816 = vmatmul.f32.gmra.mxu0 %v5368
  %v5817 = vpop.f32.mrf.mxu0
  %v5818 = vadd.f32 0.0, %v5817
  %5819 = vmatmul.f32.gmra.mxu0 %v5371
  %v5820 = vpop.f32.mrf.mxu0
  %v5821 = vadd.f32 0.0, %v5820
  %5822 = vmatmul.f32.gmra.mxu0 %v5374
  %v5823 = vpop.f32.mrf.mxu0
  %v5824 = vadd.f32 0.0, %v5823
  %5825 = vmatmul.f32.gmra.mxu0 %v5377
  %v5826 = vpop.f32.mrf.mxu0
  %v5827 = vadd.f32 0.0, %v5826
  %5828 = vmatmul.f32.gmra.mxu0 %v5380
  %v5829 = vpop.f32.mrf.mxu0
  %v5830 = vadd.f32 0.0, %v5829
  %5831 = vmatmul.f32.gmra.mxu0 %v5383
  %v5832 = vpop.f32.mrf.mxu0
  %v5833 = vadd.f32 0.0, %v5832
  %5834 = vmatmul.f32.gmra.mxu0 %v5386
  %v5835 = vpop.f32.mrf.mxu0
  %v5836 = vadd.f32 0.0, %v5835
  %5837 = vmatmul.f32.gmra.mxu0 %v5389
  %v5838 = vpop.f32.mrf.mxu0
  %v5839 = vadd.f32 0.0, %v5838
  %5840 = vmatmul.f32.gmra.mxu0 %v5392
  %v5841 = vpop.f32.mrf.mxu0
  %v5842 = vadd.f32 0.0, %v5841
  %5843 = vmatmul.f32.gmra.mxu0 %v5395
  %v5844 = vpop.f32.mrf.mxu0
  %v5845 = vadd.f32 0.0, %v5844
  %5846 = vmatmul.f32.gmra.mxu0 %v5398
  %v5847 = vpop.f32.mrf.mxu0
  %v5848 = vadd.f32 0.0, %v5847
  %5849 = vmatmul.f32.gmra.mxu0 %v5401
  %v5850 = vpop.f32.mrf.mxu0
  %v5851 = vadd.f32 0.0, %v5850
  %5852 = vmatmul.f32.gmra.mxu0 %v5404
  %v5853 = vpop.f32.mrf.mxu0
  %v5854 = vadd.f32 0.0, %v5853
  %5855 = vmatmul.f32.gmra.mxu0 %v5407
  %v5856 = vpop.f32.mrf.mxu0
  %v5857 = vadd.f32 0.0, %v5856
  %5858 = vmatmul.f32.gmra.mxu0 %v5410
  %v5859 = vpop.f32.mrf.mxu0
  %v5860 = vadd.f32 0.0, %v5859
  %5861 = vmatmul.f32.gmra.mxu0 %v5413
  %v5862 = vpop.f32.mrf.mxu0
  %v5863 = vadd.f32 0.0, %v5862
  %5864 = vmatmul.f32.gmra.mxu0 %v5416
  %v5865 = vpop.f32.mrf.mxu0
  %v5866 = vadd.f32 0.0, %v5865
  %5867 = vmatmul.f32.gmra.mxu0 %v5419
  %v5868 = vpop.f32.mrf.mxu0
  %v5869 = vadd.f32 0.0, %v5868
  %5870 = vmatmul.f32.gmra.mxu0 %v5422
  %v5871 = vpop.f32.mrf.mxu0
  %v5872 = vadd.f32 0.0, %v5871
  %5873 = vmatmul.f32.gmra.mxu0 %v5425
  %v5874 = vpop.f32.mrf.mxu0
  %v5875 = vadd.f32 0.0, %v5874
  %5876 = vmatmul.f32.gmra.mxu0 %v5428
  %v5877 = vpop.f32.mrf.mxu0
  %v5878 = vadd.f32 0.0, %v5877
  %5879 = vmatmul.f32.gmra.mxu0 %v5431
  %v5880 = vpop.f32.mrf.mxu0
  %v5881 = vadd.f32 0.0, %v5880
  %5882 = vmatmul.f32.gmra.mxu0 %v5434
  %v5883 = vpop.f32.mrf.mxu0
  %v5884 = vadd.f32 0.0, %v5883
  %5885 = vmatmul.f32.gmra.mxu0 %v5437
  %v5886 = vpop.f32.mrf.mxu0
  %v5887 = vadd.f32 0.0, %v5886
  %5888 = vmatmul.f32.gmra.mxu0 %v5440
  %v5889 = vpop.f32.mrf.mxu0
  %v5890 = vadd.f32 0.0, %v5889
  %5891 = vmatmul.f32.gmra.mxu0 %v5443
  %v5892 = vpop.f32.mrf.mxu0
  %v5893 = vadd.f32 0.0, %v5892
  %5894 = vmatmul.f32.gmra.mxu0 %v5446
  %v5895 = vpop.f32.mrf.mxu0
  %v5896 = vadd.f32 0.0, %v5895
  %5897 = vmatmul.f32.gmra.mxu0 %v5449
  %v5898 = vpop.f32.mrf.mxu0
  %v5899 = vadd.f32 0.0, %v5898
  %5900 = vmatmul.f32.gmra.mxu0 %v5452
  %v5901 = vpop.f32.mrf.mxu0
  %v5902 = vadd.f32 0.0, %v5901
  %5903 = vmatmul.f32.gmra.mxu0 %v5455
  %v5904 = vpop.f32.mrf.mxu0
  %v5905 = vadd.f32 0.0, %v5904
  %5906 = vmatmul.f32.gmra.mxu0 %v5458
  %v5907 = vpop.f32.mrf.mxu0
  %v5908 = vadd.f32 0.0, %v5907
  %5909 = vmatmul.f32.gmra.mxu0 %v5461
  %v5910 = vpop.f32.mrf.mxu0
  %v5911 = vadd.f32 0.0, %v5910
  %5912 = vmatmul.f32.gmra.mxu0 %v5464
  %v5913 = vpop.f32.mrf.mxu0
  %v5914 = vadd.f32 0.0, %v5913
  %5915 = vmatmul.f32.gmra.mxu0 %v5467
  %v5916 = vpop.f32.mrf.mxu0
  %v5917 = vadd.f32 0.0, %v5916
  %5918 = vmatmul.f32.gmra.mxu0 %v5470
  %v5919 = vpop.f32.mrf.mxu0
  %v5920 = vadd.f32 0.0, %v5919
  %5921 = vmatmul.f32.gmra.mxu0 %v5473
  %v5922 = vpop.f32.mrf.mxu0
  %v5923 = vadd.f32 0.0, %v5922
  %5924 = vmatmul.f32.gmra.mxu0 %v5476
  %v5925 = vpop.f32.mrf.mxu0
  %v5926 = vadd.f32 0.0, %v5925
  %5927 = vmatmul.f32.gmra.mxu0 %v5479
  %v5928 = vpop.f32.mrf.mxu0
  %v5929 = vadd.f32 0.0, %v5928
  %5930 = vmatmul.f32.gmra.mxu0 %v5482
  %v5931 = vpop.f32.mrf.mxu0
  %v5932 = vadd.f32 0.0, %v5931
  %5933 = vmatmul.f32.gmra.mxu0 %v5485
  %v5934 = vpop.f32.mrf.mxu0
  %v5935 = vadd.f32 0.0, %v5934
  %5936 = vmatmul.f32.gmra.mxu0 %v5488
  %v5937 = vpop.f32.mrf.mxu0
  %v5938 = vadd.f32 0.0, %v5937
  %5939 = vmatmul.f32.gmra.mxu0 %v5491
  %v5940 = vpop.f32.mrf.mxu0
  %v5941 = vadd.f32 0.0, %v5940
  %5942 = vmatmul.f32.gmra.mxu0 %v5494
  %v5943 = vpop.f32.mrf.mxu0
  %v5944 = vadd.f32 0.0, %v5943
  %5945 = vmatmul.f32.gmra.mxu0 %v5497
  %v5946 = vpop.f32.mrf.mxu0
  %v5947 = vadd.f32 0.0, %v5946
  %5948 = vmatmul.f32.gmra.mxu0 %v5500
  %v5949 = vpop.f32.mrf.mxu0
  %v5950 = vadd.f32 0.0, %v5949
  %5951 = vmatmul.f32.gmra.mxu0 %v5503
  %v5952 = vpop.f32.mrf.mxu0
  %v5953 = vadd.f32 0.0, %v5952
  %5954 = vmatmul.f32.gmra.mxu0 %v5506
  %v5955 = vpop.f32.mrf.mxu0
  %v5956 = vadd.f32 0.0, %v5955
  %5957 = vmatmul.f32.gmra.mxu0 %v5509
  %v5958 = vpop.f32.mrf.mxu0
  %v5959 = vadd.f32 0.0, %v5958
  %5960 = vmatmul.f32.gmra.mxu0 %v5512
  %v5961 = vpop.f32.mrf.mxu0
  %v5962 = vadd.f32 0.0, %v5961
  %5963 = vmatmul.f32.gmra.mxu0 %v5515
  %v5964 = vpop.f32.mrf.mxu0
  %v5965 = vadd.f32 0.0, %v5964
  %5966 = vmatmul.f32.gmra.mxu0 %v5518
  %v5967 = vpop.f32.mrf.mxu0
  %v5968 = vadd.f32 0.0, %v5967
  %5969 = vmatmul.f32.gmra.mxu0 %v5521
  %v5970 = vpop.f32.mrf.mxu0
  %v5971 = vadd.f32 0.0, %v5970
  %5972 = vmatmul.f32.gmra.mxu0 %v5524
  %v5973 = vpop.f32.mrf.mxu0
  %v5974 = vadd.f32 0.0, %v5973
  %5975 = vmatmul.f32.gmra.mxu0 %v5527
  %v5976 = vpop.f32.mrf.mxu0
  %v5977 = vadd.f32 0.0, %v5976
  %5978 = vmatmul.f32.gmra.mxu0 %v5530
  %v5979 = vpop.f32.mrf.mxu0
  %v5980 = vadd.f32 0.0, %v5979
  %5981 = vmatmul.f32.gmra.mxu0 %v5533
  %v5982 = vpop.f32.mrf.mxu0
  %v5983 = vadd.f32 0.0, %v5982
  %5984 = vmatmul.f32.gmra.mxu0 %v5536
  %v5985 = vpop.f32.mrf.mxu0
  %v5986 = vadd.f32 0.0, %v5985
  %5987 = vmatmul.f32.gmra.mxu0 %v5539
  %v5988 = vpop.f32.mrf.mxu0
  %v5989 = vadd.f32 0.0, %v5988
  %5990 = vmatmul.f32.gmra.mxu0 %v5542
  %v5991 = vpop.f32.mrf.mxu0
  %v5992 = vadd.f32 0.0, %v5991
  %5993 = vdwg.mxu0
  %5994 = vmatpush.msra.mxu0 %v5784
  %5995 = vmatpush.msra.mxu0 %v5783
  %5996 = vmatpush.msra.mxu0 %v5782
  %5997 = vmatpush.msra.mxu0 %v5781
  %5998 = vmatpush.msra.mxu0 %v5780
  %5999 = vmatpush.msra.mxu0 %v5779
  %6000 = vmatpush.msra.mxu0 %v5778
  %6001 = vmatpush.msra.mxu0 %v5777
  %6002 = vmatpush.msra.mxu0 %v5776
  %6003 = vmatpush.msra.mxu0 %v5775
  %6004 = vmatpush.msra.mxu0 %v5774
  %6005 = vmatpush.msra.mxu0 %v5773
  %6006 = vmatpush.msra.mxu0 %v5772
  %6007 = vmatpush.msra.mxu0 %v5771
  %6008 = vmatpush.msra.mxu0 %v5770
  %6009 = vmatpush.msra.mxu0 %v5769
  %6010 = vmatmul.f32.gmra.mxu0 %v5562
  %v6011 = vpop.f32.mrf.mxu0
  %v6012 = vadd.f32 %v5803, %v6011
  %6013 = vmatmul.f32.gmra.mxu0 %v5565
  %v6014 = vpop.f32.mrf.mxu0
  %v6015 = vadd.f32 %v5806, %v6014
  %6016 = vmatmul.f32.gmra.mxu0 %v5568
  %v6017 = vpop.f32.mrf.mxu0
  %v6018 = vadd.f32 %v5809, %v6017
  %6019 = vmatmul.f32.gmra.mxu0 %v5571
  %v6020 = vpop.f32.mrf.mxu0
  %v6021 = vadd.f32 %v5812, %v6020
  %6022 = vmatmul.f32.gmra.mxu0 %v5574
  %v6023 = vpop.f32.mrf.mxu0
  %v6024 = vadd.f32 %v5815, %v6023
  %6025 = vmatmul.f32.gmra.mxu0 %v5577
  %v6026 = vpop.f32.mrf.mxu0
  %v6027 = vadd.f32 %v5818, %v6026
  %6028 = vmatmul.f32.gmra.mxu0 %v5580
  %v6029 = vpop.f32.mrf.mxu0
  %v6030 = vadd.f32 %v5821, %v6029
  %6031 = vmatmul.f32.gmra.mxu0 %v5583
  %v6032 = vpop.f32.mrf.mxu0
  %v6033 = vadd.f32 %v5824, %v6032
  %6034 = vmatmul.f32.gmra.mxu0 %v5586
  %v6035 = vpop.f32.mrf.mxu0
  %v6036 = vadd.f32 %v5827, %v6035
  %6037 = vmatmul.f32.gmra.mxu0 %v5589
  %v6038 = vpop.f32.mrf.mxu0
  %v6039 = vadd.f32 %v5830, %v6038
  %6040 = vmatmul.f32.gmra.mxu0 %v5592
  %v6041 = vpop.f32.mrf.mxu0
  %v6042 = vadd.f32 %v5833, %v6041
  %6043 = vmatmul.f32.gmra.mxu0 %v5595
  %v6044 = vpop.f32.mrf.mxu0
  %v6045 = vadd.f32 %v5836, %v6044
  %6046 = vmatmul.f32.gmra.mxu0 %v5598
  %v6047 = vpop.f32.mrf.mxu0
  %v6048 = vadd.f32 %v5839, %v6047
  %6049 = vmatmul.f32.gmra.mxu0 %v5601
  %v6050 = vpop.f32.mrf.mxu0
  %v6051 = vadd.f32 %v5842, %v6050
  %6052 = vmatmul.f32.gmra.mxu0 %v5604
  %v6053 = vpop.f32.mrf.mxu0
  %v6054 = vadd.f32 %v5845, %v6053
  %6055 = vmatmul.f32.gmra.mxu0 %v5607
  %v6056 = vpop.f32.mrf.mxu0
  %v6057 = vadd.f32 %v5848, %v6056
  %6058 = vmatmul.f32.gmra.mxu0 %v5610
  %v6059 = vpop.f32.mrf.mxu0
  %v6060 = vadd.f32 %v5851, %v6059
  %6061 = vmatmul.f32.gmra.mxu0 %v5613
  %v6062 = vpop.f32.mrf.mxu0
  %v6063 = vadd.f32 %v5854, %v6062
  %6064 = vmatmul.f32.gmra.mxu0 %v5616
  %v6065 = vpop.f32.mrf.mxu0
  %v6066 = vadd.f32 %v5857, %v6065
  %6067 = vmatmul.f32.gmra.mxu0 %v5619
  %v6068 = vpop.f32.mrf.mxu0
  %v6069 = vadd.f32 %v5860, %v6068
  %6070 = vmatmul.f32.gmra.mxu0 %v5622
  %v6071 = vpop.f32.mrf.mxu0
  %v6072 = vadd.f32 %v5863, %v6071
  %6073 = vmatmul.f32.gmra.mxu0 %v5625
  %v6074 = vpop.f32.mrf.mxu0
  %v6075 = vadd.f32 %v5866, %v6074
  %6076 = vmatmul.f32.gmra.mxu0 %v5628
  %v6077 = vpop.f32.mrf.mxu0
  %v6078 = vadd.f32 %v5869, %v6077
  %6079 = vmatmul.f32.gmra.mxu0 %v5631
  %v6080 = vpop.f32.mrf.mxu0
  %v6081 = vadd.f32 %v5872, %v6080
  %6082 = vmatmul.f32.gmra.mxu0 %v5634
  %v6083 = vpop.f32.mrf.mxu0
  %v6084 = vadd.f32 %v5875, %v6083
  %6085 = vmatmul.f32.gmra.mxu0 %v5637
  %v6086 = vpop.f32.mrf.mxu0
  %v6087 = vadd.f32 %v5878, %v6086
  %6088 = vmatmul.f32.gmra.mxu0 %v5640
  %v6089 = vpop.f32.mrf.mxu0
  %v6090 = vadd.f32 %v5881, %v6089
  %6091 = vmatmul.f32.gmra.mxu0 %v5643
  %v6092 = vpop.f32.mrf.mxu0
  %v6093 = vadd.f32 %v5884, %v6092
  %6094 = vmatmul.f32.gmra.mxu0 %v5646
  %v6095 = vpop.f32.mrf.mxu0
  %v6096 = vadd.f32 %v5887, %v6095
  %6097 = vmatmul.f32.gmra.mxu0 %v5649
  %v6098 = vpop.f32.mrf.mxu0
  %v6099 = vadd.f32 %v5890, %v6098
  %6100 = vmatmul.f32.gmra.mxu0 %v5652
  %v6101 = vpop.f32.mrf.mxu0
  %v6102 = vadd.f32 %v5893, %v6101
  %6103 = vmatmul.f32.gmra.mxu0 %v5655
  %v6104 = vpop.f32.mrf.mxu0
  %v6105 = vadd.f32 %v5896, %v6104
  %6106 = vmatmul.f32.gmra.mxu0 %v5658
  %v6107 = vpop.f32.mrf.mxu0
  %v6108 = vadd.f32 %v5899, %v6107
  %6109 = vmatmul.f32.gmra.mxu0 %v5661
  %v6110 = vpop.f32.mrf.mxu0
  %v6111 = vadd.f32 %v5902, %v6110
  %6112 = vmatmul.f32.gmra.mxu0 %v5664
  %v6113 = vpop.f32.mrf.mxu0
  %v6114 = vadd.f32 %v5905, %v6113
  %6115 = vmatmul.f32.gmra.mxu0 %v5667
  %v6116 = vpop.f32.mrf.mxu0
  %v6117 = vadd.f32 %v5908, %v6116
  %6118 = vmatmul.f32.gmra.mxu0 %v5670
  %v6119 = vpop.f32.mrf.mxu0
  %v6120 = vadd.f32 %v5911, %v6119
  %6121 = vmatmul.f32.gmra.mxu0 %v5673
  %v6122 = vpop.f32.mrf.mxu0
  %v6123 = vadd.f32 %v5914, %v6122
  %6124 = vmatmul.f32.gmra.mxu0 %v5676
  %v6125 = vpop.f32.mrf.mxu0
  %v6126 = vadd.f32 %v5917, %v6125
  %6127 = vmatmul.f32.gmra.mxu0 %v5679
  %v6128 = vpop.f32.mrf.mxu0
  %v6129 = vadd.f32 %v5920, %v6128
  %6130 = vmatmul.f32.gmra.mxu0 %v5682
  %v6131 = vpop.f32.mrf.mxu0
  %v6132 = vadd.f32 %v5923, %v6131
  %6133 = vmatmul.f32.gmra.mxu0 %v5685
  %v6134 = vpop.f32.mrf.mxu0
  %v6135 = vadd.f32 %v5926, %v6134
  %6136 = vmatmul.f32.gmra.mxu0 %v5688
  %v6137 = vpop.f32.mrf.mxu0
  %v6138 = vadd.f32 %v5929, %v6137
  %6139 = vmatmul.f32.gmra.mxu0 %v5691
  %v6140 = vpop.f32.mrf.mxu0
  %v6141 = vadd.f32 %v5932, %v6140
  %6142 = vmatmul.f32.gmra.mxu0 %v5694
  %v6143 = vpop.f32.mrf.mxu0
  %v6144 = vadd.f32 %v5935, %v6143
  %6145 = vmatmul.f32.gmra.mxu0 %v5697
  %v6146 = vpop.f32.mrf.mxu0
  %v6147 = vadd.f32 %v5938, %v6146
  %6148 = vmatmul.f32.gmra.mxu0 %v5700
  %v6149 = vpop.f32.mrf.mxu0
  %v6150 = vadd.f32 %v5941, %v6149
  %6151 = vmatmul.f32.gmra.mxu0 %v5703
  %v6152 = vpop.f32.mrf.mxu0
  %v6153 = vadd.f32 %v5944, %v6152
  %6154 = vmatmul.f32.gmra.mxu0 %v5706
  %v6155 = vpop.f32.mrf.mxu0
  %v6156 = vadd.f32 %v5947, %v6155
  %6157 = vmatmul.f32.gmra.mxu0 %v5709
  %v6158 = vpop.f32.mrf.mxu0
  %v6159 = vadd.f32 %v5950, %v6158
  %6160 = vmatmul.f32.gmra.mxu0 %v5712
  %v6161 = vpop.f32.mrf.mxu0
  %v6162 = vadd.f32 %v5953, %v6161
  %6163 = vmatmul.f32.gmra.mxu0 %v5715
  %v6164 = vpop.f32.mrf.mxu0
  %v6165 = vadd.f32 %v5956, %v6164
  %6166 = vmatmul.f32.gmra.mxu0 %v5718
  %v6167 = vpop.f32.mrf.mxu0
  %v6168 = vadd.f32 %v5959, %v6167
  %6169 = vmatmul.f32.gmra.mxu0 %v5721
  %v6170 = vpop.f32.mrf.mxu0
  %v6171 = vadd.f32 %v5962, %v6170
  %6172 = vmatmul.f32.gmra.mxu0 %v5724
  %v6173 = vpop.f32.mrf.mxu0
  %v6174 = vadd.f32 %v5965, %v6173
  %6175 = vmatmul.f32.gmra.mxu0 %v5727
  %v6176 = vpop.f32.mrf.mxu0
  %v6177 = vadd.f32 %v5968, %v6176
  %6178 = vmatmul.f32.gmra.mxu0 %v5730
  %v6179 = vpop.f32.mrf.mxu0
  %v6180 = vadd.f32 %v5971, %v6179
  %6181 = vmatmul.f32.gmra.mxu0 %v5733
  %v6182 = vpop.f32.mrf.mxu0
  %v6183 = vadd.f32 %v5974, %v6182
  %6184 = vmatmul.f32.gmra.mxu0 %v5736
  %v6185 = vpop.f32.mrf.mxu0
  %v6186 = vadd.f32 %v5977, %v6185
  %6187 = vmatmul.f32.gmra.mxu0 %v5739
  %v6188 = vpop.f32.mrf.mxu0
  %v6189 = vadd.f32 %v5980, %v6188
  %6190 = vmatmul.f32.gmra.mxu0 %v5742
  %v6191 = vpop.f32.mrf.mxu0
  %v6192 = vadd.f32 %v5983, %v6191
  %6193 = vmatmul.f32.gmra.mxu0 %v5745
  %v6194 = vpop.f32.mrf.mxu0
  %v6195 = vadd.f32 %v5986, %v6194
  %6196 = vmatmul.f32.gmra.mxu0 %v5748
  %v6197 = vpop.f32.mrf.mxu0
  %v6198 = vadd.f32 %v5989, %v6197
  %6199 = vmatmul.f32.gmra.mxu0 %v5751
  %v6200 = vpop.f32.mrf.mxu0
  %v6201 = vadd.f32 %v5992, %v6200
  %6202 = vdwg.mxu0
  %v6203 = vld [vmem:[%s20] sm:$0xff]
  %v6204 = vld [vmem:[%s20 + $0x8] sm:$0xff]
  %v6205 = vld [vmem:[%s20 + $0x10] sm:$0xff]
  %v6206 = vld [vmem:[%s20 + $0x18] sm:$0xff]
  %v6208 = vsel %vm1241, %v6012, 0
  %v6211 = vsel %vm1241, %v6015, 0
  %v6214 = vsel %vm1241, %v6018, 0
  %v6217 = vsel %vm1241, %v6021, 0
  %v6220 = vsel %vm1241, %v6024, 0
  %v6223 = vsel %vm1241, %v6027, 0
  %v6226 = vsel %vm1241, %v6030, 0
  %v6229 = vsel %vm1241, %v6033, 0
  %v6232 = vsel %vm1241, %v6036, 0
  %v6235 = vsel %vm1241, %v6039, 0
  %v6238 = vsel %vm1241, %v6042, 0
  %v6241 = vsel %vm1241, %v6045, 0
  %v6244 = vsel %vm1241, %v6048, 0
  %v6247 = vsel %vm1241, %v6051, 0
  %v6250 = vsel %vm1241, %v6054, 0
  %v6253 = vsel %vm1241, %v6057, 0
  %v6256 = vsel %vm1241, %v6060, 0
  %v6259 = vsel %vm1241, %v6063, 0
  %v6262 = vsel %vm1241, %v6066, 0
  %v6265 = vsel %vm1241, %v6069, 0
  %v6268 = vsel %vm1241, %v6072, 0
  %v6271 = vsel %vm1241, %v6075, 0
  %v6274 = vsel %vm1241, %v6078, 0
  %v6277 = vsel %vm1241, %v6081, 0
  %v6280 = vsel %vm1241, %v6084, 0
  %v6283 = vsel %vm1241, %v6087, 0
  %v6286 = vsel %vm1241, %v6090, 0
  %v6289 = vsel %vm1241, %v6093, 0
  %v6292 = vsel %vm1241, %v6096, 0
  %v6295 = vsel %vm1241, %v6099, 0
  %v6298 = vsel %vm1241, %v6102, 0
  %v6301 = vsel %vm1241, %v6105, 0
  %v6304 = vsel %vm1241, %v6108, 0
  %v6307 = vsel %vm1241, %v6111, 0
  %v6310 = vsel %vm1241, %v6114, 0
  %v6313 = vsel %vm1241, %v6117, 0
  %v6316 = vsel %vm1241, %v6120, 0
  %v6319 = vsel %vm1241, %v6123, 0
  %v6322 = vsel %vm1241, %v6126, 0
  %v6325 = vsel %vm1241, %v6129, 0
  %v6328 = vsel %vm1241, %v6132, 0
  %v6331 = vsel %vm1241, %v6135, 0
  %v6334 = vsel %vm1241, %v6138, 0
  %v6337 = vsel %vm1241, %v6141, 0
  %v6340 = vsel %vm1241, %v6144, 0
  %v6343 = vsel %vm1241, %v6147, 0
  %v6346 = vsel %vm1241, %v6150, 0
  %v6349 = vsel %vm1241, %v6153, 0
  %v6352 = vsel %vm1241, %v6156, 0
  %v6355 = vsel %vm1241, %v6159, 0
  %v6358 = vsel %vm1241, %v6162, 0
  %v6361 = vsel %vm1241, %v6165, 0
  %v6364 = vsel %vm1241, %v6168, 0
  %v6367 = vsel %vm1241, %v6171, 0
  %v6370 = vsel %vm1241, %v6174, 0
  %v6373 = vsel %vm1241, %v6177, 0
  %v6376 = vsel %vm1241, %v6180, 0
  %v6379 = vsel %vm1241, %v6183, 0
  %v6382 = vsel %vm1241, %v6186, 0
  %v6385 = vsel %vm1241, %v6189, 0
  %v6388 = vsel %vm1241, %v6192, 0
  %v6391 = vsel %vm1241, %v6195, 0
  %v6394 = vsel %vm1241, %v6198, 0
  %v6397 = vsel %vm1241, %v6201, 0
  %6399 = vmatpush.msra.mxu0 0.0
  %6400 = vmatpush.msra.mxu0 0.0
  %6401 = vmatpush.msra.mxu0 0.0
  %6402 = vmatpush.msra.mxu0 0.0
  %6403 = vmatpush.msra.mxu0 0.0
  %6404 = vmatpush.msra.mxu0 0.0
  %6405 = vmatpush.msra.mxu0 0.0
  %6406 = vmatpush.msra.mxu0 0.0
  %6407 = vmatpush.msra.mxu0 0.0
  %6408 = vmatpush.msra.mxu0 0.0
  %6409 = vmatpush.msra.mxu0 0.0
  %6410 = vmatpush.msra.mxu0 0.0
  %6411 = vmatpush.msra.mxu0 0.0
  %6412 = vmatpush.msra.mxu0 0.0
  %6413 = vmatpush.msra.mxu0 %v6205
  %6414 = vmatpush.msra.mxu0 %v6203
  %6415 = vmatmul.f32.gmra.mxu0 %v6208
  %v6416 = vpop.f32.mrf.mxu0
  %v6417 = vadd.f32 0.0, %v6416
  %6418 = vmatmul.f32.gmra.mxu0 %v6211
  %v6419 = vpop.f32.mrf.mxu0
  %v6420 = vadd.f32 0.0, %v6419
  %6421 = vmatmul.f32.gmra.mxu0 %v6214
  %v6422 = vpop.f32.mrf.mxu0
  %v6423 = vadd.f32 0.0, %v6422
  %6424 = vmatmul.f32.gmra.mxu0 %v6217
  %v6425 = vpop.f32.mrf.mxu0
  %v6426 = vadd.f32 0.0, %v6425
  %6427 = vmatmul.f32.gmra.mxu0 %v6220
  %v6428 = vpop.f32.mrf.mxu0
  %v6429 = vadd.f32 0.0, %v6428
  %6430 = vmatmul.f32.gmra.mxu0 %v6223
  %v6431 = vpop.f32.mrf.mxu0
  %v6432 = vadd.f32 0.0, %v6431
  %6433 = vmatmul.f32.gmra.mxu0 %v6226
  %v6434 = vpop.f32.mrf.mxu0
  %v6435 = vadd.f32 0.0, %v6434
  %6436 = vmatmul.f32.gmra.mxu0 %v6229
  %v6437 = vpop.f32.mrf.mxu0
  %v6438 = vadd.f32 0.0, %v6437
  %6439 = vmatmul.f32.gmra.mxu0 %v6232
  %v6440 = vpop.f32.mrf.mxu0
  %v6441 = vadd.f32 0.0, %v6440
  %6442 = vmatmul.f32.gmra.mxu0 %v6235
  %v6443 = vpop.f32.mrf.mxu0
  %v6444 = vadd.f32 0.0, %v6443
  %6445 = vmatmul.f32.gmra.mxu0 %v6238
  %v6446 = vpop.f32.mrf.mxu0
  %v6447 = vadd.f32 0.0, %v6446
  %6448 = vmatmul.f32.gmra.mxu0 %v6241
  %v6449 = vpop.f32.mrf.mxu0
  %v6450 = vadd.f32 0.0, %v6449
  %6451 = vmatmul.f32.gmra.mxu0 %v6244
  %v6452 = vpop.f32.mrf.mxu0
  %v6453 = vadd.f32 0.0, %v6452
  %6454 = vmatmul.f32.gmra.mxu0 %v6247
  %v6455 = vpop.f32.mrf.mxu0
  %v6456 = vadd.f32 0.0, %v6455
  %6457 = vmatmul.f32.gmra.mxu0 %v6250
  %v6458 = vpop.f32.mrf.mxu0
  %v6459 = vadd.f32 0.0, %v6458
  %6460 = vmatmul.f32.gmra.mxu0 %v6253
  %v6461 = vpop.f32.mrf.mxu0
  %v6462 = vadd.f32 0.0, %v6461
  %6463 = vmatmul.f32.gmra.mxu0 %v6256
  %v6464 = vpop.f32.mrf.mxu0
  %v6465 = vadd.f32 0.0, %v6464
  %6466 = vmatmul.f32.gmra.mxu0 %v6259
  %v6467 = vpop.f32.mrf.mxu0
  %v6468 = vadd.f32 0.0, %v6467
  %6469 = vmatmul.f32.gmra.mxu0 %v6262
  %v6470 = vpop.f32.mrf.mxu0
  %v6471 = vadd.f32 0.0, %v6470
  %6472 = vmatmul.f32.gmra.mxu0 %v6265
  %v6473 = vpop.f32.mrf.mxu0
  %v6474 = vadd.f32 0.0, %v6473
  %6475 = vmatmul.f32.gmra.mxu0 %v6268
  %v6476 = vpop.f32.mrf.mxu0
  %v6477 = vadd.f32 0.0, %v6476
  %6478 = vmatmul.f32.gmra.mxu0 %v6271
  %v6479 = vpop.f32.mrf.mxu0
  %v6480 = vadd.f32 0.0, %v6479
  %6481 = vmatmul.f32.gmra.mxu0 %v6274
  %v6482 = vpop.f32.mrf.mxu0
  %v6483 = vadd.f32 0.0, %v6482
  %6484 = vmatmul.f32.gmra.mxu0 %v6277
  %v6485 = vpop.f32.mrf.mxu0
  %v6486 = vadd.f32 0.0, %v6485
  %6487 = vmatmul.f32.gmra.mxu0 %v6280
  %v6488 = vpop.f32.mrf.mxu0
  %v6489 = vadd.f32 0.0, %v6488
  %6490 = vmatmul.f32.gmra.mxu0 %v6283
  %v6491 = vpop.f32.mrf.mxu0
  %v6492 = vadd.f32 0.0, %v6491
  %6493 = vmatmul.f32.gmra.mxu0 %v6286
  %v6494 = vpop.f32.mrf.mxu0
  %v6495 = vadd.f32 0.0, %v6494
  %6496 = vmatmul.f32.gmra.mxu0 %v6289
  %v6497 = vpop.f32.mrf.mxu0
  %v6498 = vadd.f32 0.0, %v6497
  %6499 = vmatmul.f32.gmra.mxu0 %v6292
  %v6500 = vpop.f32.mrf.mxu0
  %v6501 = vadd.f32 0.0, %v6500
  %6502 = vmatmul.f32.gmra.mxu0 %v6295
  %v6503 = vpop.f32.mrf.mxu0
  %v6504 = vadd.f32 0.0, %v6503
  %6505 = vmatmul.f32.gmra.mxu0 %v6298
  %v6506 = vpop.f32.mrf.mxu0
  %v6507 = vadd.f32 0.0, %v6506
  %6508 = vmatmul.f32.gmra.mxu0 %v6301
  %v6509 = vpop.f32.mrf.mxu0
  %v6510 = vadd.f32 0.0, %v6509
  %6511 = vmatmul.f32.gmra.mxu0 %v6304
  %v6512 = vpop.f32.mrf.mxu0
  %v6513 = vadd.f32 0.0, %v6512
  %6514 = vmatmul.f32.gmra.mxu0 %v6307
  %v6515 = vpop.f32.mrf.mxu0
  %v6516 = vadd.f32 0.0, %v6515
  %6517 = vmatmul.f32.gmra.mxu0 %v6310
  %v6518 = vpop.f32.mrf.mxu0
  %v6519 = vadd.f32 0.0, %v6518
  %6520 = vmatmul.f32.gmra.mxu0 %v6313
  %v6521 = vpop.f32.mrf.mxu0
  %v6522 = vadd.f32 0.0, %v6521
  %6523 = vmatmul.f32.gmra.mxu0 %v6316
  %v6524 = vpop.f32.mrf.mxu0
  %v6525 = vadd.f32 0.0, %v6524
  %6526 = vmatmul.f32.gmra.mxu0 %v6319
  %v6527 = vpop.f32.mrf.mxu0
  %v6528 = vadd.f32 0.0, %v6527
  %6529 = vmatmul.f32.gmra.mxu0 %v6322
  %v6530 = vpop.f32.mrf.mxu0
  %v6531 = vadd.f32 0.0, %v6530
  %6532 = vmatmul.f32.gmra.mxu0 %v6325
  %v6533 = vpop.f32.mrf.mxu0
  %v6534 = vadd.f32 0.0, %v6533
  %6535 = vmatmul.f32.gmra.mxu0 %v6328
  %v6536 = vpop.f32.mrf.mxu0
  %v6537 = vadd.f32 0.0, %v6536
  %6538 = vmatmul.f32.gmra.mxu0 %v6331
  %v6539 = vpop.f32.mrf.mxu0
  %v6540 = vadd.f32 0.0, %v6539
  %6541 = vmatmul.f32.gmra.mxu0 %v6334
  %v6542 = vpop.f32.mrf.mxu0
  %v6543 = vadd.f32 0.0, %v6542
  %6544 = vmatmul.f32.gmra.mxu0 %v6337
  %v6545 = vpop.f32.mrf.mxu0
  %v6546 = vadd.f32 0.0, %v6545
  %6547 = vmatmul.f32.gmra.mxu0 %v6340
  %v6548 = vpop.f32.mrf.mxu0
  %v6549 = vadd.f32 0.0, %v6548
  %6550 = vmatmul.f32.gmra.mxu0 %v6343
  %v6551 = vpop.f32.mrf.mxu0
  %v6552 = vadd.f32 0.0, %v6551
  %6553 = vmatmul.f32.gmra.mxu0 %v6346
  %v6554 = vpop.f32.mrf.mxu0
  %v6555 = vadd.f32 0.0, %v6554
  %6556 = vmatmul.f32.gmra.mxu0 %v6349
  %v6557 = vpop.f32.mrf.mxu0
  %v6558 = vadd.f32 0.0, %v6557
  %6559 = vmatmul.f32.gmra.mxu0 %v6352
  %v6560 = vpop.f32.mrf.mxu0
  %v6561 = vadd.f32 0.0, %v6560
  %6562 = vmatmul.f32.gmra.mxu0 %v6355
  %v6563 = vpop.f32.mrf.mxu0
  %v6564 = vadd.f32 0.0, %v6563
  %6565 = vmatmul.f32.gmra.mxu0 %v6358
  %v6566 = vpop.f32.mrf.mxu0
  %v6567 = vadd.f32 0.0, %v6566
  %6568 = vmatmul.f32.gmra.mxu0 %v6361
  %v6569 = vpop.f32.mrf.mxu0
  %v6570 = vadd.f32 0.0, %v6569
  %6571 = vmatmul.f32.gmra.mxu0 %v6364
  %v6572 = vpop.f32.mrf.mxu0
  %v6573 = vadd.f32 0.0, %v6572
  %6574 = vmatmul.f32.gmra.mxu0 %v6367
  %v6575 = vpop.f32.mrf.mxu0
  %v6576 = vadd.f32 0.0, %v6575
  %6577 = vmatmul.f32.gmra.mxu0 %v6370
  %v6578 = vpop.f32.mrf.mxu0
  %v6579 = vadd.f32 0.0, %v6578
  %6580 = vmatmul.f32.gmra.mxu0 %v6373
  %v6581 = vpop.f32.mrf.mxu0
  %v6582 = vadd.f32 0.0, %v6581
  %6583 = vmatmul.f32.gmra.mxu0 %v6376
  %v6584 = vpop.f32.mrf.mxu0
  %v6585 = vadd.f32 0.0, %v6584
  %6586 = vmatmul.f32.gmra.mxu0 %v6379
  %v6587 = vpop.f32.mrf.mxu0
  %v6588 = vadd.f32 0.0, %v6587
  %6589 = vmatmul.f32.gmra.mxu0 %v6382
  %v6590 = vpop.f32.mrf.mxu0
  %v6591 = vadd.f32 0.0, %v6590
  %6592 = vmatmul.f32.gmra.mxu0 %v6385
  %v6593 = vpop.f32.mrf.mxu0
  %v6594 = vadd.f32 0.0, %v6593
  %6595 = vmatmul.f32.gmra.mxu0 %v6388
  %v6596 = vpop.f32.mrf.mxu0
  %v6597 = vadd.f32 0.0, %v6596
  %6598 = vmatmul.f32.gmra.mxu0 %v6391
  %v6599 = vpop.f32.mrf.mxu0
  %v6600 = vadd.f32 0.0, %v6599
  %6601 = vmatmul.f32.gmra.mxu0 %v6394
  %v6602 = vpop.f32.mrf.mxu0
  %v6603 = vadd.f32 0.0, %v6602
  %6604 = vmatmul.f32.gmra.mxu0 %v6397
  %v6605 = vpop.f32.mrf.mxu0
  %v6606 = vadd.f32 0.0, %v6605
  %6607 = vdwg.mxu0
  %6608 = vmatpush.msra.mxu0 0.0
  %6609 = vmatpush.msra.mxu0 0.0
  %6610 = vmatpush.msra.mxu0 0.0
  %6611 = vmatpush.msra.mxu0 0.0
  %6612 = vmatpush.msra.mxu0 0.0
  %6613 = vmatpush.msra.mxu0 0.0
  %6614 = vmatpush.msra.mxu0 0.0
  %6615 = vmatpush.msra.mxu0 0.0
  %6616 = vmatpush.msra.mxu0 0.0
  %6617 = vmatpush.msra.mxu0 0.0
  %6618 = vmatpush.msra.mxu0 0.0
  %6619 = vmatpush.msra.mxu0 0.0
  %6620 = vmatpush.msra.mxu0 0.0
  %6621 = vmatpush.msra.mxu0 0.0
  %6622 = vmatpush.msra.mxu0 %v6206
  %6623 = vmatpush.msra.mxu0 %v6204
  %6624 = vmatmul.f32.gmra.mxu0 %v6208
  %v6625 = vpop.f32.mrf.mxu0
  %v6626 = vadd.f32 0.0, %v6625
  %6627 = vmatmul.f32.gmra.mxu0 %v6211
  %v6628 = vpop.f32.mrf.mxu0
  %v6629 = vadd.f32 0.0, %v6628
  %6630 = vmatmul.f32.gmra.mxu0 %v6214
  %v6631 = vpop.f32.mrf.mxu0
  %v6632 = vadd.f32 0.0, %v6631
  %6633 = vmatmul.f32.gmra.mxu0 %v6217
  %v6634 = vpop.f32.mrf.mxu0
  %v6635 = vadd.f32 0.0, %v6634
  %6636 = vmatmul.f32.gmra.mxu0 %v6220
  %v6637 = vpop.f32.mrf.mxu0
  %v6638 = vadd.f32 0.0, %v6637
  %6639 = vmatmul.f32.gmra.mxu0 %v6223
  %v6640 = vpop.f32.mrf.mxu0
  %v6641 = vadd.f32 0.0, %v6640
  %6642 = vmatmul.f32.gmra.mxu0 %v6226
  %v6643 = vpop.f32.mrf.mxu0
  %v6644 = vadd.f32 0.0, %v6643
  %6645 = vmatmul.f32.gmra.mxu0 %v6229
  %v6646 = vpop.f32.mrf.mxu0
  %v6647 = vadd.f32 0.0, %v6646
  %6648 = vmatmul.f32.gmra.mxu0 %v6232
  %v6649 = vpop.f32.mrf.mxu0
  %v6650 = vadd.f32 0.0, %v6649
  %6651 = vmatmul.f32.gmra.mxu0 %v6235
  %v6652 = vpop.f32.mrf.mxu0
  %v6653 = vadd.f32 0.0, %v6652
  %6654 = vmatmul.f32.gmra.mxu0 %v6238
  %v6655 = vpop.f32.mrf.mxu0
  %v6656 = vadd.f32 0.0, %v6655
  %6657 = vmatmul.f32.gmra.mxu0 %v6241
  %v6658 = vpop.f32.mrf.mxu0
  %v6659 = vadd.f32 0.0, %v6658
  %6660 = vmatmul.f32.gmra.mxu0 %v6244
  %v6661 = vpop.f32.mrf.mxu0
  %v6662 = vadd.f32 0.0, %v6661
  %6663 = vmatmul.f32.gmra.mxu0 %v6247
  %v6664 = vpop.f32.mrf.mxu0
  %v6665 = vadd.f32 0.0, %v6664
  %6666 = vmatmul.f32.gmra.mxu0 %v6250
  %v6667 = vpop.f32.mrf.mxu0
  %v6668 = vadd.f32 0.0, %v6667
  %6669 = vmatmul.f32.gmra.mxu0 %v6253
  %v6670 = vpop.f32.mrf.mxu0
  %v6671 = vadd.f32 0.0, %v6670
  %6672 = vmatmul.f32.gmra.mxu0 %v6256
  %v6673 = vpop.f32.mrf.mxu0
  %v6674 = vadd.f32 0.0, %v6673
  %6675 = vmatmul.f32.gmra.mxu0 %v6259
  %v6676 = vpop.f32.mrf.mxu0
  %v6677 = vadd.f32 0.0, %v6676
  %6678 = vmatmul.f32.gmra.mxu0 %v6262
  %v6679 = vpop.f32.mrf.mxu0
  %v6680 = vadd.f32 0.0, %v6679
  %6681 = vmatmul.f32.gmra.mxu0 %v6265
  %v6682 = vpop.f32.mrf.mxu0
  %v6683 = vadd.f32 0.0, %v6682
  %6684 = vmatmul.f32.gmra.mxu0 %v6268
  %v6685 = vpop.f32.mrf.mxu0
  %v6686 = vadd.f32 0.0, %v6685
  %6687 = vmatmul.f32.gmra.mxu0 %v6271
  %v6688 = vpop.f32.mrf.mxu0
  %v6689 = vadd.f32 0.0, %v6688
  %6690 = vmatmul.f32.gmra.mxu0 %v6274
  %v6691 = vpop.f32.mrf.mxu0
  %v6692 = vadd.f32 0.0, %v6691
  %6693 = vmatmul.f32.gmra.mxu0 %v6277
  %v6694 = vpop.f32.mrf.mxu0
  %v6695 = vadd.f32 0.0, %v6694
  %6696 = vmatmul.f32.gmra.mxu0 %v6280
  %v6697 = vpop.f32.mrf.mxu0
  %v6698 = vadd.f32 0.0, %v6697
  %6699 = vmatmul.f32.gmra.mxu0 %v6283
  %v6700 = vpop.f32.mrf.mxu0
  %v6701 = vadd.f32 0.0, %v6700
  %6702 = vmatmul.f32.gmra.mxu0 %v6286
  %v6703 = vpop.f32.mrf.mxu0
  %v6704 = vadd.f32 0.0, %v6703
  %6705 = vmatmul.f32.gmra.mxu0 %v6289
  %v6706 = vpop.f32.mrf.mxu0
  %v6707 = vadd.f32 0.0, %v6706
  %6708 = vmatmul.f32.gmra.mxu0 %v6292
  %v6709 = vpop.f32.mrf.mxu0
  %v6710 = vadd.f32 0.0, %v6709
  %6711 = vmatmul.f32.gmra.mxu0 %v6295
  %v6712 = vpop.f32.mrf.mxu0
  %v6713 = vadd.f32 0.0, %v6712
  %6714 = vmatmul.f32.gmra.mxu0 %v6298
  %v6715 = vpop.f32.mrf.mxu0
  %v6716 = vadd.f32 0.0, %v6715
  %6717 = vmatmul.f32.gmra.mxu0 %v6301
  %v6718 = vpop.f32.mrf.mxu0
  %v6719 = vadd.f32 0.0, %v6718
  %6720 = vmatmul.f32.gmra.mxu0 %v6304
  %v6721 = vpop.f32.mrf.mxu0
  %v6722 = vadd.f32 0.0, %v6721
  %6723 = vmatmul.f32.gmra.mxu0 %v6307
  %v6724 = vpop.f32.mrf.mxu0
  %v6725 = vadd.f32 0.0, %v6724
  %6726 = vmatmul.f32.gmra.mxu0 %v6310
  %v6727 = vpop.f32.mrf.mxu0
  %v6728 = vadd.f32 0.0, %v6727
  %6729 = vmatmul.f32.gmra.mxu0 %v6313
  %v6730 = vpop.f32.mrf.mxu0
  %v6731 = vadd.f32 0.0, %v6730
  %6732 = vmatmul.f32.gmra.mxu0 %v6316
  %v6733 = vpop.f32.mrf.mxu0
  %v6734 = vadd.f32 0.0, %v6733
  %6735 = vmatmul.f32.gmra.mxu0 %v6319
  %v6736 = vpop.f32.mrf.mxu0
  %v6737 = vadd.f32 0.0, %v6736
  %6738 = vmatmul.f32.gmra.mxu0 %v6322
  %v6739 = vpop.f32.mrf.mxu0
  %v6740 = vadd.f32 0.0, %v6739
  %6741 = vmatmul.f32.gmra.mxu0 %v6325
  %v6742 = vpop.f32.mrf.mxu0
  %v6743 = vadd.f32 0.0, %v6742
  %6744 = vmatmul.f32.gmra.mxu0 %v6328
  %v6745 = vpop.f32.mrf.mxu0
  %v6746 = vadd.f32 0.0, %v6745
  %6747 = vmatmul.f32.gmra.mxu0 %v6331
  %v6748 = vpop.f32.mrf.mxu0
  %v6749 = vadd.f32 0.0, %v6748
  %6750 = vmatmul.f32.gmra.mxu0 %v6334
  %v6751 = vpop.f32.mrf.mxu0
  %v6752 = vadd.f32 0.0, %v6751
  %6753 = vmatmul.f32.gmra.mxu0 %v6337
  %v6754 = vpop.f32.mrf.mxu0
  %v6755 = vadd.f32 0.0, %v6754
  %6756 = vmatmul.f32.gmra.mxu0 %v6340
  %v6757 = vpop.f32.mrf.mxu0
  %v6758 = vadd.f32 0.0, %v6757
  %6759 = vmatmul.f32.gmra.mxu0 %v6343
  %v6760 = vpop.f32.mrf.mxu0
  %v6761 = vadd.f32 0.0, %v6760
  %6762 = vmatmul.f32.gmra.mxu0 %v6346
  %v6763 = vpop.f32.mrf.mxu0
  %v6764 = vadd.f32 0.0, %v6763
  %6765 = vmatmul.f32.gmra.mxu0 %v6349
  %v6766 = vpop.f32.mrf.mxu0
  %v6767 = vadd.f32 0.0, %v6766
  %6768 = vmatmul.f32.gmra.mxu0 %v6352
  %v6769 = vpop.f32.mrf.mxu0
  %v6770 = vadd.f32 0.0, %v6769
  %6771 = vmatmul.f32.gmra.mxu0 %v6355
  %v6772 = vpop.f32.mrf.mxu0
  %v6773 = vadd.f32 0.0, %v6772
  %6774 = vmatmul.f32.gmra.mxu0 %v6358
  %v6775 = vpop.f32.mrf.mxu0
  %v6776 = vadd.f32 0.0, %v6775
  %6777 = vmatmul.f32.gmra.mxu0 %v6361
  %v6778 = vpop.f32.mrf.mxu0
  %v6779 = vadd.f32 0.0, %v6778
  %6780 = vmatmul.f32.gmra.mxu0 %v6364
  %v6781 = vpop.f32.mrf.mxu0
  %v6782 = vadd.f32 0.0, %v6781
  %6783 = vmatmul.f32.gmra.mxu0 %v6367
  %v6784 = vpop.f32.mrf.mxu0
  %v6785 = vadd.f32 0.0, %v6784
  %6786 = vmatmul.f32.gmra.mxu0 %v6370
  %v6787 = vpop.f32.mrf.mxu0
  %v6788 = vadd.f32 0.0, %v6787
  %6789 = vmatmul.f32.gmra.mxu0 %v6373
  %v6790 = vpop.f32.mrf.mxu0
  %v6791 = vadd.f32 0.0, %v6790
  %6792 = vmatmul.f32.gmra.mxu0 %v6376
  %v6793 = vpop.f32.mrf.mxu0
  %v6794 = vadd.f32 0.0, %v6793
  %6795 = vmatmul.f32.gmra.mxu0 %v6379
  %v6796 = vpop.f32.mrf.mxu0
  %v6797 = vadd.f32 0.0, %v6796
  %6798 = vmatmul.f32.gmra.mxu0 %v6382
  %v6799 = vpop.f32.mrf.mxu0
  %v6800 = vadd.f32 0.0, %v6799
  %6801 = vmatmul.f32.gmra.mxu0 %v6385
  %v6802 = vpop.f32.mrf.mxu0
  %v6803 = vadd.f32 0.0, %v6802
  %6804 = vmatmul.f32.gmra.mxu0 %v6388
  %v6805 = vpop.f32.mrf.mxu0
  %v6806 = vadd.f32 0.0, %v6805
  %6807 = vmatmul.f32.gmra.mxu0 %v6391
  %v6808 = vpop.f32.mrf.mxu0
  %v6809 = vadd.f32 0.0, %v6808
  %6810 = vmatmul.f32.gmra.mxu0 %v6394
  %v6811 = vpop.f32.mrf.mxu0
  %v6812 = vadd.f32 0.0, %v6811
  %6813 = vmatmul.f32.gmra.mxu0 %v6397
  %v6814 = vpop.f32.mrf.mxu0
  %v6815 = vadd.f32 0.0, %v6814
  %6816 = vdwg.mxu0
  %v6817 = vsub.f32 %v5353, %v6417
  %v6818 = vsub.f32 %v5562, %v6626
  %v6819 = vsub.f32 %v5356, %v6420
  %v6820 = vsub.f32 %v5565, %v6629
  %v6821 = vsub.f32 %v5359, %v6423
  %v6822 = vsub.f32 %v5568, %v6632
  %v6823 = vsub.f32 %v5362, %v6426
  %v6824 = vsub.f32 %v5571, %v6635
  %v6825 = vsub.f32 %v5365, %v6429
  %v6826 = vsub.f32 %v5574, %v6638
  %v6827 = vsub.f32 %v5368, %v6432
  %v6828 = vsub.f32 %v5577, %v6641
  %v6829 = vsub.f32 %v5371, %v6435
  %v6830 = vsub.f32 %v5580, %v6644
  %v6831 = vsub.f32 %v5374, %v6438
  %v6832 = vsub.f32 %v5583, %v6647
  %v6833 = vsub.f32 %v5377, %v6441
  %v6834 = vsub.f32 %v5586, %v6650
  %v6835 = vsub.f32 %v5380, %v6444
  %v6836 = vsub.f32 %v5589, %v6653
  %v6837 = vsub.f32 %v5383, %v6447
  %v6838 = vsub.f32 %v5592, %v6656
  %v6839 = vsub.f32 %v5386, %v6450
  %v6840 = vsub.f32 %v5595, %v6659
  %v6841 = vsub.f32 %v5389, %v6453
  %v6842 = vsub.f32 %v5598, %v6662
  %v6843 = vsub.f32 %v5392, %v6456
  %v6844 = vsub.f32 %v5601, %v6665
  %v6845 = vsub.f32 %v5395, %v6459
  %v6846 = vsub.f32 %v5604, %v6668
  %v6847 = vsub.f32 %v5398, %v6462
  %v6848 = vsub.f32 %v5607, %v6671
  %v6849 = vsub.f32 %v5401, %v6465
  %v6850 = vsub.f32 %v5610, %v6674
  %v6851 = vsub.f32 %v5404, %v6468
  %v6852 = vsub.f32 %v5613, %v6677
  %v6853 = vsub.f32 %v5407, %v6471
  %v6854 = vsub.f32 %v5616, %v6680
  %v6855 = vsub.f32 %v5410, %v6474
  %v6856 = vsub.f32 %v5619, %v6683
  %v6857 = vsub.f32 %v5413, %v6477
  %v6858 = vsub.f32 %v5622, %v6686
  %v6859 = vsub.f32 %v5416, %v6480
  %v6860 = vsub.f32 %v5625, %v6689
  %v6861 = vsub.f32 %v5419, %v6483
  %v6862 = vsub.f32 %v5628, %v6692
  %v6863 = vsub.f32 %v5422, %v6486
  %v6864 = vsub.f32 %v5631, %v6695
  %v6865 = vsub.f32 %v5425, %v6489
  %v6866 = vsub.f32 %v5634, %v6698
  %v6867 = vsub.f32 %v5428, %v6492
  %v6868 = vsub.f32 %v5637, %v6701
  %v6869 = vsub.f32 %v5431, %v6495
  %v6870 = vsub.f32 %v5640, %v6704
  %v6871 = vsub.f32 %v5434, %v6498
  %v6872 = vsub.f32 %v5643, %v6707
  %v6873 = vsub.f32 %v5437, %v6501
  %v6874 = vsub.f32 %v5646, %v6710
  %v6875 = vsub.f32 %v5440, %v6504
  %v6876 = vsub.f32 %v5649, %v6713
  %v6877 = vsub.f32 %v5443, %v6507
  %v6878 = vsub.f32 %v5652, %v6716
  %v6879 = vsub.f32 %v5446, %v6510
  %v6880 = vsub.f32 %v5655, %v6719
  %v6881 = vsub.f32 %v5449, %v6513
  %v6882 = vsub.f32 %v5658, %v6722
  %v6883 = vsub.f32 %v5452, %v6516
  %v6884 = vsub.f32 %v5661, %v6725
  %v6885 = vsub.f32 %v5455, %v6519
  %v6886 = vsub.f32 %v5664, %v6728
  %v6887 = vsub.f32 %v5458, %v6522
  %v6888 = vsub.f32 %v5667, %v6731
  %v6889 = vsub.f32 %v5461, %v6525
  %v6890 = vsub.f32 %v5670, %v6734
  %v6891 = vsub.f32 %v5464, %v6528
  %v6892 = vsub.f32 %v5673, %v6737
  %v6893 = vsub.f32 %v5467, %v6531
  %v6894 = vsub.f32 %v5676, %v6740
  %v6895 = vsub.f32 %v5470, %v6534
  %v6896 = vsub.f32 %v5679, %v6743
  %v6897 = vsub.f32 %v5473, %v6537
  %v6898 = vsub.f32 %v5682, %v6746
  %v6899 = vsub.f32 %v5476, %v6540
  %v6900 = vsub.f32 %v5685, %v6749
  %v6901 = vsub.f32 %v5479, %v6543
  %v6902 = vsub.f32 %v5688, %v6752
  %v6903 = vsub.f32 %v5482, %v6546
  %v6904 = vsub.f32 %v5691, %v6755
  %v6905 = vsub.f32 %v5485, %v6549
  %v6906 = vsub.f32 %v5694, %v6758
  %v6907 = vsub.f32 %v5488, %v6552
  %v6908 = vsub.f32 %v5697, %v6761
  %v6909 = vsub.f32 %v5491, %v6555
  %v6910 = vsub.f32 %v5700, %v6764
  %v6911 = vsub.f32 %v5494, %v6558
  %v6912 = vsub.f32 %v5703, %v6767
  %v6913 = vsub.f32 %v5497, %v6561
  %v6914 = vsub.f32 %v5706, %v6770
  %v6915 = vsub.f32 %v5500, %v6564
  %v6916 = vsub.f32 %v5709, %v6773
  %v6917 = vsub.f32 %v5503, %v6567
  %v6918 = vsub.f32 %v5712, %v6776
  %v6919 = vsub.f32 %v5506, %v6570
  %v6920 = vsub.f32 %v5715, %v6779
  %v6921 = vsub.f32 %v5509, %v6573
  %v6922 = vsub.f32 %v5718, %v6782
  %v6923 = vsub.f32 %v5512, %v6576
  %v6924 = vsub.f32 %v5721, %v6785
  %v6925 = vsub.f32 %v5515, %v6579
  %v6926 = vsub.f32 %v5724, %v6788
  %v6927 = vsub.f32 %v5518, %v6582
  %v6928 = vsub.f32 %v5727, %v6791
  %v6929 = vsub.f32 %v5521, %v6585
  %v6930 = vsub.f32 %v5730, %v6794
  %v6931 = vsub.f32 %v5524, %v6588
  %v6932 = vsub.f32 %v5733, %v6797
  %v6933 = vsub.f32 %v5527, %v6591
  %v6934 = vsub.f32 %v5736, %v6800
  %v6935 = vsub.f32 %v5530, %v6594
  %v6936 = vsub.f32 %v5739, %v6803
  %v6937 = vsub.f32 %v5533, %v6597
  %v6938 = vsub.f32 %v5742, %v6806
  %v6939 = vsub.f32 %v5536, %v6600
  %v6940 = vsub.f32 %v5745, %v6809
  %v6941 = vsub.f32 %v5539, %v6603
  %v6942 = vsub.f32 %v5748, %v6812
  %v6943 = vsub.f32 %v5542, %v6606
  %v6944 = vsub.f32 %v5751, %v6815
  %v6945 = vmul.f32 %v6817, %v6817
  %v6946 = vmul.f32 %v6818, %v6818
  %v6947 = vmul.f32 %v6819, %v6819
  %v6948 = vmul.f32 %v6820, %v6820
  %v6949 = vmul.f32 %v6821, %v6821
  %v6950 = vmul.f32 %v6822, %v6822
  %v6951 = vmul.f32 %v6823, %v6823
  %v6952 = vmul.f32 %v6824, %v6824
  %v6953 = vmul.f32 %v6825, %v6825
  %v6954 = vmul.f32 %v6826, %v6826
  %v6955 = vmul.f32 %v6827, %v6827
  %v6956 = vmul.f32 %v6828, %v6828
  %v6957 = vmul.f32 %v6829, %v6829
  %v6958 = vmul.f32 %v6830, %v6830
  %v6959 = vmul.f32 %v6831, %v6831
  %v6960 = vmul.f32 %v6832, %v6832
  %v6961 = vmul.f32 %v6833, %v6833
  %v6962 = vmul.f32 %v6834, %v6834
  %v6963 = vmul.f32 %v6835, %v6835
  %v6964 = vmul.f32 %v6836, %v6836
  %v6965 = vmul.f32 %v6837, %v6837
  %v6966 = vmul.f32 %v6838, %v6838
  %v6967 = vmul.f32 %v6839, %v6839
  %v6968 = vmul.f32 %v6840, %v6840
  %v6969 = vmul.f32 %v6841, %v6841
  %v6970 = vmul.f32 %v6842, %v6842
  %v6971 = vmul.f32 %v6843, %v6843
  %v6972 = vmul.f32 %v6844, %v6844
  %v6973 = vmul.f32 %v6845, %v6845
  %v6974 = vmul.f32 %v6846, %v6846
  %v6975 = vmul.f32 %v6847, %v6847
  %v6976 = vmul.f32 %v6848, %v6848
  %v6977 = vmul.f32 %v6849, %v6849
  %v6978 = vmul.f32 %v6850, %v6850
  %v6979 = vmul.f32 %v6851, %v6851
  %v6980 = vmul.f32 %v6852, %v6852
  %v6981 = vmul.f32 %v6853, %v6853
  %v6982 = vmul.f32 %v6854, %v6854
  %v6983 = vmul.f32 %v6855, %v6855
  %v6984 = vmul.f32 %v6856, %v6856
  %v6985 = vmul.f32 %v6857, %v6857
  %v6986 = vmul.f32 %v6858, %v6858
  %v6987 = vmul.f32 %v6859, %v6859
  %v6988 = vmul.f32 %v6860, %v6860
  %v6989 = vmul.f32 %v6861, %v6861
  %v6990 = vmul.f32 %v6862, %v6862
  %v6991 = vmul.f32 %v6863, %v6863
  %v6992 = vmul.f32 %v6864, %v6864
  %v6993 = vmul.f32 %v6865, %v6865
  %v6994 = vmul.f32 %v6866, %v6866
  %v6995 = vmul.f32 %v6867, %v6867
  %v6996 = vmul.f32 %v6868, %v6868
  %v6997 = vmul.f32 %v6869, %v6869
  %v6998 = vmul.f32 %v6870, %v6870
  %v6999 = vmul.f32 %v6871, %v6871
  %v7000 = vmul.f32 %v6872, %v6872
  %v7001 = vmul.f32 %v6873, %v6873
  %v7002 = vmul.f32 %v6874, %v6874
  %v7003 = vmul.f32 %v6875, %v6875
  %v7004 = vmul.f32 %v6876, %v6876
  %v7005 = vmul.f32 %v6877, %v6877
  %v7006 = vmul.f32 %v6878, %v6878
  %v7007 = vmul.f32 %v6879, %v6879
  %v7008 = vmul.f32 %v6880, %v6880
  %v7009 = vmul.f32 %v6881, %v6881
  %v7010 = vmul.f32 %v6882, %v6882
  %v7011 = vmul.f32 %v6883, %v6883
  %v7012 = vmul.f32 %v6884, %v6884
  %v7013 = vmul.f32 %v6885, %v6885
  %v7014 = vmul.f32 %v6886, %v6886
  %v7015 = vmul.f32 %v6887, %v6887
  %v7016 = vmul.f32 %v6888, %v6888
  %v7017 = vmul.f32 %v6889, %v6889
  %v7018 = vmul.f32 %v6890, %v6890
  %v7019 = vmul.f32 %v6891, %v6891
  %v7020 = vmul.f32 %v6892, %v6892
  %v7021 = vmul.f32 %v6893, %v6893
  %v7022 = vmul.f32 %v6894, %v6894
  %v7023 = vmul.f32 %v6895, %v6895
  %v7024 = vmul.f32 %v6896, %v6896
  %v7025 = vmul.f32 %v6897, %v6897
  %v7026 = vmul.f32 %v6898, %v6898
  %v7027 = vmul.f32 %v6899, %v6899
  %v7028 = vmul.f32 %v6900, %v6900
  %v7029 = vmul.f32 %v6901, %v6901
  %v7030 = vmul.f32 %v6902, %v6902
  %v7031 = vmul.f32 %v6903, %v6903
  %v7032 = vmul.f32 %v6904, %v6904
  %v7033 = vmul.f32 %v6905, %v6905
  %v7034 = vmul.f32 %v6906, %v6906
  %v7035 = vmul.f32 %v6907, %v6907
  %v7036 = vmul.f32 %v6908, %v6908
  %v7037 = vmul.f32 %v6909, %v6909
  %v7038 = vmul.f32 %v6910, %v6910
  %v7039 = vmul.f32 %v6911, %v6911
  %v7040 = vmul.f32 %v6912, %v6912
  %v7041 = vmul.f32 %v6913, %v6913
  %v7042 = vmul.f32 %v6914, %v6914
  %v7043 = vmul.f32 %v6915, %v6915
  %v7044 = vmul.f32 %v6916, %v6916
  %v7045 = vmul.f32 %v6917, %v6917
  %v7046 = vmul.f32 %v6918, %v6918
  %v7047 = vmul.f32 %v6919, %v6919
  %v7048 = vmul.f32 %v6920, %v6920
  %v7049 = vmul.f32 %v6921, %v6921
  %v7050 = vmul.f32 %v6922, %v6922
  %v7051 = vmul.f32 %v6923, %v6923
  %v7052 = vmul.f32 %v6924, %v6924
  %v7053 = vmul.f32 %v6925, %v6925
  %v7054 = vmul.f32 %v6926, %v6926
  %v7055 = vmul.f32 %v6927, %v6927
  %v7056 = vmul.f32 %v6928, %v6928
  %v7057 = vmul.f32 %v6929, %v6929
  %v7058 = vmul.f32 %v6930, %v6930
  %v7059 = vmul.f32 %v6931, %v6931
  %v7060 = vmul.f32 %v6932, %v6932
  %v7061 = vmul.f32 %v6933, %v6933
  %v7062 = vmul.f32 %v6934, %v6934
  %v7063 = vmul.f32 %v6935, %v6935
  %v7064 = vmul.f32 %v6936, %v6936
  %v7065 = vmul.f32 %v6937, %v6937
  %v7066 = vmul.f32 %v6938, %v6938
  %v7067 = vmul.f32 %v6939, %v6939
  %v7068 = vmul.f32 %v6940, %v6940
  %v7069 = vmul.f32 %v6941, %v6941
  %v7070 = vmul.f32 %v6942, %v6942
  %v7071 = vmul.f32 %v6943, %v6943
  %v7072 = vmul.f32 %v6944, %v6944
  %7073 = vmatpush.msra.mxu0 %v5768
  %7074 = vmatpush.msra.mxu0 %v5767
  %7075 = vmatpush.msra.mxu0 %v5766
  %7076 = vmatpush.msra.mxu0 %v5765
  %7077 = vmatpush.msra.mxu0 %v5764
  %7078 = vmatpush.msra.mxu0 %v5763
  %7079 = vmatpush.msra.mxu0 %v5762
  %7080 = vmatpush.msra.mxu0 %v5761
  %7081 = vmatpush.msra.mxu0 %v5760
  %7082 = vmatpush.msra.mxu0 %v5759
  %7083 = vmatpush.msra.mxu0 %v5758
  %7084 = vmatpush.msra.mxu0 %v5757
  %7085 = vmatpush.msra.mxu0 %v5756
  %7086 = vmatpush.msra.mxu0 %v5755
  %7087 = vmatpush.msra.mxu0 %v5754
  %7088 = vmatpush.msra.mxu0 %v5753
  %7089 = vmatmul.f32.gmra.mxu0 %v6945
  %v7090 = vpop.f32.mrf.mxu0
  %v7091 = vadd.f32 0.0, %v7090
  %7092 = vmatmul.f32.gmra.mxu0 %v6947
  %v7093 = vpop.f32.mrf.mxu0
  %v7094 = vadd.f32 0.0, %v7093
  %7095 = vmatmul.f32.gmra.mxu0 %v6949
  %v7096 = vpop.f32.mrf.mxu0
  %v7097 = vadd.f32 0.0, %v7096
  %7098 = vmatmul.f32.gmra.mxu0 %v6951
  %v7099 = vpop.f32.mrf.mxu0
  %v7100 = vadd.f32 0.0, %v7099
  %7101 = vmatmul.f32.gmra.mxu0 %v6953
  %v7102 = vpop.f32.mrf.mxu0
  %v7103 = vadd.f32 0.0, %v7102
  %7104 = vmatmul.f32.gmra.mxu0 %v6955
  %v7105 = vpop.f32.mrf.mxu0
  %v7106 = vadd.f32 0.0, %v7105
  %7107 = vmatmul.f32.gmra.mxu0 %v6957
  %v7108 = vpop.f32.mrf.mxu0
  %v7109 = vadd.f32 0.0, %v7108
  %7110 = vmatmul.f32.gmra.mxu0 %v6959
  %v7111 = vpop.f32.mrf.mxu0
  %v7112 = vadd.f32 0.0, %v7111
  %7113 = vmatmul.f32.gmra.mxu0 %v6961
  %v7114 = vpop.f32.mrf.mxu0
  %v7115 = vadd.f32 0.0, %v7114
  %7116 = vmatmul.f32.gmra.mxu0 %v6963
  %v7117 = vpop.f32.mrf.mxu0
  %v7118 = vadd.f32 0.0, %v7117
  %7119 = vmatmul.f32.gmra.mxu0 %v6965
  %v7120 = vpop.f32.mrf.mxu0
  %v7121 = vadd.f32 0.0, %v7120
  %7122 = vmatmul.f32.gmra.mxu0 %v6967
  %v7123 = vpop.f32.mrf.mxu0
  %v7124 = vadd.f32 0.0, %v7123
  %7125 = vmatmul.f32.gmra.mxu0 %v6969
  %v7126 = vpop.f32.mrf.mxu0
  %v7127 = vadd.f32 0.0, %v7126
  %7128 = vmatmul.f32.gmra.mxu0 %v6971
  %v7129 = vpop.f32.mrf.mxu0
  %v7130 = vadd.f32 0.0, %v7129
  %7131 = vmatmul.f32.gmra.mxu0 %v6973
  %v7132 = vpop.f32.mrf.mxu0
  %v7133 = vadd.f32 0.0, %v7132
  %7134 = vmatmul.f32.gmra.mxu0 %v6975
  %v7135 = vpop.f32.mrf.mxu0
  %v7136 = vadd.f32 0.0, %v7135
  %7137 = vmatmul.f32.gmra.mxu0 %v6977
  %v7138 = vpop.f32.mrf.mxu0
  %v7139 = vadd.f32 0.0, %v7138
  %7140 = vmatmul.f32.gmra.mxu0 %v6979
  %v7141 = vpop.f32.mrf.mxu0
  %v7142 = vadd.f32 0.0, %v7141
  %7143 = vmatmul.f32.gmra.mxu0 %v6981
  %v7144 = vpop.f32.mrf.mxu0
  %v7145 = vadd.f32 0.0, %v7144
  %7146 = vmatmul.f32.gmra.mxu0 %v6983
  %v7147 = vpop.f32.mrf.mxu0
  %v7148 = vadd.f32 0.0, %v7147
  %7149 = vmatmul.f32.gmra.mxu0 %v6985
  %v7150 = vpop.f32.mrf.mxu0
  %v7151 = vadd.f32 0.0, %v7150
  %7152 = vmatmul.f32.gmra.mxu0 %v6987
  %v7153 = vpop.f32.mrf.mxu0
  %v7154 = vadd.f32 0.0, %v7153
  %7155 = vmatmul.f32.gmra.mxu0 %v6989
  %v7156 = vpop.f32.mrf.mxu0
  %v7157 = vadd.f32 0.0, %v7156
  %7158 = vmatmul.f32.gmra.mxu0 %v6991
  %v7159 = vpop.f32.mrf.mxu0
  %v7160 = vadd.f32 0.0, %v7159
  %7161 = vmatmul.f32.gmra.mxu0 %v6993
  %v7162 = vpop.f32.mrf.mxu0
  %v7163 = vadd.f32 0.0, %v7162
  %7164 = vmatmul.f32.gmra.mxu0 %v6995
  %v7165 = vpop.f32.mrf.mxu0
  %v7166 = vadd.f32 0.0, %v7165
  %7167 = vmatmul.f32.gmra.mxu0 %v6997
  %v7168 = vpop.f32.mrf.mxu0
  %v7169 = vadd.f32 0.0, %v7168
  %7170 = vmatmul.f32.gmra.mxu0 %v6999
  %v7171 = vpop.f32.mrf.mxu0
  %v7172 = vadd.f32 0.0, %v7171
  %7173 = vmatmul.f32.gmra.mxu0 %v7001
  %v7174 = vpop.f32.mrf.mxu0
  %v7175 = vadd.f32 0.0, %v7174
  %7176 = vmatmul.f32.gmra.mxu0 %v7003
  %v7177 = vpop.f32.mrf.mxu0
  %v7178 = vadd.f32 0.0, %v7177
  %7179 = vmatmul.f32.gmra.mxu0 %v7005
  %v7180 = vpop.f32.mrf.mxu0
  %v7181 = vadd.f32 0.0, %v7180
  %7182 = vmatmul.f32.gmra.mxu0 %v7007
  %v7183 = vpop.f32.mrf.mxu0
  %v7184 = vadd.f32 0.0, %v7183
  %7185 = vmatmul.f32.gmra.mxu0 %v7009
  %v7186 = vpop.f32.mrf.mxu0
  %v7187 = vadd.f32 0.0, %v7186
  %7188 = vmatmul.f32.gmra.mxu0 %v7011
  %v7189 = vpop.f32.mrf.mxu0
  %v7190 = vadd.f32 0.0, %v7189
  %7191 = vmatmul.f32.gmra.mxu0 %v7013
  %v7192 = vpop.f32.mrf.mxu0
  %v7193 = vadd.f32 0.0, %v7192
  %7194 = vmatmul.f32.gmra.mxu0 %v7015
  %v7195 = vpop.f32.mrf.mxu0
  %v7196 = vadd.f32 0.0, %v7195
  %7197 = vmatmul.f32.gmra.mxu0 %v7017
  %v7198 = vpop.f32.mrf.mxu0
  %v7199 = vadd.f32 0.0, %v7198
  %7200 = vmatmul.f32.gmra.mxu0 %v7019
  %v7201 = vpop.f32.mrf.mxu0
  %v7202 = vadd.f32 0.0, %v7201
  %7203 = vmatmul.f32.gmra.mxu0 %v7021
  %v7204 = vpop.f32.mrf.mxu0
  %v7205 = vadd.f32 0.0, %v7204
  %7206 = vmatmul.f32.gmra.mxu0 %v7023
  %v7207 = vpop.f32.mrf.mxu0
  %v7208 = vadd.f32 0.0, %v7207
  %7209 = vmatmul.f32.gmra.mxu0 %v7025
  %v7210 = vpop.f32.mrf.mxu0
  %v7211 = vadd.f32 0.0, %v7210
  %7212 = vmatmul.f32.gmra.mxu0 %v7027
  %v7213 = vpop.f32.mrf.mxu0
  %v7214 = vadd.f32 0.0, %v7213
  %7215 = vmatmul.f32.gmra.mxu0 %v7029
  %v7216 = vpop.f32.mrf.mxu0
  %v7217 = vadd.f32 0.0, %v7216
  %7218 = vmatmul.f32.gmra.mxu0 %v7031
  %v7219 = vpop.f32.mrf.mxu0
  %v7220 = vadd.f32 0.0, %v7219
  %7221 = vmatmul.f32.gmra.mxu0 %v7033
  %v7222 = vpop.f32.mrf.mxu0
  %v7223 = vadd.f32 0.0, %v7222
  %7224 = vmatmul.f32.gmra.mxu0 %v7035
  %v7225 = vpop.f32.mrf.mxu0
  %v7226 = vadd.f32 0.0, %v7225
  %7227 = vmatmul.f32.gmra.mxu0 %v7037
  %v7228 = vpop.f32.mrf.mxu0
  %v7229 = vadd.f32 0.0, %v7228
  %7230 = vmatmul.f32.gmra.mxu0 %v7039
  %v7231 = vpop.f32.mrf.mxu0
  %v7232 = vadd.f32 0.0, %v7231
  %7233 = vmatmul.f32.gmra.mxu0 %v7041
  %v7234 = vpop.f32.mrf.mxu0
  %v7235 = vadd.f32 0.0, %v7234
  %7236 = vmatmul.f32.gmra.mxu0 %v7043
  %v7237 = vpop.f32.mrf.mxu0
  %v7238 = vadd.f32 0.0, %v7237
  %7239 = vmatmul.f32.gmra.mxu0 %v7045
  %v7240 = vpop.f32.mrf.mxu0
  %v7241 = vadd.f32 0.0, %v7240
  %7242 = vmatmul.f32.gmra.mxu0 %v7047
  %v7243 = vpop.f32.mrf.mxu0
  %v7244 = vadd.f32 0.0, %v7243
  %7245 = vmatmul.f32.gmra.mxu0 %v7049
  %v7246 = vpop.f32.mrf.mxu0
  %v7247 = vadd.f32 0.0, %v7246
  %7248 = vmatmul.f32.gmra.mxu0 %v7051
  %v7249 = vpop.f32.mrf.mxu0
  %v7250 = vadd.f32 0.0, %v7249
  %7251 = vmatmul.f32.gmra.mxu0 %v7053
  %v7252 = vpop.f32.mrf.mxu0
  %v7253 = vadd.f32 0.0, %v7252
  %7254 = vmatmul.f32.gmra.mxu0 %v7055
  %v7255 = vpop.f32.mrf.mxu0
  %v7256 = vadd.f32 0.0, %v7255
  %7257 = vmatmul.f32.gmra.mxu0 %v7057
  %v7258 = vpop.f32.mrf.mxu0
  %v7259 = vadd.f32 0.0, %v7258
  %7260 = vmatmul.f32.gmra.mxu0 %v7059
  %v7261 = vpop.f32.mrf.mxu0
  %v7262 = vadd.f32 0.0, %v7261
  %7263 = vmatmul.f32.gmra.mxu0 %v7061
  %v7264 = vpop.f32.mrf.mxu0
  %v7265 = vadd.f32 0.0, %v7264
  %7266 = vmatmul.f32.gmra.mxu0 %v7063
  %v7267 = vpop.f32.mrf.mxu0
  %v7268 = vadd.f32 0.0, %v7267
  %7269 = vmatmul.f32.gmra.mxu0 %v7065
  %v7270 = vpop.f32.mrf.mxu0
  %v7271 = vadd.f32 0.0, %v7270
  %7272 = vmatmul.f32.gmra.mxu0 %v7067
  %v7273 = vpop.f32.mrf.mxu0
  %v7274 = vadd.f32 0.0, %v7273
  %7275 = vmatmul.f32.gmra.mxu0 %v7069
  %v7276 = vpop.f32.mrf.mxu0
  %v7277 = vadd.f32 0.0, %v7276
  %7278 = vmatmul.f32.gmra.mxu0 %v7071
  %v7279 = vpop.f32.mrf.mxu0
  %v7280 = vadd.f32 0.0, %v7279
  %7281 = vdwg.mxu0
  %7282 = vmatpush.msra.mxu0 %v5784
  %7283 = vmatpush.msra.mxu0 %v5783
  %7284 = vmatpush.msra.mxu0 %v5782
  %7285 = vmatpush.msra.mxu0 %v5781
  %7286 = vmatpush.msra.mxu0 %v5780
  %7287 = vmatpush.msra.mxu0 %v5779
  %7288 = vmatpush.msra.mxu0 %v5778
  %7289 = vmatpush.msra.mxu0 %v5777
  %7290 = vmatpush.msra.mxu0 %v5776
  %7291 = vmatpush.msra.mxu0 %v5775
  %7292 = vmatpush.msra.mxu0 %v5774
  %7293 = vmatpush.msra.mxu0 %v5773
  %7294 = vmatpush.msra.mxu0 %v5772
  %7295 = vmatpush.msra.mxu0 %v5771
  %7296 = vmatpush.msra.mxu0 %v5770
  %7297 = vmatpush.msra.mxu0 %v5769
  %7298 = vmatmul.f32.gmra.mxu0 %v6946
  %v7299 = vpop.f32.mrf.mxu0
  %v7300 = vadd.f32 %v7091, %v7299
  %7301 = vmatmul.f32.gmra.mxu0 %v6948
  %v7302 = vpop.f32.mrf.mxu0
  %v7303 = vadd.f32 %v7094, %v7302
  %7304 = vmatmul.f32.gmra.mxu0 %v6950
  %v7305 = vpop.f32.mrf.mxu0
  %v7306 = vadd.f32 %v7097, %v7305
  %7307 = vmatmul.f32.gmra.mxu0 %v6952
  %v7308 = vpop.f32.mrf.mxu0
  %v7309 = vadd.f32 %v7100, %v7308
  %7310 = vmatmul.f32.gmra.mxu0 %v6954
  %v7311 = vpop.f32.mrf.mxu0
  %v7312 = vadd.f32 %v7103, %v7311
  %7313 = vmatmul.f32.gmra.mxu0 %v6956
  %v7314 = vpop.f32.mrf.mxu0
  %v7315 = vadd.f32 %v7106, %v7314
  %7316 = vmatmul.f32.gmra.mxu0 %v6958
  %v7317 = vpop.f32.mrf.mxu0
  %v7318 = vadd.f32 %v7109, %v7317
  %7319 = vmatmul.f32.gmra.mxu0 %v6960
  %v7320 = vpop.f32.mrf.mxu0
  %v7321 = vadd.f32 %v7112, %v7320
  %7322 = vmatmul.f32.gmra.mxu0 %v6962
  %v7323 = vpop.f32.mrf.mxu0
  %v7324 = vadd.f32 %v7115, %v7323
  %7325 = vmatmul.f32.gmra.mxu0 %v6964
  %v7326 = vpop.f32.mrf.mxu0
  %v7327 = vadd.f32 %v7118, %v7326
  %7328 = vmatmul.f32.gmra.mxu0 %v6966
  %v7329 = vpop.f32.mrf.mxu0
  %v7330 = vadd.f32 %v7121, %v7329
  %7331 = vmatmul.f32.gmra.mxu0 %v6968
  %v7332 = vpop.f32.mrf.mxu0
  %v7333 = vadd.f32 %v7124, %v7332
  %7334 = vmatmul.f32.gmra.mxu0 %v6970
  %v7335 = vpop.f32.mrf.mxu0
  %v7336 = vadd.f32 %v7127, %v7335
  %7337 = vmatmul.f32.gmra.mxu0 %v6972
  %v7338 = vpop.f32.mrf.mxu0
  %v7339 = vadd.f32 %v7130, %v7338
  %7340 = vmatmul.f32.gmra.mxu0 %v6974
  %v7341 = vpop.f32.mrf.mxu0
  %v7342 = vadd.f32 %v7133, %v7341
  %7343 = vmatmul.f32.gmra.mxu0 %v6976
  %v7344 = vpop.f32.mrf.mxu0
  %v7345 = vadd.f32 %v7136, %v7344
  %7346 = vmatmul.f32.gmra.mxu0 %v6978
  %v7347 = vpop.f32.mrf.mxu0
  %v7348 = vadd.f32 %v7139, %v7347
  %7349 = vmatmul.f32.gmra.mxu0 %v6980
  %v7350 = vpop.f32.mrf.mxu0
  %v7351 = vadd.f32 %v7142, %v7350
  %7352 = vmatmul.f32.gmra.mxu0 %v6982
  %v7353 = vpop.f32.mrf.mxu0
  %v7354 = vadd.f32 %v7145, %v7353
  %7355 = vmatmul.f32.gmra.mxu0 %v6984
  %v7356 = vpop.f32.mrf.mxu0
  %v7357 = vadd.f32 %v7148, %v7356
  %7358 = vmatmul.f32.gmra.mxu0 %v6986
  %v7359 = vpop.f32.mrf.mxu0
  %v7360 = vadd.f32 %v7151, %v7359
  %7361 = vmatmul.f32.gmra.mxu0 %v6988
  %v7362 = vpop.f32.mrf.mxu0
  %v7363 = vadd.f32 %v7154, %v7362
  %7364 = vmatmul.f32.gmra.mxu0 %v6990
  %v7365 = vpop.f32.mrf.mxu0
  %v7366 = vadd.f32 %v7157, %v7365
  %7367 = vmatmul.f32.gmra.mxu0 %v6992
  %v7368 = vpop.f32.mrf.mxu0
  %v7369 = vadd.f32 %v7160, %v7368
  %7370 = vmatmul.f32.gmra.mxu0 %v6994
  %v7371 = vpop.f32.mrf.mxu0
  %v7372 = vadd.f32 %v7163, %v7371
  %7373 = vmatmul.f32.gmra.mxu0 %v6996
  %v7374 = vpop.f32.mrf.mxu0
  %v7375 = vadd.f32 %v7166, %v7374
  %7376 = vmatmul.f32.gmra.mxu0 %v6998
  %v7377 = vpop.f32.mrf.mxu0
  %v7378 = vadd.f32 %v7169, %v7377
  %7379 = vmatmul.f32.gmra.mxu0 %v7000
  %v7380 = vpop.f32.mrf.mxu0
  %v7381 = vadd.f32 %v7172, %v7380
  %7382 = vmatmul.f32.gmra.mxu0 %v7002
  %v7383 = vpop.f32.mrf.mxu0
  %v7384 = vadd.f32 %v7175, %v7383
  %7385 = vmatmul.f32.gmra.mxu0 %v7004
  %v7386 = vpop.f32.mrf.mxu0
  %v7387 = vadd.f32 %v7178, %v7386
  %7388 = vmatmul.f32.gmra.mxu0 %v7006
  %v7389 = vpop.f32.mrf.mxu0
  %v7390 = vadd.f32 %v7181, %v7389
  %7391 = vmatmul.f32.gmra.mxu0 %v7008
  %v7392 = vpop.f32.mrf.mxu0
  %v7393 = vadd.f32 %v7184, %v7392
  %7394 = vmatmul.f32.gmra.mxu0 %v7010
  %v7395 = vpop.f32.mrf.mxu0
  %v7396 = vadd.f32 %v7187, %v7395
  %7397 = vmatmul.f32.gmra.mxu0 %v7012
  %v7398 = vpop.f32.mrf.mxu0
  %v7399 = vadd.f32 %v7190, %v7398
  %7400 = vmatmul.f32.gmra.mxu0 %v7014
  %v7401 = vpop.f32.mrf.mxu0
  %v7402 = vadd.f32 %v7193, %v7401
  %7403 = vmatmul.f32.gmra.mxu0 %v7016
  %v7404 = vpop.f32.mrf.mxu0
  %v7405 = vadd.f32 %v7196, %v7404
  %7406 = vmatmul.f32.gmra.mxu0 %v7018
  %v7407 = vpop.f32.mrf.mxu0
  %v7408 = vadd.f32 %v7199, %v7407
  %7409 = vmatmul.f32.gmra.mxu0 %v7020
  %v7410 = vpop.f32.mrf.mxu0
  %v7411 = vadd.f32 %v7202, %v7410
  %7412 = vmatmul.f32.gmra.mxu0 %v7022
  %v7413 = vpop.f32.mrf.mxu0
  %v7414 = vadd.f32 %v7205, %v7413
  %7415 = vmatmul.f32.gmra.mxu0 %v7024
  %v7416 = vpop.f32.mrf.mxu0
  %v7417 = vadd.f32 %v7208, %v7416
  %7418 = vmatmul.f32.gmra.mxu0 %v7026
  %v7419 = vpop.f32.mrf.mxu0
  %v7420 = vadd.f32 %v7211, %v7419
  %7421 = vmatmul.f32.gmra.mxu0 %v7028
  %v7422 = vpop.f32.mrf.mxu0
  %v7423 = vadd.f32 %v7214, %v7422
  %7424 = vmatmul.f32.gmra.mxu0 %v7030
  %v7425 = vpop.f32.mrf.mxu0
  %v7426 = vadd.f32 %v7217, %v7425
  %7427 = vmatmul.f32.gmra.mxu0 %v7032
  %v7428 = vpop.f32.mrf.mxu0
  %v7429 = vadd.f32 %v7220, %v7428
  %7430 = vmatmul.f32.gmra.mxu0 %v7034
  %v7431 = vpop.f32.mrf.mxu0
  %v7432 = vadd.f32 %v7223, %v7431
  %7433 = vmatmul.f32.gmra.mxu0 %v7036
  %v7434 = vpop.f32.mrf.mxu0
  %v7435 = vadd.f32 %v7226, %v7434
  %7436 = vmatmul.f32.gmra.mxu0 %v7038
  %v7437 = vpop.f32.mrf.mxu0
  %v7438 = vadd.f32 %v7229, %v7437
  %7439 = vmatmul.f32.gmra.mxu0 %v7040
  %v7440 = vpop.f32.mrf.mxu0
  %v7441 = vadd.f32 %v7232, %v7440
  %7442 = vmatmul.f32.gmra.mxu0 %v7042
  %v7443 = vpop.f32.mrf.mxu0
  %v7444 = vadd.f32 %v7235, %v7443
  %7445 = vmatmul.f32.gmra.mxu0 %v7044
  %v7446 = vpop.f32.mrf.mxu0
  %v7447 = vadd.f32 %v7238, %v7446
  %7448 = vmatmul.f32.gmra.mxu0 %v7046
  %v7449 = vpop.f32.mrf.mxu0
  %v7450 = vadd.f32 %v7241, %v7449
  %7451 = vmatmul.f32.gmra.mxu0 %v7048
  %v7452 = vpop.f32.mrf.mxu0
  %v7453 = vadd.f32 %v7244, %v7452
  %7454 = vmatmul.f32.gmra.mxu0 %v7050
  %v7455 = vpop.f32.mrf.mxu0
  %v7456 = vadd.f32 %v7247, %v7455
  %7457 = vmatmul.f32.gmra.mxu0 %v7052
  %v7458 = vpop.f32.mrf.mxu0
  %v7459 = vadd.f32 %v7250, %v7458
  %7460 = vmatmul.f32.gmra.mxu0 %v7054
  %v7461 = vpop.f32.mrf.mxu0
  %v7462 = vadd.f32 %v7253, %v7461
  %7463 = vmatmul.f32.gmra.mxu0 %v7056
  %v7464 = vpop.f32.mrf.mxu0
  %v7465 = vadd.f32 %v7256, %v7464
  %7466 = vmatmul.f32.gmra.mxu0 %v7058
  %v7467 = vpop.f32.mrf.mxu0
  %v7468 = vadd.f32 %v7259, %v7467
  %7469 = vmatmul.f32.gmra.mxu0 %v7060
  %v7470 = vpop.f32.mrf.mxu0
  %v7471 = vadd.f32 %v7262, %v7470
  %7472 = vmatmul.f32.gmra.mxu0 %v7062
  %v7473 = vpop.f32.mrf.mxu0
  %v7474 = vadd.f32 %v7265, %v7473
  %7475 = vmatmul.f32.gmra.mxu0 %v7064
  %v7476 = vpop.f32.mrf.mxu0
  %v7477 = vadd.f32 %v7268, %v7476
  %7478 = vmatmul.f32.gmra.mxu0 %v7066
  %v7479 = vpop.f32.mrf.mxu0
  %v7480 = vadd.f32 %v7271, %v7479
  %7481 = vmatmul.f32.gmra.mxu0 %v7068
  %v7482 = vpop.f32.mrf.mxu0
  %v7483 = vadd.f32 %v7274, %v7482
  %7484 = vmatmul.f32.gmra.mxu0 %v7070
  %v7485 = vpop.f32.mrf.mxu0
  %v7486 = vadd.f32 %v7277, %v7485
  %7487 = vmatmul.f32.gmra.mxu0 %v7072
  %v7488 = vpop.f32.mrf.mxu0
  %v7489 = vadd.f32 %v7280, %v7488
  %7490 = vdwg.mxu0
  %v7492 = vsel %vm1241, %v7300, 0
  %v7495 = vsel %vm1241, %v7303, 0
  %v7498 = vsel %vm1241, %v7306, 0
  %v7501 = vsel %vm1241, %v7309, 0
  %v7504 = vsel %vm1241, %v7312, 0
  %v7507 = vsel %vm1241, %v7315, 0
  %v7510 = vsel %vm1241, %v7318, 0
  %v7513 = vsel %vm1241, %v7321, 0
  %v7516 = vsel %vm1241, %v7324, 0
  %v7519 = vsel %vm1241, %v7327, 0
  %v7522 = vsel %vm1241, %v7330, 0
  %v7525 = vsel %vm1241, %v7333, 0
  %v7528 = vsel %vm1241, %v7336, 0
  %v7531 = vsel %vm1241, %v7339, 0
  %v7534 = vsel %vm1241, %v7342, 0
  %v7537 = vsel %vm1241, %v7345, 0
  %v7540 = vsel %vm1241, %v7348, 0
  %v7543 = vsel %vm1241, %v7351, 0
  %v7546 = vsel %vm1241, %v7354, 0
  %v7549 = vsel %vm1241, %v7357, 0
  %v7552 = vsel %vm1241, %v7360, 0
  %v7555 = vsel %vm1241, %v7363, 0
  %v7558 = vsel %vm1241, %v7366, 0
  %v7561 = vsel %vm1241, %v7369, 0
  %v7564 = vsel %vm1241, %v7372, 0
  %v7567 = vsel %vm1241, %v7375, 0
  %v7570 = vsel %vm1241, %v7378, 0
  %v7573 = vsel %vm1241, %v7381, 0
  %v7576 = vsel %vm1241, %v7384, 0
  %v7579 = vsel %vm1241, %v7387, 0
  %v7582 = vsel %vm1241, %v7390, 0
  %v7585 = vsel %vm1241, %v7393, 0
  %v7588 = vsel %vm1241, %v7396, 0
  %v7591 = vsel %vm1241, %v7399, 0
  %v7594 = vsel %vm1241, %v7402, 0
  %v7597 = vsel %vm1241, %v7405, 0
  %v7600 = vsel %vm1241, %v7408, 0
  %v7603 = vsel %vm1241, %v7411, 0
  %v7606 = vsel %vm1241, %v7414, 0
  %v7609 = vsel %vm1241, %v7417, 0
  %v7612 = vsel %vm1241, %v7420, 0
  %v7615 = vsel %vm1241, %v7423, 0
  %v7618 = vsel %vm1241, %v7426, 0
  %v7621 = vsel %vm1241, %v7429, 0
  %v7624 = vsel %vm1241, %v7432, 0
  %v7627 = vsel %vm1241, %v7435, 0
  %v7630 = vsel %vm1241, %v7438, 0
  %v7633 = vsel %vm1241, %v7441, 0
  %v7636 = vsel %vm1241, %v7444, 0
  %v7639 = vsel %vm1241, %v7447, 0
  %v7642 = vsel %vm1241, %v7450, 0
  %v7645 = vsel %vm1241, %v7453, 0
  %v7648 = vsel %vm1241, %v7456, 0
  %v7651 = vsel %vm1241, %v7459, 0
  %v7654 = vsel %vm1241, %v7462, 0
  %v7657 = vsel %vm1241, %v7465, 0
  %v7660 = vsel %vm1241, %v7468, 0
  %v7663 = vsel %vm1241, %v7471, 0
  %v7666 = vsel %vm1241, %v7474, 0
  %v7669 = vsel %vm1241, %v7477, 0
  %v7672 = vsel %vm1241, %v7480, 0
  %v7675 = vsel %vm1241, %v7483, 0
  %v7678 = vsel %vm1241, %v7486, 0
  %v7681 = vsel %vm1241, %v7489, 0
  %7683 = vmatpush.msra.mxu0 0.0
  %7684 = vmatpush.msra.mxu0 0.0
  %7685 = vmatpush.msra.mxu0 0.0
  %7686 = vmatpush.msra.mxu0 0.0
  %7687 = vmatpush.msra.mxu0 0.0
  %7688 = vmatpush.msra.mxu0 0.0
  %7689 = vmatpush.msra.mxu0 0.0
  %7690 = vmatpush.msra.mxu0 0.0
  %7691 = vmatpush.msra.mxu0 0.0
  %7692 = vmatpush.msra.mxu0 0.0
  %7693 = vmatpush.msra.mxu0 0.0
  %7694 = vmatpush.msra.mxu0 0.0
  %7695 = vmatpush.msra.mxu0 0.0
  %7696 = vmatpush.msra.mxu0 0.0
  %7697 = vmatpush.msra.mxu0 %v6205
  %7698 = vmatpush.msra.mxu0 %v6203
  %7699 = vmatmul.f32.gmra.mxu0 %v7492
  %v7700 = vpop.f32.mrf.mxu0
  %v7701 = vadd.f32 1e-05, %v7700
  %7702 = vmatmul.f32.gmra.mxu0 %v7495
  %v7703 = vpop.f32.mrf.mxu0
  %v7704 = vadd.f32 1e-05, %v7703
  %7705 = vmatmul.f32.gmra.mxu0 %v7498
  %v7706 = vpop.f32.mrf.mxu0
  %v7707 = vadd.f32 1e-05, %v7706
  %7708 = vmatmul.f32.gmra.mxu0 %v7501
  %v7709 = vpop.f32.mrf.mxu0
  %v7710 = vadd.f32 1e-05, %v7709
  %7711 = vmatmul.f32.gmra.mxu0 %v7504
  %v7712 = vpop.f32.mrf.mxu0
  %v7713 = vadd.f32 1e-05, %v7712
  %7714 = vmatmul.f32.gmra.mxu0 %v7507
  %v7715 = vpop.f32.mrf.mxu0
  %v7716 = vadd.f32 1e-05, %v7715
  %7717 = vmatmul.f32.gmra.mxu0 %v7510
  %v7718 = vpop.f32.mrf.mxu0
  %v7719 = vadd.f32 1e-05, %v7718
  %7720 = vmatmul.f32.gmra.mxu0 %v7513
  %v7721 = vpop.f32.mrf.mxu0
  %v7722 = vadd.f32 1e-05, %v7721
  %7723 = vmatmul.f32.gmra.mxu0 %v7516
  %v7724 = vpop.f32.mrf.mxu0
  %v7725 = vadd.f32 1e-05, %v7724
  %7726 = vmatmul.f32.gmra.mxu0 %v7519
  %v7727 = vpop.f32.mrf.mxu0
  %v7728 = vadd.f32 1e-05, %v7727
  %7729 = vmatmul.f32.gmra.mxu0 %v7522
  %v7730 = vpop.f32.mrf.mxu0
  %v7731 = vadd.f32 1e-05, %v7730
  %7732 = vmatmul.f32.gmra.mxu0 %v7525
  %v7733 = vpop.f32.mrf.mxu0
  %v7734 = vadd.f32 1e-05, %v7733
  %7735 = vmatmul.f32.gmra.mxu0 %v7528
  %v7736 = vpop.f32.mrf.mxu0
  %v7737 = vadd.f32 1e-05, %v7736
  %7738 = vmatmul.f32.gmra.mxu0 %v7531
  %v7739 = vpop.f32.mrf.mxu0
  %v7740 = vadd.f32 1e-05, %v7739
  %7741 = vmatmul.f32.gmra.mxu0 %v7534
  %v7742 = vpop.f32.mrf.mxu0
  %v7743 = vadd.f32 1e-05, %v7742
  %7744 = vmatmul.f32.gmra.mxu0 %v7537
  %v7745 = vpop.f32.mrf.mxu0
  %v7746 = vadd.f32 1e-05, %v7745
  %7747 = vmatmul.f32.gmra.mxu0 %v7540
  %v7748 = vpop.f32.mrf.mxu0
  %v7749 = vadd.f32 1e-05, %v7748
  %7750 = vmatmul.f32.gmra.mxu0 %v7543
  %v7751 = vpop.f32.mrf.mxu0
  %v7752 = vadd.f32 1e-05, %v7751
  %7753 = vmatmul.f32.gmra.mxu0 %v7546
  %v7754 = vpop.f32.mrf.mxu0
  %v7755 = vadd.f32 1e-05, %v7754
  %7756 = vmatmul.f32.gmra.mxu0 %v7549
  %v7757 = vpop.f32.mrf.mxu0
  %v7758 = vadd.f32 1e-05, %v7757
  %7759 = vmatmul.f32.gmra.mxu0 %v7552
  %v7760 = vpop.f32.mrf.mxu0
  %v7761 = vadd.f32 1e-05, %v7760
  %7762 = vmatmul.f32.gmra.mxu0 %v7555
  %v7763 = vpop.f32.mrf.mxu0
  %v7764 = vadd.f32 1e-05, %v7763
  %7765 = vmatmul.f32.gmra.mxu0 %v7558
  %v7766 = vpop.f32.mrf.mxu0
  %v7767 = vadd.f32 1e-05, %v7766
  %7768 = vmatmul.f32.gmra.mxu0 %v7561
  %v7769 = vpop.f32.mrf.mxu0
  %v7770 = vadd.f32 1e-05, %v7769
  %7771 = vmatmul.f32.gmra.mxu0 %v7564
  %v7772 = vpop.f32.mrf.mxu0
  %v7773 = vadd.f32 1e-05, %v7772
  %7774 = vmatmul.f32.gmra.mxu0 %v7567
  %v7775 = vpop.f32.mrf.mxu0
  %v7776 = vadd.f32 1e-05, %v7775
  %7777 = vmatmul.f32.gmra.mxu0 %v7570
  %v7778 = vpop.f32.mrf.mxu0
  %v7779 = vadd.f32 1e-05, %v7778
  %7780 = vmatmul.f32.gmra.mxu0 %v7573
  %v7781 = vpop.f32.mrf.mxu0
  %v7782 = vadd.f32 1e-05, %v7781
  %7783 = vmatmul.f32.gmra.mxu0 %v7576
  %v7784 = vpop.f32.mrf.mxu0
  %v7785 = vadd.f32 1e-05, %v7784
  %7786 = vmatmul.f32.gmra.mxu0 %v7579
  %v7787 = vpop.f32.mrf.mxu0
  %v7788 = vadd.f32 1e-05, %v7787
  %7789 = vmatmul.f32.gmra.mxu0 %v7582
  %v7790 = vpop.f32.mrf.mxu0
  %v7791 = vadd.f32 1e-05, %v7790
  %7792 = vmatmul.f32.gmra.mxu0 %v7585
  %v7793 = vpop.f32.mrf.mxu0
  %v7794 = vadd.f32 1e-05, %v7793
  %7795 = vmatmul.f32.gmra.mxu0 %v7588
  %v7796 = vpop.f32.mrf.mxu0
  %v7797 = vadd.f32 1e-05, %v7796
  %7798 = vmatmul.f32.gmra.mxu0 %v7591
  %v7799 = vpop.f32.mrf.mxu0
  %v7800 = vadd.f32 1e-05, %v7799
  %7801 = vmatmul.f32.gmra.mxu0 %v7594
  %v7802 = vpop.f32.mrf.mxu0
  %v7803 = vadd.f32 1e-05, %v7802
  %7804 = vmatmul.f32.gmra.mxu0 %v7597
  %v7805 = vpop.f32.mrf.mxu0
  %v7806 = vadd.f32 1e-05, %v7805
  %7807 = vmatmul.f32.gmra.mxu0 %v7600
  %v7808 = vpop.f32.mrf.mxu0
  %v7809 = vadd.f32 1e-05, %v7808
  %7810 = vmatmul.f32.gmra.mxu0 %v7603
  %v7811 = vpop.f32.mrf.mxu0
  %v7812 = vadd.f32 1e-05, %v7811
  %7813 = vmatmul.f32.gmra.mxu0 %v7606
  %v7814 = vpop.f32.mrf.mxu0
  %v7815 = vadd.f32 1e-05, %v7814
  %7816 = vmatmul.f32.gmra.mxu0 %v7609
  %v7817 = vpop.f32.mrf.mxu0
  %v7818 = vadd.f32 1e-05, %v7817
  %7819 = vmatmul.f32.gmra.mxu0 %v7612
  %v7820 = vpop.f32.mrf.mxu0
  %v7821 = vadd.f32 1e-05, %v7820
  %7822 = vmatmul.f32.gmra.mxu0 %v7615
  %v7823 = vpop.f32.mrf.mxu0
  %v7824 = vadd.f32 1e-05, %v7823
  %7825 = vmatmul.f32.gmra.mxu0 %v7618
  %v7826 = vpop.f32.mrf.mxu0
  %v7827 = vadd.f32 1e-05, %v7826
  %7828 = vmatmul.f32.gmra.mxu0 %v7621
  %v7829 = vpop.f32.mrf.mxu0
  %v7830 = vadd.f32 1e-05, %v7829
  %7831 = vmatmul.f32.gmra.mxu0 %v7624
  %v7832 = vpop.f32.mrf.mxu0
  %v7833 = vadd.f32 1e-05, %v7832
  %7834 = vmatmul.f32.gmra.mxu0 %v7627
  %v7835 = vpop.f32.mrf.mxu0
  %v7836 = vadd.f32 1e-05, %v7835
  %7837 = vmatmul.f32.gmra.mxu0 %v7630
  %v7838 = vpop.f32.mrf.mxu0
  %v7839 = vadd.f32 1e-05, %v7838
  %7840 = vmatmul.f32.gmra.mxu0 %v7633
  %v7841 = vpop.f32.mrf.mxu0
  %v7842 = vadd.f32 1e-05, %v7841
  %7843 = vmatmul.f32.gmra.mxu0 %v7636
  %v7844 = vpop.f32.mrf.mxu0
  %v7845 = vadd.f32 1e-05, %v7844
  %7846 = vmatmul.f32.gmra.mxu0 %v7639
  %v7847 = vpop.f32.mrf.mxu0
  %v7848 = vadd.f32 1e-05, %v7847
  %7849 = vmatmul.f32.gmra.mxu0 %v7642
  %v7850 = vpop.f32.mrf.mxu0
  %v7851 = vadd.f32 1e-05, %v7850
  %7852 = vmatmul.f32.gmra.mxu0 %v7645
  %v7853 = vpop.f32.mrf.mxu0
  %v7854 = vadd.f32 1e-05, %v7853
  %7855 = vmatmul.f32.gmra.mxu0 %v7648
  %v7856 = vpop.f32.mrf.mxu0
  %v7857 = vadd.f32 1e-05, %v7856
  %7858 = vmatmul.f32.gmra.mxu0 %v7651
  %v7859 = vpop.f32.mrf.mxu0
  %v7860 = vadd.f32 1e-05, %v7859
  %7861 = vmatmul.f32.gmra.mxu0 %v7654
  %v7862 = vpop.f32.mrf.mxu0
  %v7863 = vadd.f32 1e-05, %v7862
  %7864 = vmatmul.f32.gmra.mxu0 %v7657
  %v7865 = vpop.f32.mrf.mxu0
  %v7866 = vadd.f32 1e-05, %v7865
  %7867 = vmatmul.f32.gmra.mxu0 %v7660
  %v7868 = vpop.f32.mrf.mxu0
  %v7869 = vadd.f32 1e-05, %v7868
  %7870 = vmatmul.f32.gmra.mxu0 %v7663
  %v7871 = vpop.f32.mrf.mxu0
  %v7872 = vadd.f32 1e-05, %v7871
  %7873 = vmatmul.f32.gmra.mxu0 %v7666
  %v7874 = vpop.f32.mrf.mxu0
  %v7875 = vadd.f32 1e-05, %v7874
  %7876 = vmatmul.f32.gmra.mxu0 %v7669
  %v7877 = vpop.f32.mrf.mxu0
  %v7878 = vadd.f32 1e-05, %v7877
  %7879 = vmatmul.f32.gmra.mxu0 %v7672
  %v7880 = vpop.f32.mrf.mxu0
  %v7881 = vadd.f32 1e-05, %v7880
  %7882 = vmatmul.f32.gmra.mxu0 %v7675
  %v7883 = vpop.f32.mrf.mxu0
  %v7884 = vadd.f32 1e-05, %v7883
  %7885 = vmatmul.f32.gmra.mxu0 %v7678
  %v7886 = vpop.f32.mrf.mxu0
  %v7887 = vadd.f32 1e-05, %v7886
  %7888 = vmatmul.f32.gmra.mxu0 %v7681
  %v7889 = vpop.f32.mrf.mxu0
  %v7890 = vadd.f32 1e-05, %v7889
  %7891 = vdwg.mxu0
  %7892 = vmatpush.msra.mxu0 0.0
  %7893 = vmatpush.msra.mxu0 0.0
  %7894 = vmatpush.msra.mxu0 0.0
  %7895 = vmatpush.msra.mxu0 0.0
  %7896 = vmatpush.msra.mxu0 0.0
  %7897 = vmatpush.msra.mxu0 0.0
  %7898 = vmatpush.msra.mxu0 0.0
  %7899 = vmatpush.msra.mxu0 0.0
  %7900 = vmatpush.msra.mxu0 0.0
  %7901 = vmatpush.msra.mxu0 0.0
  %7902 = vmatpush.msra.mxu0 0.0
  %7903 = vmatpush.msra.mxu0 0.0
  %7904 = vmatpush.msra.mxu0 0.0
  %7905 = vmatpush.msra.mxu0 0.0
  %7906 = vmatpush.msra.mxu0 %v6206
  %7907 = vmatpush.msra.mxu0 %v6204
  %7908 = vmatmul.f32.gmra.mxu0 %v7492
  %v7909 = vpop.f32.mrf.mxu0
  %v7910 = vadd.f32 1e-05, %v7909
  %7911 = vmatmul.f32.gmra.mxu0 %v7495
  %v7912 = vpop.f32.mrf.mxu0
  %v7913 = vadd.f32 1e-05, %v7912
  %7914 = vmatmul.f32.gmra.mxu0 %v7498
  %v7915 = vpop.f32.mrf.mxu0
  %v7916 = vadd.f32 1e-05, %v7915
  %7917 = vmatmul.f32.gmra.mxu0 %v7501
  %v7918 = vpop.f32.mrf.mxu0
  %v7919 = vadd.f32 1e-05, %v7918
  %7920 = vmatmul.f32.gmra.mxu0 %v7504
  %v7921 = vpop.f32.mrf.mxu0
  %v7922 = vadd.f32 1e-05, %v7921
  %7923 = vmatmul.f32.gmra.mxu0 %v7507
  %v7924 = vpop.f32.mrf.mxu0
  %v7925 = vadd.f32 1e-05, %v7924
  %7926 = vmatmul.f32.gmra.mxu0 %v7510
  %v7927 = vpop.f32.mrf.mxu0
  %v7928 = vadd.f32 1e-05, %v7927
  %7929 = vmatmul.f32.gmra.mxu0 %v7513
  %v7930 = vpop.f32.mrf.mxu0
  %v7931 = vadd.f32 1e-05, %v7930
  %7932 = vmatmul.f32.gmra.mxu0 %v7516
  %v7933 = vpop.f32.mrf.mxu0
  %v7934 = vadd.f32 1e-05, %v7933
  %7935 = vmatmul.f32.gmra.mxu0 %v7519
  %v7936 = vpop.f32.mrf.mxu0
  %v7937 = vadd.f32 1e-05, %v7936
  %7938 = vmatmul.f32.gmra.mxu0 %v7522
  %v7939 = vpop.f32.mrf.mxu0
  %v7940 = vadd.f32 1e-05, %v7939
  %7941 = vmatmul.f32.gmra.mxu0 %v7525
  %v7942 = vpop.f32.mrf.mxu0
  %v7943 = vadd.f32 1e-05, %v7942
  %7944 = vmatmul.f32.gmra.mxu0 %v7528
  %v7945 = vpop.f32.mrf.mxu0
  %v7946 = vadd.f32 1e-05, %v7945
  %7947 = vmatmul.f32.gmra.mxu0 %v7531
  %v7948 = vpop.f32.mrf.mxu0
  %v7949 = vadd.f32 1e-05, %v7948
  %7950 = vmatmul.f32.gmra.mxu0 %v7534
  %v7951 = vpop.f32.mrf.mxu0
  %v7952 = vadd.f32 1e-05, %v7951
  %7953 = vmatmul.f32.gmra.mxu0 %v7537
  %v7954 = vpop.f32.mrf.mxu0
  %v7955 = vadd.f32 1e-05, %v7954
  %7956 = vmatmul.f32.gmra.mxu0 %v7540
  %v7957 = vpop.f32.mrf.mxu0
  %v7958 = vadd.f32 1e-05, %v7957
  %7959 = vmatmul.f32.gmra.mxu0 %v7543
  %v7960 = vpop.f32.mrf.mxu0
  %v7961 = vadd.f32 1e-05, %v7960
  %7962 = vmatmul.f32.gmra.mxu0 %v7546
  %v7963 = vpop.f32.mrf.mxu0
  %v7964 = vadd.f32 1e-05, %v7963
  %7965 = vmatmul.f32.gmra.mxu0 %v7549
  %v7966 = vpop.f32.mrf.mxu0
  %v7967 = vadd.f32 1e-05, %v7966
  %7968 = vmatmul.f32.gmra.mxu0 %v7552
  %v7969 = vpop.f32.mrf.mxu0
  %v7970 = vadd.f32 1e-05, %v7969
  %7971 = vmatmul.f32.gmra.mxu0 %v7555
  %v7972 = vpop.f32.mrf.mxu0
  %v7973 = vadd.f32 1e-05, %v7972
  %7974 = vmatmul.f32.gmra.mxu0 %v7558
  %v7975 = vpop.f32.mrf.mxu0
  %v7976 = vadd.f32 1e-05, %v7975
  %7977 = vmatmul.f32.gmra.mxu0 %v7561
  %v7978 = vpop.f32.mrf.mxu0
  %v7979 = vadd.f32 1e-05, %v7978
  %7980 = vmatmul.f32.gmra.mxu0 %v7564
  %v7981 = vpop.f32.mrf.mxu0
  %v7982 = vadd.f32 1e-05, %v7981
  %7983 = vmatmul.f32.gmra.mxu0 %v7567
  %v7984 = vpop.f32.mrf.mxu0
  %v7985 = vadd.f32 1e-05, %v7984
  %7986 = vmatmul.f32.gmra.mxu0 %v7570
  %v7987 = vpop.f32.mrf.mxu0
  %v7988 = vadd.f32 1e-05, %v7987
  %7989 = vmatmul.f32.gmra.mxu0 %v7573
  %v7990 = vpop.f32.mrf.mxu0
  %v7991 = vadd.f32 1e-05, %v7990
  %7992 = vmatmul.f32.gmra.mxu0 %v7576
  %v7993 = vpop.f32.mrf.mxu0
  %v7994 = vadd.f32 1e-05, %v7993
  %7995 = vmatmul.f32.gmra.mxu0 %v7579
  %v7996 = vpop.f32.mrf.mxu0
  %v7997 = vadd.f32 1e-05, %v7996
  %7998 = vmatmul.f32.gmra.mxu0 %v7582
  %v7999 = vpop.f32.mrf.mxu0
  %v8000 = vadd.f32 1e-05, %v7999
  %8001 = vmatmul.f32.gmra.mxu0 %v7585
  %v8002 = vpop.f32.mrf.mxu0
  %v8003 = vadd.f32 1e-05, %v8002
  %8004 = vmatmul.f32.gmra.mxu0 %v7588
  %v8005 = vpop.f32.mrf.mxu0
  %v8006 = vadd.f32 1e-05, %v8005
  %8007 = vmatmul.f32.gmra.mxu0 %v7591
  %v8008 = vpop.f32.mrf.mxu0
  %v8009 = vadd.f32 1e-05, %v8008
  %8010 = vmatmul.f32.gmra.mxu0 %v7594
  %v8011 = vpop.f32.mrf.mxu0
  %v8012 = vadd.f32 1e-05, %v8011
  %8013 = vmatmul.f32.gmra.mxu0 %v7597
  %v8014 = vpop.f32.mrf.mxu0
  %v8015 = vadd.f32 1e-05, %v8014
  %8016 = vmatmul.f32.gmra.mxu0 %v7600
  %v8017 = vpop.f32.mrf.mxu0
  %v8018 = vadd.f32 1e-05, %v8017
  %8019 = vmatmul.f32.gmra.mxu0 %v7603
  %v8020 = vpop.f32.mrf.mxu0
  %v8021 = vadd.f32 1e-05, %v8020
  %8022 = vmatmul.f32.gmra.mxu0 %v7606
  %v8023 = vpop.f32.mrf.mxu0
  %v8024 = vadd.f32 1e-05, %v8023
  %8025 = vmatmul.f32.gmra.mxu0 %v7609
  %v8026 = vpop.f32.mrf.mxu0
  %v8027 = vadd.f32 1e-05, %v8026
  %8028 = vmatmul.f32.gmra.mxu0 %v7612
  %v8029 = vpop.f32.mrf.mxu0
  %v8030 = vadd.f32 1e-05, %v8029
  %8031 = vmatmul.f32.gmra.mxu0 %v7615
  %v8032 = vpop.f32.mrf.mxu0
  %v8033 = vadd.f32 1e-05, %v8032
  %8034 = vmatmul.f32.gmra.mxu0 %v7618
  %v8035 = vpop.f32.mrf.mxu0
  %v8036 = vadd.f32 1e-05, %v8035
  %8037 = vmatmul.f32.gmra.mxu0 %v7621
  %v8038 = vpop.f32.mrf.mxu0
  %v8039 = vadd.f32 1e-05, %v8038
  %8040 = vmatmul.f32.gmra.mxu0 %v7624
  %v8041 = vpop.f32.mrf.mxu0
  %v8042 = vadd.f32 1e-05, %v8041
  %8043 = vmatmul.f32.gmra.mxu0 %v7627
  %v8044 = vpop.f32.mrf.mxu0
  %v8045 = vadd.f32 1e-05, %v8044
  %8046 = vmatmul.f32.gmra.mxu0 %v7630
  %v8047 = vpop.f32.mrf.mxu0
  %v8048 = vadd.f32 1e-05, %v8047
  %8049 = vmatmul.f32.gmra.mxu0 %v7633
  %v8050 = vpop.f32.mrf.mxu0
  %v8051 = vadd.f32 1e-05, %v8050
  %8052 = vmatmul.f32.gmra.mxu0 %v7636
  %v8053 = vpop.f32.mrf.mxu0
  %v8054 = vadd.f32 1e-05, %v8053
  %8055 = vmatmul.f32.gmra.mxu0 %v7639
  %v8056 = vpop.f32.mrf.mxu0
  %v8057 = vadd.f32 1e-05, %v8056
  %8058 = vmatmul.f32.gmra.mxu0 %v7642
  %v8059 = vpop.f32.mrf.mxu0
  %v8060 = vadd.f32 1e-05, %v8059
  %8061 = vmatmul.f32.gmra.mxu0 %v7645
  %v8062 = vpop.f32.mrf.mxu0
  %v8063 = vadd.f32 1e-05, %v8062
  %8064 = vmatmul.f32.gmra.mxu0 %v7648
  %v8065 = vpop.f32.mrf.mxu0
  %v8066 = vadd.f32 1e-05, %v8065
  %8067 = vmatmul.f32.gmra.mxu0 %v7651
  %v8068 = vpop.f32.mrf.mxu0
  %v8069 = vadd.f32 1e-05, %v8068
  %8070 = vmatmul.f32.gmra.mxu0 %v7654
  %v8071 = vpop.f32.mrf.mxu0
  %v8072 = vadd.f32 1e-05, %v8071
  %8073 = vmatmul.f32.gmra.mxu0 %v7657
  %v8074 = vpop.f32.mrf.mxu0
  %v8075 = vadd.f32 1e-05, %v8074
  %8076 = vmatmul.f32.gmra.mxu0 %v7660
  %v8077 = vpop.f32.mrf.mxu0
  %v8078 = vadd.f32 1e-05, %v8077
  %8079 = vmatmul.f32.gmra.mxu0 %v7663
  %v8080 = vpop.f32.mrf.mxu0
  %v8081 = vadd.f32 1e-05, %v8080
  %8082 = vmatmul.f32.gmra.mxu0 %v7666
  %v8083 = vpop.f32.mrf.mxu0
  %v8084 = vadd.f32 1e-05, %v8083
  %8085 = vmatmul.f32.gmra.mxu0 %v7669
  %v8086 = vpop.f32.mrf.mxu0
  %v8087 = vadd.f32 1e-05, %v8086
  %8088 = vmatmul.f32.gmra.mxu0 %v7672
  %v8089 = vpop.f32.mrf.mxu0
  %v8090 = vadd.f32 1e-05, %v8089
  %8091 = vmatmul.f32.gmra.mxu0 %v7675
  %v8092 = vpop.f32.mrf.mxu0
  %v8093 = vadd.f32 1e-05, %v8092
  %8094 = vmatmul.f32.gmra.mxu0 %v7678
  %v8095 = vpop.f32.mrf.mxu0
  %v8096 = vadd.f32 1e-05, %v8095
  %8097 = vmatmul.f32.gmra.mxu0 %v7681
  %v8098 = vpop.f32.mrf.mxu0
  %v8099 = vadd.f32 1e-05, %v8098
  %8100 = vdwg.mxu0
  %v8101 = vrsqrt.pop %v7701
  %v8102 = vmul.f32 %v8101, %v7701
  %v8103 = vmul.f32 %v8102, %v8101
  %v8104 = vmul.f32 0.5, %v8103
  %v8105 = vsub.f32 1.5, %v8104
  %v8106 = vmul.f32 %v8101, %v8105
  %vm8107 = vweird.f32 %v7701
  %vm8108 = vweird.f32 %v8101
  %vm8109 = vmor %vm8107, %vm8108
  %v8110 = vsel %vm8109, %v8101, %v8106
  %v8111 = vrsqrt.pop %v7910
  %v8112 = vmul.f32 %v8111, %v7910
  %v8113 = vmul.f32 %v8112, %v8111
  %v8114 = vmul.f32 0.5, %v8113
  %v8115 = vsub.f32 1.5, %v8114
  %v8116 = vmul.f32 %v8111, %v8115
  %vm8117 = vweird.f32 %v7910
  %vm8118 = vweird.f32 %v8111
  %vm8119 = vmor %vm8117, %vm8118
  %v8120 = vsel %vm8119, %v8111, %v8116
  %v8121 = vrsqrt.pop %v7704
  %v8122 = vmul.f32 %v8121, %v7704
  %v8123 = vmul.f32 %v8122, %v8121
  %v8124 = vmul.f32 0.5, %v8123
  %v8125 = vsub.f32 1.5, %v8124
  %v8126 = vmul.f32 %v8121, %v8125
  %vm8127 = vweird.f32 %v7704
  %vm8128 = vweird.f32 %v8121
  %vm8129 = vmor %vm8127, %vm8128
  %v8130 = vsel %vm8129, %v8121, %v8126
  %v8131 = vrsqrt.pop %v7913
  %v8132 = vmul.f32 %v8131, %v7913
  %v8133 = vmul.f32 %v8132, %v8131
  %v8134 = vmul.f32 0.5, %v8133
  %v8135 = vsub.f32 1.5, %v8134
  %v8136 = vmul.f32 %v8131, %v8135
  %vm8137 = vweird.f32 %v7913
  %vm8138 = vweird.f32 %v8131
  %vm8139 = vmor %vm8137, %vm8138
  %v8140 = vsel %vm8139, %v8131, %v8136
  %v8141 = vrsqrt.pop %v7707
  %v8142 = vmul.f32 %v8141, %v7707
  %v8143 = vmul.f32 %v8142, %v8141
  %v8144 = vmul.f32 0.5, %v8143
  %v8145 = vsub.f32 1.5, %v8144
  %v8146 = vmul.f32 %v8141, %v8145
  %vm8147 = vweird.f32 %v7707
  %vm8148 = vweird.f32 %v8141
  %vm8149 = vmor %vm8147, %vm8148
  %v8150 = vsel %vm8149, %v8141, %v8146
  %v8151 = vrsqrt.pop %v7916
  %v8152 = vmul.f32 %v8151, %v7916
  %v8153 = vmul.f32 %v8152, %v8151
  %v8154 = vmul.f32 0.5, %v8153
  %v8155 = vsub.f32 1.5, %v8154
  %v8156 = vmul.f32 %v8151, %v8155
  %vm8157 = vweird.f32 %v7916
  %vm8158 = vweird.f32 %v8151
  %vm8159 = vmor %vm8157, %vm8158
  %v8160 = vsel %vm8159, %v8151, %v8156
  %v8161 = vrsqrt.pop %v7710
  %v8162 = vmul.f32 %v8161, %v7710
  %v8163 = vmul.f32 %v8162, %v8161
  %v8164 = vmul.f32 0.5, %v8163
  %v8165 = vsub.f32 1.5, %v8164
  %v8166 = vmul.f32 %v8161, %v8165
  %vm8167 = vweird.f32 %v7710
  %vm8168 = vweird.f32 %v8161
  %vm8169 = vmor %vm8167, %vm8168
  %v8170 = vsel %vm8169, %v8161, %v8166
  %v8171 = vrsqrt.pop %v7919
  %v8172 = vmul.f32 %v8171, %v7919
  %v8173 = vmul.f32 %v8172, %v8171
  %v8174 = vmul.f32 0.5, %v8173
  %v8175 = vsub.f32 1.5, %v8174
  %v8176 = vmul.f32 %v8171, %v8175
  %vm8177 = vweird.f32 %v7919
  %vm8178 = vweird.f32 %v8171
  %vm8179 = vmor %vm8177, %vm8178
  %v8180 = vsel %vm8179, %v8171, %v8176
  %v8181 = vrsqrt.pop %v7713
  %v8182 = vmul.f32 %v8181, %v7713
  %v8183 = vmul.f32 %v8182, %v8181
  %v8184 = vmul.f32 0.5, %v8183
  %v8185 = vsub.f32 1.5, %v8184
  %v8186 = vmul.f32 %v8181, %v8185
  %vm8187 = vweird.f32 %v7713
  %vm8188 = vweird.f32 %v8181
  %vm8189 = vmor %vm8187, %vm8188
  %v8190 = vsel %vm8189, %v8181, %v8186
  %v8191 = vrsqrt.pop %v7922
  %v8192 = vmul.f32 %v8191, %v7922
  %v8193 = vmul.f32 %v8192, %v8191
  %v8194 = vmul.f32 0.5, %v8193
  %v8195 = vsub.f32 1.5, %v8194
  %v8196 = vmul.f32 %v8191, %v8195
  %vm8197 = vweird.f32 %v7922
  %vm8198 = vweird.f32 %v8191
  %vm8199 = vmor %vm8197, %vm8198
  %v8200 = vsel %vm8199, %v8191, %v8196
  %v8201 = vrsqrt.pop %v7716
  %v8202 = vmul.f32 %v8201, %v7716
  %v8203 = vmul.f32 %v8202, %v8201
  %v8204 = vmul.f32 0.5, %v8203
  %v8205 = vsub.f32 1.5, %v8204
  %v8206 = vmul.f32 %v8201, %v8205
  %vm8207 = vweird.f32 %v7716
  %vm8208 = vweird.f32 %v8201
  %vm8209 = vmor %vm8207, %vm8208
  %v8210 = vsel %vm8209, %v8201, %v8206
  %v8211 = vrsqrt.pop %v7925
  %v8212 = vmul.f32 %v8211, %v7925
  %v8213 = vmul.f32 %v8212, %v8211
  %v8214 = vmul.f32 0.5, %v8213
  %v8215 = vsub.f32 1.5, %v8214
  %v8216 = vmul.f32 %v8211, %v8215
  %vm8217 = vweird.f32 %v7925
  %vm8218 = vweird.f32 %v8211
  %vm8219 = vmor %vm8217, %vm8218
  %v8220 = vsel %vm8219, %v8211, %v8216
  %v8221 = vrsqrt.pop %v7719
  %v8222 = vmul.f32 %v8221, %v7719
  %v8223 = vmul.f32 %v8222, %v8221
  %v8224 = vmul.f32 0.5, %v8223
  %v8225 = vsub.f32 1.5, %v8224
  %v8226 = vmul.f32 %v8221, %v8225
  %vm8227 = vweird.f32 %v7719
  %vm8228 = vweird.f32 %v8221
  %vm8229 = vmor %vm8227, %vm8228
  %v8230 = vsel %vm8229, %v8221, %v8226
  %v8231 = vrsqrt.pop %v7928
  %v8232 = vmul.f32 %v8231, %v7928
  %v8233 = vmul.f32 %v8232, %v8231
  %v8234 = vmul.f32 0.5, %v8233
  %v8235 = vsub.f32 1.5, %v8234
  %v8236 = vmul.f32 %v8231, %v8235
  %vm8237 = vweird.f32 %v7928
  %vm8238 = vweird.f32 %v8231
  %vm8239 = vmor %vm8237, %vm8238
  %v8240 = vsel %vm8239, %v8231, %v8236
  %v8241 = vrsqrt.pop %v7722
  %v8242 = vmul.f32 %v8241, %v7722
  %v8243 = vmul.f32 %v8242, %v8241
  %v8244 = vmul.f32 0.5, %v8243
  %v8245 = vsub.f32 1.5, %v8244
  %v8246 = vmul.f32 %v8241, %v8245
  %vm8247 = vweird.f32 %v7722
  %vm8248 = vweird.f32 %v8241
  %vm8249 = vmor %vm8247, %vm8248
  %v8250 = vsel %vm8249, %v8241, %v8246
  %v8251 = vrsqrt.pop %v7931
  %v8252 = vmul.f32 %v8251, %v7931
  %v8253 = vmul.f32 %v8252, %v8251
  %v8254 = vmul.f32 0.5, %v8253
  %v8255 = vsub.f32 1.5, %v8254
  %v8256 = vmul.f32 %v8251, %v8255
  %vm8257 = vweird.f32 %v7931
  %vm8258 = vweird.f32 %v8251
  %vm8259 = vmor %vm8257, %vm8258
  %v8260 = vsel %vm8259, %v8251, %v8256
  %v8261 = vrsqrt.pop %v7725
  %v8262 = vmul.f32 %v8261, %v7725
  %v8263 = vmul.f32 %v8262, %v8261
  %v8264 = vmul.f32 0.5, %v8263
  %v8265 = vsub.f32 1.5, %v8264
  %v8266 = vmul.f32 %v8261, %v8265
  %vm8267 = vweird.f32 %v7725
  %vm8268 = vweird.f32 %v8261
  %vm8269 = vmor %vm8267, %vm8268
  %v8270 = vsel %vm8269, %v8261, %v8266
  %v8271 = vrsqrt.pop %v7934
  %v8272 = vmul.f32 %v8271, %v7934
  %v8273 = vmul.f32 %v8272, %v8271
  %v8274 = vmul.f32 0.5, %v8273
  %v8275 = vsub.f32 1.5, %v8274
  %v8276 = vmul.f32 %v8271, %v8275
  %vm8277 = vweird.f32 %v7934
  %vm8278 = vweird.f32 %v8271
  %vm8279 = vmor %vm8277, %vm8278
  %v8280 = vsel %vm8279, %v8271, %v8276
  %v8281 = vrsqrt.pop %v7728
  %v8282 = vmul.f32 %v8281, %v7728
  %v8283 = vmul.f32 %v8282, %v8281
  %v8284 = vmul.f32 0.5, %v8283
  %v8285 = vsub.f32 1.5, %v8284
  %v8286 = vmul.f32 %v8281, %v8285
  %vm8287 = vweird.f32 %v7728
  %vm8288 = vweird.f32 %v8281
  %vm8289 = vmor %vm8287, %vm8288
  %v8290 = vsel %vm8289, %v8281, %v8286
  %v8291 = vrsqrt.pop %v7937
  %v8292 = vmul.f32 %v8291, %v7937
  %v8293 = vmul.f32 %v8292, %v8291
  %v8294 = vmul.f32 0.5, %v8293
  %v8295 = vsub.f32 1.5, %v8294
  %v8296 = vmul.f32 %v8291, %v8295
  %vm8297 = vweird.f32 %v7937
  %vm8298 = vweird.f32 %v8291
  %vm8299 = vmor %vm8297, %vm8298
  %v8300 = vsel %vm8299, %v8291, %v8296
  %v8301 = vrsqrt.pop %v7731
  %v8302 = vmul.f32 %v8301, %v7731
  %v8303 = vmul.f32 %v8302, %v8301
  %v8304 = vmul.f32 0.5, %v8303
  %v8305 = vsub.f32 1.5, %v8304
  %v8306 = vmul.f32 %v8301, %v8305
  %vm8307 = vweird.f32 %v7731
  %vm8308 = vweird.f32 %v8301
  %vm8309 = vmor %vm8307, %vm8308
  %v8310 = vsel %vm8309, %v8301, %v8306
  %v8311 = vrsqrt.pop %v7940
  %v8312 = vmul.f32 %v8311, %v7940
  %v8313 = vmul.f32 %v8312, %v8311
  %v8314 = vmul.f32 0.5, %v8313
  %v8315 = vsub.f32 1.5, %v8314
  %v8316 = vmul.f32 %v8311, %v8315
  %vm8317 = vweird.f32 %v7940
  %vm8318 = vweird.f32 %v8311
  %vm8319 = vmor %vm8317, %vm8318
  %v8320 = vsel %vm8319, %v8311, %v8316
  %v8321 = vrsqrt.pop %v7734
  %v8322 = vmul.f32 %v8321, %v7734
  %v8323 = vmul.f32 %v8322, %v8321
  %v8324 = vmul.f32 0.5, %v8323
  %v8325 = vsub.f32 1.5, %v8324
  %v8326 = vmul.f32 %v8321, %v8325
  %vm8327 = vweird.f32 %v7734
  %vm8328 = vweird.f32 %v8321
  %vm8329 = vmor %vm8327, %vm8328
  %v8330 = vsel %vm8329, %v8321, %v8326
  %v8331 = vrsqrt.pop %v7943
  %v8332 = vmul.f32 %v8331, %v7943
  %v8333 = vmul.f32 %v8332, %v8331
  %v8334 = vmul.f32 0.5, %v8333
  %v8335 = vsub.f32 1.5, %v8334
  %v8336 = vmul.f32 %v8331, %v8335
  %vm8337 = vweird.f32 %v7943
  %vm8338 = vweird.f32 %v8331
  %vm8339 = vmor %vm8337, %vm8338
  %v8340 = vsel %vm8339, %v8331, %v8336
  %v8341 = vrsqrt.pop %v7737
  %v8342 = vmul.f32 %v8341, %v7737
  %v8343 = vmul.f32 %v8342, %v8341
  %v8344 = vmul.f32 0.5, %v8343
  %v8345 = vsub.f32 1.5, %v8344
  %v8346 = vmul.f32 %v8341, %v8345
  %vm8347 = vweird.f32 %v7737
  %vm8348 = vweird.f32 %v8341
  %vm8349 = vmor %vm8347, %vm8348
  %v8350 = vsel %vm8349, %v8341, %v8346
  %v8351 = vrsqrt.pop %v7946
  %v8352 = vmul.f32 %v8351, %v7946
  %v8353 = vmul.f32 %v8352, %v8351
  %v8354 = vmul.f32 0.5, %v8353
  %v8355 = vsub.f32 1.5, %v8354
  %v8356 = vmul.f32 %v8351, %v8355
  %vm8357 = vweird.f32 %v7946
  %vm8358 = vweird.f32 %v8351
  %vm8359 = vmor %vm8357, %vm8358
  %v8360 = vsel %vm8359, %v8351, %v8356
  %v8361 = vrsqrt.pop %v7740
  %v8362 = vmul.f32 %v8361, %v7740
  %v8363 = vmul.f32 %v8362, %v8361
  %v8364 = vmul.f32 0.5, %v8363
  %v8365 = vsub.f32 1.5, %v8364
  %v8366 = vmul.f32 %v8361, %v8365
  %vm8367 = vweird.f32 %v7740
  %vm8368 = vweird.f32 %v8361
  %vm8369 = vmor %vm8367, %vm8368
  %v8370 = vsel %vm8369, %v8361, %v8366
  %v8371 = vrsqrt.pop %v7949
  %v8372 = vmul.f32 %v8371, %v7949
  %v8373 = vmul.f32 %v8372, %v8371
  %v8374 = vmul.f32 0.5, %v8373
  %v8375 = vsub.f32 1.5, %v8374
  %v8376 = vmul.f32 %v8371, %v8375
  %vm8377 = vweird.f32 %v7949
  %vm8378 = vweird.f32 %v8371
  %vm8379 = vmor %vm8377, %vm8378
  %v8380 = vsel %vm8379, %v8371, %v8376
  %v8381 = vrsqrt.pop %v7743
  %v8382 = vmul.f32 %v8381, %v7743
  %v8383 = vmul.f32 %v8382, %v8381
  %v8384 = vmul.f32 0.5, %v8383
  %v8385 = vsub.f32 1.5, %v8384
  %v8386 = vmul.f32 %v8381, %v8385
  %vm8387 = vweird.f32 %v7743
  %vm8388 = vweird.f32 %v8381
  %vm8389 = vmor %vm8387, %vm8388
  %v8390 = vsel %vm8389, %v8381, %v8386
  %v8391 = vrsqrt.pop %v7952
  %v8392 = vmul.f32 %v8391, %v7952
  %v8393 = vmul.f32 %v8392, %v8391
  %v8394 = vmul.f32 0.5, %v8393
  %v8395 = vsub.f32 1.5, %v8394
  %v8396 = vmul.f32 %v8391, %v8395
  %vm8397 = vweird.f32 %v7952
  %vm8398 = vweird.f32 %v8391
  %vm8399 = vmor %vm8397, %vm8398
  %v8400 = vsel %vm8399, %v8391, %v8396
  %v8401 = vrsqrt.pop %v7746
  %v8402 = vmul.f32 %v8401, %v7746
  %v8403 = vmul.f32 %v8402, %v8401
  %v8404 = vmul.f32 0.5, %v8403
  %v8405 = vsub.f32 1.5, %v8404
  %v8406 = vmul.f32 %v8401, %v8405
  %vm8407 = vweird.f32 %v7746
  %vm8408 = vweird.f32 %v8401
  %vm8409 = vmor %vm8407, %vm8408
  %v8410 = vsel %vm8409, %v8401, %v8406
  %v8411 = vrsqrt.pop %v7955
  %v8412 = vmul.f32 %v8411, %v7955
  %v8413 = vmul.f32 %v8412, %v8411
  %v8414 = vmul.f32 0.5, %v8413
  %v8415 = vsub.f32 1.5, %v8414
  %v8416 = vmul.f32 %v8411, %v8415
  %vm8417 = vweird.f32 %v7955
  %vm8418 = vweird.f32 %v8411
  %vm8419 = vmor %vm8417, %vm8418
  %v8420 = vsel %vm8419, %v8411, %v8416
  %v8421 = vrsqrt.pop %v7749
  %v8422 = vmul.f32 %v8421, %v7749
  %v8423 = vmul.f32 %v8422, %v8421
  %v8424 = vmul.f32 0.5, %v8423
  %v8425 = vsub.f32 1.5, %v8424
  %v8426 = vmul.f32 %v8421, %v8425
  %vm8427 = vweird.f32 %v7749
  %vm8428 = vweird.f32 %v8421
  %vm8429 = vmor %vm8427, %vm8428
  %v8430 = vsel %vm8429, %v8421, %v8426
  %v8431 = vrsqrt.pop %v7958
  %v8432 = vmul.f32 %v8431, %v7958
  %v8433 = vmul.f32 %v8432, %v8431
  %v8434 = vmul.f32 0.5, %v8433
  %v8435 = vsub.f32 1.5, %v8434
  %v8436 = vmul.f32 %v8431, %v8435
  %vm8437 = vweird.f32 %v7958
  %vm8438 = vweird.f32 %v8431
  %vm8439 = vmor %vm8437, %vm8438
  %v8440 = vsel %vm8439, %v8431, %v8436
  %v8441 = vrsqrt.pop %v7752
  %v8442 = vmul.f32 %v8441, %v7752
  %v8443 = vmul.f32 %v8442, %v8441
  %v8444 = vmul.f32 0.5, %v8443
  %v8445 = vsub.f32 1.5, %v8444
  %v8446 = vmul.f32 %v8441, %v8445
  %vm8447 = vweird.f32 %v7752
  %vm8448 = vweird.f32 %v8441
  %vm8449 = vmor %vm8447, %vm8448
  %v8450 = vsel %vm8449, %v8441, %v8446
  %v8451 = vrsqrt.pop %v7961
  %v8452 = vmul.f32 %v8451, %v7961
  %v8453 = vmul.f32 %v8452, %v8451
  %v8454 = vmul.f32 0.5, %v8453
  %v8455 = vsub.f32 1.5, %v8454
  %v8456 = vmul.f32 %v8451, %v8455
  %vm8457 = vweird.f32 %v7961
  %vm8458 = vweird.f32 %v8451
  %vm8459 = vmor %vm8457, %vm8458
  %v8460 = vsel %vm8459, %v8451, %v8456
  %v8461 = vrsqrt.pop %v7755
  %v8462 = vmul.f32 %v8461, %v7755
  %v8463 = vmul.f32 %v8462, %v8461
  %v8464 = vmul.f32 0.5, %v8463
  %v8465 = vsub.f32 1.5, %v8464
  %v8466 = vmul.f32 %v8461, %v8465
  %vm8467 = vweird.f32 %v7755
  %vm8468 = vweird.f32 %v8461
  %vm8469 = vmor %vm8467, %vm8468
  %v8470 = vsel %vm8469, %v8461, %v8466
  %v8471 = vrsqrt.pop %v7964
  %v8472 = vmul.f32 %v8471, %v7964
  %v8473 = vmul.f32 %v8472, %v8471
  %v8474 = vmul.f32 0.5, %v8473
  %v8475 = vsub.f32 1.5, %v8474
  %v8476 = vmul.f32 %v8471, %v8475
  %vm8477 = vweird.f32 %v7964
  %vm8478 = vweird.f32 %v8471
  %vm8479 = vmor %vm8477, %vm8478
  %v8480 = vsel %vm8479, %v8471, %v8476
  %v8481 = vrsqrt.pop %v7758
  %v8482 = vmul.f32 %v8481, %v7758
  %v8483 = vmul.f32 %v8482, %v8481
  %v8484 = vmul.f32 0.5, %v8483
  %v8485 = vsub.f32 1.5, %v8484
  %v8486 = vmul.f32 %v8481, %v8485
  %vm8487 = vweird.f32 %v7758
  %vm8488 = vweird.f32 %v8481
  %vm8489 = vmor %vm8487, %vm8488
  %v8490 = vsel %vm8489, %v8481, %v8486
  %v8491 = vrsqrt.pop %v7967
  %v8492 = vmul.f32 %v8491, %v7967
  %v8493 = vmul.f32 %v8492, %v8491
  %v8494 = vmul.f32 0.5, %v8493
  %v8495 = vsub.f32 1.5, %v8494
  %v8496 = vmul.f32 %v8491, %v8495
  %vm8497 = vweird.f32 %v7967
  %vm8498 = vweird.f32 %v8491
  %vm8499 = vmor %vm8497, %vm8498
  %v8500 = vsel %vm8499, %v8491, %v8496
  %v8501 = vrsqrt.pop %v7761
  %v8502 = vmul.f32 %v8501, %v7761
  %v8503 = vmul.f32 %v8502, %v8501
  %v8504 = vmul.f32 0.5, %v8503
  %v8505 = vsub.f32 1.5, %v8504
  %v8506 = vmul.f32 %v8501, %v8505
  %vm8507 = vweird.f32 %v7761
  %vm8508 = vweird.f32 %v8501
  %vm8509 = vmor %vm8507, %vm8508
  %v8510 = vsel %vm8509, %v8501, %v8506
  %v8511 = vrsqrt.pop %v7970
  %v8512 = vmul.f32 %v8511, %v7970
  %v8513 = vmul.f32 %v8512, %v8511
  %v8514 = vmul.f32 0.5, %v8513
  %v8515 = vsub.f32 1.5, %v8514
  %v8516 = vmul.f32 %v8511, %v8515
  %vm8517 = vweird.f32 %v7970
  %vm8518 = vweird.f32 %v8511
  %vm8519 = vmor %vm8517, %vm8518
  %v8520 = vsel %vm8519, %v8511, %v8516
  %v8521 = vrsqrt.pop %v7764
  %v8522 = vmul.f32 %v8521, %v7764
  %v8523 = vmul.f32 %v8522, %v8521
  %v8524 = vmul.f32 0.5, %v8523
  %v8525 = vsub.f32 1.5, %v8524
  %v8526 = vmul.f32 %v8521, %v8525
  %vm8527 = vweird.f32 %v7764
  %vm8528 = vweird.f32 %v8521
  %vm8529 = vmor %vm8527, %vm8528
  %v8530 = vsel %vm8529, %v8521, %v8526
  %v8531 = vrsqrt.pop %v7973
  %v8532 = vmul.f32 %v8531, %v7973
  %v8533 = vmul.f32 %v8532, %v8531
  %v8534 = vmul.f32 0.5, %v8533
  %v8535 = vsub.f32 1.5, %v8534
  %v8536 = vmul.f32 %v8531, %v8535
  %vm8537 = vweird.f32 %v7973
  %vm8538 = vweird.f32 %v8531
  %vm8539 = vmor %vm8537, %vm8538
  %v8540 = vsel %vm8539, %v8531, %v8536
  %v8541 = vrsqrt.pop %v7767
  %v8542 = vmul.f32 %v8541, %v7767
  %v8543 = vmul.f32 %v8542, %v8541
  %v8544 = vmul.f32 0.5, %v8543
  %v8545 = vsub.f32 1.5, %v8544
  %v8546 = vmul.f32 %v8541, %v8545
  %vm8547 = vweird.f32 %v7767
  %vm8548 = vweird.f32 %v8541
  %vm8549 = vmor %vm8547, %vm8548
  %v8550 = vsel %vm8549, %v8541, %v8546
  %v8551 = vrsqrt.pop %v7976
  %v8552 = vmul.f32 %v8551, %v7976
  %v8553 = vmul.f32 %v8552, %v8551
  %v8554 = vmul.f32 0.5, %v8553
  %v8555 = vsub.f32 1.5, %v8554
  %v8556 = vmul.f32 %v8551, %v8555
  %vm8557 = vweird.f32 %v7976
  %vm8558 = vweird.f32 %v8551
  %vm8559 = vmor %vm8557, %vm8558
  %v8560 = vsel %vm8559, %v8551, %v8556
  %v8561 = vrsqrt.pop %v7770
  %v8562 = vmul.f32 %v8561, %v7770
  %v8563 = vmul.f32 %v8562, %v8561
  %v8564 = vmul.f32 0.5, %v8563
  %v8565 = vsub.f32 1.5, %v8564
  %v8566 = vmul.f32 %v8561, %v8565
  %vm8567 = vweird.f32 %v7770
  %vm8568 = vweird.f32 %v8561
  %vm8569 = vmor %vm8567, %vm8568
  %v8570 = vsel %vm8569, %v8561, %v8566
  %v8571 = vrsqrt.pop %v7979
  %v8572 = vmul.f32 %v8571, %v7979
  %v8573 = vmul.f32 %v8572, %v8571
  %v8574 = vmul.f32 0.5, %v8573
  %v8575 = vsub.f32 1.5, %v8574
  %v8576 = vmul.f32 %v8571, %v8575
  %vm8577 = vweird.f32 %v7979
  %vm8578 = vweird.f32 %v8571
  %vm8579 = vmor %vm8577, %vm8578
  %v8580 = vsel %vm8579, %v8571, %v8576
  %v8581 = vrsqrt.pop %v7773
  %v8582 = vmul.f32 %v8581, %v7773
  %v8583 = vmul.f32 %v8582, %v8581
  %v8584 = vmul.f32 0.5, %v8583
  %v8585 = vsub.f32 1.5, %v8584
  %v8586 = vmul.f32 %v8581, %v8585
  %vm8587 = vweird.f32 %v7773
  %vm8588 = vweird.f32 %v8581
  %vm8589 = vmor %vm8587, %vm8588
  %v8590 = vsel %vm8589, %v8581, %v8586
  %v8591 = vrsqrt.pop %v7982
  %v8592 = vmul.f32 %v8591, %v7982
  %v8593 = vmul.f32 %v8592, %v8591
  %v8594 = vmul.f32 0.5, %v8593
  %v8595 = vsub.f32 1.5, %v8594
  %v8596 = vmul.f32 %v8591, %v8595
  %vm8597 = vweird.f32 %v7982
  %vm8598 = vweird.f32 %v8591
  %vm8599 = vmor %vm8597, %vm8598
  %v8600 = vsel %vm8599, %v8591, %v8596
  %v8601 = vrsqrt.pop %v7776
  %v8602 = vmul.f32 %v8601, %v7776
  %v8603 = vmul.f32 %v8602, %v8601
  %v8604 = vmul.f32 0.5, %v8603
  %v8605 = vsub.f32 1.5, %v8604
  %v8606 = vmul.f32 %v8601, %v8605
  %vm8607 = vweird.f32 %v7776
  %vm8608 = vweird.f32 %v8601
  %vm8609 = vmor %vm8607, %vm8608
  %v8610 = vsel %vm8609, %v8601, %v8606
  %v8611 = vrsqrt.pop %v7985
  %v8612 = vmul.f32 %v8611, %v7985
  %v8613 = vmul.f32 %v8612, %v8611
  %v8614 = vmul.f32 0.5, %v8613
  %v8615 = vsub.f32 1.5, %v8614
  %v8616 = vmul.f32 %v8611, %v8615
  %vm8617 = vweird.f32 %v7985
  %vm8618 = vweird.f32 %v8611
  %vm8619 = vmor %vm8617, %vm8618
  %v8620 = vsel %vm8619, %v8611, %v8616
  %v8621 = vrsqrt.pop %v7779
  %v8622 = vmul.f32 %v8621, %v7779
  %v8623 = vmul.f32 %v8622, %v8621
  %v8624 = vmul.f32 0.5, %v8623
  %v8625 = vsub.f32 1.5, %v8624
  %v8626 = vmul.f32 %v8621, %v8625
  %vm8627 = vweird.f32 %v7779
  %vm8628 = vweird.f32 %v8621
  %vm8629 = vmor %vm8627, %vm8628
  %v8630 = vsel %vm8629, %v8621, %v8626
  %v8631 = vrsqrt.pop %v7988
  %v8632 = vmul.f32 %v8631, %v7988
  %v8633 = vmul.f32 %v8632, %v8631
  %v8634 = vmul.f32 0.5, %v8633
  %v8635 = vsub.f32 1.5, %v8634
  %v8636 = vmul.f32 %v8631, %v8635
  %vm8637 = vweird.f32 %v7988
  %vm8638 = vweird.f32 %v8631
  %vm8639 = vmor %vm8637, %vm8638
  %v8640 = vsel %vm8639, %v8631, %v8636
  %v8641 = vrsqrt.pop %v7782
  %v8642 = vmul.f32 %v8641, %v7782
  %v8643 = vmul.f32 %v8642, %v8641
  %v8644 = vmul.f32 0.5, %v8643
  %v8645 = vsub.f32 1.5, %v8644
  %v8646 = vmul.f32 %v8641, %v8645
  %vm8647 = vweird.f32 %v7782
  %vm8648 = vweird.f32 %v8641
  %vm8649 = vmor %vm8647, %vm8648
  %v8650 = vsel %vm8649, %v8641, %v8646
  %v8651 = vrsqrt.pop %v7991
  %v8652 = vmul.f32 %v8651, %v7991
  %v8653 = vmul.f32 %v8652, %v8651
  %v8654 = vmul.f32 0.5, %v8653
  %v8655 = vsub.f32 1.5, %v8654
  %v8656 = vmul.f32 %v8651, %v8655
  %vm8657 = vweird.f32 %v7991
  %vm8658 = vweird.f32 %v8651
  %vm8659 = vmor %vm8657, %vm8658
  %v8660 = vsel %vm8659, %v8651, %v8656
  %v8661 = vrsqrt.pop %v7785
  %v8662 = vmul.f32 %v8661, %v7785
  %v8663 = vmul.f32 %v8662, %v8661
  %v8664 = vmul.f32 0.5, %v8663
  %v8665 = vsub.f32 1.5, %v8664
  %v8666 = vmul.f32 %v8661, %v8665
  %vm8667 = vweird.f32 %v7785
  %vm8668 = vweird.f32 %v8661
  %vm8669 = vmor %vm8667, %vm8668
  %v8670 = vsel %vm8669, %v8661, %v8666
  %v8671 = vrsqrt.pop %v7994
  %v8672 = vmul.f32 %v8671, %v7994
  %v8673 = vmul.f32 %v8672, %v8671
  %v8674 = vmul.f32 0.5, %v8673
  %v8675 = vsub.f32 1.5, %v8674
  %v8676 = vmul.f32 %v8671, %v8675
  %vm8677 = vweird.f32 %v7994
  %vm8678 = vweird.f32 %v8671
  %vm8679 = vmor %vm8677, %vm8678
  %v8680 = vsel %vm8679, %v8671, %v8676
  %v8681 = vrsqrt.pop %v7788
  %v8682 = vmul.f32 %v8681, %v7788
  %v8683 = vmul.f32 %v8682, %v8681
  %v8684 = vmul.f32 0.5, %v8683
  %v8685 = vsub.f32 1.5, %v8684
  %v8686 = vmul.f32 %v8681, %v8685
  %vm8687 = vweird.f32 %v7788
  %vm8688 = vweird.f32 %v8681
  %vm8689 = vmor %vm8687, %vm8688
  %v8690 = vsel %vm8689, %v8681, %v8686
  %v8691 = vrsqrt.pop %v7997
  %v8692 = vmul.f32 %v8691, %v7997
  %v8693 = vmul.f32 %v8692, %v8691
  %v8694 = vmul.f32 0.5, %v8693
  %v8695 = vsub.f32 1.5, %v8694
  %v8696 = vmul.f32 %v8691, %v8695
  %vm8697 = vweird.f32 %v7997
  %vm8698 = vweird.f32 %v8691
  %vm8699 = vmor %vm8697, %vm8698
  %v8700 = vsel %vm8699, %v8691, %v8696
  %v8701 = vrsqrt.pop %v7791
  %v8702 = vmul.f32 %v8701, %v7791
  %v8703 = vmul.f32 %v8702, %v8701
  %v8704 = vmul.f32 0.5, %v8703
  %v8705 = vsub.f32 1.5, %v8704
  %v8706 = vmul.f32 %v8701, %v8705
  %vm8707 = vweird.f32 %v7791
  %vm8708 = vweird.f32 %v8701
  %vm8709 = vmor %vm8707, %vm8708
  %v8710 = vsel %vm8709, %v8701, %v8706
  %v8711 = vrsqrt.pop %v8000
  %v8712 = vmul.f32 %v8711, %v8000
  %v8713 = vmul.f32 %v8712, %v8711
  %v8714 = vmul.f32 0.5, %v8713
  %v8715 = vsub.f32 1.5, %v8714
  %v8716 = vmul.f32 %v8711, %v8715
  %vm8717 = vweird.f32 %v8000
  %vm8718 = vweird.f32 %v8711
  %vm8719 = vmor %vm8717, %vm8718
  %v8720 = vsel %vm8719, %v8711, %v8716
  %v8721 = vrsqrt.pop %v7794
  %v8722 = vmul.f32 %v8721, %v7794
  %v8723 = vmul.f32 %v8722, %v8721
  %v8724 = vmul.f32 0.5, %v8723
  %v8725 = vsub.f32 1.5, %v8724
  %v8726 = vmul.f32 %v8721, %v8725
  %vm8727 = vweird.f32 %v7794
  %vm8728 = vweird.f32 %v8721
  %vm8729 = vmor %vm8727, %vm8728
  %v8730 = vsel %vm8729, %v8721, %v8726
  %v8731 = vrsqrt.pop %v8003
  %v8732 = vmul.f32 %v8731, %v8003
  %v8733 = vmul.f32 %v8732, %v8731
  %v8734 = vmul.f32 0.5, %v8733
  %v8735 = vsub.f32 1.5, %v8734
  %v8736 = vmul.f32 %v8731, %v8735
  %vm8737 = vweird.f32 %v8003
  %vm8738 = vweird.f32 %v8731
  %vm8739 = vmor %vm8737, %vm8738
  %v8740 = vsel %vm8739, %v8731, %v8736
  %v8741 = vrsqrt.pop %v7797
  %v8742 = vmul.f32 %v8741, %v7797
  %v8743 = vmul.f32 %v8742, %v8741
  %v8744 = vmul.f32 0.5, %v8743
  %v8745 = vsub.f32 1.5, %v8744
  %v8746 = vmul.f32 %v8741, %v8745
  %vm8747 = vweird.f32 %v7797
  %vm8748 = vweird.f32 %v8741
  %vm8749 = vmor %vm8747, %vm8748
  %v8750 = vsel %vm8749, %v8741, %v8746
  %v8751 = vrsqrt.pop %v8006
  %v8752 = vmul.f32 %v8751, %v8006
  %v8753 = vmul.f32 %v8752, %v8751
  %v8754 = vmul.f32 0.5, %v8753
  %v8755 = vsub.f32 1.5, %v8754
  %v8756 = vmul.f32 %v8751, %v8755
  %vm8757 = vweird.f32 %v8006
  %vm8758 = vweird.f32 %v8751
  %vm8759 = vmor %vm8757, %vm8758
  %v8760 = vsel %vm8759, %v8751, %v8756
  %v8761 = vrsqrt.pop %v7800
  %v8762 = vmul.f32 %v8761, %v7800
  %v8763 = vmul.f32 %v8762, %v8761
  %v8764 = vmul.f32 0.5, %v8763
  %v8765 = vsub.f32 1.5, %v8764
  %v8766 = vmul.f32 %v8761, %v8765
  %vm8767 = vweird.f32 %v7800
  %vm8768 = vweird.f32 %v8761
  %vm8769 = vmor %vm8767, %vm8768
  %v8770 = vsel %vm8769, %v8761, %v8766
  %v8771 = vrsqrt.pop %v8009
  %v8772 = vmul.f32 %v8771, %v8009
  %v8773 = vmul.f32 %v8772, %v8771
  %v8774 = vmul.f32 0.5, %v8773
  %v8775 = vsub.f32 1.5, %v8774
  %v8776 = vmul.f32 %v8771, %v8775
  %vm8777 = vweird.f32 %v8009
  %vm8778 = vweird.f32 %v8771
  %vm8779 = vmor %vm8777, %vm8778
  %v8780 = vsel %vm8779, %v8771, %v8776
  %v8781 = vrsqrt.pop %v7803
  %v8782 = vmul.f32 %v8781, %v7803
  %v8783 = vmul.f32 %v8782, %v8781
  %v8784 = vmul.f32 0.5, %v8783
  %v8785 = vsub.f32 1.5, %v8784
  %v8786 = vmul.f32 %v8781, %v8785
  %vm8787 = vweird.f32 %v7803
  %vm8788 = vweird.f32 %v8781
  %vm8789 = vmor %vm8787, %vm8788
  %v8790 = vsel %vm8789, %v8781, %v8786
  %v8791 = vrsqrt.pop %v8012
  %v8792 = vmul.f32 %v8791, %v8012
  %v8793 = vmul.f32 %v8792, %v8791
  %v8794 = vmul.f32 0.5, %v8793
  %v8795 = vsub.f32 1.5, %v8794
  %v8796 = vmul.f32 %v8791, %v8795
  %vm8797 = vweird.f32 %v8012
  %vm8798 = vweird.f32 %v8791
  %vm8799 = vmor %vm8797, %vm8798
  %v8800 = vsel %vm8799, %v8791, %v8796
  %v8801 = vrsqrt.pop %v7806
  %v8802 = vmul.f32 %v8801, %v7806
  %v8803 = vmul.f32 %v8802, %v8801
  %v8804 = vmul.f32 0.5, %v8803
  %v8805 = vsub.f32 1.5, %v8804
  %v8806 = vmul.f32 %v8801, %v8805
  %vm8807 = vweird.f32 %v7806
  %vm8808 = vweird.f32 %v8801
  %vm8809 = vmor %vm8807, %vm8808
  %v8810 = vsel %vm8809, %v8801, %v8806
  %v8811 = vrsqrt.pop %v8015
  %v8812 = vmul.f32 %v8811, %v8015
  %v8813 = vmul.f32 %v8812, %v8811
  %v8814 = vmul.f32 0.5, %v8813
  %v8815 = vsub.f32 1.5, %v8814
  %v8816 = vmul.f32 %v8811, %v8815
  %vm8817 = vweird.f32 %v8015
  %vm8818 = vweird.f32 %v8811
  %vm8819 = vmor %vm8817, %vm8818
  %v8820 = vsel %vm8819, %v8811, %v8816
  %v8821 = vrsqrt.pop %v7809
  %v8822 = vmul.f32 %v8821, %v7809
  %v8823 = vmul.f32 %v8822, %v8821
  %v8824 = vmul.f32 0.5, %v8823
  %v8825 = vsub.f32 1.5, %v8824
  %v8826 = vmul.f32 %v8821, %v8825
  %vm8827 = vweird.f32 %v7809
  %vm8828 = vweird.f32 %v8821
  %vm8829 = vmor %vm8827, %vm8828
  %v8830 = vsel %vm8829, %v8821, %v8826
  %v8831 = vrsqrt.pop %v8018
  %v8832 = vmul.f32 %v8831, %v8018
  %v8833 = vmul.f32 %v8832, %v8831
  %v8834 = vmul.f32 0.5, %v8833
  %v8835 = vsub.f32 1.5, %v8834
  %v8836 = vmul.f32 %v8831, %v8835
  %vm8837 = vweird.f32 %v8018
  %vm8838 = vweird.f32 %v8831
  %vm8839 = vmor %vm8837, %vm8838
  %v8840 = vsel %vm8839, %v8831, %v8836
  %v8841 = vrsqrt.pop %v7812
  %v8842 = vmul.f32 %v8841, %v7812
  %v8843 = vmul.f32 %v8842, %v8841
  %v8844 = vmul.f32 0.5, %v8843
  %v8845 = vsub.f32 1.5, %v8844
  %v8846 = vmul.f32 %v8841, %v8845
  %vm8847 = vweird.f32 %v7812
  %vm8848 = vweird.f32 %v8841
  %vm8849 = vmor %vm8847, %vm8848
  %v8850 = vsel %vm8849, %v8841, %v8846
  %v8851 = vrsqrt.pop %v8021
  %v8852 = vmul.f32 %v8851, %v8021
  %v8853 = vmul.f32 %v8852, %v8851
  %v8854 = vmul.f32 0.5, %v8853
  %v8855 = vsub.f32 1.5, %v8854
  %v8856 = vmul.f32 %v8851, %v8855
  %vm8857 = vweird.f32 %v8021
  %vm8858 = vweird.f32 %v8851
  %vm8859 = vmor %vm8857, %vm8858
  %v8860 = vsel %vm8859, %v8851, %v8856
  %v8861 = vrsqrt.pop %v7815
  %v8862 = vmul.f32 %v8861, %v7815
  %v8863 = vmul.f32 %v8862, %v8861
  %v8864 = vmul.f32 0.5, %v8863
  %v8865 = vsub.f32 1.5, %v8864
  %v8866 = vmul.f32 %v8861, %v8865
  %vm8867 = vweird.f32 %v7815
  %vm8868 = vweird.f32 %v8861
  %vm8869 = vmor %vm8867, %vm8868
  %v8870 = vsel %vm8869, %v8861, %v8866
  %v8871 = vrsqrt.pop %v8024
  %v8872 = vmul.f32 %v8871, %v8024
  %v8873 = vmul.f32 %v8872, %v8871
  %v8874 = vmul.f32 0.5, %v8873
  %v8875 = vsub.f32 1.5, %v8874
  %v8876 = vmul.f32 %v8871, %v8875
  %vm8877 = vweird.f32 %v8024
  %vm8878 = vweird.f32 %v8871
  %vm8879 = vmor %vm8877, %vm8878
  %v8880 = vsel %vm8879, %v8871, %v8876
  %v8881 = vrsqrt.pop %v7818
  %v8882 = vmul.f32 %v8881, %v7818
  %v8883 = vmul.f32 %v8882, %v8881
  %v8884 = vmul.f32 0.5, %v8883
  %v8885 = vsub.f32 1.5, %v8884
  %v8886 = vmul.f32 %v8881, %v8885
  %vm8887 = vweird.f32 %v7818
  %vm8888 = vweird.f32 %v8881
  %vm8889 = vmor %vm8887, %vm8888
  %v8890 = vsel %vm8889, %v8881, %v8886
  %v8891 = vrsqrt.pop %v8027
  %v8892 = vmul.f32 %v8891, %v8027
  %v8893 = vmul.f32 %v8892, %v8891
  %v8894 = vmul.f32 0.5, %v8893
  %v8895 = vsub.f32 1.5, %v8894
  %v8896 = vmul.f32 %v8891, %v8895
  %vm8897 = vweird.f32 %v8027
  %vm8898 = vweird.f32 %v8891
  %vm8899 = vmor %vm8897, %vm8898
  %v8900 = vsel %vm8899, %v8891, %v8896
  %v8901 = vrsqrt.pop %v7821
  %v8902 = vmul.f32 %v8901, %v7821
  %v8903 = vmul.f32 %v8902, %v8901
  %v8904 = vmul.f32 0.5, %v8903
  %v8905 = vsub.f32 1.5, %v8904
  %v8906 = vmul.f32 %v8901, %v8905
  %vm8907 = vweird.f32 %v7821
  %vm8908 = vweird.f32 %v8901
  %vm8909 = vmor %vm8907, %vm8908
  %v8910 = vsel %vm8909, %v8901, %v8906
  %v8911 = vrsqrt.pop %v8030
  %v8912 = vmul.f32 %v8911, %v8030
  %v8913 = vmul.f32 %v8912, %v8911
  %v8914 = vmul.f32 0.5, %v8913
  %v8915 = vsub.f32 1.5, %v8914
  %v8916 = vmul.f32 %v8911, %v8915
  %vm8917 = vweird.f32 %v8030
  %vm8918 = vweird.f32 %v8911
  %vm8919 = vmor %vm8917, %vm8918
  %v8920 = vsel %vm8919, %v8911, %v8916
  %v8921 = vrsqrt.pop %v7824
  %v8922 = vmul.f32 %v8921, %v7824
  %v8923 = vmul.f32 %v8922, %v8921
  %v8924 = vmul.f32 0.5, %v8923
  %v8925 = vsub.f32 1.5, %v8924
  %v8926 = vmul.f32 %v8921, %v8925
  %vm8927 = vweird.f32 %v7824
  %vm8928 = vweird.f32 %v8921
  %vm8929 = vmor %vm8927, %vm8928
  %v8930 = vsel %vm8929, %v8921, %v8926
  %v8931 = vrsqrt.pop %v8033
  %v8932 = vmul.f32 %v8931, %v8033
  %v8933 = vmul.f32 %v8932, %v8931
  %v8934 = vmul.f32 0.5, %v8933
  %v8935 = vsub.f32 1.5, %v8934
  %v8936 = vmul.f32 %v8931, %v8935
  %vm8937 = vweird.f32 %v8033
  %vm8938 = vweird.f32 %v8931
  %vm8939 = vmor %vm8937, %vm8938
  %v8940 = vsel %vm8939, %v8931, %v8936
  %v8941 = vrsqrt.pop %v7827
  %v8942 = vmul.f32 %v8941, %v7827
  %v8943 = vmul.f32 %v8942, %v8941
  %v8944 = vmul.f32 0.5, %v8943
  %v8945 = vsub.f32 1.5, %v8944
  %v8946 = vmul.f32 %v8941, %v8945
  %vm8947 = vweird.f32 %v7827
  %vm8948 = vweird.f32 %v8941
  %vm8949 = vmor %vm8947, %vm8948
  %v8950 = vsel %vm8949, %v8941, %v8946
  %v8951 = vrsqrt.pop %v8036
  %v8952 = vmul.f32 %v8951, %v8036
  %v8953 = vmul.f32 %v8952, %v8951
  %v8954 = vmul.f32 0.5, %v8953
  %v8955 = vsub.f32 1.5, %v8954
  %v8956 = vmul.f32 %v8951, %v8955
  %vm8957 = vweird.f32 %v8036
  %vm8958 = vweird.f32 %v8951
  %vm8959 = vmor %vm8957, %vm8958
  %v8960 = vsel %vm8959, %v8951, %v8956
  %v8961 = vrsqrt.pop %v7830
  %v8962 = vmul.f32 %v8961, %v7830
  %v8963 = vmul.f32 %v8962, %v8961
  %v8964 = vmul.f32 0.5, %v8963
  %v8965 = vsub.f32 1.5, %v8964
  %v8966 = vmul.f32 %v8961, %v8965
  %vm8967 = vweird.f32 %v7830
  %vm8968 = vweird.f32 %v8961
  %vm8969 = vmor %vm8967, %vm8968
  %v8970 = vsel %vm8969, %v8961, %v8966
  %v8971 = vrsqrt.pop %v8039
  %v8972 = vmul.f32 %v8971, %v8039
  %v8973 = vmul.f32 %v8972, %v8971
  %v8974 = vmul.f32 0.5, %v8973
  %v8975 = vsub.f32 1.5, %v8974
  %v8976 = vmul.f32 %v8971, %v8975
  %vm8977 = vweird.f32 %v8039
  %vm8978 = vweird.f32 %v8971
  %vm8979 = vmor %vm8977, %vm8978
  %v8980 = vsel %vm8979, %v8971, %v8976
  %v8981 = vrsqrt.pop %v7833
  %v8982 = vmul.f32 %v8981, %v7833
  %v8983 = vmul.f32 %v8982, %v8981
  %v8984 = vmul.f32 0.5, %v8983
  %v8985 = vsub.f32 1.5, %v8984
  %v8986 = vmul.f32 %v8981, %v8985
  %vm8987 = vweird.f32 %v7833
  %vm8988 = vweird.f32 %v8981
  %vm8989 = vmor %vm8987, %vm8988
  %v8990 = vsel %vm8989, %v8981, %v8986
  %v8991 = vrsqrt.pop %v8042
  %v8992 = vmul.f32 %v8991, %v8042
  %v8993 = vmul.f32 %v8992, %v8991
  %v8994 = vmul.f32 0.5, %v8993
  %v8995 = vsub.f32 1.5, %v8994
  %v8996 = vmul.f32 %v8991, %v8995
  %vm8997 = vweird.f32 %v8042
  %vm8998 = vweird.f32 %v8991
  %vm8999 = vmor %vm8997, %vm8998
  %v9000 = vsel %vm8999, %v8991, %v8996
  %v9001 = vrsqrt.pop %v7836
  %v9002 = vmul.f32 %v9001, %v7836
  %v9003 = vmul.f32 %v9002, %v9001
  %v9004 = vmul.f32 0.5, %v9003
  %v9005 = vsub.f32 1.5, %v9004
  %v9006 = vmul.f32 %v9001, %v9005
  %vm9007 = vweird.f32 %v7836
  %vm9008 = vweird.f32 %v9001
  %vm9009 = vmor %vm9007, %vm9008
  %v9010 = vsel %vm9009, %v9001, %v9006
  %v9011 = vrsqrt.pop %v8045
  %v9012 = vmul.f32 %v9011, %v8045
  %v9013 = vmul.f32 %v9012, %v9011
  %v9014 = vmul.f32 0.5, %v9013
  %v9015 = vsub.f32 1.5, %v9014
  %v9016 = vmul.f32 %v9011, %v9015
  %vm9017 = vweird.f32 %v8045
  %vm9018 = vweird.f32 %v9011
  %vm9019 = vmor %vm9017, %vm9018
  %v9020 = vsel %vm9019, %v9011, %v9016
  %v9021 = vrsqrt.pop %v7839
  %v9022 = vmul.f32 %v9021, %v7839
  %v9023 = vmul.f32 %v9022, %v9021
  %v9024 = vmul.f32 0.5, %v9023
  %v9025 = vsub.f32 1.5, %v9024
  %v9026 = vmul.f32 %v9021, %v9025
  %vm9027 = vweird.f32 %v7839
  %vm9028 = vweird.f32 %v9021
  %vm9029 = vmor %vm9027, %vm9028
  %v9030 = vsel %vm9029, %v9021, %v9026
  %v9031 = vrsqrt.pop %v8048
  %v9032 = vmul.f32 %v9031, %v8048
  %v9033 = vmul.f32 %v9032, %v9031
  %v9034 = vmul.f32 0.5, %v9033
  %v9035 = vsub.f32 1.5, %v9034
  %v9036 = vmul.f32 %v9031, %v9035
  %vm9037 = vweird.f32 %v8048
  %vm9038 = vweird.f32 %v9031
  %vm9039 = vmor %vm9037, %vm9038
  %v9040 = vsel %vm9039, %v9031, %v9036
  %v9041 = vrsqrt.pop %v7842
  %v9042 = vmul.f32 %v9041, %v7842
  %v9043 = vmul.f32 %v9042, %v9041
  %v9044 = vmul.f32 0.5, %v9043
  %v9045 = vsub.f32 1.5, %v9044
  %v9046 = vmul.f32 %v9041, %v9045
  %vm9047 = vweird.f32 %v7842
  %vm9048 = vweird.f32 %v9041
  %vm9049 = vmor %vm9047, %vm9048
  %v9050 = vsel %vm9049, %v9041, %v9046
  %v9051 = vrsqrt.pop %v8051
  %v9052 = vmul.f32 %v9051, %v8051
  %v9053 = vmul.f32 %v9052, %v9051
  %v9054 = vmul.f32 0.5, %v9053
  %v9055 = vsub.f32 1.5, %v9054
  %v9056 = vmul.f32 %v9051, %v9055
  %vm9057 = vweird.f32 %v8051
  %vm9058 = vweird.f32 %v9051
  %vm9059 = vmor %vm9057, %vm9058
  %v9060 = vsel %vm9059, %v9051, %v9056
  %v9061 = vrsqrt.pop %v7845
  %v9062 = vmul.f32 %v9061, %v7845
  %v9063 = vmul.f32 %v9062, %v9061
  %v9064 = vmul.f32 0.5, %v9063
  %v9065 = vsub.f32 1.5, %v9064
  %v9066 = vmul.f32 %v9061, %v9065
  %vm9067 = vweird.f32 %v7845
  %vm9068 = vweird.f32 %v9061
  %vm9069 = vmor %vm9067, %vm9068
  %v9070 = vsel %vm9069, %v9061, %v9066
  %v9071 = vrsqrt.pop %v8054
  %v9072 = vmul.f32 %v9071, %v8054
  %v9073 = vmul.f32 %v9072, %v9071
  %v9074 = vmul.f32 0.5, %v9073
  %v9075 = vsub.f32 1.5, %v9074
  %v9076 = vmul.f32 %v9071, %v9075
  %vm9077 = vweird.f32 %v8054
  %vm9078 = vweird.f32 %v9071
  %vm9079 = vmor %vm9077, %vm9078
  %v9080 = vsel %vm9079, %v9071, %v9076
  %v9081 = vrsqrt.pop %v7848
  %v9082 = vmul.f32 %v9081, %v7848
  %v9083 = vmul.f32 %v9082, %v9081
  %v9084 = vmul.f32 0.5, %v9083
  %v9085 = vsub.f32 1.5, %v9084
  %v9086 = vmul.f32 %v9081, %v9085
  %vm9087 = vweird.f32 %v7848
  %vm9088 = vweird.f32 %v9081
  %vm9089 = vmor %vm9087, %vm9088
  %v9090 = vsel %vm9089, %v9081, %v9086
  %v9091 = vrsqrt.pop %v8057
  %v9092 = vmul.f32 %v9091, %v8057
  %v9093 = vmul.f32 %v9092, %v9091
  %v9094 = vmul.f32 0.5, %v9093
  %v9095 = vsub.f32 1.5, %v9094
  %v9096 = vmul.f32 %v9091, %v9095
  %vm9097 = vweird.f32 %v8057
  %vm9098 = vweird.f32 %v9091
  %vm9099 = vmor %vm9097, %vm9098
  %v9100 = vsel %vm9099, %v9091, %v9096
  %v9101 = vrsqrt.pop %v7851
  %v9102 = vmul.f32 %v9101, %v7851
  %v9103 = vmul.f32 %v9102, %v9101
  %v9104 = vmul.f32 0.5, %v9103
  %v9105 = vsub.f32 1.5, %v9104
  %v9106 = vmul.f32 %v9101, %v9105
  %vm9107 = vweird.f32 %v7851
  %vm9108 = vweird.f32 %v9101
  %vm9109 = vmor %vm9107, %vm9108
  %v9110 = vsel %vm9109, %v9101, %v9106
  %v9111 = vrsqrt.pop %v8060
  %v9112 = vmul.f32 %v9111, %v8060
  %v9113 = vmul.f32 %v9112, %v9111
  %v9114 = vmul.f32 0.5, %v9113
  %v9115 = vsub.f32 1.5, %v9114
  %v9116 = vmul.f32 %v9111, %v9115
  %vm9117 = vweird.f32 %v8060
  %vm9118 = vweird.f32 %v9111
  %vm9119 = vmor %vm9117, %vm9118
  %v9120 = vsel %vm9119, %v9111, %v9116
  %v9121 = vrsqrt.pop %v7854
  %v9122 = vmul.f32 %v9121, %v7854
  %v9123 = vmul.f32 %v9122, %v9121
  %v9124 = vmul.f32 0.5, %v9123
  %v9125 = vsub.f32 1.5, %v9124
  %v9126 = vmul.f32 %v9121, %v9125
  %vm9127 = vweird.f32 %v7854
  %vm9128 = vweird.f32 %v9121
  %vm9129 = vmor %vm9127, %vm9128
  %v9130 = vsel %vm9129, %v9121, %v9126
  %v9131 = vrsqrt.pop %v8063
  %v9132 = vmul.f32 %v9131, %v8063
  %v9133 = vmul.f32 %v9132, %v9131
  %v9134 = vmul.f32 0.5, %v9133
  %v9135 = vsub.f32 1.5, %v9134
  %v9136 = vmul.f32 %v9131, %v9135
  %vm9137 = vweird.f32 %v8063
  %vm9138 = vweird.f32 %v9131
  %vm9139 = vmor %vm9137, %vm9138
  %v9140 = vsel %vm9139, %v9131, %v9136
  %v9141 = vrsqrt.pop %v7857
  %v9142 = vmul.f32 %v9141, %v7857
  %v9143 = vmul.f32 %v9142, %v9141
  %v9144 = vmul.f32 0.5, %v9143
  %v9145 = vsub.f32 1.5, %v9144
  %v9146 = vmul.f32 %v9141, %v9145
  %vm9147 = vweird.f32 %v7857
  %vm9148 = vweird.f32 %v9141
  %vm9149 = vmor %vm9147, %vm9148
  %v9150 = vsel %vm9149, %v9141, %v9146
  %v9151 = vrsqrt.pop %v8066
  %v9152 = vmul.f32 %v9151, %v8066
  %v9153 = vmul.f32 %v9152, %v9151
  %v9154 = vmul.f32 0.5, %v9153
  %v9155 = vsub.f32 1.5, %v9154
  %v9156 = vmul.f32 %v9151, %v9155
  %vm9157 = vweird.f32 %v8066
  %vm9158 = vweird.f32 %v9151
  %vm9159 = vmor %vm9157, %vm9158
  %v9160 = vsel %vm9159, %v9151, %v9156
  %v9161 = vrsqrt.pop %v7860
  %v9162 = vmul.f32 %v9161, %v7860
  %v9163 = vmul.f32 %v9162, %v9161
  %v9164 = vmul.f32 0.5, %v9163
  %v9165 = vsub.f32 1.5, %v9164
  %v9166 = vmul.f32 %v9161, %v9165
  %vm9167 = vweird.f32 %v7860
  %vm9168 = vweird.f32 %v9161
  %vm9169 = vmor %vm9167, %vm9168
  %v9170 = vsel %vm9169, %v9161, %v9166
  %v9171 = vrsqrt.pop %v8069
  %v9172 = vmul.f32 %v9171, %v8069
  %v9173 = vmul.f32 %v9172, %v9171
  %v9174 = vmul.f32 0.5, %v9173
  %v9175 = vsub.f32 1.5, %v9174
  %v9176 = vmul.f32 %v9171, %v9175
  %vm9177 = vweird.f32 %v8069
  %vm9178 = vweird.f32 %v9171
  %vm9179 = vmor %vm9177, %vm9178
  %v9180 = vsel %vm9179, %v9171, %v9176
  %v9181 = vrsqrt.pop %v7863
  %v9182 = vmul.f32 %v9181, %v7863
  %v9183 = vmul.f32 %v9182, %v9181
  %v9184 = vmul.f32 0.5, %v9183
  %v9185 = vsub.f32 1.5, %v9184
  %v9186 = vmul.f32 %v9181, %v9185
  %vm9187 = vweird.f32 %v7863
  %vm9188 = vweird.f32 %v9181
  %vm9189 = vmor %vm9187, %vm9188
  %v9190 = vsel %vm9189, %v9181, %v9186
  %v9191 = vrsqrt.pop %v8072
  %v9192 = vmul.f32 %v9191, %v8072
  %v9193 = vmul.f32 %v9192, %v9191
  %v9194 = vmul.f32 0.5, %v9193
  %v9195 = vsub.f32 1.5, %v9194
  %v9196 = vmul.f32 %v9191, %v9195
  %vm9197 = vweird.f32 %v8072
  %vm9198 = vweird.f32 %v9191
  %vm9199 = vmor %vm9197, %vm9198
  %v9200 = vsel %vm9199, %v9191, %v9196
  %v9201 = vrsqrt.pop %v7866
  %v9202 = vmul.f32 %v9201, %v7866
  %v9203 = vmul.f32 %v9202, %v9201
  %v9204 = vmul.f32 0.5, %v9203
  %v9205 = vsub.f32 1.5, %v9204
  %v9206 = vmul.f32 %v9201, %v9205
  %vm9207 = vweird.f32 %v7866
  %vm9208 = vweird.f32 %v9201
  %vm9209 = vmor %vm9207, %vm9208
  %v9210 = vsel %vm9209, %v9201, %v9206
  %v9211 = vrsqrt.pop %v8075
  %v9212 = vmul.f32 %v9211, %v8075
  %v9213 = vmul.f32 %v9212, %v9211
  %v9214 = vmul.f32 0.5, %v9213
  %v9215 = vsub.f32 1.5, %v9214
  %v9216 = vmul.f32 %v9211, %v9215
  %vm9217 = vweird.f32 %v8075
  %vm9218 = vweird.f32 %v9211
  %vm9219 = vmor %vm9217, %vm9218
  %v9220 = vsel %vm9219, %v9211, %v9216
  %v9221 = vrsqrt.pop %v7869
  %v9222 = vmul.f32 %v9221, %v7869
  %v9223 = vmul.f32 %v9222, %v9221
  %v9224 = vmul.f32 0.5, %v9223
  %v9225 = vsub.f32 1.5, %v9224
  %v9226 = vmul.f32 %v9221, %v9225
  %vm9227 = vweird.f32 %v7869
  %vm9228 = vweird.f32 %v9221
  %vm9229 = vmor %vm9227, %vm9228
  %v9230 = vsel %vm9229, %v9221, %v9226
  %v9231 = vrsqrt.pop %v8078
  %v9232 = vmul.f32 %v9231, %v8078
  %v9233 = vmul.f32 %v9232, %v9231
  %v9234 = vmul.f32 0.5, %v9233
  %v9235 = vsub.f32 1.5, %v9234
  %v9236 = vmul.f32 %v9231, %v9235
  %vm9237 = vweird.f32 %v8078
  %vm9238 = vweird.f32 %v9231
  %vm9239 = vmor %vm9237, %vm9238
  %v9240 = vsel %vm9239, %v9231, %v9236
  %v9241 = vrsqrt.pop %v7872
  %v9242 = vmul.f32 %v9241, %v7872
  %v9243 = vmul.f32 %v9242, %v9241
  %v9244 = vmul.f32 0.5, %v9243
  %v9245 = vsub.f32 1.5, %v9244
  %v9246 = vmul.f32 %v9241, %v9245
  %vm9247 = vweird.f32 %v7872
  %vm9248 = vweird.f32 %v9241
  %vm9249 = vmor %vm9247, %vm9248
  %v9250 = vsel %vm9249, %v9241, %v9246
  %v9251 = vrsqrt.pop %v8081
  %v9252 = vmul.f32 %v9251, %v8081
  %v9253 = vmul.f32 %v9252, %v9251
  %v9254 = vmul.f32 0.5, %v9253
  %v9255 = vsub.f32 1.5, %v9254
  %v9256 = vmul.f32 %v9251, %v9255
  %vm9257 = vweird.f32 %v8081
  %vm9258 = vweird.f32 %v9251
  %vm9259 = vmor %vm9257, %vm9258
  %v9260 = vsel %vm9259, %v9251, %v9256
  %v9261 = vrsqrt.pop %v7875
  %v9262 = vmul.f32 %v9261, %v7875
  %v9263 = vmul.f32 %v9262, %v9261
  %v9264 = vmul.f32 0.5, %v9263
  %v9265 = vsub.f32 1.5, %v9264
  %v9266 = vmul.f32 %v9261, %v9265
  %vm9267 = vweird.f32 %v7875
  %vm9268 = vweird.f32 %v9261
  %vm9269 = vmor %vm9267, %vm9268
  %v9270 = vsel %vm9269, %v9261, %v9266
  %v9271 = vrsqrt.pop %v8084
  %v9272 = vmul.f32 %v9271, %v8084
  %v9273 = vmul.f32 %v9272, %v9271
  %v9274 = vmul.f32 0.5, %v9273
  %v9275 = vsub.f32 1.5, %v9274
  %v9276 = vmul.f32 %v9271, %v9275
  %vm9277 = vweird.f32 %v8084
  %vm9278 = vweird.f32 %v9271
  %vm9279 = vmor %vm9277, %vm9278
  %v9280 = vsel %vm9279, %v9271, %v9276
  %v9281 = vrsqrt.pop %v7878
  %v9282 = vmul.f32 %v9281, %v7878
  %v9283 = vmul.f32 %v9282, %v9281
  %v9284 = vmul.f32 0.5, %v9283
  %v9285 = vsub.f32 1.5, %v9284
  %v9286 = vmul.f32 %v9281, %v9285
  %vm9287 = vweird.f32 %v7878
  %vm9288 = vweird.f32 %v9281
  %vm9289 = vmor %vm9287, %vm9288
  %v9290 = vsel %vm9289, %v9281, %v9286
  %v9291 = vrsqrt.pop %v8087
  %v9292 = vmul.f32 %v9291, %v8087
  %v9293 = vmul.f32 %v9292, %v9291
  %v9294 = vmul.f32 0.5, %v9293
  %v9295 = vsub.f32 1.5, %v9294
  %v9296 = vmul.f32 %v9291, %v9295
  %vm9297 = vweird.f32 %v8087
  %vm9298 = vweird.f32 %v9291
  %vm9299 = vmor %vm9297, %vm9298
  %v9300 = vsel %vm9299, %v9291, %v9296
  %v9301 = vrsqrt.pop %v7881
  %v9302 = vmul.f32 %v9301, %v7881
  %v9303 = vmul.f32 %v9302, %v9301
  %v9304 = vmul.f32 0.5, %v9303
  %v9305 = vsub.f32 1.5, %v9304
  %v9306 = vmul.f32 %v9301, %v9305
  %vm9307 = vweird.f32 %v7881
  %vm9308 = vweird.f32 %v9301
  %vm9309 = vmor %vm9307, %vm9308
  %v9310 = vsel %vm9309, %v9301, %v9306
  %v9311 = vrsqrt.pop %v8090
  %v9312 = vmul.f32 %v9311, %v8090
  %v9313 = vmul.f32 %v9312, %v9311
  %v9314 = vmul.f32 0.5, %v9313
  %v9315 = vsub.f32 1.5, %v9314
  %v9316 = vmul.f32 %v9311, %v9315
  %vm9317 = vweird.f32 %v8090
  %vm9318 = vweird.f32 %v9311
  %vm9319 = vmor %vm9317, %vm9318
  %v9320 = vsel %vm9319, %v9311, %v9316
  %v9321 = vrsqrt.pop %v7884
  %v9322 = vmul.f32 %v9321, %v7884
  %v9323 = vmul.f32 %v9322, %v9321
  %v9324 = vmul.f32 0.5, %v9323
  %v9325 = vsub.f32 1.5, %v9324
  %v9326 = vmul.f32 %v9321, %v9325
  %vm9327 = vweird.f32 %v7884
  %vm9328 = vweird.f32 %v9321
  %vm9329 = vmor %vm9327, %vm9328
  %v9330 = vsel %vm9329, %v9321, %v9326
  %v9331 = vrsqrt.pop %v8093
  %v9332 = vmul.f32 %v9331, %v8093
  %v9333 = vmul.f32 %v9332, %v9331
  %v9334 = vmul.f32 0.5, %v9333
  %v9335 = vsub.f32 1.5, %v9334
  %v9336 = vmul.f32 %v9331, %v9335
  %vm9337 = vweird.f32 %v8093
  %vm9338 = vweird.f32 %v9331
  %vm9339 = vmor %vm9337, %vm9338
  %v9340 = vsel %vm9339, %v9331, %v9336
  %v9341 = vrsqrt.pop %v7887
  %v9342 = vmul.f32 %v9341, %v7887
  %v9343 = vmul.f32 %v9342, %v9341
  %v9344 = vmul.f32 0.5, %v9343
  %v9345 = vsub.f32 1.5, %v9344
  %v9346 = vmul.f32 %v9341, %v9345
  %vm9347 = vweird.f32 %v7887
  %vm9348 = vweird.f32 %v9341
  %vm9349 = vmor %vm9347, %vm9348
  %v9350 = vsel %vm9349, %v9341, %v9346
  %v9351 = vrsqrt.pop %v8096
  %v9352 = vmul.f32 %v9351, %v8096
  %v9353 = vmul.f32 %v9352, %v9351
  %v9354 = vmul.f32 0.5, %v9353
  %v9355 = vsub.f32 1.5, %v9354
  %v9356 = vmul.f32 %v9351, %v9355
  %vm9357 = vweird.f32 %v8096
  %vm9358 = vweird.f32 %v9351
  %vm9359 = vmor %vm9357, %vm9358
  %v9360 = vsel %vm9359, %v9351, %v9356
  %v9361 = vrsqrt.pop %v7890
  %v9362 = vmul.f32 %v9361, %v7890
  %v9363 = vmul.f32 %v9362, %v9361
  %v9364 = vmul.f32 0.5, %v9363
  %v9365 = vsub.f32 1.5, %v9364
  %v9366 = vmul.f32 %v9361, %v9365
  %vm9367 = vweird.f32 %v7890
  %vm9368 = vweird.f32 %v9361
  %vm9369 = vmor %vm9367, %vm9368
  %v9370 = vsel %vm9369, %v9361, %v9366
  %v9371 = vrsqrt.pop %v8099
  %v9372 = vmul.f32 %v9371, %v8099
  %v9373 = vmul.f32 %v9372, %v9371
  %v9374 = vmul.f32 0.5, %v9373
  %v9375 = vsub.f32 1.5, %v9374
  %v9376 = vmul.f32 %v9371, %v9375
  %vm9377 = vweird.f32 %v8099
  %vm9378 = vweird.f32 %v9371
  %vm9379 = vmor %vm9377, %vm9378
  %v9380 = vsel %vm9379, %v9371, %v9376
  %v9381 = vmul.f32 %v6817, %v8110
  %v9382 = vmul.f32 %v6818, %v8120
  %v9383 = vmul.f32 %v6819, %v8130
  %v9384 = vmul.f32 %v6820, %v8140
  %v9385 = vmul.f32 %v6821, %v8150
  %v9386 = vmul.f32 %v6822, %v8160
  %v9387 = vmul.f32 %v6823, %v8170
  %v9388 = vmul.f32 %v6824, %v8180
  %v9389 = vmul.f32 %v6825, %v8190
  %v9390 = vmul.f32 %v6826, %v8200
  %v9391 = vmul.f32 %v6827, %v8210
  %v9392 = vmul.f32 %v6828, %v8220
  %v9393 = vmul.f32 %v6829, %v8230
  %v9394 = vmul.f32 %v6830, %v8240
  %v9395 = vmul.f32 %v6831, %v8250
  %v9396 = vmul.f32 %v6832, %v8260
  %v9397 = vmul.f32 %v6833, %v8270
  %v9398 = vmul.f32 %v6834, %v8280
  %v9399 = vmul.f32 %v6835, %v8290
  %v9400 = vmul.f32 %v6836, %v8300
  %v9401 = vmul.f32 %v6837, %v8310
  %v9402 = vmul.f32 %v6838, %v8320
  %v9403 = vmul.f32 %v6839, %v8330
  %v9404 = vmul.f32 %v6840, %v8340
  %v9405 = vmul.f32 %v6841, %v8350
  %v9406 = vmul.f32 %v6842, %v8360
  %v9407 = vmul.f32 %v6843, %v8370
  %v9408 = vmul.f32 %v6844, %v8380
  %v9409 = vmul.f32 %v6845, %v8390
  %v9410 = vmul.f32 %v6846, %v8400
  %v9411 = vmul.f32 %v6847, %v8410
  %v9412 = vmul.f32 %v6848, %v8420
  %v9413 = vmul.f32 %v6849, %v8430
  %v9414 = vmul.f32 %v6850, %v8440
  %v9415 = vmul.f32 %v6851, %v8450
  %v9416 = vmul.f32 %v6852, %v8460
  %v9417 = vmul.f32 %v6853, %v8470
  %v9418 = vmul.f32 %v6854, %v8480
  %v9419 = vmul.f32 %v6855, %v8490
  %v9420 = vmul.f32 %v6856, %v8500
  %v9421 = vmul.f32 %v6857, %v8510
  %v9422 = vmul.f32 %v6858, %v8520
  %v9423 = vmul.f32 %v6859, %v8530
  %v9424 = vmul.f32 %v6860, %v8540
  %v9425 = vmul.f32 %v6861, %v8550
  %v9426 = vmul.f32 %v6862, %v8560
  %v9427 = vmul.f32 %v6863, %v8570
  %v9428 = vmul.f32 %v6864, %v8580
  %v9429 = vmul.f32 %v6865, %v8590
  %v9430 = vmul.f32 %v6866, %v8600
  %v9431 = vmul.f32 %v6867, %v8610
  %v9432 = vmul.f32 %v6868, %v8620
  %v9433 = vmul.f32 %v6869, %v8630
  %v9434 = vmul.f32 %v6870, %v8640
  %v9435 = vmul.f32 %v6871, %v8650
  %v9436 = vmul.f32 %v6872, %v8660
  %v9437 = vmul.f32 %v6873, %v8670
  %v9438 = vmul.f32 %v6874, %v8680
  %v9439 = vmul.f32 %v6875, %v8690
  %v9440 = vmul.f32 %v6876, %v8700
  %v9441 = vmul.f32 %v6877, %v8710
  %v9442 = vmul.f32 %v6878, %v8720
  %v9443 = vmul.f32 %v6879, %v8730
  %v9444 = vmul.f32 %v6880, %v8740
  %v9445 = vmul.f32 %v6881, %v8750
  %v9446 = vmul.f32 %v6882, %v8760
  %v9447 = vmul.f32 %v6883, %v8770
  %v9448 = vmul.f32 %v6884, %v8780
  %v9449 = vmul.f32 %v6885, %v8790
  %v9450 = vmul.f32 %v6886, %v8800
  %v9451 = vmul.f32 %v6887, %v8810
  %v9452 = vmul.f32 %v6888, %v8820
  %v9453 = vmul.f32 %v6889, %v8830
  %v9454 = vmul.f32 %v6890, %v8840
  %v9455 = vmul.f32 %v6891, %v8850
  %v9456 = vmul.f32 %v6892, %v8860
  %v9457 = vmul.f32 %v6893, %v8870
  %v9458 = vmul.f32 %v6894, %v8880
  %v9459 = vmul.f32 %v6895, %v8890
  %v9460 = vmul.f32 %v6896, %v8900
  %v9461 = vmul.f32 %v6897, %v8910
  %v9462 = vmul.f32 %v6898, %v8920
  %v9463 = vmul.f32 %v6899, %v8930
  %v9464 = vmul.f32 %v6900, %v8940
  %v9465 = vmul.f32 %v6901, %v8950
  %v9466 = vmul.f32 %v6902, %v8960
  %v9467 = vmul.f32 %v6903, %v8970
  %v9468 = vmul.f32 %v6904, %v8980
  %v9469 = vmul.f32 %v6905, %v8990
  %v9470 = vmul.f32 %v6906, %v9000
  %v9471 = vmul.f32 %v6907, %v9010
  %v9472 = vmul.f32 %v6908, %v9020
  %v9473 = vmul.f32 %v6909, %v9030
  %v9474 = vmul.f32 %v6910, %v9040
  %v9475 = vmul.f32 %v6911, %v9050
  %v9476 = vmul.f32 %v6912, %v9060
  %v9477 = vmul.f32 %v6913, %v9070
  %v9478 = vmul.f32 %v6914, %v9080
  %v9479 = vmul.f32 %v6915, %v9090
  %v9480 = vmul.f32 %v6916, %v9100
  %v9481 = vmul.f32 %v6917, %v9110
  %v9482 = vmul.f32 %v6918, %v9120
  %v9483 = vmul.f32 %v6919, %v9130
  %v9484 = vmul.f32 %v6920, %v9140
  %v9485 = vmul.f32 %v6921, %v9150
  %v9486 = vmul.f32 %v6922, %v9160
  %v9487 = vmul.f32 %v6923, %v9170
  %v9488 = vmul.f32 %v6924, %v9180
  %v9489 = vmul.f32 %v6925, %v9190
  %v9490 = vmul.f32 %v6926, %v9200
  %v9491 = vmul.f32 %v6927, %v9210
  %v9492 = vmul.f32 %v6928, %v9220
  %v9493 = vmul.f32 %v6929, %v9230
  %v9494 = vmul.f32 %v6930, %v9240
  %v9495 = vmul.f32 %v6931, %v9250
  %v9496 = vmul.f32 %v6932, %v9260
  %v9497 = vmul.f32 %v6933, %v9270
  %v9498 = vmul.f32 %v6934, %v9280
  %v9499 = vmul.f32 %v6935, %v9290
  %v9500 = vmul.f32 %v6936, %v9300
  %v9501 = vmul.f32 %v6937, %v9310
  %v9502 = vmul.f32 %v6938, %v9320
  %v9503 = vmul.f32 %v6939, %v9330
  %v9504 = vmul.f32 %v6940, %v9340
  %v9505 = vmul.f32 %v6941, %v9350
  %v9506 = vmul.f32 %v6942, %v9360
  %v9507 = vmul.f32 %v6943, %v9370
  %v9508 = vmul.f32 %v6944, %v9380
  %v9509 = vld [vmem:[%s21] sm:$0xff]
  %v9510 = vld [vmem:[%s21 + $0x8] sm:$0xff]
  %v9511 = vld [vmem:[%s21 + $0x10] sm:$0xff]
  %v9512 = vld [vmem:[%s21 + $0x18] sm:$0xff]
  %v9513 = vld [vmem:[%s21 + $0x20] sm:$0xff]
  %v9514 = vld [vmem:[%s21 + $0x28] sm:$0xff]
  %v9515 = vld [vmem:[%s21 + $0x30] sm:$0xff]
  %v9516 = vld [vmem:[%s21 + $0x38] sm:$0xff]
  %v9517 = vld [vmem:[%s21 + $0x40] sm:$0xff]
  %v9518 = vld [vmem:[%s21 + $0x48] sm:$0xff]
  %v9519 = vld [vmem:[%s21 + $0x50] sm:$0xff]
  %v9520 = vld [vmem:[%s21 + $0x58] sm:$0xff]
  %v9521 = vld [vmem:[%s21 + $0x60] sm:$0xff]
  %v9522 = vld [vmem:[%s21 + $0x68] sm:$0xff]
  %v9523 = vld [vmem:[%s21 + $0x70] sm:$0xff]
  %v9524 = vld [vmem:[%s21 + $0x78] sm:$0xff]
  %v9525 = vld [vmem:[%s21 + $0x80] sm:$0xff]
  %v9526 = vld [vmem:[%s21 + $0x88] sm:$0xff]
  %v9527 = vld [vmem:[%s21 + $0x90] sm:$0xff]
  %v9528 = vld [vmem:[%s21 + $0x98] sm:$0xff]
  %v9529 = vld [vmem:[%s21 + $0xa0] sm:$0xff]
  %v9530 = vld [vmem:[%s21 + $0xa8] sm:$0xff]
  %v9531 = vld [vmem:[%s21 + $0xb0] sm:$0xff]
  %v9532 = vld [vmem:[%s21 + $0xb8] sm:$0xff]
  %v9533 = vld [vmem:[%s21 + $0xc0] sm:$0xff]
  %v9534 = vld [vmem:[%s21 + $0xc8] sm:$0xff]
  %v9535 = vld [vmem:[%s21 + $0xd0] sm:$0xff]
  %v9536 = vld [vmem:[%s21 + $0xd8] sm:$0xff]
  %v9537 = vld [vmem:[%s21 + $0xe0] sm:$0xff]
  %v9538 = vld [vmem:[%s21 + $0xe8] sm:$0xff]
  %v9539 = vld [vmem:[%s21 + $0xf0] sm:$0xff]
  %v9540 = vld [vmem:[%s21 + $0xf8] sm:$0xff]
  %v9541 = vld [vmem:[%s22] sm:$0x1]
  %v9543 = vperm.slane %v9541, 0
  %9545 = vmatpush.msra.mxu0 %v9524
  %9546 = vmatpush.msra.mxu0 %v9523
  %9547 = vmatpush.msra.mxu0 %v9522
  %9548 = vmatpush.msra.mxu0 %v9521
  %9549 = vmatpush.msra.mxu0 %v9520
  %9550 = vmatpush.msra.mxu0 %v9519
  %9551 = vmatpush.msra.mxu0 %v9518
  %9552 = vmatpush.msra.mxu0 %v9517
  %9553 = vmatpush.msra.mxu0 %v9516
  %9554 = vmatpush.msra.mxu0 %v9515
  %9555 = vmatpush.msra.mxu0 %v9514
  %9556 = vmatpush.msra.mxu0 %v9513
  %9557 = vmatpush.msra.mxu0 %v9512
  %9558 = vmatpush.msra.mxu0 %v9511
  %9559 = vmatpush.msra.mxu0 %v9510
  %9560 = vmatpush.msra.mxu0 %v9509
  %9561 = vmatmul.f32.gmra.mxu0 %v9381
  %v9562 = vpop.f32.mrf.mxu0
  %v9563 = vadd.f32 %v9543, %v9562
  %9564 = vmatmul.f32.gmra.mxu0 %v9383
  %v9565 = vpop.f32.mrf.mxu0
  %v9566 = vadd.f32 %v9543, %v9565
  %9567 = vmatmul.f32.gmra.mxu0 %v9385
  %v9568 = vpop.f32.mrf.mxu0
  %v9569 = vadd.f32 %v9543, %v9568
  %9570 = vmatmul.f32.gmra.mxu0 %v9387
  %v9571 = vpop.f32.mrf.mxu0
  %v9572 = vadd.f32 %v9543, %v9571
  %9573 = vmatmul.f32.gmra.mxu0 %v9389
  %v9574 = vpop.f32.mrf.mxu0
  %v9575 = vadd.f32 %v9543, %v9574
  %9576 = vmatmul.f32.gmra.mxu0 %v9391
  %v9577 = vpop.f32.mrf.mxu0
  %v9578 = vadd.f32 %v9543, %v9577
  %9579 = vmatmul.f32.gmra.mxu0 %v9393
  %v9580 = vpop.f32.mrf.mxu0
  %v9581 = vadd.f32 %v9543, %v9580
  %9582 = vmatmul.f32.gmra.mxu0 %v9395
  %v9583 = vpop.f32.mrf.mxu0
  %v9584 = vadd.f32 %v9543, %v9583
  %9585 = vmatmul.f32.gmra.mxu0 %v9397
  %v9586 = vpop.f32.mrf.mxu0
  %v9587 = vadd.f32 %v9543, %v9586
  %9588 = vmatmul.f32.gmra.mxu0 %v9399
  %v9589 = vpop.f32.mrf.mxu0
  %v9590 = vadd.f32 %v9543, %v9589
  %9591 = vmatmul.f32.gmra.mxu0 %v9401
  %v9592 = vpop.f32.mrf.mxu0
  %v9593 = vadd.f32 %v9543, %v9592
  %9594 = vmatmul.f32.gmra.mxu0 %v9403
  %v9595 = vpop.f32.mrf.mxu0
  %v9596 = vadd.f32 %v9543, %v9595
  %9597 = vmatmul.f32.gmra.mxu0 %v9405
  %v9598 = vpop.f32.mrf.mxu0
  %v9599 = vadd.f32 %v9543, %v9598
  %9600 = vmatmul.f32.gmra.mxu0 %v9407
  %v9601 = vpop.f32.mrf.mxu0
  %v9602 = vadd.f32 %v9543, %v9601
  %9603 = vmatmul.f32.gmra.mxu0 %v9409
  %v9604 = vpop.f32.mrf.mxu0
  %v9605 = vadd.f32 %v9543, %v9604
  %9606 = vmatmul.f32.gmra.mxu0 %v9411
  %v9607 = vpop.f32.mrf.mxu0
  %v9608 = vadd.f32 %v9543, %v9607
  %9609 = vmatmul.f32.gmra.mxu0 %v9413
  %v9610 = vpop.f32.mrf.mxu0
  %v9611 = vadd.f32 %v9543, %v9610
  %9612 = vmatmul.f32.gmra.mxu0 %v9415
  %v9613 = vpop.f32.mrf.mxu0
  %v9614 = vadd.f32 %v9543, %v9613
  %9615 = vmatmul.f32.gmra.mxu0 %v9417
  %v9616 = vpop.f32.mrf.mxu0
  %v9617 = vadd.f32 %v9543, %v9616
  %9618 = vmatmul.f32.gmra.mxu0 %v9419
  %v9619 = vpop.f32.mrf.mxu0
  %v9620 = vadd.f32 %v9543, %v9619
  %9621 = vmatmul.f32.gmra.mxu0 %v9421
  %v9622 = vpop.f32.mrf.mxu0
  %v9623 = vadd.f32 %v9543, %v9622
  %9624 = vmatmul.f32.gmra.mxu0 %v9423
  %v9625 = vpop.f32.mrf.mxu0
  %v9626 = vadd.f32 %v9543, %v9625
  %9627 = vmatmul.f32.gmra.mxu0 %v9425
  %v9628 = vpop.f32.mrf.mxu0
  %v9629 = vadd.f32 %v9543, %v9628
  %9630 = vmatmul.f32.gmra.mxu0 %v9427
  %v9631 = vpop.f32.mrf.mxu0
  %v9632 = vadd.f32 %v9543, %v9631
  %9633 = vmatmul.f32.gmra.mxu0 %v9429
  %v9634 = vpop.f32.mrf.mxu0
  %v9635 = vadd.f32 %v9543, %v9634
  %9636 = vmatmul.f32.gmra.mxu0 %v9431
  %v9637 = vpop.f32.mrf.mxu0
  %v9638 = vadd.f32 %v9543, %v9637
  %9639 = vmatmul.f32.gmra.mxu0 %v9433
  %v9640 = vpop.f32.mrf.mxu0
  %v9641 = vadd.f32 %v9543, %v9640
  %9642 = vmatmul.f32.gmra.mxu0 %v9435
  %v9643 = vpop.f32.mrf.mxu0
  %v9644 = vadd.f32 %v9543, %v9643
  %9645 = vmatmul.f32.gmra.mxu0 %v9437
  %v9646 = vpop.f32.mrf.mxu0
  %v9647 = vadd.f32 %v9543, %v9646
  %9648 = vmatmul.f32.gmra.mxu0 %v9439
  %v9649 = vpop.f32.mrf.mxu0
  %v9650 = vadd.f32 %v9543, %v9649
  %9651 = vmatmul.f32.gmra.mxu0 %v9441
  %v9652 = vpop.f32.mrf.mxu0
  %v9653 = vadd.f32 %v9543, %v9652
  %9654 = vmatmul.f32.gmra.mxu0 %v9443
  %v9655 = vpop.f32.mrf.mxu0
  %v9656 = vadd.f32 %v9543, %v9655
  %9657 = vmatmul.f32.gmra.mxu0 %v9445
  %v9658 = vpop.f32.mrf.mxu0
  %v9659 = vadd.f32 %v9543, %v9658
  %9660 = vmatmul.f32.gmra.mxu0 %v9447
  %v9661 = vpop.f32.mrf.mxu0
  %v9662 = vadd.f32 %v9543, %v9661
  %9663 = vmatmul.f32.gmra.mxu0 %v9449
  %v9664 = vpop.f32.mrf.mxu0
  %v9665 = vadd.f32 %v9543, %v9664
  %9666 = vmatmul.f32.gmra.mxu0 %v9451
  %v9667 = vpop.f32.mrf.mxu0
  %v9668 = vadd.f32 %v9543, %v9667
  %9669 = vmatmul.f32.gmra.mxu0 %v9453
  %v9670 = vpop.f32.mrf.mxu0
  %v9671 = vadd.f32 %v9543, %v9670
  %9672 = vmatmul.f32.gmra.mxu0 %v9455
  %v9673 = vpop.f32.mrf.mxu0
  %v9674 = vadd.f32 %v9543, %v9673
  %9675 = vmatmul.f32.gmra.mxu0 %v9457
  %v9676 = vpop.f32.mrf.mxu0
  %v9677 = vadd.f32 %v9543, %v9676
  %9678 = vmatmul.f32.gmra.mxu0 %v9459
  %v9679 = vpop.f32.mrf.mxu0
  %v9680 = vadd.f32 %v9543, %v9679
  %9681 = vmatmul.f32.gmra.mxu0 %v9461
  %v9682 = vpop.f32.mrf.mxu0
  %v9683 = vadd.f32 %v9543, %v9682
  %9684 = vmatmul.f32.gmra.mxu0 %v9463
  %v9685 = vpop.f32.mrf.mxu0
  %v9686 = vadd.f32 %v9543, %v9685
  %9687 = vmatmul.f32.gmra.mxu0 %v9465
  %v9688 = vpop.f32.mrf.mxu0
  %v9689 = vadd.f32 %v9543, %v9688
  %9690 = vmatmul.f32.gmra.mxu0 %v9467
  %v9691 = vpop.f32.mrf.mxu0
  %v9692 = vadd.f32 %v9543, %v9691
  %9693 = vmatmul.f32.gmra.mxu0 %v9469
  %v9694 = vpop.f32.mrf.mxu0
  %v9695 = vadd.f32 %v9543, %v9694
  %9696 = vmatmul.f32.gmra.mxu0 %v9471
  %v9697 = vpop.f32.mrf.mxu0
  %v9698 = vadd.f32 %v9543, %v9697
  %9699 = vmatmul.f32.gmra.mxu0 %v9473
  %v9700 = vpop.f32.mrf.mxu0
  %v9701 = vadd.f32 %v9543, %v9700
  %9702 = vmatmul.f32.gmra.mxu0 %v9475
  %v9703 = vpop.f32.mrf.mxu0
  %v9704 = vadd.f32 %v9543, %v9703
  %9705 = vmatmul.f32.gmra.mxu0 %v9477
  %v9706 = vpop.f32.mrf.mxu0
  %v9707 = vadd.f32 %v9543, %v9706
  %9708 = vmatmul.f32.gmra.mxu0 %v9479
  %v9709 = vpop.f32.mrf.mxu0
  %v9710 = vadd.f32 %v9543, %v9709
  %9711 = vmatmul.f32.gmra.mxu0 %v9481
  %v9712 = vpop.f32.mrf.mxu0
  %v9713 = vadd.f32 %v9543, %v9712
  %9714 = vmatmul.f32.gmra.mxu0 %v9483
  %v9715 = vpop.f32.mrf.mxu0
  %v9716 = vadd.f32 %v9543, %v9715
  %9717 = vmatmul.f32.gmra.mxu0 %v9485
  %v9718 = vpop.f32.mrf.mxu0
  %v9719 = vadd.f32 %v9543, %v9718
  %9720 = vmatmul.f32.gmra.mxu0 %v9487
  %v9721 = vpop.f32.mrf.mxu0
  %v9722 = vadd.f32 %v9543, %v9721
  %9723 = vmatmul.f32.gmra.mxu0 %v9489
  %v9724 = vpop.f32.mrf.mxu0
  %v9725 = vadd.f32 %v9543, %v9724
  %9726 = vmatmul.f32.gmra.mxu0 %v9491
  %v9727 = vpop.f32.mrf.mxu0
  %v9728 = vadd.f32 %v9543, %v9727
  %9729 = vmatmul.f32.gmra.mxu0 %v9493
  %v9730 = vpop.f32.mrf.mxu0
  %v9731 = vadd.f32 %v9543, %v9730
  %9732 = vmatmul.f32.gmra.mxu0 %v9495
  %v9733 = vpop.f32.mrf.mxu0
  %v9734 = vadd.f32 %v9543, %v9733
  %9735 = vmatmul.f32.gmra.mxu0 %v9497
  %v9736 = vpop.f32.mrf.mxu0
  %v9737 = vadd.f32 %v9543, %v9736
  %9738 = vmatmul.f32.gmra.mxu0 %v9499
  %v9739 = vpop.f32.mrf.mxu0
  %v9740 = vadd.f32 %v9543, %v9739
  %9741 = vmatmul.f32.gmra.mxu0 %v9501
  %v9742 = vpop.f32.mrf.mxu0
  %v9743 = vadd.f32 %v9543, %v9742
  %9744 = vmatmul.f32.gmra.mxu0 %v9503
  %v9745 = vpop.f32.mrf.mxu0
  %v9746 = vadd.f32 %v9543, %v9745
  %9747 = vmatmul.f32.gmra.mxu0 %v9505
  %v9748 = vpop.f32.mrf.mxu0
  %v9749 = vadd.f32 %v9543, %v9748
  %9750 = vmatmul.f32.gmra.mxu0 %v9507
  %v9751 = vpop.f32.mrf.mxu0
  %v9752 = vadd.f32 %v9543, %v9751
  %9753 = vdwg.mxu0
  %9754 = vmatpush.msra.mxu0 %v9540
  %9755 = vmatpush.msra.mxu0 %v9539
  %9756 = vmatpush.msra.mxu0 %v9538
  %9757 = vmatpush.msra.mxu0 %v9537
  %9758 = vmatpush.msra.mxu0 %v9536
  %9759 = vmatpush.msra.mxu0 %v9535
  %9760 = vmatpush.msra.mxu0 %v9534
  %9761 = vmatpush.msra.mxu0 %v9533
  %9762 = vmatpush.msra.mxu0 %v9532
  %9763 = vmatpush.msra.mxu0 %v9531
  %9764 = vmatpush.msra.mxu0 %v9530
  %9765 = vmatpush.msra.mxu0 %v9529
  %9766 = vmatpush.msra.mxu0 %v9528
  %9767 = vmatpush.msra.mxu0 %v9527
  %9768 = vmatpush.msra.mxu0 %v9526
  %9769 = vmatpush.msra.mxu0 %v9525
  %9770 = vmatmul.f32.gmra.mxu0 %v9382
  %v9771 = vpop.f32.mrf.mxu0
  %v9772 = vadd.f32 %v9563, %v9771
  %9773 = vmatmul.f32.gmra.mxu0 %v9384
  %v9774 = vpop.f32.mrf.mxu0
  %v9775 = vadd.f32 %v9566, %v9774
  %9776 = vmatmul.f32.gmra.mxu0 %v9386
  %v9777 = vpop.f32.mrf.mxu0
  %v9778 = vadd.f32 %v9569, %v9777
  %9779 = vmatmul.f32.gmra.mxu0 %v9388
  %v9780 = vpop.f32.mrf.mxu0
  %v9781 = vadd.f32 %v9572, %v9780
  %9782 = vmatmul.f32.gmra.mxu0 %v9390
  %v9783 = vpop.f32.mrf.mxu0
  %v9784 = vadd.f32 %v9575, %v9783
  %9785 = vmatmul.f32.gmra.mxu0 %v9392
  %v9786 = vpop.f32.mrf.mxu0
  %v9787 = vadd.f32 %v9578, %v9786
  %9788 = vmatmul.f32.gmra.mxu0 %v9394
  %v9789 = vpop.f32.mrf.mxu0
  %v9790 = vadd.f32 %v9581, %v9789
  %9791 = vmatmul.f32.gmra.mxu0 %v9396
  %v9792 = vpop.f32.mrf.mxu0
  %v9793 = vadd.f32 %v9584, %v9792
  %9794 = vmatmul.f32.gmra.mxu0 %v9398
  %v9795 = vpop.f32.mrf.mxu0
  %v9796 = vadd.f32 %v9587, %v9795
  %9797 = vmatmul.f32.gmra.mxu0 %v9400
  %v9798 = vpop.f32.mrf.mxu0
  %v9799 = vadd.f32 %v9590, %v9798
  %9800 = vmatmul.f32.gmra.mxu0 %v9402
  %v9801 = vpop.f32.mrf.mxu0
  %v9802 = vadd.f32 %v9593, %v9801
  %9803 = vmatmul.f32.gmra.mxu0 %v9404
  %v9804 = vpop.f32.mrf.mxu0
  %v9805 = vadd.f32 %v9596, %v9804
  %9806 = vmatmul.f32.gmra.mxu0 %v9406
  %v9807 = vpop.f32.mrf.mxu0
  %v9808 = vadd.f32 %v9599, %v9807
  %9809 = vmatmul.f32.gmra.mxu0 %v9408
  %v9810 = vpop.f32.mrf.mxu0
  %v9811 = vadd.f32 %v9602, %v9810
  %9812 = vmatmul.f32.gmra.mxu0 %v9410
  %v9813 = vpop.f32.mrf.mxu0
  %v9814 = vadd.f32 %v9605, %v9813
  %9815 = vmatmul.f32.gmra.mxu0 %v9412
  %v9816 = vpop.f32.mrf.mxu0
  %v9817 = vadd.f32 %v9608, %v9816
  %9818 = vmatmul.f32.gmra.mxu0 %v9414
  %v9819 = vpop.f32.mrf.mxu0
  %v9820 = vadd.f32 %v9611, %v9819
  %9821 = vmatmul.f32.gmra.mxu0 %v9416
  %v9822 = vpop.f32.mrf.mxu0
  %v9823 = vadd.f32 %v9614, %v9822
  %9824 = vmatmul.f32.gmra.mxu0 %v9418
  %v9825 = vpop.f32.mrf.mxu0
  %v9826 = vadd.f32 %v9617, %v9825
  %9827 = vmatmul.f32.gmra.mxu0 %v9420
  %v9828 = vpop.f32.mrf.mxu0
  %v9829 = vadd.f32 %v9620, %v9828
  %9830 = vmatmul.f32.gmra.mxu0 %v9422
  %v9831 = vpop.f32.mrf.mxu0
  %v9832 = vadd.f32 %v9623, %v9831
  %9833 = vmatmul.f32.gmra.mxu0 %v9424
  %v9834 = vpop.f32.mrf.mxu0
  %v9835 = vadd.f32 %v9626, %v9834
  %9836 = vmatmul.f32.gmra.mxu0 %v9426
  %v9837 = vpop.f32.mrf.mxu0
  %v9838 = vadd.f32 %v9629, %v9837
  %9839 = vmatmul.f32.gmra.mxu0 %v9428
  %v9840 = vpop.f32.mrf.mxu0
  %v9841 = vadd.f32 %v9632, %v9840
  %9842 = vmatmul.f32.gmra.mxu0 %v9430
  %v9843 = vpop.f32.mrf.mxu0
  %v9844 = vadd.f32 %v9635, %v9843
  %9845 = vmatmul.f32.gmra.mxu0 %v9432
  %v9846 = vpop.f32.mrf.mxu0
  %v9847 = vadd.f32 %v9638, %v9846
  %9848 = vmatmul.f32.gmra.mxu0 %v9434
  %v9849 = vpop.f32.mrf.mxu0
  %v9850 = vadd.f32 %v9641, %v9849
  %9851 = vmatmul.f32.gmra.mxu0 %v9436
  %v9852 = vpop.f32.mrf.mxu0
  %v9853 = vadd.f32 %v9644, %v9852
  %9854 = vmatmul.f32.gmra.mxu0 %v9438
  %v9855 = vpop.f32.mrf.mxu0
  %v9856 = vadd.f32 %v9647, %v9855
  %9857 = vmatmul.f32.gmra.mxu0 %v9440
  %v9858 = vpop.f32.mrf.mxu0
  %v9859 = vadd.f32 %v9650, %v9858
  %9860 = vmatmul.f32.gmra.mxu0 %v9442
  %v9861 = vpop.f32.mrf.mxu0
  %v9862 = vadd.f32 %v9653, %v9861
  %9863 = vmatmul.f32.gmra.mxu0 %v9444
  %v9864 = vpop.f32.mrf.mxu0
  %v9865 = vadd.f32 %v9656, %v9864
  %9866 = vmatmul.f32.gmra.mxu0 %v9446
  %v9867 = vpop.f32.mrf.mxu0
  %v9868 = vadd.f32 %v9659, %v9867
  %9869 = vmatmul.f32.gmra.mxu0 %v9448
  %v9870 = vpop.f32.mrf.mxu0
  %v9871 = vadd.f32 %v9662, %v9870
  %9872 = vmatmul.f32.gmra.mxu0 %v9450
  %v9873 = vpop.f32.mrf.mxu0
  %v9874 = vadd.f32 %v9665, %v9873
  %9875 = vmatmul.f32.gmra.mxu0 %v9452
  %v9876 = vpop.f32.mrf.mxu0
  %v9877 = vadd.f32 %v9668, %v9876
  %9878 = vmatmul.f32.gmra.mxu0 %v9454
  %v9879 = vpop.f32.mrf.mxu0
  %v9880 = vadd.f32 %v9671, %v9879
  %9881 = vmatmul.f32.gmra.mxu0 %v9456
  %v9882 = vpop.f32.mrf.mxu0
  %v9883 = vadd.f32 %v9674, %v9882
  %9884 = vmatmul.f32.gmra.mxu0 %v9458
  %v9885 = vpop.f32.mrf.mxu0
  %v9886 = vadd.f32 %v9677, %v9885
  %9887 = vmatmul.f32.gmra.mxu0 %v9460
  %v9888 = vpop.f32.mrf.mxu0
  %v9889 = vadd.f32 %v9680, %v9888
  %9890 = vmatmul.f32.gmra.mxu0 %v9462
  %v9891 = vpop.f32.mrf.mxu0
  %v9892 = vadd.f32 %v9683, %v9891
  %9893 = vmatmul.f32.gmra.mxu0 %v9464
  %v9894 = vpop.f32.mrf.mxu0
  %v9895 = vadd.f32 %v9686, %v9894
  %9896 = vmatmul.f32.gmra.mxu0 %v9466
  %v9897 = vpop.f32.mrf.mxu0
  %v9898 = vadd.f32 %v9689, %v9897
  %9899 = vmatmul.f32.gmra.mxu0 %v9468
  %v9900 = vpop.f32.mrf.mxu0
  %v9901 = vadd.f32 %v9692, %v9900
  %9902 = vmatmul.f32.gmra.mxu0 %v9470
  %v9903 = vpop.f32.mrf.mxu0
  %v9904 = vadd.f32 %v9695, %v9903
  %9905 = vmatmul.f32.gmra.mxu0 %v9472
  %v9906 = vpop.f32.mrf.mxu0
  %v9907 = vadd.f32 %v9698, %v9906
  %9908 = vmatmul.f32.gmra.mxu0 %v9474
  %v9909 = vpop.f32.mrf.mxu0
  %v9910 = vadd.f32 %v9701, %v9909
  %9911 = vmatmul.f32.gmra.mxu0 %v9476
  %v9912 = vpop.f32.mrf.mxu0
  %v9913 = vadd.f32 %v9704, %v9912
  %9914 = vmatmul.f32.gmra.mxu0 %v9478
  %v9915 = vpop.f32.mrf.mxu0
  %v9916 = vadd.f32 %v9707, %v9915
  %9917 = vmatmul.f32.gmra.mxu0 %v9480
  %v9918 = vpop.f32.mrf.mxu0
  %v9919 = vadd.f32 %v9710, %v9918
  %9920 = vmatmul.f32.gmra.mxu0 %v9482
  %v9921 = vpop.f32.mrf.mxu0
  %v9922 = vadd.f32 %v9713, %v9921
  %9923 = vmatmul.f32.gmra.mxu0 %v9484
  %v9924 = vpop.f32.mrf.mxu0
  %v9925 = vadd.f32 %v9716, %v9924
  %9926 = vmatmul.f32.gmra.mxu0 %v9486
  %v9927 = vpop.f32.mrf.mxu0
  %v9928 = vadd.f32 %v9719, %v9927
  %9929 = vmatmul.f32.gmra.mxu0 %v9488
  %v9930 = vpop.f32.mrf.mxu0
  %v9931 = vadd.f32 %v9722, %v9930
  %9932 = vmatmul.f32.gmra.mxu0 %v9490
  %v9933 = vpop.f32.mrf.mxu0
  %v9934 = vadd.f32 %v9725, %v9933
  %9935 = vmatmul.f32.gmra.mxu0 %v9492
  %v9936 = vpop.f32.mrf.mxu0
  %v9937 = vadd.f32 %v9728, %v9936
  %9938 = vmatmul.f32.gmra.mxu0 %v9494
  %v9939 = vpop.f32.mrf.mxu0
  %v9940 = vadd.f32 %v9731, %v9939
  %9941 = vmatmul.f32.gmra.mxu0 %v9496
  %v9942 = vpop.f32.mrf.mxu0
  %v9943 = vadd.f32 %v9734, %v9942
  %9944 = vmatmul.f32.gmra.mxu0 %v9498
  %v9945 = vpop.f32.mrf.mxu0
  %v9946 = vadd.f32 %v9737, %v9945
  %9947 = vmatmul.f32.gmra.mxu0 %v9500
  %v9948 = vpop.f32.mrf.mxu0
  %v9949 = vadd.f32 %v9740, %v9948
  %9950 = vmatmul.f32.gmra.mxu0 %v9502
  %v9951 = vpop.f32.mrf.mxu0
  %v9952 = vadd.f32 %v9743, %v9951
  %9953 = vmatmul.f32.gmra.mxu0 %v9504
  %v9954 = vpop.f32.mrf.mxu0
  %v9955 = vadd.f32 %v9746, %v9954
  %9956 = vmatmul.f32.gmra.mxu0 %v9506
  %v9957 = vpop.f32.mrf.mxu0
  %v9958 = vadd.f32 %v9749, %v9957
  %9959 = vmatmul.f32.gmra.mxu0 %v9508
  %v9960 = vpop.f32.mrf.mxu0
  %v9961 = vadd.f32 %v9752, %v9960
  %9962 = vdwg.mxu0
  %9963 = vst.msk [vmem:[%s23] sm:$0xff] %vm1241, %v9772
  %9964 = vst.msk [vmem:[%s23 + $0x8] sm:$0xff] %vm1241, %v9775
  %9965 = vst.msk [vmem:[%s23 + $0x10] sm:$0xff] %vm1241, %v9778
  %9966 = vst.msk [vmem:[%s23 + $0x18] sm:$0xff] %vm1241, %v9781
  %9967 = vst.msk [vmem:[%s23 + $0x20] sm:$0xff] %vm1241, %v9784
  %9968 = vst.msk [vmem:[%s23 + $0x28] sm:$0xff] %vm1241, %v9787
  %9969 = vst.msk [vmem:[%s23 + $0x30] sm:$0xff] %vm1241, %v9790
  %9970 = vst.msk [vmem:[%s23 + $0x38] sm:$0xff] %vm1241, %v9793
  %9971 = vst.msk [vmem:[%s23 + $0x40] sm:$0xff] %vm1241, %v9796
  %9972 = vst.msk [vmem:[%s23 + $0x48] sm:$0xff] %vm1241, %v9799
  %9973 = vst.msk [vmem:[%s23 + $0x50] sm:$0xff] %vm1241, %v9802
  %9974 = vst.msk [vmem:[%s23 + $0x58] sm:$0xff] %vm1241, %v9805
  %9975 = vst.msk [vmem:[%s23 + $0x60] sm:$0xff] %vm1241, %v9808
  %9976 = vst.msk [vmem:[%s23 + $0x68] sm:$0xff] %vm1241, %v9811
  %9977 = vst.msk [vmem:[%s23 + $0x70] sm:$0xff] %vm1241, %v9814
  %9978 = vst.msk [vmem:[%s23 + $0x78] sm:$0xff] %vm1241, %v9817
  %9979 = vst.msk [vmem:[%s23 + $0x80] sm:$0xff] %vm1241, %v9820
  %9980 = vst.msk [vmem:[%s23 + $0x88] sm:$0xff] %vm1241, %v9823
  %9981 = vst.msk [vmem:[%s23 + $0x90] sm:$0xff] %vm1241, %v9826
  %9982 = vst.msk [vmem:[%s23 + $0x98] sm:$0xff] %vm1241, %v9829
  %9983 = vst.msk [vmem:[%s23 + $0xa0] sm:$0xff] %vm1241, %v9832
  %9984 = vst.msk [vmem:[%s23 + $0xa8] sm:$0xff] %vm1241, %v9835
  %9985 = vst.msk [vmem:[%s23 + $0xb0] sm:$0xff] %vm1241, %v9838
  %9986 = vst.msk [vmem:[%s23 + $0xb8] sm:$0xff] %vm1241, %v9841
  %9987 = vst.msk [vmem:[%s23 + $0xc0] sm:$0xff] %vm1241, %v9844
  %9988 = vst.msk [vmem:[%s23 + $0xc8] sm:$0xff] %vm1241, %v9847
  %9989 = vst.msk [vmem:[%s23 + $0xd0] sm:$0xff] %vm1241, %v9850
  %9990 = vst.msk [vmem:[%s23 + $0xd8] sm:$0xff] %vm1241, %v9853
  %9991 = vst.msk [vmem:[%s23 + $0xe0] sm:$0xff] %vm1241, %v9856
  %9992 = vst.msk [vmem:[%s23 + $0xe8] sm:$0xff] %vm1241, %v9859
  %9993 = vst.msk [vmem:[%s23 + $0xf0] sm:$0xff] %vm1241, %v9862
  %9994 = vst.msk [vmem:[%s23 + $0xf8] sm:$0xff] %vm1241, %v9865
  %9995 = vst.msk [vmem:[%s23 + $0x100] sm:$0xff] %vm1241, %v9868
  %9996 = vst.msk [vmem:[%s23 + $0x108] sm:$0xff] %vm1241, %v9871
  %9997 = vst.msk [vmem:[%s23 + $0x110] sm:$0xff] %vm1241, %v9874
  %9998 = vst.msk [vmem:[%s23 + $0x118] sm:$0xff] %vm1241, %v9877
  %9999 = vst.msk [vmem:[%s23 + $0x120] sm:$0xff] %vm1241, %v9880
  %10000 = vst.msk [vmem:[%s23 + $0x128] sm:$0xff] %vm1241, %v9883
  %10001 = vst.msk [vmem:[%s23 + $0x130] sm:$0xff] %vm1241, %v9886
  %10002 = vst.msk [vmem:[%s23 + $0x138] sm:$0xff] %vm1241, %v9889
  %10003 = vst.msk [vmem:[%s23 + $0x140] sm:$0xff] %vm1241, %v9892
  %10004 = vst.msk [vmem:[%s23 + $0x148] sm:$0xff] %vm1241, %v9895
  %10005 = vst.msk [vmem:[%s23 + $0x150] sm:$0xff] %vm1241, %v9898
  %10006 = vst.msk [vmem:[%s23 + $0x158] sm:$0xff] %vm1241, %v9901
  %10007 = vst.msk [vmem:[%s23 + $0x160] sm:$0xff] %vm1241, %v9904
  %10008 = vst.msk [vmem:[%s23 + $0x168] sm:$0xff] %vm1241, %v9907
  %10009 = vst.msk [vmem:[%s23 + $0x170] sm:$0xff] %vm1241, %v9910
  %10010 = vst.msk [vmem:[%s23 + $0x178] sm:$0xff] %vm1241, %v9913
  %10011 = vst.msk [vmem:[%s23 + $0x180] sm:$0xff] %vm1241, %v9916
  %10012 = vst.msk [vmem:[%s23 + $0x188] sm:$0xff] %vm1241, %v9919
  %10013 = vst.msk [vmem:[%s23 + $0x190] sm:$0xff] %vm1241, %v9922
  %10014 = vst.msk [vmem:[%s23 + $0x198] sm:$0xff] %vm1241, %v9925
  %10015 = vst.msk [vmem:[%s23 + $0x1a0] sm:$0xff] %vm1241, %v9928
  %10016 = vst.msk [vmem:[%s23 + $0x1a8] sm:$0xff] %vm1241, %v9931
  %10017 = vst.msk [vmem:[%s23 + $0x1b0] sm:$0xff] %vm1241, %v9934
  %10018 = vst.msk [vmem:[%s23 + $0x1b8] sm:$0xff] %vm1241, %v9937
  %10019 = vst.msk [vmem:[%s23 + $0x1c0] sm:$0xff] %vm1241, %v9940
  %10020 = vst.msk [vmem:[%s23 + $0x1c8] sm:$0xff] %vm1241, %v9943
  %10021 = vst.msk [vmem:[%s23 + $0x1d0] sm:$0xff] %vm1241, %v9946
  %10022 = vst.msk [vmem:[%s23 + $0x1d8] sm:$0xff] %vm1241, %v9949
  %10023 = vst.msk [vmem:[%s23 + $0x1e0] sm:$0xff] %vm1241, %v9952
  %10024 = vst.msk [vmem:[%s23 + $0x1e8] sm:$0xff] %vm1241, %v9955
  %10025 = vst.msk [vmem:[%s23 + $0x1f0] sm:$0xff] %vm1241, %v9958
  %10026 = vst.msk [vmem:[%s23 + $0x1f8] sm:$0xff] %vm1241, %v9961
  // Predicated region
  $region94: #{decoder_forward.1} parent=0 // pred_check
    _
  $region95: #{decoder_forward.1} parent=0 // pred_check_branch
    %10028 = sbr.rel (0) target = $region97
  $region96: #{decoder_forward.1} parent=0 // pred_region
    _
  $region97: #{decoder_forward.1} parent=0 // pred_fallthru
    _
  // Predicated region
  $region98: #{decoder_forward.1} parent=0 // pred_check
    _
  $region99: #{decoder_forward.1} parent=0 // pred_check_branch
    %10030 = sbr.rel (0) target = $region101
  $region100: #{decoder_forward.1} parent=0 // pred_region
    _
  $region101: #{decoder_forward.1} parent=0 // pred_fallthru
    _

</llo_original>
